<compile_context>
chip_gen: v5e
topology: v5e:2x2
jax: 0.10.0
libtpu: 0.0.40
codegen_flags: <defaults>
</compile_context>

<pallas_src>
import numpy as np
import jax
import jax.numpy as jnp
from jax.experimental import pallas as pl
from jax.experimental.pallas import tpu as pltpu

WIDTH = 192
LAYERS = 2
HEADS = 8
HEAD_DIM = WIDTH // HEADS          # 24
MLP_DIM = 4 * WIDTH                # 768
TIME_EMB_DIM = 100
FEATURE_DIM = 400
SEQ_IN = 11520 // WIDTH            # 60 signal tokens
SEQ = SEQ_IN + 1                   # 61 tokens (signal + time-embedding token)
S_PAD = 64                         # tokens padded 61 -> 64 (sublane aligned)
LN_EPS = 1e-5


# ------------------------------ fused kernel ------------------------------ #

def fused_kernel(xp_ref, t_ref, sel_ref, hsum_ref, hexp_ref, te_w_ref,
                 attn_w_ref, mlp_fc_w_ref, mlp_pj_w_ref, vecs_ref,
                 mlp_fc_b_ref, gvec_ref, conv_ref, fcst_ref, fcb_ref,
                 out_ref, x_scr):
    f32 = jnp.float32
    bf16 = jnp.bfloat16
    T, D = x_scr.shape
    B = T // S_PAD
    layer = pl.program_id(0)
    last = pl.num_programs(0) - 1

    def ln(x, g, b):                       # f32 elementwise (v5e-safe)
        mu = jnp.mean(x, axis=-1, keepdims=True)
        xc = x - mu
        var = jnp.mean(xc * xc, axis=-1, keepdims=True)
        return xc * jax.lax.rsqrt(var + LN_EPS) * g + b

    def mm(a, w_bf16):                     # bf16 MXU matmul, f32 accumulate
        return jnp.dot(a.astype(bf16), w_bf16, preferred_element_type=f32)

    def shift_blocks(a, o):
        # == jnp.roll(a, o*S_PAD, axis=0); static sublane shift at 64-row
        # boundaries (no relayout).  Could be swapped for pltpu.roll (XLU) if
        # profiling shows the tiny copies matter.
        rows = o * S_PAD
        if rows == 0:
            return a
        return jnp.concatenate([a[T - rows:], a[:T - rows]], axis=0)

    # ---- grid step 0: assemble tokens (signal tokens + time-emb token) -----
    @pl.when(layer == 0)
    def _init():
        te = mm(t_ref[...], te_w_ref[...]) + gvec_ref[0:1, :]          # (B, D)
        x_scr[...] = xp_ref[...] + jnp.dot(sel_ref[...], te,
                                           preferred_element_type=f32)

    x = x_scr[...]                                                     # (T, D)

    # ---- residual attention block `layer` ----------------------------------
    # (this layer's weight slabs were selected by the BlockSpec index_maps;
    #  the next layer's slabs are DMA'd while this compute runs)
    xn = ln(x, vecs_ref[0:1, :], vecs_ref[1:2, :])
    q = mm(xn, attn_w_ref[0]) + vecs_ref[2:3, :]       # 1/sqrt(hd) folded in
    k = mm(xn, attn_w_ref[1]) + vecs_ref[3:4, :]
    v = mm(xn, attn_w_ref[2]) + vecs_ref[4:5, :]

    hsum = hsum_ref[...]                               # (D, H) head reduce
    hexp = hexp_ref[...]                               # (H, D) head expand
    # Attention over the batch axis, independently per (token, head).
    # O(B) lane-dense matmuls on the full (T, D) slab.
    scores = [mm(q * shift_blocks(k, o), hsum) for o in range(B)]   # B x (T,H)
    s_max = scores[0]
    for s in scores[1:]:
        s_max = jnp.maximum(s_max, s)
    probs = [jnp.exp(s - s_max) for s in scores]
    denom = probs[0]
    for p in probs[1:]:
        denom = denom + p
    inv = 1.0 / denom                                  # exact (tiny (T, H))
    attn = None
    for o in range(B):
        w_o = mm(probs[o] * inv, hexp)                 # (T, D)
        c = w_o * shift_blocks(v, o)
        attn = c if attn is None else attn + c
    x = x + mm(attn, attn_w_ref[3]) + vecs_ref[5:6, :]

    xn2 = ln(x, vecs_ref[6:7, :], vecs_ref[7:8, :])
    h = mm(xn2, mlp_fc_w_ref[...]) + mlp_fc_b_ref[...]                 # (T, 4D)
    h = h * jax.nn.sigmoid(1.702 * h)                  # QuickGELU, f32
    x = x + mm(h, mlp_pj_w_ref[...]) + vecs_ref[8:9, :]

    x_scr[...] = x                                     # carry to next step

    # ---- last step: LayerNorm + Conv1d(61->1,k=3,p=1) + fc, all folded into
    #      6 lane-dense matmuls (shift matrices folded into fc weights) -------
    @pl.when(layer == last)
    def _final():
        xf = ln(x, gvec_ref[1:2, :], gvec_ref[2:3, :])
        xfb = xf.astype(bf16)
        res = fcb_ref[...]                             # fc bias + conv bias
        for kk in range(3):
            r = jnp.dot(conv_ref[kk], xfb,
                        preferred_element_type=f32)    # (B, D) channel mix
            res = res + mm(r, fcst_ref[kk])            # (B, FEATURE_DIM)
        out_ref[...] = res.astype(out_ref.dtype)


# ----------------------------- parameters ---------------------------------- #

def init_params(key):
    keys = iter(jax.random.split(key, 64))

    def w(shape, scale=0.02):
        return scale * jax.random.normal(next(keys), shape, jnp.float32)

    def ones(n):
        return jnp.ones((n,), jnp.float32)

    def zeros(n):
        return jnp.zeros((n,), jnp.float32)

    layers = []
    for _ in range(LAYERS):
        layers.append(dict(
            ln1_g=ones(WIDTH), ln1_b=zeros(WIDTH),
            wq=w((WIDTH, WIDTH)), bq=w((WIDTH,)),
            wk=w((WIDTH, WIDTH)), bk=w((WIDTH,)),
            wv=w((WIDTH, WIDTH)), bv=w((WIDTH,)),
            wo=w((WIDTH, WIDTH)), bo=w((WIDTH,)),
            ln2_g=ones(WIDTH), ln2_b=zeros(WIDTH),
            mlp_fc_w=w((WIDTH, MLP_DIM)), mlp_fc_b=w((MLP_DIM,)),
            mlp_proj_w=w((MLP_DIM, WIDTH)), mlp_proj_b=w((WIDTH,)),
        ))
    return dict(
        layers=layers,
        make_te_w=w((TIME_EMB_DIM, WIDTH)), make_te_b=w((WIDTH,)),
        lnf_g=ones(WIDTH), lnf_b=zeros(WIDTH),
        conv_w=w((SEQ, 3)), conv_b=w((1,)),
        fc_w=w((WIDTH, FEATURE_DIM)), fc_b=w((FEATURE_DIM,)),
    )


def prepare_kernel_weights(params, batch):
    """Flatten/stack params into 13 kernel weight slabs (bf16 for everything
    that feeds the MXU), fold the q-scale, the conv lane-shifts and the conv
    bias, and build the constant scatter / head-mask / conv-selector matrices.
    Done once, outside the jitted forward."""
    D, H, hd = WIDTH, HEADS, HEAD_DIM
    T = batch * S_PAD
    scale = 1.0 / float(np.sqrt(hd))
    f32 = np.float32

    def bf(a):
        return jnp.asarray(a, jnp.bfloat16)

    # scatter matrix placing the time-embedding token at row 60 of each block
    sel = np.zeros((T, batch), f32)
    for b in range(batch):
        sel[b * S_PAD + SEQ_IN, b] = 1.0

    # per-head segment reduce / expand matrices (lane-dense head reductions)
    hsum = np.zeros((D, H), f32)
    for h in range(H):
        hsum[h * hd:(h + 1) * hd, h] = 1.0
    hexp = hsum.T.copy()

    attn_w, vecs, fcw_l, fcb_l, pjw_l = [], [], [], [], []
    for p in params["layers"]:
        attn_w.append(np.stack([np.asarray(p["wq"]) * scale,   # fold 1/sqrt(hd)
                                np.asarray(p["wk"]),
                                np.asarray(p["wv"]),
                                np.asarray(p["wo"])], axis=0))
        vecs.append(np.stack([np.asarray(p["ln1_g"]), np.asarray(p["ln1_b"]),
                              np.asarray(p["bq"]) * scale, np.asarray(p["bk"]),
                              np.asarray(p["bv"]), np.asarray(p["bo"]),
                              np.asarray(p["ln2_g"]), np.asarray(p["ln2_b"]),
                              np.asarray(p["mlp_proj_b"])], axis=0))
        fcw_l.append(np.asarray(p["mlp_fc_w"]))
        fcb_l.append(np.asarray(p["mlp_fc_b"]).reshape(1, MLP_DIM))
        pjw_l.append(np.asarray(p["mlp_proj_w"]))
    attn_w = np.stack(attn_w, 0)                       # (L, 4, D, D)
    vecs = np.stack(vecs, 0).astype(f32)               # (L, 9, D)
    fcw_l = np.stack(fcw_l, 0)                         # (L, D, 4D)
    fcb_l = np.stack(fcb_l, 0).astype(f32)             # (L, 1, 4D)
    pjw_l = np.stack(pjw_l, 0)                         # (L, 4D, D)

    gvecs = np.stack([np.asarray(params["make_te_b"]),
                      np.asarray(params["lnf_g"]),
                      np.asarray(params["lnf_b"])], axis=0).astype(f32)  # (3,D)

    # Conv1d(61->1,k=3,p=1) + fc folded:
    #   r_kk  = conv_sel[kk] @ x     (block-diag channel mix, pad rows zeroed)
    #   out  += r_kk @ fc_stack[kk]  (the +-1 lane shift folded into fc rows)
    conv_w = np.asarray(params["conv_w"])              # (61, 3)
    conv_sel = np.zeros((3, batch, T), f32)
    for kk in range(3):
        for b in range(batch):
            conv_sel[kk, b, b * S_PAD:b * S_PAD + SEQ] = conv_w[:, kk]
    fcw = np.asarray(params["fc_w"])                   # (D, 400)
    fcw_up = np.vstack([fcw[1:], np.zeros((1, FEATURE_DIM), f32)])
    fcw_dn = np.vstack([np.zeros((1, FEATURE_DIM), f32), fcw[:-1]])
    fc_stack = np.stack([fcw_up, fcw, fcw_dn], axis=0)  # (3, D, 400)
    fcb_eff = (np.asarray(params["fc_b"])
               + float(np.asarray(params["conv_b"])[0]) * fcw.sum(axis=0)
               ).reshape(1, FEATURE_DIM).astype(f32)

    return [
        jnp.asarray(sel),                              # (T, B)      f32
        bf(hsum), bf(hexp),                            # (D,H),(H,D) bf16
        bf(params["make_te_w"]),                       # (100, D)    bf16
        bf(attn_w), bf(fcw_l), bf(pjw_l),              # big mats    bf16
        jnp.asarray(vecs), jnp.asarray(fcb_l),         # biases/LN   f32
        jnp.asarray(gvecs),                            # (3, D)      f32
        bf(conv_sel), bf(fc_stack),                    # conv fold   bf16
        jnp.asarray(fcb_eff),                          # (1, 400)    f32
    ]


# ------------------------------ forward ------------------------------------ #

def make_forward(batch):
    T = batch * S_PAD
    D = WIDTH

    in_specs = [
        pl.BlockSpec((T, D), lambda l: (0, 0)),                        # xp
        pl.BlockSpec((batch, TIME_EMB_DIM), lambda l: (0, 0)),         # t
        pl.BlockSpec((T, batch), lambda l: (0, 0)),                    # sel
        pl.BlockSpec((D, HEADS), lambda l: (0, 0)),                    # hsum
        pl.BlockSpec((HEADS, D), lambda l: (0, 0)),                    # hexp
        pl.BlockSpec((TIME_EMB_DIM, D), lambda l: (0, 0)),             # te_w
        pl.BlockSpec((None, 4, D, D), lambda l: (l, 0, 0, 0)),         # attn_w
        pl.BlockSpec((None, D, MLP_DIM), lambda l: (l, 0, 0)),         # mlp_fc_w
        pl.BlockSpec((None, MLP_DIM, D), lambda l: (l, 0, 0)),         # mlp_pj_w
        pl.BlockSpec((None, 9, D), lambda l: (l, 0, 0)),               # vecs
        pl.BlockSpec((None, 1, MLP_DIM), lambda l: (l, 0, 0)),         # mlp_fc_b
        pl.BlockSpec((3, D), lambda l: (0, 0)),                        # gvecs
        pl.BlockSpec((3, batch, T), lambda l: (0, 0, 0)),              # conv_sel
        pl.BlockSpec((3, D, FEATURE_DIM), lambda l: (0, 0, 0)),        # fc_stack
        pl.BlockSpec((1, FEATURE_DIM), lambda l: (0, 0)),              # fcb_eff
    ]
    out_spec = pl.BlockSpec((batch, FEATURE_DIM), lambda l: (0, 0))

    grid_spec = pltpu.PrefetchScalarGridSpec(
        num_scalar_prefetch=0,
        grid=(LAYERS,),
        in_specs=in_specs,
        out_specs=out_spec,
        scratch_shapes=[pltpu.VMEM((T, D), jnp.float32)],
    )

    # advisory cost estimate (lets XLA schedule around this small call)
    flops = (LAYERS * (8 * T * D * D + 4 * T * D * MLP_DIM
                       + 4 * batch * T * D * HEADS)
             + 6 * batch * T * D + 6 * batch * D * FEATURE_DIM)
    transc = LAYERS * (T * MLP_DIM + batch * T * HEADS)
    w_bytes = 2 * (LAYERS * (4 * D * D + 2 * D * MLP_DIM)
                   + TIME_EMB_DIM * D + 2 * D * HEADS
                   + 3 * D * FEATURE_DIM + 3 * batch * T)
    a_bytes = 4 * (T * D + batch * TIME_EMB_DIM + T * batch
                   + LAYERS * (9 * D + MLP_DIM) + 3 * D + FEATURE_DIM
                   + batch * FEATURE_DIM)

    fused = pl.pallas_call(
        fused_kernel,
        out_shape=jax.ShapeDtypeStruct((batch, FEATURE_DIM), jnp.float32),
        grid_spec=grid_spec,
        compiler_params=pltpu.CompilerParams(
            dimension_semantics=("arbitrary",),
            vmem_limit_bytes=32 * 1024 * 1024,
        ),
        cost_estimate=pl.CostEstimate(flops=flops, transcendentals=transc,
                                      bytes_accessed=w_bytes + a_bytes),
    )

    def forward(x, t, weights):
        # layout plumbing only: reshape + pad tokens 61 -> 64 per batch block
        xt = x.reshape(batch, SEQ_IN, WIDTH)
        xp = jnp.pad(xt, ((0, 0), (0, S_PAD - SEQ_IN), (0, 0))).reshape(T, WIDTH)
        t2 = t.reshape(batch, TIME_EMB_DIM)
        return fused(xp, t2, *weights)

    return jax.jit(forward)


# --------------------------- pure-JAX reference ----------------------------- #

def _ref_layer_norm(x, g, b):
    mu = jnp.mean(x, axis=-1, keepdims=True)
    var = jnp.mean(jnp.square(x - mu), axis=-1, keepdims=True)
    return (x - mu) * jax.lax.rsqrt(var + LN_EPS) * g + b


def reference_forward(params, x, t):
    B = x.shape[0]
    h = x.reshape(B, SEQ_IN, WIDTH)
    te = t.reshape(B, TIME_EMB_DIM) @ params["make_te_w"] + params["make_te_b"]
    h = jnp.concatenate([h, te[:, None, :]], axis=1)                  # (B,61,D)
    scale = 1.0 / float(np.sqrt(HEAD_DIM))
    for p in params["layers"]:
        xn = _ref_layer_norm(h, p["ln1_g"], p["ln1_b"])
        q = ((xn @ p["wq"] + p["bq"]) * scale).reshape(B, SEQ, HEADS, HEAD_DIM)
        k = (xn @ p["wk"] + p["bk"]).reshape(B, SEQ, HEADS, HEAD_DIM)
        v = (xn @ p["wv"] + p["bv"]).reshape(B, SEQ, HEADS, HEAD_DIM)
        s = jnp.einsum("lshe,mshe->shlm", q, k)
        pr = jax.nn.softmax(s, axis=-1)
        o = jnp.einsum("shlm,mshe->lshe", pr, v).reshape(B, SEQ, WIDTH)
        h = h + o @ p["wo"] + p["bo"]
        xn2 = _ref_layer_norm(h, p["ln2_g"], p["ln2_b"])
        m = xn2 @ p["mlp_fc_w"] + p["mlp_fc_b"]
        m = m * jax.nn.sigmoid(1.702 * m)
        h = h + m @ p["mlp_proj_w"] + p["mlp_proj_b"]
    h = _ref_layer_norm(h, params["lnf_g"], params["lnf_b"])
    hp = jnp.pad(h, ((0, 0), (0, 0), (1, 1)))
    y = jnp.zeros((B, WIDTH), jnp.float32)
    for kk in range(3):
        y = y + jnp.einsum("bcl,c->bl", hp[:, :, kk:kk + WIDTH],
                           params["conv_w"][:, kk])
    y = y + params["conv_b"][0]
    return y @ params["fc_w"] + params["fc_b"]


# --------------------------------- main ------------------------------------- #

if __name__ == "__main__":
    key = jax.random.PRNGKey(0)
    pkey, xkey, tkey = jax.random.split(key, 3)
    params = init_params(pkey)

    B = 2
    x = jax.random.normal(xkey, (B, 11520), jnp.float32)             # signal
    t = jax.random.normal(tkey, (B, 1, TIME_EMB_DIM), jnp.float32)   # time emb

    weights = prepare_kernel_weights(params, B)
    forward = make_forward(B)

    out = forward(x, t, weights)
    jax.block_until_ready(out)
    assert out.shape == (B, FEATURE_DIM), out.shape
    assert out.dtype == jnp.float32

    # sanity check against a pure-JAX f32 reference (tolerance covers bf16
    # weights / MXU accumulation-order differences)
    ref = jax.jit(reference_forward)(params, x, t)
    max_err = float(jnp.max(jnp.abs(out - ref)))
    assert max_err < 2e-2, f"kernel/reference mismatch: {max_err}"
    print("KERNEL_OK")
</pallas_src>

<mosaic_0001>
module attributes {stable_mosaic.version = 11 : i64} {
  func.func @fused_kernel(%arg0: i32, %arg1: memref<128x192xf32, #tpu.memory_space<vmem>>, %arg2: memref<2x100xf32, #tpu.memory_space<vmem>>, %arg3: memref<128x2xf32, #tpu.memory_space<vmem>>, %arg4: memref<192x8xbf16, #tpu.memory_space<vmem>>, %arg5: memref<8x192xbf16, #tpu.memory_space<vmem>>, %arg6: memref<100x192xbf16, #tpu.memory_space<vmem>>, %arg7: memref<1x4x192x192xbf16, #tpu.memory_space<vmem>>, %arg8: memref<1x192x768xbf16, #tpu.memory_space<vmem>>, %arg9: memref<1x768x192xbf16, #tpu.memory_space<vmem>>, %arg10: memref<1x9x192xf32, #tpu.memory_space<vmem>>, %arg11: memref<1x1x768xf32, #tpu.memory_space<vmem>>, %arg12: memref<3x192xf32, #tpu.memory_space<vmem>>, %arg13: memref<3x2x128xbf16, #tpu.memory_space<vmem>>, %arg14: memref<3x192x400xbf16, #tpu.memory_space<vmem>>, %arg15: memref<1x400xf32, #tpu.memory_space<vmem>>, %arg16: memref<2x400xf32, #tpu.memory_space<vmem>>, %arg17: memref<128x192xf32, #tpu.memory_space<vmem>>) attributes {dimension_semantics = [#tpu.dimension_semantics<arbitrary>], iteration_bounds = array<i64: 2>, scalar_prefetch = 0 : i64, scratch_operands = 1 : i64, tpu.core_type = #tpu.core_type<tc>, window_params = [{pipeline_mode = #tpu.pipeline_mode<synchronous>, transform_indices = @transform_0, window_bounds = array<i64: 128, 192>}, {pipeline_mode = #tpu.pipeline_mode<synchronous>, transform_indices = @transform_1, window_bounds = array<i64: 2, 100>}, {pipeline_mode = #tpu.pipeline_mode<synchronous>, transform_indices = @transform_2, window_bounds = array<i64: 128, 2>}, {pipeline_mode = #tpu.pipeline_mode<synchronous>, transform_indices = @transform_3, window_bounds = array<i64: 192, 8>}, {pipeline_mode = #tpu.pipeline_mode<synchronous>, transform_indices = @transform_4, window_bounds = array<i64: 8, 192>}, {pipeline_mode = #tpu.pipeline_mode<synchronous>, transform_indices = @transform_5, window_bounds = array<i64: 100, 192>}, {transform_indices = @transform_6, window_bounds = array<i64: 1, 4, 192, 192>}, {transform_indices = @transform_7, window_bounds = array<i64: 1, 192, 768>}, {transform_indices = @transform_8, window_bounds = array<i64: 1, 768, 192>}, {transform_indices = @transform_9, window_bounds = array<i64: 1, 9, 192>}, {transform_indices = @transform_10, window_bounds = array<i64: 1, 1, 768>}, {pipeline_mode = #tpu.pipeline_mode<synchronous>, transform_indices = @transform_11, window_bounds = array<i64: 3, 192>}, {pipeline_mode = #tpu.pipeline_mode<synchronous>, transform_indices = @transform_12, window_bounds = array<i64: 3, 2, 128>}, {pipeline_mode = #tpu.pipeline_mode<synchronous>, transform_indices = @transform_13, window_bounds = array<i64: 3, 192, 400>}, {pipeline_mode = #tpu.pipeline_mode<synchronous>, transform_indices = @transform_14, window_bounds = array<i64: 1, 400>}, {pipeline_mode = #tpu.pipeline_mode<synchronous>, transform_indices = @transform_15, window_bounds = array<i64: 2, 400>}]} {
    %c0_i32 = arith.constant 0 : i32
    %0 = arith.cmpi eq, %arg0, %c0_i32 : i32
    %1 = arith.extui %0 : i1 to i32
    %c0_i32_0 = arith.constant 0 : i32
    %2 = arith.cmpi ne, %1, %c0_i32_0 : i32
    scf.if %2 {
      %c0_75 = arith.constant 0 : index
      %c0_76 = arith.constant 0 : index
      %145 = vector.load %arg2[%c0_75, %c0_76] : memref<2x100xf32, #tpu.memory_space<vmem>>, vector<2x100xf32>
      %c0_77 = arith.constant 0 : index
      %c0_78 = arith.constant 0 : index
      %146 = vector.load %arg6[%c0_77, %c0_78] : memref<100x192xbf16, #tpu.memory_space<vmem>>, vector<100x192xbf16>
      %147 = arith.truncf %145 : vector<2x100xf32> to vector<2x100xbf16>
      %cst_79 = arith.constant dense<0.000000e+00> : vector<2x192xf32>
      %148 = tpu.matmul %147, %146, %cst_79 {dimension_numbers = #tpu.dot_dimension_numbers<[1], [0], [0], [1], [0, 0, 1, 1], [], []>} : vector<2x100xbf16>, vector<100x192xbf16>, vector<2x192xf32> -> vector<2x192xf32>
      %c0_80 = arith.constant 0 : index
      %c0_81 = arith.constant 0 : index
      %149 = vector.load %arg12[%c0_80, %c0_81] : memref<3x192xf32, #tpu.memory_space<vmem>>, vector<1x192xf32>
      %150 = vector.broadcast %149 : vector<1x192xf32> to vector<2x192xf32>
      %151 = arith.addf %148, %150 : vector<2x192xf32>
      %c0_82 = arith.constant 0 : index
      %c0_83 = arith.constant 0 : index
      %152 = vector.load %arg1[%c0_82, %c0_83] : memref<128x192xf32, #tpu.memory_space<vmem>>, vector<128x192xf32>
      %c0_84 = arith.constant 0 : index
      %c0_85 = arith.constant 0 : index
      %153 = vector.load %arg3[%c0_84, %c0_85] : memref<128x2xf32, #tpu.memory_space<vmem>>, vector<128x2xf32>
      %cst_86 = arith.constant dense<0.000000e+00> : vector<128x192xf32>
      %154 = tpu.matmul %153, %151, %cst_86 {dimension_numbers = #tpu.dot_dimension_numbers<[1], [0], [0], [1], [0, 0, 1, 1], [], []>} : vector<128x2xf32>, vector<2x192xf32>, vector<128x192xf32> -> vector<128x192xf32>
      %155 = arith.addf %152, %154 : vector<128x192xf32>
      %c0_87 = arith.constant 0 : index
      %c0_88 = arith.constant 0 : index
      %156 = vector.load %arg17[%c0_87, %c0_88] : memref<128x192xf32, #tpu.memory_space<vmem>>, vector<128x192xf32>
      tpu.vector_store %arg17[%c0_87, %c0_88], %155 {strides = array<i32>} : memref<128x192xf32, #tpu.memory_space<vmem>>, vector<128x192xf32>,
    } else {
    }
    %c0 = arith.constant 0 : index
    %c0_1 = arith.constant 0 : index
    %3 = vector.load %arg17[%c0, %c0_1] : memref<128x192xf32, #tpu.memory_space<vmem>>, vector<128x192xf32>
    %c0_2 = arith.constant 0 : index
    %c0_3 = arith.constant 0 : index
    %c0_4 = arith.constant 0 : index
    %4 = vector.load %arg10[%c0_2, %c0_3, %c0_4] : memref<1x9x192xf32, #tpu.memory_space<vmem>>, vector<1x1x192xf32>
    %5 = vector.shape_cast %4 : vector<1x1x192xf32> to vector<1x192xf32>
    %c0_5 = arith.constant 0 : index
    %c1 = arith.constant 1 : index
    %c0_6 = arith.constant 0 : index
    %6 = vector.load %arg10[%c0_5, %c1, %c0_6] : memref<1x9x192xf32, #tpu.memory_space<vmem>>, vector<1x1x192xf32>
    %7 = vector.shape_cast %6 : vector<1x1x192xf32> to vector<1x192xf32>
    %cst = arith.constant dense<0.000000e+00> : vector<128xf32>
    %8 = vector.multi_reduction <add>, %3, %cst [1] : vector<128x192xf32> to vector<128xf32>
    %9 = vector.shape_cast %8 : vector<128xf32> to vector<128x1xf32>
    %cst_7 = arith.constant 1.920000e+02 : f32
    %10 = vector.broadcast %cst_7 : f32 to vector<128x1xf32>
    %11 = arith.divf %9, %10 : vector<128x1xf32>
    %12 = vector.broadcast %11 : vector<128x1xf32> to vector<128x192xf32>
    %13 = arith.subf %3, %12 : vector<128x192xf32>
    %14 = arith.mulf %13, %13 : vector<128x192xf32>
    %cst_8 = arith.constant dense<0.000000e+00> : vector<128xf32>
    %15 = vector.multi_reduction <add>, %14, %cst_8 [1] : vector<128x192xf32> to vector<128xf32>
    %16 = vector.shape_cast %15 : vector<128xf32> to vector<128x1xf32>
    %cst_9 = arith.constant 1.920000e+02 : f32
    %17 = vector.broadcast %cst_9 : f32 to vector<128x1xf32>
    %18 = arith.divf %16, %17 : vector<128x1xf32>
    %cst_10 = arith.constant 9.99999974E-6 : f32
    %19 = vector.broadcast %cst_10 : f32 to vector<128x1xf32>
    %20 = arith.addf %18, %19 : vector<128x1xf32>
    %21 = math.rsqrt %20 : vector<128x1xf32>
    %22 = vector.broadcast %21 : vector<128x1xf32> to vector<128x192xf32>
    %23 = arith.mulf %13, %22 : vector<128x192xf32>
    %24 = vector.broadcast %5 : vector<1x192xf32> to vector<128x192xf32>
    %25 = arith.mulf %23, %24 : vector<128x192xf32>
    %26 = vector.broadcast %7 : vector<1x192xf32> to vector<128x192xf32>
    %27 = arith.addf %25, %26 : vector<128x192xf32>
    %c0_11 = arith.constant 0 : index
    %c0_12 = arith.constant 0 : index
    %c0_13 = arith.constant 0 : index
    %c0_14 = arith.constant 0 : index
    %28 = vector.load %arg7[%c0_11, %c0_12, %c0_13, %c0_14] : memref<1x4x192x192xbf16, #tpu.memory_space<vmem>>, vector<1x1x192x192xbf16>
    %29 = vector.shape_cast %28 : vector<1x1x192x192xbf16> to vector<192x192xbf16>
    %30 = arith.truncf %27 : vector<128x192xf32> to vector<128x192xbf16>
    %cst_15 = arith.constant dense<0.000000e+00> : vector<128x192xf32>
    %31 = tpu.matmul %30, %29, %cst_15 {dimension_numbers = #tpu.dot_dimension_numbers<[1], [0], [0], [1], [0, 0, 1, 1], [], []>} : vector<128x192xbf16>, vector<192x192xbf16>, vector<128x192xf32> -> vector<128x192xf32>
    %c0_16 = arith.constant 0 : index
    %c2 = arith.constant 2 : index
    %c0_17 = arith.constant 0 : index
    %32 = vector.load %arg10[%c0_16, %c2, %c0_17] : memref<1x9x192xf32, #tpu.memory_space<vmem>>, vector<1x1x192xf32>
    %33 = vector.shape_cast %32 : vector<1x1x192xf32> to vector<1x192xf32>
    %34 = vector.broadcast %33 : vector<1x192xf32> to vector<128x192xf32>
    %35 = arith.addf %31, %34 : vector<128x192xf32>
    %c0_18 = arith.constant 0 : index
    %c1_19 = arith.constant 1 : index
    %c0_20 = arith.constant 0 : index
    %c0_21 = arith.constant 0 : index
    %36 = vector.load %arg7[%c0_18, %c1_19, %c0_20, %c0_21] : memref<1x4x192x192xbf16, #tpu.memory_space<vmem>>, vector<1x1x192x192xbf16>
    %37 = vector.shape_cast %36 : vector<1x1x192x192xbf16> to vector<192x192xbf16>
    %38 = arith.truncf %27 : vector<128x192xf32> to vector<128x192xbf16>
    %cst_22 = arith.constant dense<0.000000e+00> : vector<128x192xf32>
    %39 = tpu.matmul %38, %37, %cst_22 {dimension_numbers = #tpu.dot_dimension_numbers<[1], [0], [0], [1], [0, 0, 1, 1], [], []>} : vector<128x192xbf16>, vector<192x192xbf16>, vector<128x192xf32> -> vector<128x192xf32>
    %c0_23 = arith.constant 0 : index
    %c3 = arith.constant 3 : index
    %c0_24 = arith.constant 0 : index
    %40 = vector.load %arg10[%c0_23, %c3, %c0_24] : memref<1x9x192xf32, #tpu.memory_space<vmem>>, vector<1x1x192xf32>
    %41 = vector.shape_cast %40 : vector<1x1x192xf32> to vector<1x192xf32>
    %42 = vector.broadcast %41 : vector<1x192xf32> to vector<128x192xf32>
    %43 = arith.addf %39, %42 : vector<128x192xf32>
    %c0_25 = arith.constant 0 : index
    %c2_26 = arith.constant 2 : index
    %c0_27 = arith.constant 0 : index
    %c0_28 = arith.constant 0 : index
    %44 = vector.load %arg7[%c0_25, %c2_26, %c0_27, %c0_28] : memref<1x4x192x192xbf16, #tpu.memory_space<vmem>>, vector<1x1x192x192xbf16>
    %45 = vector.shape_cast %44 : vector<1x1x192x192xbf16> to vector<192x192xbf16>
    %46 = arith.truncf %27 : vector<128x192xf32> to vector<128x192xbf16>
    %cst_29 = arith.constant dense<0.000000e+00> : vector<128x192xf32>
    %47 = tpu.matmul %46, %45, %cst_29 {dimension_numbers = #tpu.dot_dimension_numbers<[1], [0], [0], [1], [0, 0, 1, 1], [], []>} : vector<128x192xbf16>, vector<192x192xbf16>, vector<128x192xf32> -> vector<128x192xf32>
    %c0_30 = arith.constant 0 : index
    %c4 = arith.constant 4 : index
    %c0_31 = arith.constant 0 : index
    %48 = vector.load %arg10[%c0_30, %c4, %c0_31] : memref<1x9x192xf32, #tpu.memory_space<vmem>>, vector<1x1x192xf32>
    %49 = vector.shape_cast %48 : vector<1x1x192xf32> to vector<1x192xf32>
    %50 = vector.broadcast %49 : vector<1x192xf32> to vector<128x192xf32>
    %51 = arith.addf %47, %50 : vector<128x192xf32>
    %c0_32 = arith.constant 0 : index
    %c0_33 = arith.constant 0 : index
    %52 = vector.load %arg4[%c0_32, %c0_33] : memref<192x8xbf16, #tpu.memory_space<vmem>>, vector<192x8xbf16>
    %c0_34 = arith.constant 0 : index
    %c0_35 = arith.constant 0 : index
    %53 = vector.load %arg5[%c0_34, %c0_35] : memref<8x192xbf16, #tpu.memory_space<vmem>>, vector<8x192xbf16>
    %54 = arith.mulf %35, %43 : vector<128x192xf32>
    %55 = arith.truncf %54 : vector<128x192xf32> to vector<128x192xbf16>
    %cst_36 = arith.constant dense<0.000000e+00> : vector<128x8xf32>
    %56 = tpu.matmul %55, %52, %cst_36 {dimension_numbers = #tpu.dot_dimension_numbers<[1], [0], [0], [1], [0, 0, 1, 1], [], []>} : vector<128x192xbf16>, vector<192x8xbf16>, vector<128x8xf32> -> vector<128x8xf32>
    %57 = vector.extract_strided_slice %43 {offsets = [64, 0], sizes = [64, 192], strides = [1, 1]} : vector<128x192xf32> to vector<64x192xf32>
    %58 = vector.extract_strided_slice %43 {offsets = [0, 0], sizes = [64, 192], strides = [1, 1]} : vector<128x192xf32> to vector<64x192xf32>
    %59 = tpu.concatenate %57, %58 in 0 : vector<64x192xf32>, vector<64x192xf32> -> vector<128x192xf32>
    %60 = arith.mulf %35, %59 : vector<128x192xf32>
    %61 = arith.truncf %60 : vector<128x192xf32> to vector<128x192xbf16>
    %cst_37 = arith.constant dense<0.000000e+00> : vector<128x8xf32>
    %62 = tpu.matmul %61, %52, %cst_37 {dimension_numbers = #tpu.dot_dimension_numbers<[1], [0], [0], [1], [0, 0, 1, 1], [], []>} : vector<128x192xbf16>, vector<192x8xbf16>, vector<128x8xf32> -> vector<128x8xf32>
    %63 = arith.maximumf %56, %62 : vector<128x8xf32>
    %64 = arith.subf %56, %63 : vector<128x8xf32>
    %65 = math.exp %64 : vector<128x8xf32>
    %66 = arith.subf %62, %63 : vector<128x8xf32>
    %67 = math.exp %66 : vector<128x8xf32>
    %68 = arith.addf %65, %67 : vector<128x8xf32>
    %cst_38 = arith.constant 1.000000e+00 : f32
    %69 = vector.broadcast %cst_38 : f32 to vector<128x8xf32>
    %70 = arith.divf %69, %68 : vector<128x8xf32>
    %71 = arith.mulf %65, %70 : vector<128x8xf32>
    %72 = arith.truncf %71 : vector<128x8xf32> to vector<128x8xbf16>
    %cst_39 = arith.constant dense<0.000000e+00> : vector<128x192xf32>
    %73 = tpu.matmul %72, %53, %cst_39 {dimension_numbers = #tpu.dot_dimension_numbers<[1], [0], [0], [1], [0, 0, 1, 1], [], []>} : vector<128x8xbf16>, vector<8x192xbf16>, vector<128x192xf32> -> vector<128x192xf32>
    %74 = arith.mulf %73, %51 : vector<128x192xf32>
    %75 = arith.mulf %67, %70 : vector<128x8xf32>
    %76 = arith.truncf %75 : vector<128x8xf32> to vector<128x8xbf16>
    %cst_40 = arith.constant dense<0.000000e+00> : vector<128x192xf32>
    %77 = tpu.matmul %76, %53, %cst_40 {dimension_numbers = #tpu.dot_dimension_numbers<[1], [0], [0], [1], [0, 0, 1, 1], [], []>} : vector<128x8xbf16>, vector<8x192xbf16>, vector<128x192xf32> -> vector<128x192xf32>
    %78 = vector.extract_strided_slice %51 {offsets = [64, 0], sizes = [64, 192], strides = [1, 1]} : vector<128x192xf32> to vector<64x192xf32>
    %79 = vector.extract_strided_slice %51 {offsets = [0, 0], sizes = [64, 192], strides = [1, 1]} : vector<128x192xf32> to vector<64x192xf32>
    %80 = tpu.concatenate %78, %79 in 0 : vector<64x192xf32>, vector<64x192xf32> -> vector<128x192xf32>
    %81 = arith.mulf %77, %80 : vector<128x192xf32>
    %82 = arith.addf %74, %81 : vector<128x192xf32>
    %c0_41 = arith.constant 0 : index
    %c3_42 = arith.constant 3 : index
    %c0_43 = arith.constant 0 : index
    %c0_44 = arith.constant 0 : index
    %83 = vector.load %arg7[%c0_41, %c3_42, %c0_43, %c0_44] : memref<1x4x192x192xbf16, #tpu.memory_space<vmem>>, vector<1x1x192x192xbf16>
    %84 = vector.shape_cast %83 : vector<1x1x192x192xbf16> to vector<192x192xbf16>
    %85 = arith.truncf %82 : vector<128x192xf32> to vector<128x192xbf16>
    %cst_45 = arith.constant dense<0.000000e+00> : vector<128x192xf32>
    %86 = tpu.matmul %85, %84, %cst_45 {dimension_numbers = #tpu.dot_dimension_numbers<[1], [0], [0], [1], [0, 0, 1, 1], [], []>} : vector<128x192xbf16>, vector<192x192xbf16>, vector<128x192xf32> -> vector<128x192xf32>
    %87 = arith.addf %3, %86 : vector<128x192xf32>
    %c0_46 = arith.constant 0 : index
    %c5 = arith.constant 5 : index
    %c0_47 = arith.constant 0 : index
    %88 = vector.load %arg10[%c0_46, %c5, %c0_47] : memref<1x9x192xf32, #tpu.memory_space<vmem>>, vector<1x1x192xf32>
    %89 = vector.shape_cast %88 : vector<1x1x192xf32> to vector<1x192xf32>
    %90 = vector.broadcast %89 : vector<1x192xf32> to vector<128x192xf32>
    %91 = arith.addf %87, %90 : vector<128x192xf32>
    %c0_48 = arith.constant 0 : index
    %c6 = arith.constant 6 : index
    %c0_49 = arith.constant 0 : index
    %92 = vector.load %arg10[%c0_48, %c6, %c0_49] : memref<1x9x192xf32, #tpu.memory_space<vmem>>, vector<1x1x192xf32>
    %93 = vector.shape_cast %92 : vector<1x1x192xf32> to vector<1x192xf32>
    %c0_50 = arith.constant 0 : index
    %c7 = arith.constant 7 : index
    %c0_51 = arith.constant 0 : index
    %94 = vector.load %arg10[%c0_50, %c7, %c0_51] : memref<1x9x192xf32, #tpu.memory_space<vmem>>, vector<1x1x192xf32>
    %95 = vector.shape_cast %94 : vector<1x1x192xf32> to vector<1x192xf32>
    %cst_52 = arith.constant dense<0.000000e+00> : vector<128xf32>
    %96 = vector.multi_reduction <add>, %91, %cst_52 [1] : vector<128x192xf32> to vector<128xf32>
    %97 = vector.shape_cast %96 : vector<128xf32> to vector<128x1xf32>
    %cst_53 = arith.constant 1.920000e+02 : f32
    %98 = vector.broadcast %cst_53 : f32 to vector<128x1xf32>
    %99 = arith.divf %97, %98 : vector<128x1xf32>
    %100 = vector.broadcast %99 : vector<128x1xf32> to vector<128x192xf32>
    %101 = arith.subf %91, %100 : vector<128x192xf32>
    %102 = arith.mulf %101, %101 : vector<128x192xf32>
    %cst_54 = arith.constant dense<0.000000e+00> : vector<128xf32>
    %103 = vector.multi_reduction <add>, %102, %cst_54 [1] : vector<128x192xf32> to vector<128xf32>
    %104 = vector.shape_cast %103 : vector<128xf32> to vector<128x1xf32>
    %cst_55 = arith.constant 1.920000e+02 : f32
    %105 = vector.broadcast %cst_55 : f32 to vector<128x1xf32>
    %106 = arith.divf %104, %105 : vector<128x1xf32>
    %cst_56 = arith.constant 9.99999974E-6 : f32
    %107 = vector.broadcast %cst_56 : f32 to vector<128x1xf32>
    %108 = arith.addf %106, %107 : vector<128x1xf32>
    %109 = math.rsqrt %108 : vector<128x1xf32>
    %110 = vector.broadcast %109 : vector<128x1xf32> to vector<128x192xf32>
    %111 = arith.mulf %101, %110 : vector<128x192xf32>
    %112 = vector.broadcast %93 : vector<1x192xf32> to vector<128x192xf32>
    %113 = arith.mulf %111, %112 : vector<128x192xf32>
    %114 = vector.broadcast %95 : vector<1x192xf32> to vector<128x192xf32>
    %115 = arith.addf %113, %114 : vector<128x192xf32>
    %c0_57 = arith.constant 0 : index
    %c0_58 = arith.constant 0 : index
    %c0_59 = arith.constant 0 : index
    %116 = vector.load %arg8[%c0_57, %c0_58, %c0_59] : memref<1x192x768xbf16, #tpu.memory_space<vmem>>, vector<1x192x768xbf16>
    %117 = vector.shape_cast %116 : vector<1x192x768xbf16> to vector<192x768xbf16>
    %118 = arith.truncf %115 : vector<128x192xf32> to vector<128x192xbf16>
    %cst_60 = arith.constant dense<0.000000e+00> : vector<128x768xf32>
    %119 = tpu.matmul %118, %117, %cst_60 {dimension_numbers = #tpu.dot_dimension_numbers<[1], [0], [0], [1], [0, 0, 1, 1], [], []>} : vector<128x192xbf16>, vector<192x768xbf16>, vector<128x768xf32> -> vector<128x768xf32>
    %c0_61 = arith.constant 0 : index
    %c0_62 = arith.constant 0 : index
    %c0_63 = arith.constant 0 : index
    %120 = vector.load %arg11[%c0_61, %c0_62, %c0_63] : memref<1x1x768xf32, #tpu.memory_space<vmem>>, vector<1x1x768xf32>
    %121 = vector.shape_cast %120 : vector<1x1x768xf32> to vector<1x768xf32>
    %122 = vector.broadcast %121 : vector<1x768xf32> to vector<128x768xf32>
    %123 = arith.addf %119, %122 : vector<128x768xf32>
    %cst_64 = arith.constant 1.702000e+00 : f32
    %124 = vector.broadcast %cst_64 : f32 to vector<128x768xf32>
    %125 = arith.mulf %124, %123 : vector<128x768xf32>
    %126 = arith.negf %125 : vector<128x768xf32>
    %127 = math.exp %126 : vector<128x768xf32>
    %cst_65 = arith.constant 1.000000e+00 : f32
    %128 = vector.broadcast %cst_65 : f32 to vector<128x768xf32>
    %129 = arith.addf %128, %127 : vector<128x768xf32>
    %130 = arith.divf %128, %129 : vector<128x768xf32>
    %131 = arith.mulf %123, %130 : vector<128x768xf32>
    %c0_66 = arith.constant 0 : index
    %c0_67 = arith.constant 0 : index
    %c0_68 = arith.constant 0 : index
    %132 = vector.load %arg9[%c0_66, %c0_67, %c0_68] : memref<1x768x192xbf16, #tpu.memory_space<vmem>>, vector<1x768x192xbf16>
    %133 = vector.shape_cast %132 : vector<1x768x192xbf16> to vector<768x192xbf16>
    %134 = arith.truncf %131 : vector<128x768xf32> to vector<128x768xbf16>
    %cst_69 = arith.constant dense<0.000000e+00> : vector<128x192xf32>
    %135 = tpu.matmul %134, %133, %cst_69 {dimension_numbers = #tpu.dot_dimension_numbers<[1], [0], [0], [1], [0, 0, 1, 1], [], []>} : vector<128x768xbf16>, vector<768x192xbf16>, vector<128x192xf32> -> vector<128x192xf32>
    %136 = arith.addf %91, %135 : vector<128x192xf32>
    %c0_70 = arith.constant 0 : index
    %c8 = arith.constant 8 : index
    %c0_71 = arith.constant 0 : index
    %137 = vector.load %arg10[%c0_70, %c8, %c0_71] : memref<1x9x192xf32, #tpu.memory_space<vmem>>, vector<1x1x192xf32>
    %138 = vector.shape_cast %137 : vector<1x1x192xf32> to vector<1x192xf32>
    %139 = vector.broadcast %138 : vector<1x192xf32> to vector<128x192xf32>
    %140 = arith.addf %136, %139 : vector<128x192xf32>
    %c0_72 = arith.constant 0 : index
    %c0_73 = arith.constant 0 : index
    %141 = vector.load %arg17[%c0_72, %c0_73] : memref<128x192xf32, #tpu.memory_space<vmem>>, vector<128x192xf32>
    tpu.vector_store %arg17[%c0_72, %c0_73], %140 {strides = array<i32>} : memref<128x192xf32, #tpu.memory_space<vmem>>, vector<128x192xf32>,
    %c1_i32 = arith.constant 1 : i32
    %142 = arith.cmpi eq, %arg0, %c1_i32 : i32
    %143 = arith.extui %142 : i1 to i32
    %c0_i32_74 = arith.constant 0 : i32
    %144 = arith.cmpi ne, %143, %c0_i32_74 : i32
    scf.if %144 {
      %c1_75 = arith.constant 1 : index
      %c0_76 = arith.constant 0 : index
      %145 = vector.load %arg12[%c1_75, %c0_76] : memref<3x192xf32, #tpu.memory_space<vmem>>, vector<1x192xf32>
      %c2_77 = arith.constant 2 : index
      %c0_78 = arith.constant 0 : index
      %146 = vector.load %arg12[%c2_77, %c0_78] : memref<3x192xf32, #tpu.memory_space<vmem>>, vector<1x192xf32>
      %cst_79 = arith.constant dense<0.000000e+00> : vector<128xf32>
      %147 = vector.multi_reduction <add>, %140, %cst_79 [1] : vector<128x192xf32> to vector<128xf32>
      %148 = vector.shape_cast %147 : vector<128xf32> to vector<128x1xf32>
      %cst_80 = arith.constant 1.920000e+02 : f32
      %149 = vector.broadcast %cst_80 : f32 to vector<128x1xf32>
      %150 = arith.divf %148, %149 : vector<128x1xf32>
      %151 = vector.broadcast %150 : vector<128x1xf32> to vector<128x192xf32>
      %152 = arith.subf %140, %151 : vector<128x192xf32>
      %153 = arith.mulf %152, %152 : vector<128x192xf32>
      %cst_81 = arith.constant dense<0.000000e+00> : vector<128xf32>
      %154 = vector.multi_reduction <add>, %153, %cst_81 [1] : vector<128x192xf32> to vector<128xf32>
      %155 = vector.shape_cast %154 : vector<128xf32> to vector<128x1xf32>
      %cst_82 = arith.constant 1.920000e+02 : f32
      %156 = vector.broadcast %cst_82 : f32 to vector<128x1xf32>
      %157 = arith.divf %155, %156 : vector<128x1xf32>
      %cst_83 = arith.constant 9.99999974E-6 : f32
      %158 = vector.broadcast %cst_83 : f32 to vector<128x1xf32>
      %159 = arith.addf %157, %158 : vector<128x1xf32>
      %160 = math.rsqrt %159 : vector<128x1xf32>
      %161 = vector.broadcast %160 : vector<128x1xf32> to vector<128x192xf32>
      %162 = arith.mulf %152, %161 : vector<128x192xf32>
      %163 = vector.broadcast %145 : vector<1x192xf32> to vector<128x192xf32>
      %164 = arith.mulf %162, %163 : vector<128x192xf32>
      %165 = vector.broadcast %146 : vector<1x192xf32> to vector<128x192xf32>
      %166 = arith.addf %164, %165 : vector<128x192xf32>
      %167 = arith.truncf %166 : vector<128x192xf32> to vector<128x192xbf16>
      %c0_84 = arith.constant 0 : index
      %c0_85 = arith.constant 0 : index
      %168 = vector.load %arg15[%c0_84, %c0_85] : memref<1x400xf32, #tpu.memory_space<vmem>>, vector<1x400xf32>
      %c0_86 = arith.constant 0 : index
      %c0_87 = arith.constant 0 : index
      %c0_88 = arith.constant 0 : index
      %169 = vector.load %arg13[%c0_86, %c0_87, %c0_88] : memref<3x2x128xbf16, #tpu.memory_space<vmem>>, vector<1x2x128xbf16>
      %170 = vector.shape_cast %169 : vector<1x2x128xbf16> to vector<2x128xbf16>
      %cst_89 = arith.constant dense<0.000000e+00> : vector<2x192xf32>
      %171 = tpu.matmul %170, %167, %cst_89 {dimension_numbers = #tpu.dot_dimension_numbers<[1], [0], [0], [1], [0, 0, 1, 1], [], []>} : vector<2x128xbf16>, vector<128x192xbf16>, vector<2x192xf32> -> vector<2x192xf32>
      %c0_90 = arith.constant 0 : index
      %c0_91 = arith.constant 0 : index
      %c0_92 = arith.constant 0 : index
      %172 = vector.load %arg14[%c0_90, %c0_91, %c0_92] : memref<3x192x400xbf16, #tpu.memory_space<vmem>>, vector<1x192x400xbf16>
      %173 = vector.shape_cast %172 : vector<1x192x400xbf16> to vector<192x400xbf16>
      %174 = arith.truncf %171 : vector<2x192xf32> to vector<2x192xbf16>
      %cst_93 = arith.constant dense<0.000000e+00> : vector<2x400xf32>
      %175 = tpu.matmul %174, %173, %cst_93 {dimension_numbers = #tpu.dot_dimension_numbers<[1], [0], [0], [1], [0, 0, 1, 1], [], []>} : vector<2x192xbf16>, vector<192x400xbf16>, vector<2x400xf32> -> vector<2x400xf32>
      %176 = vector.broadcast %168 : vector<1x400xf32> to vector<2x400xf32>
      %177 = arith.addf %176, %175 : vector<2x400xf32>
      %c1_94 = arith.constant 1 : index
      %c0_95 = arith.constant 0 : index
      %c0_96 = arith.constant 0 : index
      %178 = vector.load %arg13[%c1_94, %c0_95, %c0_96] : memref<3x2x128xbf16, #tpu.memory_space<vmem>>, vector<1x2x128xbf16>
      %179 = vector.shape_cast %178 : vector<1x2x128xbf16> to vector<2x128xbf16>
      %cst_97 = arith.constant dense<0.000000e+00> : vector<2x192xf32>
      %180 = tpu.matmul %179, %167, %cst_97 {dimension_numbers = #tpu.dot_dimension_numbers<[1], [0], [0], [1], [0, 0, 1, 1], [], []>} : vector<2x128xbf16>, vector<128x192xbf16>, vector<2x192xf32> -> vector<2x192xf32>
      %c1_98 = arith.constant 1 : index
      %c0_99 = arith.constant 0 : index
      %c0_100 = arith.constant 0 : index
      %181 = vector.load %arg14[%c1_98, %c0_99, %c0_100] : memref<3x192x400xbf16, #tpu.memory_space<vmem>>, vector<1x192x400xbf16>
      %182 = vector.shape_cast %181 : vector<1x192x400xbf16> to vector<192x400xbf16>
      %183 = arith.truncf %180 : vector<2x192xf32> to vector<2x192xbf16>
      %cst_101 = arith.constant dense<0.000000e+00> : vector<2x400xf32>
      %184 = tpu.matmul %183, %182, %cst_101 {dimension_numbers = #tpu.dot_dimension_numbers<[1], [0], [0], [1], [0, 0, 1, 1], [], []>} : vector<2x192xbf16>, vector<192x400xbf16>, vector<2x400xf32> -> vector<2x400xf32>
      %185 = arith.addf %177, %184 : vector<2x400xf32>
      %c2_102 = arith.constant 2 : index
      %c0_103 = arith.constant 0 : index
      %c0_104 = arith.constant 0 : index
      %186 = vector.load %arg13[%c2_102, %c0_103, %c0_104] : memref<3x2x128xbf16, #tpu.memory_space<vmem>>, vector<1x2x128xbf16>
      %187 = vector.shape_cast %186 : vector<1x2x128xbf16> to vector<2x128xbf16>
      %cst_105 = arith.constant dense<0.000000e+00> : vector<2x192xf32>
      %188 = tpu.matmul %187, %167, %cst_105 {dimension_numbers = #tpu.dot_dimension_numbers<[1], [0], [0], [1], [0, 0, 1, 1], [], []>} : vector<2x128xbf16>, vector<128x192xbf16>, vector<2x192xf32> -> vector<2x192xf32>
      %c2_106 = arith.constant 2 : index
      %c0_107 = arith.constant 0 : index
      %c0_108 = arith.constant 0 : index
      %189 = vector.load %arg14[%c2_106, %c0_107, %c0_108] : memref<3x192x400xbf16, #tpu.memory_space<vmem>>, vector<1x192x400xbf16>
      %190 = vector.shape_cast %189 : vector<1x192x400xbf16> to vector<192x400xbf16>
      %191 = arith.truncf %188 : vector<2x192xf32> to vector<2x192xbf16>
      %cst_109 = arith.constant dense<0.000000e+00> : vector<2x400xf32>
      %192 = tpu.matmul %191, %190, %cst_109 {dimension_numbers = #tpu.dot_dimension_numbers<[1], [0], [0], [1], [0, 0, 1, 1], [], []>} : vector<2x192xbf16>, vector<192x400xbf16>, vector<2x400xf32> -> vector<2x400xf32>
      %193 = arith.addf %185, %192 : vector<2x400xf32>
      %c0_110 = arith.constant 0 : index
      %c0_111 = arith.constant 0 : index
      %194 = vector.load %arg16[%c0_110, %c0_111] : memref<2x400xf32, #tpu.memory_space<vmem>>, vector<2x400xf32>
      tpu.vector_store %arg16[%c0_110, %c0_111], %193 {strides = array<i32>} : memref<2x400xf32, #tpu.memory_space<vmem>>, vector<2x400xf32>,
    } else {
    }
    return
  }
  func.func @transform_0(%arg0: i32) -> (i32, i32) {
    %c0_i32 = arith.constant 0 : i32
    %c0_i32_0 = arith.constant 0 : i32
    %c0_i32_1 = arith.constant 0 : i32
    return %c0_i32, %c0_i32_0 : i32, i32
  }
  func.func @transform_1(%arg0: i32) -> (i32, i32) {
    %c0_i32 = arith.constant 0 : i32
    %c0_i32_0 = arith.constant 0 : i32
    %c0_i32_1 = arith.constant 0 : i32
    return %c0_i32, %c0_i32_0 : i32, i32
  }
  func.func @transform_2(%arg0: i32) -> (i32, i32) {
    %c0_i32 = arith.constant 0 : i32
    %c0_i32_0 = arith.constant 0 : i32
    %c0_i32_1 = arith.constant 0 : i32
    return %c0_i32, %c0_i32_0 : i32, i32
  }
  func.func @transform_3(%arg0: i32) -> (i32, i32) {
    %c0_i32 = arith.constant 0 : i32
    %c0_i32_0 = arith.constant 0 : i32
    %c0_i32_1 = arith.constant 0 : i32
    return %c0_i32, %c0_i32_0 : i32, i32
  }
  func.func @transform_4(%arg0: i32) -> (i32, i32) {
    %c0_i32 = arith.constant 0 : i32
    %c0_i32_0 = arith.constant 0 : i32
    %c0_i32_1 = arith.constant 0 : i32
    return %c0_i32, %c0_i32_0 : i32, i32
  }
  func.func @transform_5(%arg0: i32) -> (i32, i32) {
    %c0_i32 = arith.constant 0 : i32
    %c0_i32_0 = arith.constant 0 : i32
    %c0_i32_1 = arith.constant 0 : i32
    return %c0_i32, %c0_i32_0 : i32, i32
  }
  func.func @transform_6(%arg0: i32) -> (i32, i32, i32, i32) {
    %c0_i32 = arith.constant 0 : i32
    %c0_i32_0 = arith.constant 0 : i32
    %c0_i32_1 = arith.constant 0 : i32
    %c0_i32_2 = arith.constant 0 : i32
    return %arg0, %c0_i32, %c0_i32_0, %c0_i32_1 : i32, i32, i32, i32
  }
  func.func @transform_7(%arg0: i32) -> (i32, i32, i32) {
    %c0_i32 = arith.constant 0 : i32
    %c0_i32_0 = arith.constant 0 : i32
    %c0_i32_1 = arith.constant 0 : i32
    return %arg0, %c0_i32, %c0_i32_0 : i32, i32, i32
  }
  func.func @transform_8(%arg0: i32) -> (i32, i32, i32) {
    %c0_i32 = arith.constant 0 : i32
    %c0_i32_0 = arith.constant 0 : i32
    %c0_i32_1 = arith.constant 0 : i32
    return %arg0, %c0_i32, %c0_i32_0 : i32, i32, i32
  }
  func.func @transform_9(%arg0: i32) -> (i32, i32, i32) {
    %c0_i32 = arith.constant 0 : i32
    %c0_i32_0 = arith.constant 0 : i32
    %c0_i32_1 = arith.constant 0 : i32
    return %arg0, %c0_i32, %c0_i32_0 : i32, i32, i32
  }
  func.func @transform_10(%arg0: i32) -> (i32, i32, i32) {
    %c0_i32 = arith.constant 0 : i32
    %c0_i32_0 = arith.constant 0 : i32
    %c0_i32_1 = arith.constant 0 : i32
    return %arg0, %c0_i32, %c0_i32_0 : i32, i32, i32
  }
  func.func @transform_11(%arg0: i32) -> (i32, i32) {
    %c0_i32 = arith.constant 0 : i32
    %c0_i32_0 = arith.constant 0 : i32
    %c0_i32_1 = arith.constant 0 : i32
    return %c0_i32, %c0_i32_0 : i32, i32
  }
  func.func @transform_12(%arg0: i32) -> (i32, i32, i32) {
    %c0_i32 = arith.constant 0 : i32
    %c0_i32_0 = arith.constant 0 : i32
    %c0_i32_1 = arith.constant 0 : i32
    %c0_i32_2 = arith.constant 0 : i32
    return %c0_i32, %c0_i32_0, %c0_i32_1 : i32, i32, i32
  }
  func.func @transform_13(%arg0: i32) -> (i32, i32, i32) {
    %c0_i32 = arith.constant 0 : i32
    %c0_i32_0 = arith.constant 0 : i32
    %c0_i32_1 = arith.constant 0 : i32
    %c0_i32_2 = arith.constant 0 : i32
    return %c0_i32, %c0_i32_0, %c0_i32_1 : i32, i32, i32
  }
  func.func @transform_14(%arg0: i32) -> (i32, i32) {
    %c0_i32 = arith.constant 0 : i32
    %c0_i32_0 = arith.constant 0 : i32
    %c0_i32_1 = arith.constant 0 : i32
    return %c0_i32, %c0_i32_0 : i32, i32
  }
  func.func @transform_15(%arg0: i32) -> (i32, i32) {
    %c0_i32 = arith.constant 0 : i32
    %c0_i32_0 = arith.constant 0 : i32
    %c0_i32_1 = arith.constant 0 : i32
    return %c0_i32, %c0_i32_0 : i32, i32
  }
}

</mosaic_0001>

<llo_original>
// kernel: forward.1
$region0: #{forward.1}
  #allocation0 [shape = 'u32[]', space=smem, size = 0x4, offset = 0x4, fixed_abs, tag = 'smem constant byte address 0x4 - core index']
  #allocation1 [shape = 'u32[72,128]{1,0:T(1,128)}', space=vmem, size = 0x9000, scoped, tag = 'internal scratch']
  #allocation2 [shape = 'f32[128,192]{1,0:T(8,128)}', space=vmem, size = 0x20000, scoped, tag = 'scratch operand']
  %s0 = inlined_call_operand.vmem [shape: f32[128,192], index: 0, kind: input, shape index: {}]
  %s1 = inlined_call_operand.vmem [shape: f32[2,100], index: 1, kind: input, shape index: {}]
  %s2 = inlined_call_operand.vmem [shape: f32[128,2], index: 2, kind: input, shape index: {}]
  %s3 = inlined_call_operand.vmem [shape: bf16[192,8], index: 3, kind: input, shape index: {}]
  %s4 = inlined_call_operand.vmem [shape: bf16[8,192], index: 4, kind: input, shape index: {}]
  %s5 = inlined_call_operand.vmem [shape: bf16[100,192], index: 5, kind: input, shape index: {}]
  %s6 = inlined_call_operand.vmem [shape: bf16[2,4,192,192], index: 6, kind: input, shape index: {}]
  %s7 = inlined_call_operand.vmem [shape: bf16[2,192,768], index: 7, kind: input, shape index: {}]
  %s8 = inlined_call_operand.vmem [shape: bf16[2,768,192], index: 8, kind: input, shape index: {}]
  %s9 = inlined_call_operand.vmem [shape: f32[2,9,192], index: 9, kind: input, shape index: {}]
  %s10 = inlined_call_operand.vmem [shape: f32[2,1,768], index: 10, kind: input, shape index: {}]
  %s11 = inlined_call_operand.vmem [shape: f32[3,192], index: 11, kind: input, shape index: {}]
  %s12 = inlined_call_operand.vmem [shape: bf16[3,2,128], index: 12, kind: input, shape index: {}]
  %s13 = inlined_call_operand.vmem [shape: bf16[3,192,400], index: 13, kind: input, shape index: {}]
  %s14 = inlined_call_operand.vmem [shape: f32[1,400], index: 14, kind: input, shape index: {}]
  %s15 = inlined_call_operand.hbm [shape: f32[2,400], index: 15, kind: output, shape index: {}]
  %s16 = sld [smem:[#allocation0]]
  $region101: #{forward.1} parent=0
    _
  %s18 = ssub.s32 1, %s16
  %s19 = scalar_select 0, %s18, %s16
  $region1: #{forward.1} parent=0
    #allocation3 [shape = 'u8[4096]{0}', space=vmem, size = 0x1000, scoped, tag = 'output window, operand 0, single buffered']
    #allocation4 [shape = 's32[2]{0}', space=sflag, size = 0x8, scoped, tag = 'scoped memory for forward.1']
    %20 = vsyncpa [#allocation4], 0
    loop: start=0, step=1, limit=4
    $region2: #{forward.1} parent=1 // loop_pre_header
      _
    $region3: #{forward.1} parent=1 // loop_header
      %s22 = sphi 0, %s26
      %p23 = scmp.ge.s32.totalorder %s22, 4
      %s30 = sphi 0, %s30
      %s32 = sphi 0, %s30
      %s33 = sphi 0, %s32
      %s47 = sphi 0, %s33
      %s51 = sphi 0, %s51
      %s53 = sphi 0, %s51
      %s54 = sphi 0, %s53
      %s68 = sphi 0, %s54
      %s72 = sphi 0, %s72
      %s74 = sphi 0, %s72
      %s75 = sphi 0, %s74
      %s89 = sphi 0, %s75
      %s93 = sphi 0, %s93
      %s95 = sphi 0, %s93
      %s96 = sphi 0, %s95
      %s110 = sphi 0, %s96
      %s114 = sphi 0, %s114
      %s116 = sphi 0, %s114
      %s117 = sphi 0, %s116
      %s131 = sphi 0, %s117
      %s135 = sphi 0, %s135
      %s137 = sphi 0, %s135
      %s138 = sphi 0, %s137
      %s152 = sphi 0, %s138
      %s158 = sphi 0, %s160
      %s161 = sphi 0, %s158
      %s162 = sphi 0, %s161
      %s178 = sphi 0, %s162
      %s184 = sphi 0, %s186
      %s187 = sphi 0, %s184
      %s188 = sphi 0, %s187
      %s204 = sphi 0, %s188
      %s210 = sphi 0, %s212
      %s213 = sphi 0, %s210
      %s214 = sphi 0, %s213
      %s230 = sphi 0, %s214
      %s236 = sphi 0, %s238
      %s239 = sphi 0, %s236
      %s240 = sphi 0, %s239
      %s256 = sphi 0, %s240
      %s262 = sphi 0, %s264
      %s265 = sphi 0, %s262
      %s266 = sphi 0, %s265
      %s282 = sphi 0, %s266
      %s286 = sphi 0, %s286
      %s288 = sphi 0, %s286
      %s289 = sphi 0, %s288
      %s303 = sphi 0, %s289
      %s307 = sphi 0, %s307
      %s309 = sphi 0, %s307
      %s310 = sphi 0, %s309
      %s324 = sphi 0, %s310
      %s328 = sphi 0, %s328
      %s330 = sphi 0, %s328
      %s331 = sphi 0, %s330
      %s345 = sphi 0, %s331
      %s349 = sphi 0, %s349
      %s351 = sphi 0, %s349
      %s352 = sphi 0, %s351
      %s366 = sphi 0, %s352
      %s370 = sphi 0, %s370
      %s372 = sphi 0, %s370
      %s373 = sphi 0, %s372
      %s387 = sphi 0, %s373
    $region4: #{forward.1} parent=1 // loop_header_branch
      %25 = sbr.rel (%p23) target = $region8
    $region5: #{forward.1} parent=1 // loop_body
      %s27 = ssub.s32 %s22, 1
      %s28 = ssub.s32 %s22, 2
      %s29 = sadd.s32 %s22, 1
      %s31 = sadd.s32 %s30, 1
      %p34 = scmp.eq.s32.totalorder %s22, 1
      %p35 = scmp.ne.s32.totalorder %s30, %s32
      %p36 = scmp.eq.s32.totalorder %s22, 0
      %p37 = por %p35, %p36
      %p38 = scmp.ne.s32.totalorder %s30, %s32
      %p39 = scmp.eq.s32.totalorder %s27, 1
      %p40 = por %p38, %p39
      %p41 = scmp.ne.s32.totalorder %s32, %s33
      %p42 = scmp.eq.s32.totalorder %s27, 0
      %p43 = por %p41, %p42
      %p44 = scmp.ne.s32.totalorder %s32, %s33
      %p45 = scmp.eq.s32.totalorder %s28, 1
      %p46 = por %p44, %p45
      %p48 = scmp.ne.s32.totalorder %s33, %s47
      %p49 = scmp.eq.s32.totalorder %s28, 0
      %p50 = por %p48, %p49
      %s52 = sadd.s32 %s51, 1
      %p55 = scmp.eq.s32.totalorder %s22, 1
      %p56 = scmp.ne.s32.totalorder %s51, %s53
      %p57 = scmp.eq.s32.totalorder %s22, 0
      %p58 = por %p56, %p57
      %p59 = scmp.ne.s32.totalorder %s51, %s53
      %p60 = scmp.eq.s32.totalorder %s27, 1
      %p61 = por %p59, %p60
      %p62 = scmp.ne.s32.totalorder %s53, %s54
      %p63 = scmp.eq.s32.totalorder %s27, 0
      %p64 = por %p62, %p63
      %p65 = scmp.ne.s32.totalorder %s53, %s54
      %p66 = scmp.eq.s32.totalorder %s28, 1
      %p67 = por %p65, %p66
      %p69 = scmp.ne.s32.totalorder %s54, %s68
      %p70 = scmp.eq.s32.totalorder %s28, 0
      %p71 = por %p69, %p70
      %s73 = sadd.s32 %s72, 1
      %p76 = scmp.eq.s32.totalorder %s22, 1
      %p77 = scmp.ne.s32.totalorder %s72, %s74
      %p78 = scmp.eq.s32.totalorder %s22, 0
      %p79 = por %p77, %p78
      %p80 = scmp.ne.s32.totalorder %s72, %s74
      %p81 = scmp.eq.s32.totalorder %s27, 1
      %p82 = por %p80, %p81
      %p83 = scmp.ne.s32.totalorder %s74, %s75
      %p84 = scmp.eq.s32.totalorder %s27, 0
      %p85 = por %p83, %p84
      %p86 = scmp.ne.s32.totalorder %s74, %s75
      %p87 = scmp.eq.s32.totalorder %s28, 1
      %p88 = por %p86, %p87
      %p90 = scmp.ne.s32.totalorder %s75, %s89
      %p91 = scmp.eq.s32.totalorder %s28, 0
      %p92 = por %p90, %p91
      %s94 = sadd.s32 %s93, 1
      %p97 = scmp.eq.s32.totalorder %s22, 1
      %p98 = scmp.ne.s32.totalorder %s93, %s95
      %p99 = scmp.eq.s32.totalorder %s22, 0
      %p100 = por %p98, %p99
      %p101 = scmp.ne.s32.totalorder %s93, %s95
      %p102 = scmp.eq.s32.totalorder %s27, 1
      %p103 = por %p101, %p102
      %p104 = scmp.ne.s32.totalorder %s95, %s96
      %p105 = scmp.eq.s32.totalorder %s27, 0
      %p106 = por %p104, %p105
      %p107 = scmp.ne.s32.totalorder %s95, %s96
      %p108 = scmp.eq.s32.totalorder %s28, 1
      %p109 = por %p107, %p108
      %p111 = scmp.ne.s32.totalorder %s96, %s110
      %p112 = scmp.eq.s32.totalorder %s28, 0
      %p113 = por %p111, %p112
      %s115 = sadd.s32 %s114, 1
      %p118 = scmp.eq.s32.totalorder %s22, 1
      %p119 = scmp.ne.s32.totalorder %s114, %s116
      %p120 = scmp.eq.s32.totalorder %s22, 0
      %p121 = por %p119, %p120
      %p122 = scmp.ne.s32.totalorder %s114, %s116
      %p123 = scmp.eq.s32.totalorder %s27, 1
      %p124 = por %p122, %p123
      %p125 = scmp.ne.s32.totalorder %s116, %s117
      %p126 = scmp.eq.s32.totalorder %s27, 0
      %p127 = por %p125, %p126
      %p128 = scmp.ne.s32.totalorder %s116, %s117
      %p129 = scmp.eq.s32.totalorder %s28, 1
      %p130 = por %p128, %p129
      %p132 = scmp.ne.s32.totalorder %s117, %s131
      %p133 = scmp.eq.s32.totalorder %s28, 0
      %p134 = por %p132, %p133
      %s136 = sadd.s32 %s135, 1
      %p139 = scmp.eq.s32.totalorder %s22, 1
      %p140 = scmp.ne.s32.totalorder %s135, %s137
      %p141 = scmp.eq.s32.totalorder %s22, 0
      %p142 = por %p140, %p141
      %p143 = scmp.ne.s32.totalorder %s135, %s137
      %p144 = scmp.eq.s32.totalorder %s27, 1
      %p145 = por %p143, %p144
      %p146 = scmp.ne.s32.totalorder %s137, %s138
      %p147 = scmp.eq.s32.totalorder %s27, 0
      %p148 = por %p146, %p147
      %p149 = scmp.ne.s32.totalorder %s137, %s138
      %p150 = scmp.eq.s32.totalorder %s28, 1
      %p151 = por %p149, %p150
      %p153 = scmp.ne.s32.totalorder %s138, %s152
      %p154 = scmp.eq.s32.totalorder %s28, 0
      %p155 = por %p153, %p154
      %s156 = ssub.s32 %s22, %s29
      %p157 = scmp.eq.s32.totalorder %s156, 0
      %s159 = sadd.s32 %s158, 1
      %s160 = scalar_select %p157, %s158, %s159
      %p163 = pneg %p157
      %p164 = scmp.eq.s32.totalorder %s22, 1
      %p165 = por %p163, %p164
      %p166 = scmp.ne.s32.totalorder %s158, %s161
      %p167 = scmp.eq.s32.totalorder %s22, 0
      %p168 = por %p166, %p167
      %p169 = scmp.ne.s32.totalorder %s158, %s161
      %p170 = scmp.eq.s32.totalorder %s27, 1
      %p171 = por %p169, %p170
      %p172 = scmp.ne.s32.totalorder %s161, %s162
      %p173 = scmp.eq.s32.totalorder %s27, 0
      %p174 = por %p172, %p173
      %p175 = scmp.ne.s32.totalorder %s161, %s162
      %p176 = scmp.eq.s32.totalorder %s28, 1
      %p177 = por %p175, %p176
      %p179 = scmp.ne.s32.totalorder %s162, %s178
      %p180 = scmp.eq.s32.totalorder %s28, 0
      %p181 = por %p179, %p180
      %s182 = ssub.s32 %s22, %s29
      %p183 = scmp.eq.s32.totalorder %s182, 0
      %s185 = sadd.s32 %s184, 1
      %s186 = scalar_select %p183, %s184, %s185
      %p189 = pneg %p183
      %p190 = scmp.eq.s32.totalorder %s22, 1
      %p191 = por %p189, %p190
      %p192 = scmp.ne.s32.totalorder %s184, %s187
      %p193 = scmp.eq.s32.totalorder %s22, 0
      %p194 = por %p192, %p193
      %p195 = scmp.ne.s32.totalorder %s184, %s187
      %p196 = scmp.eq.s32.totalorder %s27, 1
      %p197 = por %p195, %p196
      %p198 = scmp.ne.s32.totalorder %s187, %s188
      %p199 = scmp.eq.s32.totalorder %s27, 0
      %p200 = por %p198, %p199
      %p201 = scmp.ne.s32.totalorder %s187, %s188
      %p202 = scmp.eq.s32.totalorder %s28, 1
      %p203 = por %p201, %p202
      %p205 = scmp.ne.s32.totalorder %s188, %s204
      %p206 = scmp.eq.s32.totalorder %s28, 0
      %p207 = por %p205, %p206
      %s208 = ssub.s32 %s22, %s29
      %p209 = scmp.eq.s32.totalorder %s208, 0
      %s211 = sadd.s32 %s210, 1
      %s212 = scalar_select %p209, %s210, %s211
      %p215 = pneg %p209
      %p216 = scmp.eq.s32.totalorder %s22, 1
      %p217 = por %p215, %p216
      %p218 = scmp.ne.s32.totalorder %s210, %s213
      %p219 = scmp.eq.s32.totalorder %s22, 0
      %p220 = por %p218, %p219
      %p221 = scmp.ne.s32.totalorder %s210, %s213
      %p222 = scmp.eq.s32.totalorder %s27, 1
      %p223 = por %p221, %p222
      %p224 = scmp.ne.s32.totalorder %s213, %s214
      %p225 = scmp.eq.s32.totalorder %s27, 0
      %p226 = por %p224, %p225
      %p227 = scmp.ne.s32.totalorder %s213, %s214
      %p228 = scmp.eq.s32.totalorder %s28, 1
      %p229 = por %p227, %p228
      %p231 = scmp.ne.s32.totalorder %s214, %s230
      %p232 = scmp.eq.s32.totalorder %s28, 0
      %p233 = por %p231, %p232
      %s234 = ssub.s32 %s22, %s29
      %p235 = scmp.eq.s32.totalorder %s234, 0
      %s237 = sadd.s32 %s236, 1
      %s238 = scalar_select %p235, %s236, %s237
      %p241 = pneg %p235
      %p242 = scmp.eq.s32.totalorder %s22, 1
      %p243 = por %p241, %p242
      %p244 = scmp.ne.s32.totalorder %s236, %s239
      %p245 = scmp.eq.s32.totalorder %s22, 0
      %p246 = por %p244, %p245
      %p247 = scmp.ne.s32.totalorder %s236, %s239
      %p248 = scmp.eq.s32.totalorder %s27, 1
      %p249 = por %p247, %p248
      %p250 = scmp.ne.s32.totalorder %s239, %s240
      %p251 = scmp.eq.s32.totalorder %s27, 0
      %p252 = por %p250, %p251
      %p253 = scmp.ne.s32.totalorder %s239, %s240
      %p254 = scmp.eq.s32.totalorder %s28, 1
      %p255 = por %p253, %p254
      %p257 = scmp.ne.s32.totalorder %s240, %s256
      %p258 = scmp.eq.s32.totalorder %s28, 0
      %p259 = por %p257, %p258
      %s260 = ssub.s32 %s22, %s29
      %p261 = scmp.eq.s32.totalorder %s260, 0
      %s263 = sadd.s32 %s262, 1
      %s264 = scalar_select %p261, %s262, %s263
      %p267 = pneg %p261
      %p268 = scmp.eq.s32.totalorder %s22, 1
      %p269 = por %p267, %p268
      %p270 = scmp.ne.s32.totalorder %s262, %s265
      %p271 = scmp.eq.s32.totalorder %s22, 0
      %p272 = por %p270, %p271
      %p273 = scmp.ne.s32.totalorder %s262, %s265
      %p274 = scmp.eq.s32.totalorder %s27, 1
      %p275 = por %p273, %p274
      %p276 = scmp.ne.s32.totalorder %s265, %s266
      %p277 = scmp.eq.s32.totalorder %s27, 0
      %p278 = por %p276, %p277
      %p279 = scmp.ne.s32.totalorder %s265, %s266
      %p280 = scmp.eq.s32.totalorder %s28, 1
      %p281 = por %p279, %p280
      %p283 = scmp.ne.s32.totalorder %s266, %s282
      %p284 = scmp.eq.s32.totalorder %s28, 0
      %p285 = por %p283, %p284
      %s287 = sadd.s32 %s286, 1
      %p290 = scmp.eq.s32.totalorder %s22, 1
      %p291 = scmp.ne.s32.totalorder %s286, %s288
      %p292 = scmp.eq.s32.totalorder %s22, 0
      %p293 = por %p291, %p292
      %p294 = scmp.ne.s32.totalorder %s286, %s288
      %p295 = scmp.eq.s32.totalorder %s27, 1
      %p296 = por %p294, %p295
      %p297 = scmp.ne.s32.totalorder %s288, %s289
      %p298 = scmp.eq.s32.totalorder %s27, 0
      %p299 = por %p297, %p298
      %p300 = scmp.ne.s32.totalorder %s288, %s289
      %p301 = scmp.eq.s32.totalorder %s28, 1
      %p302 = por %p300, %p301
      %p304 = scmp.ne.s32.totalorder %s289, %s303
      %p305 = scmp.eq.s32.totalorder %s28, 0
      %p306 = por %p304, %p305
      %s308 = sadd.s32 %s307, 1
      %p311 = scmp.eq.s32.totalorder %s22, 1
      %p312 = scmp.ne.s32.totalorder %s307, %s309
      %p313 = scmp.eq.s32.totalorder %s22, 0
      %p314 = por %p312, %p313
      %p315 = scmp.ne.s32.totalorder %s307, %s309
      %p316 = scmp.eq.s32.totalorder %s27, 1
      %p317 = por %p315, %p316
      %p318 = scmp.ne.s32.totalorder %s309, %s310
      %p319 = scmp.eq.s32.totalorder %s27, 0
      %p320 = por %p318, %p319
      %p321 = scmp.ne.s32.totalorder %s309, %s310
      %p322 = scmp.eq.s32.totalorder %s28, 1
      %p323 = por %p321, %p322
      %p325 = scmp.ne.s32.totalorder %s310, %s324
      %p326 = scmp.eq.s32.totalorder %s28, 0
      %p327 = por %p325, %p326
      %s329 = sadd.s32 %s328, 1
      %p332 = scmp.eq.s32.totalorder %s22, 1
      %p333 = scmp.ne.s32.totalorder %s328, %s330
      %p334 = scmp.eq.s32.totalorder %s22, 0
      %p335 = por %p333, %p334
      %p336 = scmp.ne.s32.totalorder %s328, %s330
      %p337 = scmp.eq.s32.totalorder %s27, 1
      %p338 = por %p336, %p337
      %p339 = scmp.ne.s32.totalorder %s330, %s331
      %p340 = scmp.eq.s32.totalorder %s27, 0
      %p341 = por %p339, %p340
      %p342 = scmp.ne.s32.totalorder %s330, %s331
      %p343 = scmp.eq.s32.totalorder %s28, 1
      %p344 = por %p342, %p343
      %p346 = scmp.ne.s32.totalorder %s331, %s345
      %p347 = scmp.eq.s32.totalorder %s28, 0
      %p348 = por %p346, %p347
      %s350 = sadd.s32 %s349, 1
      %p353 = scmp.eq.s32.totalorder %s22, 1
      %p354 = scmp.ne.s32.totalorder %s349, %s351
      %p355 = scmp.eq.s32.totalorder %s22, 0
      %p356 = por %p354, %p355
      %p357 = scmp.ne.s32.totalorder %s349, %s351
      %p358 = scmp.eq.s32.totalorder %s27, 1
      %p359 = por %p357, %p358
      %p360 = scmp.ne.s32.totalorder %s351, %s352
      %p361 = scmp.eq.s32.totalorder %s27, 0
      %p362 = por %p360, %p361
      %p363 = scmp.ne.s32.totalorder %s351, %s352
      %p364 = scmp.eq.s32.totalorder %s28, 1
      %p365 = por %p363, %p364
      %p367 = scmp.ne.s32.totalorder %s352, %s366
      %p368 = scmp.eq.s32.totalorder %s28, 0
      %p369 = por %p367, %p368
      %s371 = sadd.s32 %s370, 1
      %p374 = scmp.eq.s32.totalorder %s22, 1
      %p375 = scmp.ne.s32.totalorder %s370, %s372
      %p376 = scmp.eq.s32.totalorder %s22, 0
      %p377 = por %p375, %p376
      %p378 = scmp.ne.s32.totalorder %s370, %s372
      %p379 = scmp.eq.s32.totalorder %s27, 1
      %p380 = por %p378, %p379
      %p381 = scmp.ne.s32.totalorder %s372, %s373
      %p382 = scmp.eq.s32.totalorder %s27, 0
      %p383 = por %p381, %p382
      %p384 = scmp.ne.s32.totalorder %s372, %s373
      %p385 = scmp.eq.s32.totalorder %s28, 1
      %p386 = por %p384, %p385
      %p388 = scmp.ne.s32.totalorder %s373, %s387
      %p389 = scmp.eq.s32.totalorder %s28, 0
      %p390 = por %p388, %p389
      %p391 = scmp.le.s32.totalorder 1, %s22
      %p392 = scmp.lt.s32.totalorder %s22, 3
      %p393 = pnand %p391, %p392
      %p394 = pneg %p393
      // Predicated region
      $region9: #{forward.1} parent=5 // pred_check
        _
      $region10: #{forward.1} parent=5 // pred_check_branch
        %396 = sbr.rel (%p393) target = $region12
      $region11: #{forward.1} parent=5 // pred_region
        %s397 = ssub.s32 %s22, 1
        // Predicated region
        $region13: #{forward.1} parent=11 // pred_check
          %p398 = pneg %p43
        $region14: #{forward.1} parent=11 // pred_check_branch
          %400 = sbr.rel (%p398) target = $region16
        $region15: #{forward.1} parent=11 // pred_region
          _
        $region16: #{forward.1} parent=11 // pred_fallthru
          _
        // Predicated region
        $region17: #{forward.1} parent=11 // pred_check
          %p401 = pneg %p64
        $region18: #{forward.1} parent=11 // pred_check_branch
          %403 = sbr.rel (%p401) target = $region20
        $region19: #{forward.1} parent=11 // pred_region
          _
        $region20: #{forward.1} parent=11 // pred_fallthru
          _
        // Predicated region
        $region21: #{forward.1} parent=11 // pred_check
          %p404 = pneg %p85
        $region22: #{forward.1} parent=11 // pred_check_branch
          %406 = sbr.rel (%p404) target = $region24
        $region23: #{forward.1} parent=11 // pred_region
          _
        $region24: #{forward.1} parent=11 // pred_fallthru
          _
        // Predicated region
        $region25: #{forward.1} parent=11 // pred_check
          %p407 = pneg %p106
        $region26: #{forward.1} parent=11 // pred_check_branch
          %409 = sbr.rel (%p407) target = $region28
        $region27: #{forward.1} parent=11 // pred_region
          _
        $region28: #{forward.1} parent=11 // pred_fallthru
          _
        // Predicated region
        $region29: #{forward.1} parent=11 // pred_check
          %p410 = pneg %p127
        $region30: #{forward.1} parent=11 // pred_check_branch
          %412 = sbr.rel (%p410) target = $region32
        $region31: #{forward.1} parent=11 // pred_region
          _
        $region32: #{forward.1} parent=11 // pred_fallthru
          _
        // Predicated region
        $region33: #{forward.1} parent=11 // pred_check
          %p413 = pneg %p148
        $region34: #{forward.1} parent=11 // pred_check_branch
          %415 = sbr.rel (%p413) target = $region36
        $region35: #{forward.1} parent=11 // pred_region
          _
        $region36: #{forward.1} parent=11 // pred_fallthru
          _
        // Predicated region
        $region37: #{forward.1} parent=11 // pred_check
          %p416 = pneg %p299
        $region38: #{forward.1} parent=11 // pred_check_branch
          %418 = sbr.rel (%p416) target = $region40
        $region39: #{forward.1} parent=11 // pred_region
          _
        $region40: #{forward.1} parent=11 // pred_fallthru
          _
        // Predicated region
        $region41: #{forward.1} parent=11 // pred_check
          %p419 = pneg %p320
        $region42: #{forward.1} parent=11 // pred_check_branch
          %421 = sbr.rel (%p419) target = $region44
        $region43: #{forward.1} parent=11 // pred_region
          _
        $region44: #{forward.1} parent=11 // pred_fallthru
          _
        // Predicated region
        $region45: #{forward.1} parent=11 // pred_check
          %p422 = pneg %p341
        $region46: #{forward.1} parent=11 // pred_check_branch
          %424 = sbr.rel (%p422) target = $region48
        $region47: #{forward.1} parent=11 // pred_region
          _
        $region48: #{forward.1} parent=11 // pred_fallthru
          _
        // Predicated region
        $region49: #{forward.1} parent=11 // pred_check
          %p425 = pneg %p362
        $region50: #{forward.1} parent=11 // pred_check_branch
          %427 = sbr.rel (%p425) target = $region52
        $region51: #{forward.1} parent=11 // pred_region
          _
        $region52: #{forward.1} parent=11 // pred_fallthru
          _
      $region12: #{forward.1} parent=5 // pred_fallthru
        _
      %p428 = scmp.lt.s32.totalorder %s22, 2
      // Predicated region
      $region53: #{forward.1} parent=5 // pred_check
        %p429 = pneg %p428
      $region54: #{forward.1} parent=5 // pred_check_branch
        %431 = sbr.rel (%p429) target = $region56
      $region55: #{forward.1} parent=5 // pred_region
        // Predicated region
        $region57: #{forward.1} parent=55 // pred_check
          %p432 = pneg %p168
        $region58: #{forward.1} parent=55 // pred_check_branch
          %434 = sbr.rel (%p432) target = $region60
        $region59: #{forward.1} parent=55 // pred_region
          %p435 = scmp.lt.s32.totalorder %s22, 1
          %s436 = scalar_select %p435, %s22, 1
          %s437 = smul.addr %s436, 192
          %s438 = smul.addr %s437, 4
          %s439 = scalar_lea.vmem %s6, %s438
        $region60: #{forward.1} parent=55 // pred_fallthru
          _
        // Predicated region
        $region61: #{forward.1} parent=55 // pred_check
          %p440 = pneg %p194
        $region62: #{forward.1} parent=55 // pred_check_branch
          %442 = sbr.rel (%p440) target = $region64
        $region63: #{forward.1} parent=55 // pred_region
          %p443 = scmp.lt.s32.totalorder %s22, 1
          %s444 = scalar_select %p443, %s22, 1
          %s445 = smul.addr %s444, 144
          %s446 = smul.addr %s445, 4
          %s447 = scalar_lea.vmem %s7, %s446
        $region64: #{forward.1} parent=55 // pred_fallthru
          _
        // Predicated region
        $region65: #{forward.1} parent=55 // pred_check
          %p448 = pneg %p220
        $region66: #{forward.1} parent=55 // pred_check_branch
          %450 = sbr.rel (%p448) target = $region68
        $region67: #{forward.1} parent=55 // pred_region
          %p451 = scmp.lt.s32.totalorder %s22, 1
          %s452 = scalar_select %p451, %s22, 1
          %s453 = smul.addr %s452, 192
          %s454 = smul.addr %s453, 4
          %s455 = scalar_lea.vmem %s8, %s454
        $region68: #{forward.1} parent=55 // pred_fallthru
          _
        // Predicated region
        $region69: #{forward.1} parent=55 // pred_check
          %p456 = pneg %p246
        $region70: #{forward.1} parent=55 // pred_check_branch
          %458 = sbr.rel (%p456) target = $region72
        $region71: #{forward.1} parent=55 // pred_region
          %p459 = scmp.lt.s32.totalorder %s22, 1
          %s460 = scalar_select %p459, %s22, 1
          %s461 = smul.addr %s460, 4
          %s462 = smul.addr %s461, 8
          %s463 = scalar_lea.vmem %s9, %s462
        $region72: #{forward.1} parent=55 // pred_fallthru
          _
        // Predicated region
        $region73: #{forward.1} parent=55 // pred_check
          %p464 = pneg %p272
        $region74: #{forward.1} parent=55 // pred_check_branch
          %466 = sbr.rel (%p464) target = $region76
        $region75: #{forward.1} parent=55 // pred_region
          %p467 = scmp.lt.s32.totalorder %s22, 1
          %s468 = scalar_select %p467, %s22, 1
          %s469 = smul.addr %s468, 6
          %s470 = scalar_lea.vmem %s10, %s469
        $region76: #{forward.1} parent=55 // pred_fallthru
          _
      $region56: #{forward.1} parent=5 // pred_fallthru
        _
      %p471 = scmp.le.s32.totalorder 1, %s22
      %p472 = scmp.lt.s32.totalorder %s22, 3
      %p473 = pnand %p471, %p472
      %p474 = pneg %p473
      // Predicated region
      $region77: #{forward.1} parent=5 // pred_check
        _
      $region78: #{forward.1} parent=5 // pred_check_branch
        %476 = sbr.rel (%p473) target = $region80
      $region79: #{forward.1} parent=5 // pred_region
        %s477 = ssub.s32 %s22, 1
        %p478 = pneg %p43
        %p479 = pneg %p40
        %p480 = pneg %p64
        %p481 = pneg %p61
        %p482 = pneg %p85
        %p483 = pneg %p82
        %p484 = pneg %p106
        %p485 = pneg %p103
        %p486 = pneg %p127
        %p487 = pneg %p124
        %p488 = pneg %p148
        %p489 = pneg %p145
        %p490 = scmp.lt.s32.totalorder %s27, 1
        %s491 = scalar_select %p490, %s27, 1
        %s492 = smul.addr %s491, 192
        %s493 = smul.addr %s492, 4
        %s494 = scalar_lea.vmem %s6, %s493
        %p495 = pneg %p174
        %p496 = pneg %p171
        %p497 = scmp.lt.s32.totalorder %s27, 1
        %s498 = scalar_select %p497, %s27, 1
        %s499 = smul.addr %s498, 144
        %s500 = smul.addr %s499, 4
        %s501 = scalar_lea.vmem %s7, %s500
        %p502 = pneg %p200
        %p503 = pneg %p197
        %p504 = scmp.lt.s32.totalorder %s27, 1
        %s505 = scalar_select %p504, %s27, 1
        %s506 = smul.addr %s505, 192
        %s507 = smul.addr %s506, 4
        %s508 = scalar_lea.vmem %s8, %s507
        %p509 = pneg %p226
        %p510 = pneg %p223
        %p511 = scmp.lt.s32.totalorder %s27, 1
        %s512 = scalar_select %p511, %s27, 1
        %s513 = smul.addr %s512, 4
        %s514 = smul.addr %s513, 8
        %s515 = scalar_lea.vmem %s9, %s514
        %p516 = pneg %p252
        %p517 = pneg %p249
        %p518 = scmp.lt.s32.totalorder %s27, 1
        %s519 = scalar_select %p518, %s27, 1
        %s520 = smul.addr %s519, 6
        %s521 = scalar_lea.vmem %s10, %s520
        %p522 = pneg %p278
        %p523 = pneg %p275
        %p524 = pneg %p299
        %p525 = pneg %p296
        %p526 = pneg %p320
        %p527 = pneg %p317
        %p528 = pneg %p341
        %p529 = pneg %p338
        %p530 = pneg %p362
        %p531 = pneg %p359
        %p532 = pneg %p383
        %p533 = pneg %p380
        %p534 = scmp.lt.s32.totalorder %s27, 1
        %s535 = scalar_select %p534, %s27, 1
        %s536 = smul.addr %s535, 192
        %s537 = smul.addr %s536, 4
        %s538 = scalar_lea.vmem %s6, %s537
        %p539 = scmp.lt.s32.totalorder %s27, 1
        %s540 = scalar_select %p539, %s27, 1
        %s541 = smul.addr %s540, 144
        %s542 = smul.addr %s541, 4
        %s543 = scalar_lea.vmem %s7, %s542
        %p544 = scmp.lt.s32.totalorder %s27, 1
        %s545 = scalar_select %p544, %s27, 1
        %s546 = smul.addr %s545, 192
        %s547 = smul.addr %s546, 4
        %s548 = scalar_lea.vmem %s8, %s547
        %p549 = scmp.lt.s32.totalorder %s27, 1
        %s550 = scalar_select %p549, %s27, 1
        %s551 = smul.addr %s550, 4
        %s552 = smul.addr %s551, 8
        %s553 = scalar_lea.vmem %s9, %s552
        %p554 = scmp.lt.s32.totalorder %s27, 1
        %s555 = scalar_select %p554, %s27, 1
        %s556 = smul.addr %s555, 6
        %s557 = scalar_lea.vmem %s10, %s556
        %p559 = scmp.eq.s32.totalorder %s27, 0
        // Predicated region
        $region81: #{forward.1} parent=79 // pred_check
          %p560 = pneg %p559
        $region82: #{forward.1} parent=79 // pred_check_branch
          %562 = sbr.rel (%p560) target = $region84
        $region83: #{forward.1} parent=79 // pred_region
          %v563 = vld [vmem:[%s1] sm:$0x3]
          %v564 = vld [vmem:[%s5] sm:$0xff]
          %v565 = vld [vmem:[%s5 + $0x8] sm:$0xff]
          %v566 = vld [vmem:[%s5 + $0x10] sm:$0xff]
          %v567 = vld [vmem:[%s5 + $0x18] sm:$0xff]
          %v568 = vld [vmem:[%s5 + $0x20] sm:$0xff]
          %v569 = vld [vmem:[%s5 + $0x28] sm:$0xff]
          %v570 = vld [vmem:[%s5 + $0x30] sm:$0xff]
          %v571 = vld [vmem:[%s5 + $0x38] sm:$0xff]
          %v572 = vld [vmem:[%s5 + $0x40] sm:$0xff]
          %v573 = vld [vmem:[%s5 + $0x48] sm:$0xff]
          %v574 = vld [vmem:[%s5 + $0x50] sm:$0xff]
          %v575 = vld [vmem:[%s5 + $0x58] sm:$0xff]
          %v576 = vld [vmem:[%s5 + $0x60] sm:$0x33]
          %v577 = vpack.c.bf16 %v563, %v563
          %v578 = vld [vmem:[%s11] ss:$4 sm:$0x3]
          %v580 = vperm.slane %v578, 0
          %v581 = vperm.slane %v578, 1
          %v597 = vunpack.c.l.b16 %v564
          %v598 = vunpack.c.h.b16 %v564
          %v599 = vunpack.c.l.b16 %v565
          %v600 = vunpack.c.h.b16 %v565
          %v601 = vunpack.c.l.b16 %v566
          %v602 = vunpack.c.h.b16 %v566
          %v603 = vunpack.c.l.b16 %v567
          %v604 = vunpack.c.h.b16 %v567
          %v605 = vunpack.c.l.b16 %v568
          %v606 = vunpack.c.h.b16 %v568
          %v607 = vunpack.c.l.b16 %v569
          %v608 = vunpack.c.h.b16 %v569
          %v609 = vunpack.c.l.b16 %v570
          %v610 = vunpack.c.h.b16 %v570
          %v611 = vunpack.c.l.b16 %v571
          %v612 = vunpack.c.h.b16 %v571
          %v613 = vunpack.c.l.b16 %v572
          %v614 = vunpack.c.h.b16 %v572
          %v615 = vunpack.c.l.b16 %v573
          %v616 = vunpack.c.h.b16 %v573
          %v617 = vunpack.c.l.b16 %v574
          %v618 = vunpack.c.h.b16 %v574
          %v619 = vunpack.c.l.b16 %v575
          %v620 = vunpack.c.h.b16 %v575
          %v621 = vunpack.c.l.b16 %v576
          %v622 = vunpack.c.h.b16 %v576
          %v623 = vpack.c.b16 %v599, %v597
          %v624 = vpack.c.b16 %v600, %v598
          %v625 = vpack.c.b16 %v603, %v601
          %v626 = vpack.c.b16 %v604, %v602
          %v627 = vpack.c.b16 %v607, %v605
          %v628 = vpack.c.b16 %v608, %v606
          %v629 = vpack.c.b16 %v611, %v609
          %v630 = vpack.c.b16 %v612, %v610
          %v631 = vpack.c.b16 %v615, %v613
          %v632 = vpack.c.b16 %v616, %v614
          %v633 = vpack.c.b16 %v619, %v617
          %v634 = vpack.c.b16 %v620, %v618
          %v635 = vpack.c.b16 %v621, %v621
          %v636 = vpack.c.b16 %v622, %v622
          %vm649 = vcmask 818176
          %v651 = vsel %vm649, %v577, 0
          %vm653 = vcmask 1041408
          %v655 = vsel %vm653, %v635, 0
          %v658 = vsel %vm653, %v636, 0
          %660 = vmatpush.bf16.msra.mxu0 0
          %661 = vmatpush.bf16.msra.mxu0 %v655
          %662 = vmatpush.bf16.msra.mxu0 %v633
          %663 = vmatpush.bf16.msra.mxu0 %v631
          %664 = vmatpush.bf16.msra.mxu0 %v629
          %665 = vmatpush.bf16.msra.mxu0 %v627
          %666 = vmatpush.bf16.msra.mxu0 %v625
          %667 = vmatpush.bf16.msra.mxu0 %v623
          %668 = vmatmul.bf16.gmra.mxu0 %v651
          %v669 = vpop.f32.mrf.mxu0
          %v670 = vadd.f32 %v580, %v669
          %v671 = vpop.f32.mrf.mxu0
          %672 = vdwg.mxu0
          %673 = vmatpush.bf16.msra.mxu0 0
          %674 = vmatpush.bf16.msra.mxu0 %v658
          %675 = vmatpush.bf16.msra.mxu0 %v634
          %676 = vmatpush.bf16.msra.mxu0 %v632
          %677 = vmatpush.bf16.msra.mxu0 %v630
          %678 = vmatpush.bf16.msra.mxu0 %v628
          %679 = vmatpush.bf16.msra.mxu0 %v626
          %680 = vmatpush.bf16.msra.mxu0 %v624
          %681 = vmatmul.bf16.gmra.mxu0 %v651
          %v682 = vpop.f32.mrf.mxu0
          %v683 = vadd.f32 %v581, %v682
          %v684 = vpop.f32.mrf.mxu0
          %685 = vdwg.mxu0
          %v686 = vld [vmem:[%s0] sm:$0xff]
          %v687 = vld [vmem:[%s0 + $0x8] sm:$0xff]
          %v688 = vld [vmem:[%s0 + $0x10] sm:$0xff]
          %v689 = vld [vmem:[%s0 + $0x18] sm:$0xff]
          %v690 = vld [vmem:[%s0 + $0x20] sm:$0xff]
          %v691 = vld [vmem:[%s0 + $0x28] sm:$0xff]
          %v692 = vld [vmem:[%s0 + $0x30] sm:$0xff]
          %v693 = vld [vmem:[%s0 + $0x38] sm:$0xff]
          %v694 = vld [vmem:[%s0 + $0x40] sm:$0xff]
          %v695 = vld [vmem:[%s0 + $0x48] sm:$0xff]
          %v696 = vld [vmem:[%s0 + $0x50] sm:$0xff]
          %v697 = vld [vmem:[%s0 + $0x58] sm:$0xff]
          %v698 = vld [vmem:[%s0 + $0x60] sm:$0xff]
          %v699 = vld [vmem:[%s0 + $0x68] sm:$0xff]
          %v700 = vld [vmem:[%s0 + $0x70] sm:$0xff]
          %v701 = vld [vmem:[%s0 + $0x78] sm:$0xff]
          %v702 = vld [vmem:[%s0 + $0x80] sm:$0xff]
          %v703 = vld [vmem:[%s0 + $0x88] sm:$0xff]
          %v704 = vld [vmem:[%s0 + $0x90] sm:$0xff]
          %v705 = vld [vmem:[%s0 + $0x98] sm:$0xff]
          %v706 = vld [vmem:[%s0 + $0xa0] sm:$0xff]
          %v707 = vld [vmem:[%s0 + $0xa8] sm:$0xff]
          %v708 = vld [vmem:[%s0 + $0xb0] sm:$0xff]
          %v709 = vld [vmem:[%s0 + $0xb8] sm:$0xff]
          %v710 = vld [vmem:[%s0 + $0xc0] sm:$0xff]
          %v711 = vld [vmem:[%s0 + $0xc8] sm:$0xff]
          %v712 = vld [vmem:[%s0 + $0xd0] sm:$0xff]
          %v713 = vld [vmem:[%s0 + $0xd8] sm:$0xff]
          %v714 = vld [vmem:[%s0 + $0xe0] sm:$0xff]
          %v715 = vld [vmem:[%s0 + $0xe8] sm:$0xff]
          %v716 = vld [vmem:[%s0 + $0xf0] sm:$0xff]
          %v717 = vld [vmem:[%s0 + $0xf8] sm:$0xff]
          %v718 = vld [vmem:[%s2] sm:$0xff]
          %v719 = vld [vmem:[%s2 + $0x8] sm:$0xff]
          %v720 = vld [vmem:[%s2 + $0x10] sm:$0xff]
          %v721 = vld [vmem:[%s2 + $0x18] sm:$0xff]
          %v722 = vld [vmem:[%s2 + $0x20] sm:$0xff]
          %v723 = vld [vmem:[%s2 + $0x28] sm:$0xff]
          %v724 = vld [vmem:[%s2 + $0x30] sm:$0xff]
          %v725 = vld [vmem:[%s2 + $0x38] sm:$0xff]
          %v726 = vld [vmem:[%s2 + $0x40] sm:$0xff]
          %v727 = vld [vmem:[%s2 + $0x48] sm:$0xff]
          %v728 = vld [vmem:[%s2 + $0x50] sm:$0xff]
          %v729 = vld [vmem:[%s2 + $0x58] sm:$0xff]
          %v730 = vld [vmem:[%s2 + $0x60] sm:$0xff]
          %v731 = vld [vmem:[%s2 + $0x68] sm:$0xff]
          %v732 = vld [vmem:[%s2 + $0x70] sm:$0xff]
          %v733 = vld [vmem:[%s2 + $0x78] sm:$0xff]
          %vm734 = vcmask 15360
          %v736 = vsel %vm734, %v718, 0
          %v739 = vsel %vm734, %v719, 0
          %v742 = vsel %vm734, %v720, 0
          %v745 = vsel %vm734, %v721, 0
          %v748 = vsel %vm734, %v722, 0
          %v751 = vsel %vm734, %v723, 0
          %v754 = vsel %vm734, %v724, 0
          %v757 = vsel %vm734, %v725, 0
          %v760 = vsel %vm734, %v726, 0
          %v763 = vsel %vm734, %v727, 0
          %v766 = vsel %vm734, %v728, 0
          %v769 = vsel %vm734, %v729, 0
          %v772 = vsel %vm734, %v730, 0
          %v775 = vsel %vm734, %v731, 0
          %v778 = vsel %vm734, %v732, 0
          %v781 = vsel %vm734, %v733, 0
          %v784 = vsel %vm653, %v670, 0
          %v787 = vsel %vm653, %v683, 0
          %789 = vmatpush.msra.mxu0 0.0
          %790 = vmatpush.msra.mxu0 0.0
          %791 = vmatpush.msra.mxu0 0.0
          %792 = vmatpush.msra.mxu0 0.0
          %793 = vmatpush.msra.mxu0 0.0
          %794 = vmatpush.msra.mxu0 0.0
          %795 = vmatpush.msra.mxu0 0.0
          %796 = vmatpush.msra.mxu0 0.0
          %797 = vmatpush.msra.mxu0 0.0
          %798 = vmatpush.msra.mxu0 0.0
          %799 = vmatpush.msra.mxu0 0.0
          %800 = vmatpush.msra.mxu0 0.0
          %801 = vmatpush.msra.mxu0 0.0
          %802 = vmatpush.msra.mxu0 0.0
          %803 = vmatpush.msra.mxu0 0.0
          %804 = vmatpush.msra.mxu0 %v784
          %805 = vmatmul.f32.gmra.mxu0 %v736
          %v806 = vpop.f32.mrf.mxu0
          %v807 = vadd.f32 0.0, %v806
          %808 = vmatmul.f32.gmra.mxu0 %v739
          %v809 = vpop.f32.mrf.mxu0
          %v810 = vadd.f32 0.0, %v809
          %811 = vmatmul.f32.gmra.mxu0 %v742
          %v812 = vpop.f32.mrf.mxu0
          %v813 = vadd.f32 0.0, %v812
          %814 = vmatmul.f32.gmra.mxu0 %v745
          %v815 = vpop.f32.mrf.mxu0
          %v816 = vadd.f32 0.0, %v815
          %817 = vmatmul.f32.gmra.mxu0 %v748
          %v818 = vpop.f32.mrf.mxu0
          %v819 = vadd.f32 0.0, %v818
          %820 = vmatmul.f32.gmra.mxu0 %v751
          %v821 = vpop.f32.mrf.mxu0
          %v822 = vadd.f32 0.0, %v821
          %823 = vmatmul.f32.gmra.mxu0 %v754
          %v824 = vpop.f32.mrf.mxu0
          %v825 = vadd.f32 0.0, %v824
          %826 = vmatmul.f32.gmra.mxu0 %v757
          %v827 = vpop.f32.mrf.mxu0
          %v828 = vadd.f32 0.0, %v827
          %829 = vmatmul.f32.gmra.mxu0 %v760
          %v830 = vpop.f32.mrf.mxu0
          %v831 = vadd.f32 0.0, %v830
          %832 = vmatmul.f32.gmra.mxu0 %v763
          %v833 = vpop.f32.mrf.mxu0
          %v834 = vadd.f32 0.0, %v833
          %835 = vmatmul.f32.gmra.mxu0 %v766
          %v836 = vpop.f32.mrf.mxu0
          %v837 = vadd.f32 0.0, %v836
          %838 = vmatmul.f32.gmra.mxu0 %v769
          %v839 = vpop.f32.mrf.mxu0
          %v840 = vadd.f32 0.0, %v839
          %841 = vmatmul.f32.gmra.mxu0 %v772
          %v842 = vpop.f32.mrf.mxu0
          %v843 = vadd.f32 0.0, %v842
          %844 = vmatmul.f32.gmra.mxu0 %v775
          %v845 = vpop.f32.mrf.mxu0
          %v846 = vadd.f32 0.0, %v845
          %847 = vmatmul.f32.gmra.mxu0 %v778
          %v848 = vpop.f32.mrf.mxu0
          %v849 = vadd.f32 0.0, %v848
          %850 = vmatmul.f32.gmra.mxu0 %v781
          %v851 = vpop.f32.mrf.mxu0
          %v852 = vadd.f32 0.0, %v851
          %853 = vdwg.mxu0
          %854 = vmatpush.msra.mxu0 0.0
          %855 = vmatpush.msra.mxu0 0.0
          %856 = vmatpush.msra.mxu0 0.0
          %857 = vmatpush.msra.mxu0 0.0
          %858 = vmatpush.msra.mxu0 0.0
          %859 = vmatpush.msra.mxu0 0.0
          %860 = vmatpush.msra.mxu0 0.0
          %861 = vmatpush.msra.mxu0 0.0
          %862 = vmatpush.msra.mxu0 0.0
          %863 = vmatpush.msra.mxu0 0.0
          %864 = vmatpush.msra.mxu0 0.0
          %865 = vmatpush.msra.mxu0 0.0
          %866 = vmatpush.msra.mxu0 0.0
          %867 = vmatpush.msra.mxu0 0.0
          %868 = vmatpush.msra.mxu0 0.0
          %869 = vmatpush.msra.mxu0 %v787
          %870 = vmatmul.f32.gmra.mxu0 %v736
          %v871 = vpop.f32.mrf.mxu0
          %v872 = vadd.f32 0.0, %v871
          %873 = vmatmul.f32.gmra.mxu0 %v739
          %v874 = vpop.f32.mrf.mxu0
          %v875 = vadd.f32 0.0, %v874
          %876 = vmatmul.f32.gmra.mxu0 %v742
          %v877 = vpop.f32.mrf.mxu0
          %v878 = vadd.f32 0.0, %v877
          %879 = vmatmul.f32.gmra.mxu0 %v745
          %v880 = vpop.f32.mrf.mxu0
          %v881 = vadd.f32 0.0, %v880
          %882 = vmatmul.f32.gmra.mxu0 %v748
          %v883 = vpop.f32.mrf.mxu0
          %v884 = vadd.f32 0.0, %v883
          %885 = vmatmul.f32.gmra.mxu0 %v751
          %v886 = vpop.f32.mrf.mxu0
          %v887 = vadd.f32 0.0, %v886
          %888 = vmatmul.f32.gmra.mxu0 %v754
          %v889 = vpop.f32.mrf.mxu0
          %v890 = vadd.f32 0.0, %v889
          %891 = vmatmul.f32.gmra.mxu0 %v757
          %v892 = vpop.f32.mrf.mxu0
          %v893 = vadd.f32 0.0, %v892
          %894 = vmatmul.f32.gmra.mxu0 %v760
          %v895 = vpop.f32.mrf.mxu0
          %v896 = vadd.f32 0.0, %v895
          %897 = vmatmul.f32.gmra.mxu0 %v763
          %v898 = vpop.f32.mrf.mxu0
          %v899 = vadd.f32 0.0, %v898
          %900 = vmatmul.f32.gmra.mxu0 %v766
          %v901 = vpop.f32.mrf.mxu0
          %v902 = vadd.f32 0.0, %v901
          %903 = vmatmul.f32.gmra.mxu0 %v769
          %v904 = vpop.f32.mrf.mxu0
          %v905 = vadd.f32 0.0, %v904
          %906 = vmatmul.f32.gmra.mxu0 %v772
          %v907 = vpop.f32.mrf.mxu0
          %v908 = vadd.f32 0.0, %v907
          %909 = vmatmul.f32.gmra.mxu0 %v775
          %v910 = vpop.f32.mrf.mxu0
          %v911 = vadd.f32 0.0, %v910
          %912 = vmatmul.f32.gmra.mxu0 %v778
          %v913 = vpop.f32.mrf.mxu0
          %v914 = vadd.f32 0.0, %v913
          %915 = vmatmul.f32.gmra.mxu0 %v781
          %v916 = vpop.f32.mrf.mxu0
          %v917 = vadd.f32 0.0, %v916
          %918 = vdwg.mxu0
          %v919 = vadd.f32 %v686, %v807
          %v920 = vadd.f32 %v687, %v872
          %v921 = vadd.f32 %v688, %v810
          %v922 = vadd.f32 %v689, %v875
          %v923 = vadd.f32 %v690, %v813
          %v924 = vadd.f32 %v691, %v878
          %v925 = vadd.f32 %v692, %v816
          %v926 = vadd.f32 %v693, %v881
          %v927 = vadd.f32 %v694, %v819
          %v928 = vadd.f32 %v695, %v884
          %v929 = vadd.f32 %v696, %v822
          %v930 = vadd.f32 %v697, %v887
          %v931 = vadd.f32 %v698, %v825
          %v932 = vadd.f32 %v699, %v890
          %v933 = vadd.f32 %v700, %v828
          %v934 = vadd.f32 %v701, %v893
          %v935 = vadd.f32 %v702, %v831
          %v936 = vadd.f32 %v703, %v896
          %v937 = vadd.f32 %v704, %v834
          %v938 = vadd.f32 %v705, %v899
          %v939 = vadd.f32 %v706, %v837
          %v940 = vadd.f32 %v707, %v902
          %v941 = vadd.f32 %v708, %v840
          %v942 = vadd.f32 %v709, %v905
          %v943 = vadd.f32 %v710, %v843
          %v944 = vadd.f32 %v711, %v908
          %v945 = vadd.f32 %v712, %v846
          %v946 = vadd.f32 %v713, %v911
          %v947 = vadd.f32 %v714, %v849
          %v948 = vadd.f32 %v715, %v914
          %v949 = vadd.f32 %v716, %v852
          %v950 = vadd.f32 %v717, %v917
          %951 = vst [vmem:[#allocation2] sm:$0xff] %v919
          %vm952 = vcmask 523264
          %953 = vst.msk [vmem:[#allocation2 + $0x8] sm:$0xff] %vm952, %v920
          %954 = vst [vmem:[#allocation2 + $0x10] sm:$0xff] %v921
          %955 = vst.msk [vmem:[#allocation2 + $0x18] sm:$0xff] %vm952, %v922
          %956 = vst [vmem:[#allocation2 + $0x20] sm:$0xff] %v923
          %957 = vst.msk [vmem:[#allocation2 + $0x28] sm:$0xff] %vm952, %v924
          %958 = vst [vmem:[#allocation2 + $0x30] sm:$0xff] %v925
          %959 = vst.msk [vmem:[#allocation2 + $0x38] sm:$0xff] %vm952, %v926
          %960 = vst [vmem:[#allocation2 + $0x40] sm:$0xff] %v927
          %961 = vst.msk [vmem:[#allocation2 + $0x48] sm:$0xff] %vm952, %v928
          %962 = vst [vmem:[#allocation2 + $0x50] sm:$0xff] %v929
          %963 = vst.msk [vmem:[#allocation2 + $0x58] sm:$0xff] %vm952, %v930
          %964 = vst [vmem:[#allocation2 + $0x60] sm:$0xff] %v931
          %965 = vst.msk [vmem:[#allocation2 + $0x68] sm:$0xff] %vm952, %v932
          %966 = vst [vmem:[#allocation2 + $0x70] sm:$0xff] %v933
          %967 = vst.msk [vmem:[#allocation2 + $0x78] sm:$0xff] %vm952, %v934
          %968 = vst [vmem:[#allocation2 + $0x80] sm:$0xff] %v935
          %969 = vst.msk [vmem:[#allocation2 + $0x88] sm:$0xff] %vm952, %v936
          %970 = vst [vmem:[#allocation2 + $0x90] sm:$0xff] %v937
          %971 = vst.msk [vmem:[#allocation2 + $0x98] sm:$0xff] %vm952, %v938
          %972 = vst [vmem:[#allocation2 + $0xa0] sm:$0xff] %v939
          %973 = vst.msk [vmem:[#allocation2 + $0xa8] sm:$0xff] %vm952, %v940
          %974 = vst [vmem:[#allocation2 + $0xb0] sm:$0xff] %v941
          %975 = vst.msk [vmem:[#allocation2 + $0xb8] sm:$0xff] %vm952, %v942
          %976 = vst [vmem:[#allocation2 + $0xc0] sm:$0xff] %v943
          %977 = vst.msk [vmem:[#allocation2 + $0xc8] sm:$0xff] %vm952, %v944
          %978 = vst [vmem:[#allocation2 + $0xd0] sm:$0xff] %v945
          %979 = vst.msk [vmem:[#allocation2 + $0xd8] sm:$0xff] %vm952, %v946
          %980 = vst [vmem:[#allocation2 + $0xe0] sm:$0xff] %v947
          %981 = vst.msk [vmem:[#allocation2 + $0xe8] sm:$0xff] %vm952, %v948
          %982 = vst [vmem:[#allocation2 + $0xf0] sm:$0xff] %v949
          %983 = vst.msk [vmem:[#allocation2 + $0xf8] sm:$0xff] %vm952, %v950
        $region84: #{forward.1} parent=79 // pred_fallthru
          _
        %v984 = vld [vmem:[#allocation2] sm:$0xff]
        %v985 = vld [vmem:[#allocation2 + $0x8] sm:$0xff]
        %v986 = vld [vmem:[#allocation2 + $0x10] sm:$0xff]
        %v987 = vld [vmem:[#allocation2 + $0x18] sm:$0xff]
        %v988 = vld [vmem:[#allocation2 + $0x20] sm:$0xff]
        %v989 = vld [vmem:[#allocation2 + $0x28] sm:$0xff]
        %v990 = vld [vmem:[#allocation2 + $0x30] sm:$0xff]
        %v991 = vld [vmem:[#allocation2 + $0x38] sm:$0xff]
        %v992 = vld [vmem:[#allocation2 + $0x40] sm:$0xff]
        %v993 = vld [vmem:[#allocation2 + $0x48] sm:$0xff]
        %v994 = vld [vmem:[#allocation2 + $0x50] sm:$0xff]
        %v995 = vld [vmem:[#allocation2 + $0x58] sm:$0xff]
        %v996 = vld [vmem:[#allocation2 + $0x60] sm:$0xff]
        %v997 = vld [vmem:[#allocation2 + $0x68] sm:$0xff]
        %v998 = vld [vmem:[#allocation2 + $0x70] sm:$0xff]
        %v999 = vld [vmem:[#allocation2 + $0x78] sm:$0xff]
        %v1000 = vld [vmem:[#allocation2 + $0x80] sm:$0xff]
        %v1001 = vld [vmem:[#allocation2 + $0x88] sm:$0xff]
        %v1002 = vld [vmem:[#allocation2 + $0x90] sm:$0xff]
        %v1003 = vld [vmem:[#allocation2 + $0x98] sm:$0xff]
        %v1004 = vld [vmem:[#allocation2 + $0xa0] sm:$0xff]
        %v1005 = vld [vmem:[#allocation2 + $0xa8] sm:$0xff]
        %v1006 = vld [vmem:[#allocation2 + $0xb0] sm:$0xff]
        %v1007 = vld [vmem:[#allocation2 + $0xb8] sm:$0xff]
        %v1008 = vld [vmem:[#allocation2 + $0xc0] sm:$0xff]
        %v1009 = vld [vmem:[#allocation2 + $0xc8] sm:$0xff]
        %v1010 = vld [vmem:[#allocation2 + $0xd0] sm:$0xff]
        %v1011 = vld [vmem:[#allocation2 + $0xd8] sm:$0xff]
        %v1012 = vld [vmem:[#allocation2 + $0xe0] sm:$0xff]
        %v1013 = vld [vmem:[#allocation2 + $0xe8] sm:$0xff]
        %v1014 = vld [vmem:[#allocation2 + $0xf0] sm:$0xff]
        %v1015 = vld [vmem:[#allocation2 + $0xf8] sm:$0xff]
        %v1016 = vld [vmem:[%s553] ss:$8 sm:$0x3]
        %s1017 = scalar_lea.vmem %s553, 1
        %v1018 = vld [vmem:[%s1017] ss:$8 sm:$0x3]
        %vm1019 = vcmask 523264
        %v1020 = vsel %vm1019, %v985, 0.0
        %v1021 = vadd.f32 %v984, %v1020
        %1022 = vadd.xlane.f32.xlu0 %v1021
        %v1023 = vpop.xlane.xlu0 %1022
        %v1024 = vsel %vm1019, %v987, 0.0
        %v1025 = vadd.f32 %v986, %v1024
        %1026 = vadd.xlane.f32.xlu0 %v1025
        %v1027 = vpop.xlane.xlu0 %1026
        %v1028 = vsel %vm1019, %v989, 0.0
        %v1029 = vadd.f32 %v988, %v1028
        %1030 = vadd.xlane.f32.xlu0 %v1029
        %v1031 = vpop.xlane.xlu0 %1030
        %v1032 = vsel %vm1019, %v991, 0.0
        %v1033 = vadd.f32 %v990, %v1032
        %1034 = vadd.xlane.f32.xlu0 %v1033
        %v1035 = vpop.xlane.xlu0 %1034
        %v1036 = vsel %vm1019, %v993, 0.0
        %v1037 = vadd.f32 %v992, %v1036
        %1038 = vadd.xlane.f32.xlu0 %v1037
        %v1039 = vpop.xlane.xlu0 %1038
        %v1040 = vsel %vm1019, %v995, 0.0
        %v1041 = vadd.f32 %v994, %v1040
        %1042 = vadd.xlane.f32.xlu0 %v1041
        %v1043 = vpop.xlane.xlu0 %1042
        %v1044 = vsel %vm1019, %v997, 0.0
        %v1045 = vadd.f32 %v996, %v1044
        %1046 = vadd.xlane.f32.xlu0 %v1045
        %v1047 = vpop.xlane.xlu0 %1046
        %v1048 = vsel %vm1019, %v999, 0.0
        %v1049 = vadd.f32 %v998, %v1048
        %1050 = vadd.xlane.f32.xlu0 %v1049
        %v1051 = vpop.xlane.xlu0 %1050
        %v1052 = vsel %vm1019, %v1001, 0.0
        %v1053 = vadd.f32 %v1000, %v1052
        %1054 = vadd.xlane.f32.xlu0 %v1053
        %v1055 = vpop.xlane.xlu0 %1054
        %v1056 = vsel %vm1019, %v1003, 0.0
        %v1057 = vadd.f32 %v1002, %v1056
        %1058 = vadd.xlane.f32.xlu0 %v1057
        %v1059 = vpop.xlane.xlu0 %1058
        %v1060 = vsel %vm1019, %v1005, 0.0
        %v1061 = vadd.f32 %v1004, %v1060
        %1062 = vadd.xlane.f32.xlu0 %v1061
        %v1063 = vpop.xlane.xlu0 %1062
        %v1064 = vsel %vm1019, %v1007, 0.0
        %v1065 = vadd.f32 %v1006, %v1064
        %1066 = vadd.xlane.f32.xlu0 %v1065
        %v1067 = vpop.xlane.xlu0 %1066
        %v1068 = vsel %vm1019, %v1009, 0.0
        %v1069 = vadd.f32 %v1008, %v1068
        %1070 = vadd.xlane.f32.xlu0 %v1069
        %v1071 = vpop.xlane.xlu0 %1070
        %v1072 = vsel %vm1019, %v1011, 0.0
        %v1073 = vadd.f32 %v1010, %v1072
        %1074 = vadd.xlane.f32.xlu0 %v1073
        %v1075 = vpop.xlane.xlu0 %1074
        %v1076 = vsel %vm1019, %v1013, 0.0
        %v1077 = vadd.f32 %v1012, %v1076
        %1078 = vadd.xlane.f32.xlu0 %v1077
        %v1079 = vpop.xlane.xlu0 %1078
        %v1080 = vsel %vm1019, %v1015, 0.0
        %v1081 = vadd.f32 %v1014, %v1080
        %1082 = vadd.xlane.f32.xlu0 %v1081
        %v1083 = vpop.xlane.xlu0 %1082
        %v1084 = vrcp.pop 192.0
        %v1085 = vmul.f32 192.0, %v1084
        %v1086 = vsub.f32 1.0, %v1085
        %v1087 = vmul.f32 %v1084, %v1086
        %v1088 = vadd.f32 %v1084, %v1087
        %vm1089 = vweird.f32 %v1084
        %v1090 = vsel %vm1089, %v1084, %v1088
        %v1091 = vmul.f32 %v1023, %v1090
        %v1092 = vmul.f32 %v1027, %v1090
        %v1093 = vmul.f32 %v1031, %v1090
        %v1094 = vmul.f32 %v1035, %v1090
        %v1095 = vmul.f32 %v1039, %v1090
        %v1096 = vmul.f32 %v1043, %v1090
        %v1097 = vmul.f32 %v1047, %v1090
        %v1098 = vmul.f32 %v1051, %v1090
        %v1099 = vmul.f32 %v1055, %v1090
        %v1100 = vmul.f32 %v1059, %v1090
        %v1101 = vmul.f32 %v1063, %v1090
        %v1102 = vmul.f32 %v1067, %v1090
        %v1103 = vmul.f32 %v1071, %v1090
        %v1104 = vmul.f32 %v1075, %v1090
        %v1105 = vmul.f32 %v1079, %v1090
        %v1106 = vmul.f32 %v1083, %v1090
        %v1107 = vsub.f32 %v984, %v1091
        %v1108 = vsub.f32 %v985, %v1091
        %v1109 = vsub.f32 %v986, %v1092
        %v1110 = vsub.f32 %v987, %v1092
        %v1111 = vsub.f32 %v988, %v1093
        %v1112 = vsub.f32 %v989, %v1093
        %v1113 = vsub.f32 %v990, %v1094
        %v1114 = vsub.f32 %v991, %v1094
        %v1115 = vsub.f32 %v992, %v1095
        %v1116 = vsub.f32 %v993, %v1095
        %v1117 = vsub.f32 %v994, %v1096
        %v1118 = vsub.f32 %v995, %v1096
        %v1119 = vsub.f32 %v996, %v1097
        %v1120 = vsub.f32 %v997, %v1097
        %v1121 = vsub.f32 %v998, %v1098
        %v1122 = vsub.f32 %v999, %v1098
        %v1123 = vsub.f32 %v1000, %v1099
        %v1124 = vsub.f32 %v1001, %v1099
        %v1125 = vsub.f32 %v1002, %v1100
        %v1126 = vsub.f32 %v1003, %v1100
        %v1127 = vsub.f32 %v1004, %v1101
        %v1128 = vsub.f32 %v1005, %v1101
        %v1129 = vsub.f32 %v1006, %v1102
        %v1130 = vsub.f32 %v1007, %v1102
        %v1131 = vsub.f32 %v1008, %v1103
        %v1132 = vsub.f32 %v1009, %v1103
        %v1133 = vsub.f32 %v1010, %v1104
        %v1134 = vsub.f32 %v1011, %v1104
        %v1135 = vsub.f32 %v1012, %v1105
        %v1136 = vsub.f32 %v1013, %v1105
        %v1137 = vsub.f32 %v1014, %v1106
        %v1138 = vsub.f32 %v1015, %v1106
        %v1139 = vmul.f32 %v1107, %v1107
        %v1140 = vmul.f32 %v1108, %v1108
        %v1141 = vmul.f32 %v1109, %v1109
        %v1142 = vmul.f32 %v1110, %v1110
        %v1143 = vmul.f32 %v1111, %v1111
        %v1144 = vmul.f32 %v1112, %v1112
        %v1145 = vmul.f32 %v1113, %v1113
        %v1146 = vmul.f32 %v1114, %v1114
        %v1147 = vmul.f32 %v1115, %v1115
        %v1148 = vmul.f32 %v1116, %v1116
        %v1149 = vmul.f32 %v1117, %v1117
        %v1150 = vmul.f32 %v1118, %v1118
        %v1151 = vmul.f32 %v1119, %v1119
        %v1152 = vmul.f32 %v1120, %v1120
        %v1153 = vmul.f32 %v1121, %v1121
        %v1154 = vmul.f32 %v1122, %v1122
        %v1155 = vmul.f32 %v1123, %v1123
        %v1156 = vmul.f32 %v1124, %v1124
        %v1157 = vmul.f32 %v1125, %v1125
        %v1158 = vmul.f32 %v1126, %v1126
        %v1159 = vmul.f32 %v1127, %v1127
        %v1160 = vmul.f32 %v1128, %v1128
        %v1161 = vmul.f32 %v1129, %v1129
        %v1162 = vmul.f32 %v1130, %v1130
        %v1163 = vmul.f32 %v1131, %v1131
        %v1164 = vmul.f32 %v1132, %v1132
        %v1165 = vmul.f32 %v1133, %v1133
        %v1166 = vmul.f32 %v1134, %v1134
        %v1167 = vmul.f32 %v1135, %v1135
        %v1168 = vmul.f32 %v1136, %v1136
        %v1169 = vmul.f32 %v1137, %v1137
        %v1170 = vmul.f32 %v1138, %v1138
        %v1171 = vsel %vm1019, %v1140, 0.0
        %v1172 = vadd.f32 %v1139, %v1171
        %1173 = vadd.xlane.f32.xlu0 %v1172
        %v1174 = vpop.xlane.xlu0 %1173
        %v1175 = vsel %vm1019, %v1142, 0.0
        %v1176 = vadd.f32 %v1141, %v1175
        %1177 = vadd.xlane.f32.xlu0 %v1176
        %v1178 = vpop.xlane.xlu0 %1177
        %v1179 = vsel %vm1019, %v1144, 0.0
        %v1180 = vadd.f32 %v1143, %v1179
        %1181 = vadd.xlane.f32.xlu0 %v1180
        %v1182 = vpop.xlane.xlu0 %1181
        %v1183 = vsel %vm1019, %v1146, 0.0
        %v1184 = vadd.f32 %v1145, %v1183
        %1185 = vadd.xlane.f32.xlu0 %v1184
        %v1186 = vpop.xlane.xlu0 %1185
        %v1187 = vsel %vm1019, %v1148, 0.0
        %v1188 = vadd.f32 %v1147, %v1187
        %1189 = vadd.xlane.f32.xlu0 %v1188
        %v1190 = vpop.xlane.xlu0 %1189
        %v1191 = vsel %vm1019, %v1150, 0.0
        %v1192 = vadd.f32 %v1149, %v1191
        %1193 = vadd.xlane.f32.xlu0 %v1192
        %v1194 = vpop.xlane.xlu0 %1193
        %v1195 = vsel %vm1019, %v1152, 0.0
        %v1196 = vadd.f32 %v1151, %v1195
        %1197 = vadd.xlane.f32.xlu0 %v1196
        %v1198 = vpop.xlane.xlu0 %1197
        %v1199 = vsel %vm1019, %v1154, 0.0
        %v1200 = vadd.f32 %v1153, %v1199
        %1201 = vadd.xlane.f32.xlu0 %v1200
        %v1202 = vpop.xlane.xlu0 %1201
        %v1203 = vsel %vm1019, %v1156, 0.0
        %v1204 = vadd.f32 %v1155, %v1203
        %1205 = vadd.xlane.f32.xlu0 %v1204
        %v1206 = vpop.xlane.xlu0 %1205
        %v1207 = vsel %vm1019, %v1158, 0.0
        %v1208 = vadd.f32 %v1157, %v1207
        %1209 = vadd.xlane.f32.xlu0 %v1208
        %v1210 = vpop.xlane.xlu0 %1209
        %v1211 = vsel %vm1019, %v1160, 0.0
        %v1212 = vadd.f32 %v1159, %v1211
        %1213 = vadd.xlane.f32.xlu0 %v1212
        %v1214 = vpop.xlane.xlu0 %1213
        %v1215 = vsel %vm1019, %v1162, 0.0
        %v1216 = vadd.f32 %v1161, %v1215
        %1217 = vadd.xlane.f32.xlu0 %v1216
        %v1218 = vpop.xlane.xlu0 %1217
        %v1219 = vsel %vm1019, %v1164, 0.0
        %v1220 = vadd.f32 %v1163, %v1219
        %1221 = vadd.xlane.f32.xlu0 %v1220
        %v1222 = vpop.xlane.xlu0 %1221
        %v1223 = vsel %vm1019, %v1166, 0.0
        %v1224 = vadd.f32 %v1165, %v1223
        %1225 = vadd.xlane.f32.xlu0 %v1224
        %v1226 = vpop.xlane.xlu0 %1225
        %v1227 = vsel %vm1019, %v1168, 0.0
        %v1228 = vadd.f32 %v1167, %v1227
        %1229 = vadd.xlane.f32.xlu0 %v1228
        %v1230 = vpop.xlane.xlu0 %1229
        %v1231 = vsel %vm1019, %v1170, 0.0
        %v1232 = vadd.f32 %v1169, %v1231
        %1233 = vadd.xlane.f32.xlu0 %v1232
        %v1234 = vpop.xlane.xlu0 %1233
        %v1235 = vmul.f32 %v1174, %v1090
        %v1236 = vmul.f32 %v1178, %v1090
        %v1237 = vmul.f32 %v1182, %v1090
        %v1238 = vmul.f32 %v1186, %v1090
        %v1239 = vmul.f32 %v1190, %v1090
        %v1240 = vmul.f32 %v1194, %v1090
        %v1241 = vmul.f32 %v1198, %v1090
        %v1242 = vmul.f32 %v1202, %v1090
        %v1243 = vmul.f32 %v1206, %v1090
        %v1244 = vmul.f32 %v1210, %v1090
        %v1245 = vmul.f32 %v1214, %v1090
        %v1246 = vmul.f32 %v1218, %v1090
        %v1247 = vmul.f32 %v1222, %v1090
        %v1248 = vmul.f32 %v1226, %v1090
        %v1249 = vmul.f32 %v1230, %v1090
        %v1250 = vmul.f32 %v1234, %v1090
        %v1251 = vadd.f32 %v1235, 1e-05
        %v1252 = vadd.f32 %v1236, 1e-05
        %v1253 = vadd.f32 %v1237, 1e-05
        %v1254 = vadd.f32 %v1238, 1e-05
        %v1255 = vadd.f32 %v1239, 1e-05
        %v1256 = vadd.f32 %v1240, 1e-05
        %v1257 = vadd.f32 %v1241, 1e-05
        %v1258 = vadd.f32 %v1242, 1e-05
        %v1259 = vadd.f32 %v1243, 1e-05
        %v1260 = vadd.f32 %v1244, 1e-05
        %v1261 = vadd.f32 %v1245, 1e-05
        %v1262 = vadd.f32 %v1246, 1e-05
        %v1263 = vadd.f32 %v1247, 1e-05
        %v1264 = vadd.f32 %v1248, 1e-05
        %v1265 = vadd.f32 %v1249, 1e-05
        %v1266 = vadd.f32 %v1250, 1e-05
        %v1267 = vrsqrt.pop %v1251
        %v1268 = vmul.f32 %v1267, %v1251
        %v1269 = vmul.f32 %v1268, %v1267
        %v1270 = vmul.f32 0.5, %v1269
        %v1271 = vsub.f32 1.5, %v1270
        %v1272 = vmul.f32 %v1267, %v1271
        %vm1273 = vweird.f32 %v1251
        %vm1274 = vweird.f32 %v1267
        %vm1275 = vmor %vm1273, %vm1274
        %v1276 = vsel %vm1275, %v1267, %v1272
        %v1277 = vrsqrt.pop %v1252
        %v1278 = vmul.f32 %v1277, %v1252
        %v1279 = vmul.f32 %v1278, %v1277
        %v1280 = vmul.f32 0.5, %v1279
        %v1281 = vsub.f32 1.5, %v1280
        %v1282 = vmul.f32 %v1277, %v1281
        %vm1283 = vweird.f32 %v1252
        %vm1284 = vweird.f32 %v1277
        %vm1285 = vmor %vm1283, %vm1284
        %v1286 = vsel %vm1285, %v1277, %v1282
        %v1287 = vrsqrt.pop %v1253
        %v1288 = vmul.f32 %v1287, %v1253
        %v1289 = vmul.f32 %v1288, %v1287
        %v1290 = vmul.f32 0.5, %v1289
        %v1291 = vsub.f32 1.5, %v1290
        %v1292 = vmul.f32 %v1287, %v1291
        %vm1293 = vweird.f32 %v1253
        %vm1294 = vweird.f32 %v1287
        %vm1295 = vmor %vm1293, %vm1294
        %v1296 = vsel %vm1295, %v1287, %v1292
        %v1297 = vrsqrt.pop %v1254
        %v1298 = vmul.f32 %v1297, %v1254
        %v1299 = vmul.f32 %v1298, %v1297
        %v1300 = vmul.f32 0.5, %v1299
        %v1301 = vsub.f32 1.5, %v1300
        %v1302 = vmul.f32 %v1297, %v1301
        %vm1303 = vweird.f32 %v1254
        %vm1304 = vweird.f32 %v1297
        %vm1305 = vmor %vm1303, %vm1304
        %v1306 = vsel %vm1305, %v1297, %v1302
        %v1307 = vrsqrt.pop %v1255
        %v1308 = vmul.f32 %v1307, %v1255
        %v1309 = vmul.f32 %v1308, %v1307
        %v1310 = vmul.f32 0.5, %v1309
        %v1311 = vsub.f32 1.5, %v1310
        %v1312 = vmul.f32 %v1307, %v1311
        %vm1313 = vweird.f32 %v1255
        %vm1314 = vweird.f32 %v1307
        %vm1315 = vmor %vm1313, %vm1314
        %v1316 = vsel %vm1315, %v1307, %v1312
        %v1317 = vrsqrt.pop %v1256
        %v1318 = vmul.f32 %v1317, %v1256
        %v1319 = vmul.f32 %v1318, %v1317
        %v1320 = vmul.f32 0.5, %v1319
        %v1321 = vsub.f32 1.5, %v1320
        %v1322 = vmul.f32 %v1317, %v1321
        %vm1323 = vweird.f32 %v1256
        %vm1324 = vweird.f32 %v1317
        %vm1325 = vmor %vm1323, %vm1324
        %v1326 = vsel %vm1325, %v1317, %v1322
        %v1327 = vrsqrt.pop %v1257
        %v1328 = vmul.f32 %v1327, %v1257
        %v1329 = vmul.f32 %v1328, %v1327
        %v1330 = vmul.f32 0.5, %v1329
        %v1331 = vsub.f32 1.5, %v1330
        %v1332 = vmul.f32 %v1327, %v1331
        %vm1333 = vweird.f32 %v1257
        %vm1334 = vweird.f32 %v1327
        %vm1335 = vmor %vm1333, %vm1334
        %v1336 = vsel %vm1335, %v1327, %v1332
        %v1337 = vrsqrt.pop %v1258
        %v1338 = vmul.f32 %v1337, %v1258
        %v1339 = vmul.f32 %v1338, %v1337
        %v1340 = vmul.f32 0.5, %v1339
        %v1341 = vsub.f32 1.5, %v1340
        %v1342 = vmul.f32 %v1337, %v1341
        %vm1343 = vweird.f32 %v1258
        %vm1344 = vweird.f32 %v1337
        %vm1345 = vmor %vm1343, %vm1344
        %v1346 = vsel %vm1345, %v1337, %v1342
        %v1347 = vrsqrt.pop %v1259
        %v1348 = vmul.f32 %v1347, %v1259
        %v1349 = vmul.f32 %v1348, %v1347
        %v1350 = vmul.f32 0.5, %v1349
        %v1351 = vsub.f32 1.5, %v1350
        %v1352 = vmul.f32 %v1347, %v1351
        %vm1353 = vweird.f32 %v1259
        %vm1354 = vweird.f32 %v1347
        %vm1355 = vmor %vm1353, %vm1354
        %v1356 = vsel %vm1355, %v1347, %v1352
        %v1357 = vrsqrt.pop %v1260
        %v1358 = vmul.f32 %v1357, %v1260
        %v1359 = vmul.f32 %v1358, %v1357
        %v1360 = vmul.f32 0.5, %v1359
        %v1361 = vsub.f32 1.5, %v1360
        %v1362 = vmul.f32 %v1357, %v1361
        %vm1363 = vweird.f32 %v1260
        %vm1364 = vweird.f32 %v1357
        %vm1365 = vmor %vm1363, %vm1364
        %v1366 = vsel %vm1365, %v1357, %v1362
        %v1367 = vrsqrt.pop %v1261
        %v1368 = vmul.f32 %v1367, %v1261
        %v1369 = vmul.f32 %v1368, %v1367
        %v1370 = vmul.f32 0.5, %v1369
        %v1371 = vsub.f32 1.5, %v1370
        %v1372 = vmul.f32 %v1367, %v1371
        %vm1373 = vweird.f32 %v1261
        %vm1374 = vweird.f32 %v1367
        %vm1375 = vmor %vm1373, %vm1374
        %v1376 = vsel %vm1375, %v1367, %v1372
        %v1377 = vrsqrt.pop %v1262
        %v1378 = vmul.f32 %v1377, %v1262
        %v1379 = vmul.f32 %v1378, %v1377
        %v1380 = vmul.f32 0.5, %v1379
        %v1381 = vsub.f32 1.5, %v1380
        %v1382 = vmul.f32 %v1377, %v1381
        %vm1383 = vweird.f32 %v1262
        %vm1384 = vweird.f32 %v1377
        %vm1385 = vmor %vm1383, %vm1384
        %v1386 = vsel %vm1385, %v1377, %v1382
        %v1387 = vrsqrt.pop %v1263
        %v1388 = vmul.f32 %v1387, %v1263
        %v1389 = vmul.f32 %v1388, %v1387
        %v1390 = vmul.f32 0.5, %v1389
        %v1391 = vsub.f32 1.5, %v1390
        %v1392 = vmul.f32 %v1387, %v1391
        %vm1393 = vweird.f32 %v1263
        %vm1394 = vweird.f32 %v1387
        %vm1395 = vmor %vm1393, %vm1394
        %v1396 = vsel %vm1395, %v1387, %v1392
        %v1397 = vrsqrt.pop %v1264
        %v1398 = vmul.f32 %v1397, %v1264
        %v1399 = vmul.f32 %v1398, %v1397
        %v1400 = vmul.f32 0.5, %v1399
        %v1401 = vsub.f32 1.5, %v1400
        %v1402 = vmul.f32 %v1397, %v1401
        %vm1403 = vweird.f32 %v1264
        %vm1404 = vweird.f32 %v1397
        %vm1405 = vmor %vm1403, %vm1404
        %v1406 = vsel %vm1405, %v1397, %v1402
        %v1407 = vrsqrt.pop %v1265
        %v1408 = vmul.f32 %v1407, %v1265
        %v1409 = vmul.f32 %v1408, %v1407
        %v1410 = vmul.f32 0.5, %v1409
        %v1411 = vsub.f32 1.5, %v1410
        %v1412 = vmul.f32 %v1407, %v1411
        %vm1413 = vweird.f32 %v1265
        %vm1414 = vweird.f32 %v1407
        %vm1415 = vmor %vm1413, %vm1414
        %v1416 = vsel %vm1415, %v1407, %v1412
        %v1417 = vrsqrt.pop %v1266
        %v1418 = vmul.f32 %v1417, %v1266
        %v1419 = vmul.f32 %v1418, %v1417
        %v1420 = vmul.f32 0.5, %v1419
        %v1421 = vsub.f32 1.5, %v1420
        %v1422 = vmul.f32 %v1417, %v1421
        %vm1423 = vweird.f32 %v1266
        %vm1424 = vweird.f32 %v1417
        %vm1425 = vmor %vm1423, %vm1424
        %v1426 = vsel %vm1425, %v1417, %v1422
        %v1427 = vmul.f32 %v1107, %v1276
        %v1428 = vmul.f32 %v1108, %v1276
        %v1429 = vmul.f32 %v1109, %v1286
        %v1430 = vmul.f32 %v1110, %v1286
        %v1431 = vmul.f32 %v1111, %v1296
        %v1432 = vmul.f32 %v1112, %v1296
        %v1433 = vmul.f32 %v1113, %v1306
        %v1434 = vmul.f32 %v1114, %v1306
        %v1435 = vmul.f32 %v1115, %v1316
        %v1436 = vmul.f32 %v1116, %v1316
        %v1437 = vmul.f32 %v1117, %v1326
        %v1438 = vmul.f32 %v1118, %v1326
        %v1439 = vmul.f32 %v1119, %v1336
        %v1440 = vmul.f32 %v1120, %v1336
        %v1441 = vmul.f32 %v1121, %v1346
        %v1442 = vmul.f32 %v1122, %v1346
        %v1443 = vmul.f32 %v1123, %v1356
        %v1444 = vmul.f32 %v1124, %v1356
        %v1445 = vmul.f32 %v1125, %v1366
        %v1446 = vmul.f32 %v1126, %v1366
        %v1447 = vmul.f32 %v1127, %v1376
        %v1448 = vmul.f32 %v1128, %v1376
        %v1449 = vmul.f32 %v1129, %v1386
        %v1450 = vmul.f32 %v1130, %v1386
        %v1451 = vmul.f32 %v1131, %v1396
        %v1452 = vmul.f32 %v1132, %v1396
        %v1453 = vmul.f32 %v1133, %v1406
        %v1454 = vmul.f32 %v1134, %v1406
        %v1455 = vmul.f32 %v1135, %v1416
        %v1456 = vmul.f32 %v1136, %v1416
        %v1457 = vmul.f32 %v1137, %v1426
        %v1458 = vmul.f32 %v1138, %v1426
        %v1460 = vperm.slane %v1016, 0
        %v1461 = vperm.slane %v1016, 1
        %v1464 = vmul.f32 %v1427, %v1460
        %v1465 = vmul.f32 %v1428, %v1461
        %v1466 = vmul.f32 %v1429, %v1460
        %v1467 = vmul.f32 %v1430, %v1461
        %v1468 = vmul.f32 %v1431, %v1460
        %v1469 = vmul.f32 %v1432, %v1461
        %v1470 = vmul.f32 %v1433, %v1460
        %v1471 = vmul.f32 %v1434, %v1461
        %v1472 = vmul.f32 %v1435, %v1460
        %v1473 = vmul.f32 %v1436, %v1461
        %v1474 = vmul.f32 %v1437, %v1460
        %v1475 = vmul.f32 %v1438, %v1461
        %v1476 = vmul.f32 %v1439, %v1460
        %v1477 = vmul.f32 %v1440, %v1461
        %v1478 = vmul.f32 %v1441, %v1460
        %v1479 = vmul.f32 %v1442, %v1461
        %v1480 = vmul.f32 %v1443, %v1460
        %v1481 = vmul.f32 %v1444, %v1461
        %v1482 = vmul.f32 %v1445, %v1460
        %v1483 = vmul.f32 %v1446, %v1461
        %v1484 = vmul.f32 %v1447, %v1460
        %v1485 = vmul.f32 %v1448, %v1461
        %v1486 = vmul.f32 %v1449, %v1460
        %v1487 = vmul.f32 %v1450, %v1461
        %v1488 = vmul.f32 %v1451, %v1460
        %v1489 = vmul.f32 %v1452, %v1461
        %v1490 = vmul.f32 %v1453, %v1460
        %v1491 = vmul.f32 %v1454, %v1461
        %v1492 = vmul.f32 %v1455, %v1460
        %v1493 = vmul.f32 %v1456, %v1461
        %v1494 = vmul.f32 %v1457, %v1460
        %v1495 = vmul.f32 %v1458, %v1461
        %v1497 = vperm.slane %v1018, 0
        %v1498 = vperm.slane %v1018, 1
        %v1501 = vadd.f32 %v1464, %v1497
        %v1502 = vadd.f32 %v1465, %v1498
        %v1503 = vadd.f32 %v1466, %v1497
        %v1504 = vadd.f32 %v1467, %v1498
        %v1505 = vadd.f32 %v1468, %v1497
        %v1506 = vadd.f32 %v1469, %v1498
        %v1507 = vadd.f32 %v1470, %v1497
        %v1508 = vadd.f32 %v1471, %v1498
        %v1509 = vadd.f32 %v1472, %v1497
        %v1510 = vadd.f32 %v1473, %v1498
        %v1511 = vadd.f32 %v1474, %v1497
        %v1512 = vadd.f32 %v1475, %v1498
        %v1513 = vadd.f32 %v1476, %v1497
        %v1514 = vadd.f32 %v1477, %v1498
        %v1515 = vadd.f32 %v1478, %v1497
        %v1516 = vadd.f32 %v1479, %v1498
        %v1517 = vadd.f32 %v1480, %v1497
        %v1518 = vadd.f32 %v1481, %v1498
        %v1519 = vadd.f32 %v1482, %v1497
        %v1520 = vadd.f32 %v1483, %v1498
        %v1521 = vadd.f32 %v1484, %v1497
        %v1522 = vadd.f32 %v1485, %v1498
        %v1523 = vadd.f32 %v1486, %v1497
        %v1524 = vadd.f32 %v1487, %v1498
        %v1525 = vadd.f32 %v1488, %v1497
        %v1526 = vadd.f32 %v1489, %v1498
        %v1527 = vadd.f32 %v1490, %v1497
        %v1528 = vadd.f32 %v1491, %v1498
        %v1529 = vadd.f32 %v1492, %v1497
        %v1530 = vadd.f32 %v1493, %v1498
        %v1531 = vadd.f32 %v1494, %v1497
        %v1532 = vadd.f32 %v1495, %v1498
        %v1533 = vld [vmem:[%s538] sm:$0xff]
        %v1534 = vld [vmem:[%s538 + $0x8] sm:$0xff]
        %v1535 = vld [vmem:[%s538 + $0x10] sm:$0xff]
        %v1536 = vld [vmem:[%s538 + $0x18] sm:$0xff]
        %v1537 = vld [vmem:[%s538 + $0x20] sm:$0xff]
        %v1538 = vld [vmem:[%s538 + $0x28] sm:$0xff]
        %v1539 = vld [vmem:[%s538 + $0x30] sm:$0xff]
        %v1540 = vld [vmem:[%s538 + $0x38] sm:$0xff]
        %v1541 = vld [vmem:[%s538 + $0x40] sm:$0xff]
        %v1542 = vld [vmem:[%s538 + $0x48] sm:$0xff]
        %v1543 = vld [vmem:[%s538 + $0x50] sm:$0xff]
        %v1544 = vld [vmem:[%s538 + $0x58] sm:$0xff]
        %v1545 = vld [vmem:[%s538 + $0x60] sm:$0xff]
        %v1546 = vld [vmem:[%s538 + $0x68] sm:$0xff]
        %v1547 = vld [vmem:[%s538 + $0x70] sm:$0xff]
        %v1548 = vld [vmem:[%s538 + $0x78] sm:$0xff]
        %v1549 = vld [vmem:[%s538 + $0x80] sm:$0xff]
        %v1550 = vld [vmem:[%s538 + $0x88] sm:$0xff]
        %v1551 = vld [vmem:[%s538 + $0x90] sm:$0xff]
        %v1552 = vld [vmem:[%s538 + $0x98] sm:$0xff]
        %v1553 = vld [vmem:[%s538 + $0xa0] sm:$0xff]
        %v1554 = vld [vmem:[%s538 + $0xa8] sm:$0xff]
        %v1555 = vld [vmem:[%s538 + $0xb0] sm:$0xff]
        %v1556 = vld [vmem:[%s538 + $0xb8] sm:$0xff]
        %v1557 = vpack.c.bf16 %v1503, %v1501
        %v1558 = vpack.c.bf16 %v1504, %v1502
        %v1559 = vpack.c.bf16 %v1507, %v1505
        %v1560 = vpack.c.bf16 %v1508, %v1506
        %v1561 = vpack.c.bf16 %v1511, %v1509
        %v1562 = vpack.c.bf16 %v1512, %v1510
        %v1563 = vpack.c.bf16 %v1515, %v1513
        %v1564 = vpack.c.bf16 %v1516, %v1514
        %v1565 = vpack.c.bf16 %v1519, %v1517
        %v1566 = vpack.c.bf16 %v1520, %v1518
        %v1567 = vpack.c.bf16 %v1523, %v1521
        %v1568 = vpack.c.bf16 %v1524, %v1522
        %v1569 = vpack.c.bf16 %v1527, %v1525
        %v1570 = vpack.c.bf16 %v1528, %v1526
        %v1571 = vpack.c.bf16 %v1531, %v1529
        %v1572 = vpack.c.bf16 %v1532, %v1530
        %s1573 = scalar_lea.vmem %s553, 2
        %v1574 = vld [vmem:[%s1573] ss:$8 sm:$0x3]
        %v1576 = vperm.slane %v1574, 0
        %v1577 = vperm.slane %v1574, 1
        %v1604 = vunpack.c.l.b16 %v1533
        %v1605 = vunpack.c.h.b16 %v1533
        %v1606 = vunpack.c.l.b16 %v1534
        %v1607 = vunpack.c.h.b16 %v1534
        %v1608 = vunpack.c.l.b16 %v1535
        %v1609 = vunpack.c.h.b16 %v1535
        %v1610 = vunpack.c.l.b16 %v1536
        %v1611 = vunpack.c.h.b16 %v1536
        %v1612 = vunpack.c.l.b16 %v1537
        %v1613 = vunpack.c.h.b16 %v1537
        %v1614 = vunpack.c.l.b16 %v1538
        %v1615 = vunpack.c.h.b16 %v1538
        %v1616 = vunpack.c.l.b16 %v1539
        %v1617 = vunpack.c.h.b16 %v1539
        %v1618 = vunpack.c.l.b16 %v1540
        %v1619 = vunpack.c.h.b16 %v1540
        %v1620 = vunpack.c.l.b16 %v1541
        %v1621 = vunpack.c.h.b16 %v1541
        %v1622 = vunpack.c.l.b16 %v1542
        %v1623 = vunpack.c.h.b16 %v1542
        %v1624 = vunpack.c.l.b16 %v1543
        %v1625 = vunpack.c.h.b16 %v1543
        %v1626 = vunpack.c.l.b16 %v1544
        %v1627 = vunpack.c.h.b16 %v1544
        %v1628 = vunpack.c.l.b16 %v1545
        %v1629 = vunpack.c.h.b16 %v1545
        %v1630 = vunpack.c.l.b16 %v1546
        %v1631 = vunpack.c.h.b16 %v1546
        %v1632 = vunpack.c.l.b16 %v1547
        %v1633 = vunpack.c.h.b16 %v1547
        %v1634 = vunpack.c.l.b16 %v1548
        %v1635 = vunpack.c.h.b16 %v1548
        %v1636 = vunpack.c.l.b16 %v1549
        %v1637 = vunpack.c.h.b16 %v1549
        %v1638 = vunpack.c.l.b16 %v1550
        %v1639 = vunpack.c.h.b16 %v1550
        %v1640 = vunpack.c.l.b16 %v1551
        %v1641 = vunpack.c.h.b16 %v1551
        %v1642 = vunpack.c.l.b16 %v1552
        %v1643 = vunpack.c.h.b16 %v1552
        %v1644 = vunpack.c.l.b16 %v1553
        %v1645 = vunpack.c.h.b16 %v1553
        %v1646 = vunpack.c.l.b16 %v1554
        %v1647 = vunpack.c.h.b16 %v1554
        %v1648 = vunpack.c.l.b16 %v1555
        %v1649 = vunpack.c.h.b16 %v1555
        %v1650 = vunpack.c.l.b16 %v1556
        %v1651 = vunpack.c.h.b16 %v1556
        %v1652 = vpack.c.b16 %v1606, %v1604
        %v1653 = vpack.c.b16 %v1607, %v1605
        %v1654 = vpack.c.b16 %v1610, %v1608
        %v1655 = vpack.c.b16 %v1611, %v1609
        %v1656 = vpack.c.b16 %v1614, %v1612
        %v1657 = vpack.c.b16 %v1615, %v1613
        %v1658 = vpack.c.b16 %v1618, %v1616
        %v1659 = vpack.c.b16 %v1619, %v1617
        %v1660 = vpack.c.b16 %v1622, %v1620
        %v1661 = vpack.c.b16 %v1623, %v1621
        %v1662 = vpack.c.b16 %v1626, %v1624
        %v1663 = vpack.c.b16 %v1627, %v1625
        %v1664 = vpack.c.b16 %v1630, %v1628
        %v1665 = vpack.c.b16 %v1631, %v1629
        %v1666 = vpack.c.b16 %v1634, %v1632
        %v1667 = vpack.c.b16 %v1635, %v1633
        %v1668 = vpack.c.b16 %v1638, %v1636
        %v1669 = vpack.c.b16 %v1639, %v1637
        %v1670 = vpack.c.b16 %v1642, %v1640
        %v1671 = vpack.c.b16 %v1643, %v1641
        %v1672 = vpack.c.b16 %v1646, %v1644
        %v1673 = vpack.c.b16 %v1647, %v1645
        %v1674 = vpack.c.b16 %v1650, %v1648
        %v1675 = vpack.c.b16 %v1651, %v1649
        %v1701 = vsel %vm1019, %v1558, 0
        %v1704 = vsel %vm1019, %v1560, 0
        %v1707 = vsel %vm1019, %v1562, 0
        %v1710 = vsel %vm1019, %v1564, 0
        %v1713 = vsel %vm1019, %v1566, 0
        %v1716 = vsel %vm1019, %v1568, 0
        %v1719 = vsel %vm1019, %v1570, 0
        %v1722 = vsel %vm1019, %v1572, 0
        %1724 = vmatpush.bf16.msra.mxu0 %v1666
        %1725 = vmatpush.bf16.msra.mxu0 %v1664
        %1726 = vmatpush.bf16.msra.mxu0 %v1662
        %1727 = vmatpush.bf16.msra.mxu0 %v1660
        %1728 = vmatpush.bf16.msra.mxu0 %v1658
        %1729 = vmatpush.bf16.msra.mxu0 %v1656
        %1730 = vmatpush.bf16.msra.mxu0 %v1654
        %1731 = vmatpush.bf16.msra.mxu0 %v1652
        %1732 = vmatmul.bf16.gmra.mxu0 %v1557
        %v1733 = vpop.f32.mrf.mxu0
        %v1734 = vadd.f32 %v1576, %v1733
        %v1735 = vpop.f32.mrf.mxu0
        %v1736 = vadd.f32 %v1576, %v1735
        %1737 = vmatmul.bf16.gmra.mxu0 %v1559
        %v1738 = vpop.f32.mrf.mxu0
        %v1739 = vadd.f32 %v1576, %v1738
        %v1740 = vpop.f32.mrf.mxu0
        %v1741 = vadd.f32 %v1576, %v1740
        %1742 = vmatmul.bf16.gmra.mxu0 %v1561
        %v1743 = vpop.f32.mrf.mxu0
        %v1744 = vadd.f32 %v1576, %v1743
        %v1745 = vpop.f32.mrf.mxu0
        %v1746 = vadd.f32 %v1576, %v1745
        %1747 = vmatmul.bf16.gmra.mxu0 %v1563
        %v1748 = vpop.f32.mrf.mxu0
        %v1749 = vadd.f32 %v1576, %v1748
        %v1750 = vpop.f32.mrf.mxu0
        %v1751 = vadd.f32 %v1576, %v1750
        %1752 = vmatmul.bf16.gmra.mxu0 %v1565
        %v1753 = vpop.f32.mrf.mxu0
        %v1754 = vadd.f32 %v1576, %v1753
        %v1755 = vpop.f32.mrf.mxu0
        %v1756 = vadd.f32 %v1576, %v1755
        %1757 = vmatmul.bf16.gmra.mxu0 %v1567
        %v1758 = vpop.f32.mrf.mxu0
        %v1759 = vadd.f32 %v1576, %v1758
        %v1760 = vpop.f32.mrf.mxu0
        %v1761 = vadd.f32 %v1576, %v1760
        %1762 = vmatmul.bf16.gmra.mxu0 %v1569
        %v1763 = vpop.f32.mrf.mxu0
        %v1764 = vadd.f32 %v1576, %v1763
        %v1765 = vpop.f32.mrf.mxu0
        %v1766 = vadd.f32 %v1576, %v1765
        %1767 = vmatmul.bf16.gmra.mxu0 %v1571
        %v1768 = vpop.f32.mrf.mxu0
        %v1769 = vadd.f32 %v1576, %v1768
        %v1770 = vpop.f32.mrf.mxu0
        %v1771 = vadd.f32 %v1576, %v1770
        %1772 = vdwg.mxu0
        %1773 = vmatpush.bf16.msra.mxu0 0
        %1774 = vmatpush.bf16.msra.mxu0 0
        %1775 = vmatpush.bf16.msra.mxu0 0
        %1776 = vmatpush.bf16.msra.mxu0 0
        %1777 = vmatpush.bf16.msra.mxu0 %v1674
        %1778 = vmatpush.bf16.msra.mxu0 %v1672
        %1779 = vmatpush.bf16.msra.mxu0 %v1670
        %1780 = vmatpush.bf16.msra.mxu0 %v1668
        %1781 = vmatmul.bf16.gmra.mxu0 %v1701
        %v1782 = vpop.f32.mrf.mxu0
        %v1783 = vadd.f32 %v1734, %v1782
        %v1784 = vpop.f32.mrf.mxu0
        %v1785 = vadd.f32 %v1736, %v1784
        %1786 = vmatmul.bf16.gmra.mxu0 %v1704
        %v1787 = vpop.f32.mrf.mxu0
        %v1788 = vadd.f32 %v1739, %v1787
        %v1789 = vpop.f32.mrf.mxu0
        %v1790 = vadd.f32 %v1741, %v1789
        %1791 = vmatmul.bf16.gmra.mxu0 %v1707
        %v1792 = vpop.f32.mrf.mxu0
        %v1793 = vadd.f32 %v1744, %v1792
        %v1794 = vpop.f32.mrf.mxu0
        %v1795 = vadd.f32 %v1746, %v1794
        %1796 = vmatmul.bf16.gmra.mxu0 %v1710
        %v1797 = vpop.f32.mrf.mxu0
        %v1798 = vadd.f32 %v1749, %v1797
        %v1799 = vpop.f32.mrf.mxu0
        %v1800 = vadd.f32 %v1751, %v1799
        %1801 = vmatmul.bf16.gmra.mxu0 %v1713
        %v1802 = vpop.f32.mrf.mxu0
        %v1803 = vadd.f32 %v1754, %v1802
        %v1804 = vpop.f32.mrf.mxu0
        %v1805 = vadd.f32 %v1756, %v1804
        %1806 = vmatmul.bf16.gmra.mxu0 %v1716
        %v1807 = vpop.f32.mrf.mxu0
        %v1808 = vadd.f32 %v1759, %v1807
        %v1809 = vpop.f32.mrf.mxu0
        %v1810 = vadd.f32 %v1761, %v1809
        %1811 = vmatmul.bf16.gmra.mxu0 %v1719
        %v1812 = vpop.f32.mrf.mxu0
        %v1813 = vadd.f32 %v1764, %v1812
        %v1814 = vpop.f32.mrf.mxu0
        %v1815 = vadd.f32 %v1766, %v1814
        %1816 = vmatmul.bf16.gmra.mxu0 %v1722
        %v1817 = vpop.f32.mrf.mxu0
        %v1818 = vadd.f32 %v1769, %v1817
        %v1819 = vpop.f32.mrf.mxu0
        %v1820 = vadd.f32 %v1771, %v1819
        %1821 = vdwg.mxu0
        %1822 = vmatpush.bf16.msra.mxu0 %v1667
        %1823 = vmatpush.bf16.msra.mxu0 %v1665
        %1824 = vmatpush.bf16.msra.mxu0 %v1663
        %1825 = vmatpush.bf16.msra.mxu0 %v1661
        %1826 = vmatpush.bf16.msra.mxu0 %v1659
        %1827 = vmatpush.bf16.msra.mxu0 %v1657
        %1828 = vmatpush.bf16.msra.mxu0 %v1655
        %1829 = vmatpush.bf16.msra.mxu0 %v1653
        %1830 = vmatmul.bf16.gmra.mxu0 %v1557
        %v1831 = vpop.f32.mrf.mxu0
        %v1832 = vadd.f32 %v1577, %v1831
        %v1833 = vpop.f32.mrf.mxu0
        %v1834 = vadd.f32 %v1577, %v1833
        %1835 = vmatmul.bf16.gmra.mxu0 %v1559
        %v1836 = vpop.f32.mrf.mxu0
        %v1837 = vadd.f32 %v1577, %v1836
        %v1838 = vpop.f32.mrf.mxu0
        %v1839 = vadd.f32 %v1577, %v1838
        %1840 = vmatmul.bf16.gmra.mxu0 %v1561
        %v1841 = vpop.f32.mrf.mxu0
        %v1842 = vadd.f32 %v1577, %v1841
        %v1843 = vpop.f32.mrf.mxu0
        %v1844 = vadd.f32 %v1577, %v1843
        %1845 = vmatmul.bf16.gmra.mxu0 %v1563
        %v1846 = vpop.f32.mrf.mxu0
        %v1847 = vadd.f32 %v1577, %v1846
        %v1848 = vpop.f32.mrf.mxu0
        %v1849 = vadd.f32 %v1577, %v1848
        %1850 = vmatmul.bf16.gmra.mxu0 %v1565
        %v1851 = vpop.f32.mrf.mxu0
        %v1852 = vadd.f32 %v1577, %v1851
        %v1853 = vpop.f32.mrf.mxu0
        %v1854 = vadd.f32 %v1577, %v1853
        %1855 = vmatmul.bf16.gmra.mxu0 %v1567
        %v1856 = vpop.f32.mrf.mxu0
        %v1857 = vadd.f32 %v1577, %v1856
        %v1858 = vpop.f32.mrf.mxu0
        %v1859 = vadd.f32 %v1577, %v1858
        %1860 = vmatmul.bf16.gmra.mxu0 %v1569
        %v1861 = vpop.f32.mrf.mxu0
        %v1862 = vadd.f32 %v1577, %v1861
        %v1863 = vpop.f32.mrf.mxu0
        %v1864 = vadd.f32 %v1577, %v1863
        %1865 = vmatmul.bf16.gmra.mxu0 %v1571
        %v1866 = vpop.f32.mrf.mxu0
        %v1867 = vadd.f32 %v1577, %v1866
        %v1868 = vpop.f32.mrf.mxu0
        %v1869 = vadd.f32 %v1577, %v1868
        %1870 = vdwg.mxu0
        %1871 = vmatpush.bf16.msra.mxu0 0
        %1872 = vmatpush.bf16.msra.mxu0 0
        %1873 = vmatpush.bf16.msra.mxu0 0
        %1874 = vmatpush.bf16.msra.mxu0 0
        %1875 = vmatpush.bf16.msra.mxu0 %v1675
        %1876 = vmatpush.bf16.msra.mxu0 %v1673
        %1877 = vmatpush.bf16.msra.mxu0 %v1671
        %1878 = vmatpush.bf16.msra.mxu0 %v1669
        %1879 = vmatmul.bf16.gmra.mxu0 %v1701
        %v1880 = vpop.f32.mrf.mxu0
        %v1881 = vadd.f32 %v1832, %v1880
        %v1882 = vpop.f32.mrf.mxu0
        %v1883 = vadd.f32 %v1834, %v1882
        %1884 = vmatmul.bf16.gmra.mxu0 %v1704
        %v1885 = vpop.f32.mrf.mxu0
        %v1886 = vadd.f32 %v1837, %v1885
        %v1887 = vpop.f32.mrf.mxu0
        %v1888 = vadd.f32 %v1839, %v1887
        %1889 = vmatmul.bf16.gmra.mxu0 %v1707
        %v1890 = vpop.f32.mrf.mxu0
        %v1891 = vadd.f32 %v1842, %v1890
        %v1892 = vpop.f32.mrf.mxu0
        %v1893 = vadd.f32 %v1844, %v1892
        %1894 = vmatmul.bf16.gmra.mxu0 %v1710
        %v1895 = vpop.f32.mrf.mxu0
        %v1896 = vadd.f32 %v1847, %v1895
        %v1897 = vpop.f32.mrf.mxu0
        %v1898 = vadd.f32 %v1849, %v1897
        %1899 = vmatmul.bf16.gmra.mxu0 %v1713
        %v1900 = vpop.f32.mrf.mxu0
        %v1901 = vadd.f32 %v1852, %v1900
        %v1902 = vpop.f32.mrf.mxu0
        %v1903 = vadd.f32 %v1854, %v1902
        %1904 = vmatmul.bf16.gmra.mxu0 %v1716
        %v1905 = vpop.f32.mrf.mxu0
        %v1906 = vadd.f32 %v1857, %v1905
        %v1907 = vpop.f32.mrf.mxu0
        %v1908 = vadd.f32 %v1859, %v1907
        %1909 = vmatmul.bf16.gmra.mxu0 %v1719
        %v1910 = vpop.f32.mrf.mxu0
        %v1911 = vadd.f32 %v1862, %v1910
        %v1912 = vpop.f32.mrf.mxu0
        %v1913 = vadd.f32 %v1864, %v1912
        %1914 = vmatmul.bf16.gmra.mxu0 %v1722
        %v1915 = vpop.f32.mrf.mxu0
        %v1916 = vadd.f32 %v1867, %v1915
        %v1917 = vpop.f32.mrf.mxu0
        %v1918 = vadd.f32 %v1869, %v1917
        %1919 = vdwg.mxu0
        %s1920 = scalar_lea.vmem %s538, 192
        %v1921 = vld [vmem:[%s1920] sm:$0xff]
        %v1922 = vld [vmem:[%s1920 + $0x8] sm:$0xff]
        %v1923 = vld [vmem:[%s1920 + $0x10] sm:$0xff]
        %v1924 = vld [vmem:[%s1920 + $0x18] sm:$0xff]
        %v1925 = vld [vmem:[%s1920 + $0x20] sm:$0xff]
        %v1926 = vld [vmem:[%s1920 + $0x28] sm:$0xff]
        %v1927 = vld [vmem:[%s1920 + $0x30] sm:$0xff]
        %v1928 = vld [vmem:[%s1920 + $0x38] sm:$0xff]
        %v1929 = vld [vmem:[%s1920 + $0x40] sm:$0xff]
        %v1930 = vld [vmem:[%s1920 + $0x48] sm:$0xff]
        %v1931 = vld [vmem:[%s1920 + $0x50] sm:$0xff]
        %v1932 = vld [vmem:[%s1920 + $0x58] sm:$0xff]
        %v1933 = vld [vmem:[%s1920 + $0x60] sm:$0xff]
        %v1934 = vld [vmem:[%s1920 + $0x68] sm:$0xff]
        %v1935 = vld [vmem:[%s1920 + $0x70] sm:$0xff]
        %v1936 = vld [vmem:[%s1920 + $0x78] sm:$0xff]
        %v1937 = vld [vmem:[%s1920 + $0x80] sm:$0xff]
        %v1938 = vld [vmem:[%s1920 + $0x88] sm:$0xff]
        %v1939 = vld [vmem:[%s1920 + $0x90] sm:$0xff]
        %v1940 = vld [vmem:[%s1920 + $0x98] sm:$0xff]
        %v1941 = vld [vmem:[%s1920 + $0xa0] sm:$0xff]
        %v1942 = vld [vmem:[%s1920 + $0xa8] sm:$0xff]
        %v1943 = vld [vmem:[%s1920 + $0xb0] sm:$0xff]
        %v1944 = vld [vmem:[%s1920 + $0xb8] sm:$0xff]
        %s1945 = scalar_lea.vmem %s553, 3
        %v1946 = vld [vmem:[%s1945] ss:$8 sm:$0x3]
        %v1948 = vperm.slane %v1946, 0
        %v1949 = vperm.slane %v1946, 1
        %v1976 = vunpack.c.l.b16 %v1921
        %v1977 = vunpack.c.h.b16 %v1921
        %v1978 = vunpack.c.l.b16 %v1922
        %v1979 = vunpack.c.h.b16 %v1922
        %v1980 = vunpack.c.l.b16 %v1923
        %v1981 = vunpack.c.h.b16 %v1923
        %v1982 = vunpack.c.l.b16 %v1924
        %v1983 = vunpack.c.h.b16 %v1924
        %v1984 = vunpack.c.l.b16 %v1925
        %v1985 = vunpack.c.h.b16 %v1925
        %v1986 = vunpack.c.l.b16 %v1926
        %v1987 = vunpack.c.h.b16 %v1926
        %v1988 = vunpack.c.l.b16 %v1927
        %v1989 = vunpack.c.h.b16 %v1927
        %v1990 = vunpack.c.l.b16 %v1928
        %v1991 = vunpack.c.h.b16 %v1928
        %v1992 = vunpack.c.l.b16 %v1929
        %v1993 = vunpack.c.h.b16 %v1929
        %v1994 = vunpack.c.l.b16 %v1930
        %v1995 = vunpack.c.h.b16 %v1930
        %v1996 = vunpack.c.l.b16 %v1931
        %v1997 = vunpack.c.h.b16 %v1931
        %v1998 = vunpack.c.l.b16 %v1932
        %v1999 = vunpack.c.h.b16 %v1932
        %v2000 = vunpack.c.l.b16 %v1933
        %v2001 = vunpack.c.h.b16 %v1933
        %v2002 = vunpack.c.l.b16 %v1934
        %v2003 = vunpack.c.h.b16 %v1934
        %v2004 = vunpack.c.l.b16 %v1935
        %v2005 = vunpack.c.h.b16 %v1935
        %v2006 = vunpack.c.l.b16 %v1936
        %v2007 = vunpack.c.h.b16 %v1936
        %v2008 = vunpack.c.l.b16 %v1937
        %v2009 = vunpack.c.h.b16 %v1937
        %v2010 = vunpack.c.l.b16 %v1938
        %v2011 = vunpack.c.h.b16 %v1938
        %v2012 = vunpack.c.l.b16 %v1939
        %v2013 = vunpack.c.h.b16 %v1939
        %v2014 = vunpack.c.l.b16 %v1940
        %v2015 = vunpack.c.h.b16 %v1940
        %v2016 = vunpack.c.l.b16 %v1941
        %v2017 = vunpack.c.h.b16 %v1941
        %v2018 = vunpack.c.l.b16 %v1942
        %v2019 = vunpack.c.h.b16 %v1942
        %v2020 = vunpack.c.l.b16 %v1943
        %v2021 = vunpack.c.h.b16 %v1943
        %v2022 = vunpack.c.l.b16 %v1944
        %v2023 = vunpack.c.h.b16 %v1944
        %v2024 = vpack.c.b16 %v1978, %v1976
        %v2025 = vpack.c.b16 %v1979, %v1977
        %v2026 = vpack.c.b16 %v1982, %v1980
        %v2027 = vpack.c.b16 %v1983, %v1981
        %v2028 = vpack.c.b16 %v1986, %v1984
        %v2029 = vpack.c.b16 %v1987, %v1985
        %v2030 = vpack.c.b16 %v1990, %v1988
        %v2031 = vpack.c.b16 %v1991, %v1989
        %v2032 = vpack.c.b16 %v1994, %v1992
        %v2033 = vpack.c.b16 %v1995, %v1993
        %v2034 = vpack.c.b16 %v1998, %v1996
        %v2035 = vpack.c.b16 %v1999, %v1997
        %v2036 = vpack.c.b16 %v2002, %v2000
        %v2037 = vpack.c.b16 %v2003, %v2001
        %v2038 = vpack.c.b16 %v2006, %v2004
        %v2039 = vpack.c.b16 %v2007, %v2005
        %v2040 = vpack.c.b16 %v2010, %v2008
        %v2041 = vpack.c.b16 %v2011, %v2009
        %v2042 = vpack.c.b16 %v2014, %v2012
        %v2043 = vpack.c.b16 %v2015, %v2013
        %v2044 = vpack.c.b16 %v2018, %v2016
        %v2045 = vpack.c.b16 %v2019, %v2017
        %v2046 = vpack.c.b16 %v2022, %v2020
        %v2047 = vpack.c.b16 %v2023, %v2021
        %2072 = vmatpush.bf16.msra.mxu0 %v2038
        %2073 = vmatpush.bf16.msra.mxu0 %v2036
        %2074 = vmatpush.bf16.msra.mxu0 %v2034
        %2075 = vmatpush.bf16.msra.mxu0 %v2032
        %2076 = vmatpush.bf16.msra.mxu0 %v2030
        %2077 = vmatpush.bf16.msra.mxu0 %v2028
        %2078 = vmatpush.bf16.msra.mxu0 %v2026
        %2079 = vmatpush.bf16.msra.mxu0 %v2024
        %2080 = vmatmul.bf16.gmra.mxu0 %v1557
        %v2081 = vpop.f32.mrf.mxu0
        %v2082 = vadd.f32 %v1948, %v2081
        %v2083 = vpop.f32.mrf.mxu0
        %v2084 = vadd.f32 %v1948, %v2083
        %2085 = vmatmul.bf16.gmra.mxu0 %v1559
        %v2086 = vpop.f32.mrf.mxu0
        %v2087 = vadd.f32 %v1948, %v2086
        %v2088 = vpop.f32.mrf.mxu0
        %v2089 = vadd.f32 %v1948, %v2088
        %2090 = vmatmul.bf16.gmra.mxu0 %v1561
        %v2091 = vpop.f32.mrf.mxu0
        %v2092 = vadd.f32 %v1948, %v2091
        %v2093 = vpop.f32.mrf.mxu0
        %v2094 = vadd.f32 %v1948, %v2093
        %2095 = vmatmul.bf16.gmra.mxu0 %v1563
        %v2096 = vpop.f32.mrf.mxu0
        %v2097 = vadd.f32 %v1948, %v2096
        %v2098 = vpop.f32.mrf.mxu0
        %v2099 = vadd.f32 %v1948, %v2098
        %2100 = vmatmul.bf16.gmra.mxu0 %v1565
        %v2101 = vpop.f32.mrf.mxu0
        %v2102 = vadd.f32 %v1948, %v2101
        %v2103 = vpop.f32.mrf.mxu0
        %v2104 = vadd.f32 %v1948, %v2103
        %2105 = vmatmul.bf16.gmra.mxu0 %v1567
        %v2106 = vpop.f32.mrf.mxu0
        %v2107 = vadd.f32 %v1948, %v2106
        %v2108 = vpop.f32.mrf.mxu0
        %v2109 = vadd.f32 %v1948, %v2108
        %2110 = vmatmul.bf16.gmra.mxu0 %v1569
        %v2111 = vpop.f32.mrf.mxu0
        %v2112 = vadd.f32 %v1948, %v2111
        %v2113 = vpop.f32.mrf.mxu0
        %v2114 = vadd.f32 %v1948, %v2113
        %2115 = vmatmul.bf16.gmra.mxu0 %v1571
        %v2116 = vpop.f32.mrf.mxu0
        %v2117 = vadd.f32 %v1948, %v2116
        %v2118 = vpop.f32.mrf.mxu0
        %v2119 = vadd.f32 %v1948, %v2118
        %2120 = vdwg.mxu0
        %2121 = vmatpush.bf16.msra.mxu0 0
        %2122 = vmatpush.bf16.msra.mxu0 0
        %2123 = vmatpush.bf16.msra.mxu0 0
        %2124 = vmatpush.bf16.msra.mxu0 0
        %2125 = vmatpush.bf16.msra.mxu0 %v2046
        %2126 = vmatpush.bf16.msra.mxu0 %v2044
        %2127 = vmatpush.bf16.msra.mxu0 %v2042
        %2128 = vmatpush.bf16.msra.mxu0 %v2040
        %2129 = vmatmul.bf16.gmra.mxu0 %v1701
        %v2130 = vpop.f32.mrf.mxu0
        %v2131 = vadd.f32 %v2082, %v2130
        %v2132 = vpop.f32.mrf.mxu0
        %v2133 = vadd.f32 %v2084, %v2132
        %2134 = vmatmul.bf16.gmra.mxu0 %v1704
        %v2135 = vpop.f32.mrf.mxu0
        %v2136 = vadd.f32 %v2087, %v2135
        %v2137 = vpop.f32.mrf.mxu0
        %v2138 = vadd.f32 %v2089, %v2137
        %2139 = vmatmul.bf16.gmra.mxu0 %v1707
        %v2140 = vpop.f32.mrf.mxu0
        %v2141 = vadd.f32 %v2092, %v2140
        %v2142 = vpop.f32.mrf.mxu0
        %v2143 = vadd.f32 %v2094, %v2142
        %2144 = vmatmul.bf16.gmra.mxu0 %v1710
        %v2145 = vpop.f32.mrf.mxu0
        %v2146 = vadd.f32 %v2097, %v2145
        %v2147 = vpop.f32.mrf.mxu0
        %v2148 = vadd.f32 %v2099, %v2147
        %2149 = vmatmul.bf16.gmra.mxu0 %v1713
        %v2150 = vpop.f32.mrf.mxu0
        %v2151 = vadd.f32 %v2102, %v2150
        %v2152 = vpop.f32.mrf.mxu0
        %v2153 = vadd.f32 %v2104, %v2152
        %2154 = vmatmul.bf16.gmra.mxu0 %v1716
        %v2155 = vpop.f32.mrf.mxu0
        %v2156 = vadd.f32 %v2107, %v2155
        %v2157 = vpop.f32.mrf.mxu0
        %v2158 = vadd.f32 %v2109, %v2157
        %2159 = vmatmul.bf16.gmra.mxu0 %v1719
        %v2160 = vpop.f32.mrf.mxu0
        %v2161 = vadd.f32 %v2112, %v2160
        %v2162 = vpop.f32.mrf.mxu0
        %v2163 = vadd.f32 %v2114, %v2162
        %2164 = vmatmul.bf16.gmra.mxu0 %v1722
        %v2165 = vpop.f32.mrf.mxu0
        %v2166 = vadd.f32 %v2117, %v2165
        %v2167 = vpop.f32.mrf.mxu0
        %v2168 = vadd.f32 %v2119, %v2167
        %2169 = vdwg.mxu0
        %2170 = vmatpush.bf16.msra.mxu0 %v2039
        %2171 = vmatpush.bf16.msra.mxu0 %v2037
        %2172 = vmatpush.bf16.msra.mxu0 %v2035
        %2173 = vmatpush.bf16.msra.mxu0 %v2033
        %2174 = vmatpush.bf16.msra.mxu0 %v2031
        %2175 = vmatpush.bf16.msra.mxu0 %v2029
        %2176 = vmatpush.bf16.msra.mxu0 %v2027
        %2177 = vmatpush.bf16.msra.mxu0 %v2025
        %2178 = vmatmul.bf16.gmra.mxu0 %v1557
        %v2179 = vpop.f32.mrf.mxu0
        %v2180 = vadd.f32 %v1949, %v2179
        %v2181 = vpop.f32.mrf.mxu0
        %v2182 = vadd.f32 %v1949, %v2181
        %2183 = vmatmul.bf16.gmra.mxu0 %v1559
        %v2184 = vpop.f32.mrf.mxu0
        %v2185 = vadd.f32 %v1949, %v2184
        %v2186 = vpop.f32.mrf.mxu0
        %v2187 = vadd.f32 %v1949, %v2186
        %2188 = vmatmul.bf16.gmra.mxu0 %v1561
        %v2189 = vpop.f32.mrf.mxu0
        %v2190 = vadd.f32 %v1949, %v2189
        %v2191 = vpop.f32.mrf.mxu0
        %v2192 = vadd.f32 %v1949, %v2191
        %2193 = vmatmul.bf16.gmra.mxu0 %v1563
        %v2194 = vpop.f32.mrf.mxu0
        %v2195 = vadd.f32 %v1949, %v2194
        %v2196 = vpop.f32.mrf.mxu0
        %v2197 = vadd.f32 %v1949, %v2196
        %2198 = vmatmul.bf16.gmra.mxu0 %v1565
        %v2199 = vpop.f32.mrf.mxu0
        %v2200 = vadd.f32 %v1949, %v2199
        %v2201 = vpop.f32.mrf.mxu0
        %v2202 = vadd.f32 %v1949, %v2201
        %2203 = vmatmul.bf16.gmra.mxu0 %v1567
        %v2204 = vpop.f32.mrf.mxu0
        %v2205 = vadd.f32 %v1949, %v2204
        %v2206 = vpop.f32.mrf.mxu0
        %v2207 = vadd.f32 %v1949, %v2206
        %2208 = vmatmul.bf16.gmra.mxu0 %v1569
        %v2209 = vpop.f32.mrf.mxu0
        %v2210 = vadd.f32 %v1949, %v2209
        %v2211 = vpop.f32.mrf.mxu0
        %v2212 = vadd.f32 %v1949, %v2211
        %2213 = vmatmul.bf16.gmra.mxu0 %v1571
        %v2214 = vpop.f32.mrf.mxu0
        %v2215 = vadd.f32 %v1949, %v2214
        %v2216 = vpop.f32.mrf.mxu0
        %v2217 = vadd.f32 %v1949, %v2216
        %2218 = vdwg.mxu0
        %2219 = vmatpush.bf16.msra.mxu0 0
        %2220 = vmatpush.bf16.msra.mxu0 0
        %2221 = vmatpush.bf16.msra.mxu0 0
        %2222 = vmatpush.bf16.msra.mxu0 0
        %2223 = vmatpush.bf16.msra.mxu0 %v2047
        %2224 = vmatpush.bf16.msra.mxu0 %v2045
        %2225 = vmatpush.bf16.msra.mxu0 %v2043
        %2226 = vmatpush.bf16.msra.mxu0 %v2041
        %2227 = vmatmul.bf16.gmra.mxu0 %v1701
        %v2228 = vpop.f32.mrf.mxu0
        %v2229 = vadd.f32 %v2180, %v2228
        %v2230 = vpop.f32.mrf.mxu0
        %v2231 = vadd.f32 %v2182, %v2230
        %2232 = vmatmul.bf16.gmra.mxu0 %v1704
        %v2233 = vpop.f32.mrf.mxu0
        %v2234 = vadd.f32 %v2185, %v2233
        %v2235 = vpop.f32.mrf.mxu0
        %v2236 = vadd.f32 %v2187, %v2235
        %2237 = vmatmul.bf16.gmra.mxu0 %v1707
        %v2238 = vpop.f32.mrf.mxu0
        %v2239 = vadd.f32 %v2190, %v2238
        %v2240 = vpop.f32.mrf.mxu0
        %v2241 = vadd.f32 %v2192, %v2240
        %2242 = vmatmul.bf16.gmra.mxu0 %v1710
        %v2243 = vpop.f32.mrf.mxu0
        %v2244 = vadd.f32 %v2195, %v2243
        %v2245 = vpop.f32.mrf.mxu0
        %v2246 = vadd.f32 %v2197, %v2245
        %2247 = vmatmul.bf16.gmra.mxu0 %v1713
        %v2248 = vpop.f32.mrf.mxu0
        %v2249 = vadd.f32 %v2200, %v2248
        %v2250 = vpop.f32.mrf.mxu0
        %v2251 = vadd.f32 %v2202, %v2250
        %2252 = vmatmul.bf16.gmra.mxu0 %v1716
        %v2253 = vpop.f32.mrf.mxu0
        %v2254 = vadd.f32 %v2205, %v2253
        %v2255 = vpop.f32.mrf.mxu0
        %v2256 = vadd.f32 %v2207, %v2255
        %2257 = vmatmul.bf16.gmra.mxu0 %v1719
        %v2258 = vpop.f32.mrf.mxu0
        %v2259 = vadd.f32 %v2210, %v2258
        %v2260 = vpop.f32.mrf.mxu0
        %v2261 = vadd.f32 %v2212, %v2260
        %2262 = vmatmul.bf16.gmra.mxu0 %v1722
        %v2263 = vpop.f32.mrf.mxu0
        %v2264 = vadd.f32 %v2215, %v2263
        %v2265 = vpop.f32.mrf.mxu0
        %v2266 = vadd.f32 %v2217, %v2265
        %2267 = vdwg.mxu0
        %s2268 = scalar_lea.vmem %s538, 384
        %v2269 = vld [vmem:[%s2268] sm:$0xff]
        %v2270 = vld [vmem:[%s2268 + $0x8] sm:$0xff]
        %v2271 = vld [vmem:[%s2268 + $0x10] sm:$0xff]
        %v2272 = vld [vmem:[%s2268 + $0x18] sm:$0xff]
        %v2273 = vld [vmem:[%s2268 + $0x20] sm:$0xff]
        %v2274 = vld [vmem:[%s2268 + $0x28] sm:$0xff]
        %v2275 = vld [vmem:[%s2268 + $0x30] sm:$0xff]
        %v2276 = vld [vmem:[%s2268 + $0x38] sm:$0xff]
        %v2277 = vld [vmem:[%s2268 + $0x40] sm:$0xff]
        %v2278 = vld [vmem:[%s2268 + $0x48] sm:$0xff]
        %v2279 = vld [vmem:[%s2268 + $0x50] sm:$0xff]
        %v2280 = vld [vmem:[%s2268 + $0x58] sm:$0xff]
        %v2281 = vld [vmem:[%s2268 + $0x60] sm:$0xff]
        %v2282 = vld [vmem:[%s2268 + $0x68] sm:$0xff]
        %v2283 = vld [vmem:[%s2268 + $0x70] sm:$0xff]
        %v2284 = vld [vmem:[%s2268 + $0x78] sm:$0xff]
        %v2285 = vld [vmem:[%s2268 + $0x80] sm:$0xff]
        %v2286 = vld [vmem:[%s2268 + $0x88] sm:$0xff]
        %v2287 = vld [vmem:[%s2268 + $0x90] sm:$0xff]
        %v2288 = vld [vmem:[%s2268 + $0x98] sm:$0xff]
        %v2289 = vld [vmem:[%s2268 + $0xa0] sm:$0xff]
        %v2290 = vld [vmem:[%s2268 + $0xa8] sm:$0xff]
        %v2291 = vld [vmem:[%s2268 + $0xb0] sm:$0xff]
        %v2292 = vld [vmem:[%s2268 + $0xb8] sm:$0xff]
        %s2293 = scalar_lea.vmem %s553, 4
        %v2294 = vld [vmem:[%s2293] ss:$8 sm:$0x3]
        %v2296 = vperm.slane %v2294, 0
        %v2297 = vperm.slane %v2294, 1
        %v2324 = vunpack.c.l.b16 %v2269
        %v2325 = vunpack.c.h.b16 %v2269
        %v2326 = vunpack.c.l.b16 %v2270
        %v2327 = vunpack.c.h.b16 %v2270
        %v2328 = vunpack.c.l.b16 %v2271
        %v2329 = vunpack.c.h.b16 %v2271
        %v2330 = vunpack.c.l.b16 %v2272
        %v2331 = vunpack.c.h.b16 %v2272
        %v2332 = vunpack.c.l.b16 %v2273
        %v2333 = vunpack.c.h.b16 %v2273
        %v2334 = vunpack.c.l.b16 %v2274
        %v2335 = vunpack.c.h.b16 %v2274
        %v2336 = vunpack.c.l.b16 %v2275
        %v2337 = vunpack.c.h.b16 %v2275
        %v2338 = vunpack.c.l.b16 %v2276
        %v2339 = vunpack.c.h.b16 %v2276
        %v2340 = vunpack.c.l.b16 %v2277
        %v2341 = vunpack.c.h.b16 %v2277
        %v2342 = vunpack.c.l.b16 %v2278
        %v2343 = vunpack.c.h.b16 %v2278
        %v2344 = vunpack.c.l.b16 %v2279
        %v2345 = vunpack.c.h.b16 %v2279
        %v2346 = vunpack.c.l.b16 %v2280
        %v2347 = vunpack.c.h.b16 %v2280
        %v2348 = vunpack.c.l.b16 %v2281
        %v2349 = vunpack.c.h.b16 %v2281
        %v2350 = vunpack.c.l.b16 %v2282
        %v2351 = vunpack.c.h.b16 %v2282
        %v2352 = vunpack.c.l.b16 %v2283
        %v2353 = vunpack.c.h.b16 %v2283
        %v2354 = vunpack.c.l.b16 %v2284
        %v2355 = vunpack.c.h.b16 %v2284
        %v2356 = vunpack.c.l.b16 %v2285
        %v2357 = vunpack.c.h.b16 %v2285
        %v2358 = vunpack.c.l.b16 %v2286
        %v2359 = vunpack.c.h.b16 %v2286
        %v2360 = vunpack.c.l.b16 %v2287
        %v2361 = vunpack.c.h.b16 %v2287
        %v2362 = vunpack.c.l.b16 %v2288
        %v2363 = vunpack.c.h.b16 %v2288
        %v2364 = vunpack.c.l.b16 %v2289
        %v2365 = vunpack.c.h.b16 %v2289
        %v2366 = vunpack.c.l.b16 %v2290
        %v2367 = vunpack.c.h.b16 %v2290
        %v2368 = vunpack.c.l.b16 %v2291
        %v2369 = vunpack.c.h.b16 %v2291
        %v2370 = vunpack.c.l.b16 %v2292
        %v2371 = vunpack.c.h.b16 %v2292
        %v2372 = vpack.c.b16 %v2326, %v2324
        %v2373 = vpack.c.b16 %v2327, %v2325
        %v2374 = vpack.c.b16 %v2330, %v2328
        %v2375 = vpack.c.b16 %v2331, %v2329
        %v2376 = vpack.c.b16 %v2334, %v2332
        %v2377 = vpack.c.b16 %v2335, %v2333
        %v2378 = vpack.c.b16 %v2338, %v2336
        %v2379 = vpack.c.b16 %v2339, %v2337
        %v2380 = vpack.c.b16 %v2342, %v2340
        %v2381 = vpack.c.b16 %v2343, %v2341
        %v2382 = vpack.c.b16 %v2346, %v2344
        %v2383 = vpack.c.b16 %v2347, %v2345
        %v2384 = vpack.c.b16 %v2350, %v2348
        %v2385 = vpack.c.b16 %v2351, %v2349
        %v2386 = vpack.c.b16 %v2354, %v2352
        %v2387 = vpack.c.b16 %v2355, %v2353
        %v2388 = vpack.c.b16 %v2358, %v2356
        %v2389 = vpack.c.b16 %v2359, %v2357
        %v2390 = vpack.c.b16 %v2362, %v2360
        %v2391 = vpack.c.b16 %v2363, %v2361
        %v2392 = vpack.c.b16 %v2366, %v2364
        %v2393 = vpack.c.b16 %v2367, %v2365
        %v2394 = vpack.c.b16 %v2370, %v2368
        %v2395 = vpack.c.b16 %v2371, %v2369
        %2420 = vmatpush.bf16.msra.mxu0 %v2386
        %2421 = vmatpush.bf16.msra.mxu0 %v2384
        %2422 = vmatpush.bf16.msra.mxu0 %v2382
        %2423 = vmatpush.bf16.msra.mxu0 %v2380
        %2424 = vmatpush.bf16.msra.mxu0 %v2378
        %2425 = vmatpush.bf16.msra.mxu0 %v2376
        %2426 = vmatpush.bf16.msra.mxu0 %v2374
        %2427 = vmatpush.bf16.msra.mxu0 %v2372
        %2428 = vmatmul.bf16.gmra.mxu0 %v1557
        %v2429 = vpop.f32.mrf.mxu0
        %v2430 = vadd.f32 %v2296, %v2429
        %v2431 = vpop.f32.mrf.mxu0
        %v2432 = vadd.f32 %v2296, %v2431
        %2433 = vmatmul.bf16.gmra.mxu0 %v1559
        %v2434 = vpop.f32.mrf.mxu0
        %v2435 = vadd.f32 %v2296, %v2434
        %v2436 = vpop.f32.mrf.mxu0
        %v2437 = vadd.f32 %v2296, %v2436
        %2438 = vmatmul.bf16.gmra.mxu0 %v1561
        %v2439 = vpop.f32.mrf.mxu0
        %v2440 = vadd.f32 %v2296, %v2439
        %v2441 = vpop.f32.mrf.mxu0
        %v2442 = vadd.f32 %v2296, %v2441
        %2443 = vmatmul.bf16.gmra.mxu0 %v1563
        %v2444 = vpop.f32.mrf.mxu0
        %v2445 = vadd.f32 %v2296, %v2444
        %v2446 = vpop.f32.mrf.mxu0
        %v2447 = vadd.f32 %v2296, %v2446
        %2448 = vmatmul.bf16.gmra.mxu0 %v1565
        %v2449 = vpop.f32.mrf.mxu0
        %v2450 = vadd.f32 %v2296, %v2449
        %v2451 = vpop.f32.mrf.mxu0
        %v2452 = vadd.f32 %v2296, %v2451
        %2453 = vmatmul.bf16.gmra.mxu0 %v1567
        %v2454 = vpop.f32.mrf.mxu0
        %v2455 = vadd.f32 %v2296, %v2454
        %v2456 = vpop.f32.mrf.mxu0
        %v2457 = vadd.f32 %v2296, %v2456
        %2458 = vmatmul.bf16.gmra.mxu0 %v1569
        %v2459 = vpop.f32.mrf.mxu0
        %v2460 = vadd.f32 %v2296, %v2459
        %v2461 = vpop.f32.mrf.mxu0
        %v2462 = vadd.f32 %v2296, %v2461
        %2463 = vmatmul.bf16.gmra.mxu0 %v1571
        %v2464 = vpop.f32.mrf.mxu0
        %v2465 = vadd.f32 %v2296, %v2464
        %v2466 = vpop.f32.mrf.mxu0
        %v2467 = vadd.f32 %v2296, %v2466
        %2468 = vdwg.mxu0
        %2469 = vmatpush.bf16.msra.mxu0 0
        %2470 = vmatpush.bf16.msra.mxu0 0
        %2471 = vmatpush.bf16.msra.mxu0 0
        %2472 = vmatpush.bf16.msra.mxu0 0
        %2473 = vmatpush.bf16.msra.mxu0 %v2394
        %2474 = vmatpush.bf16.msra.mxu0 %v2392
        %2475 = vmatpush.bf16.msra.mxu0 %v2390
        %2476 = vmatpush.bf16.msra.mxu0 %v2388
        %2477 = vmatmul.bf16.gmra.mxu0 %v1701
        %v2478 = vpop.f32.mrf.mxu0
        %v2479 = vadd.f32 %v2430, %v2478
        %v2480 = vpop.f32.mrf.mxu0
        %v2481 = vadd.f32 %v2432, %v2480
        %2482 = vmatmul.bf16.gmra.mxu0 %v1704
        %v2483 = vpop.f32.mrf.mxu0
        %v2484 = vadd.f32 %v2435, %v2483
        %v2485 = vpop.f32.mrf.mxu0
        %v2486 = vadd.f32 %v2437, %v2485
        %2487 = vmatmul.bf16.gmra.mxu0 %v1707
        %v2488 = vpop.f32.mrf.mxu0
        %v2489 = vadd.f32 %v2440, %v2488
        %v2490 = vpop.f32.mrf.mxu0
        %v2491 = vadd.f32 %v2442, %v2490
        %2492 = vmatmul.bf16.gmra.mxu0 %v1710
        %v2493 = vpop.f32.mrf.mxu0
        %v2494 = vadd.f32 %v2445, %v2493
        %v2495 = vpop.f32.mrf.mxu0
        %v2496 = vadd.f32 %v2447, %v2495
        %2497 = vmatmul.bf16.gmra.mxu0 %v1713
        %v2498 = vpop.f32.mrf.mxu0
        %v2499 = vadd.f32 %v2450, %v2498
        %v2500 = vpop.f32.mrf.mxu0
        %v2501 = vadd.f32 %v2452, %v2500
        %2502 = vmatmul.bf16.gmra.mxu0 %v1716
        %v2503 = vpop.f32.mrf.mxu0
        %v2504 = vadd.f32 %v2455, %v2503
        %v2505 = vpop.f32.mrf.mxu0
        %v2506 = vadd.f32 %v2457, %v2505
        %2507 = vmatmul.bf16.gmra.mxu0 %v1719
        %v2508 = vpop.f32.mrf.mxu0
        %v2509 = vadd.f32 %v2460, %v2508
        %v2510 = vpop.f32.mrf.mxu0
        %v2511 = vadd.f32 %v2462, %v2510
        %2512 = vmatmul.bf16.gmra.mxu0 %v1722
        %v2513 = vpop.f32.mrf.mxu0
        %v2514 = vadd.f32 %v2465, %v2513
        %v2515 = vpop.f32.mrf.mxu0
        %v2516 = vadd.f32 %v2467, %v2515
        %2517 = vdwg.mxu0
        %2518 = vmatpush.bf16.msra.mxu0 %v2387
        %2519 = vmatpush.bf16.msra.mxu0 %v2385
        %2520 = vmatpush.bf16.msra.mxu0 %v2383
        %2521 = vmatpush.bf16.msra.mxu0 %v2381
        %2522 = vmatpush.bf16.msra.mxu0 %v2379
        %2523 = vmatpush.bf16.msra.mxu0 %v2377
        %2524 = vmatpush.bf16.msra.mxu0 %v2375
        %2525 = vmatpush.bf16.msra.mxu0 %v2373
        %2526 = vmatmul.bf16.gmra.mxu0 %v1557
        %v2527 = vpop.f32.mrf.mxu0
        %v2528 = vadd.f32 %v2297, %v2527
        %v2529 = vpop.f32.mrf.mxu0
        %v2530 = vadd.f32 %v2297, %v2529
        %2531 = vmatmul.bf16.gmra.mxu0 %v1559
        %v2532 = vpop.f32.mrf.mxu0
        %v2533 = vadd.f32 %v2297, %v2532
        %v2534 = vpop.f32.mrf.mxu0
        %v2535 = vadd.f32 %v2297, %v2534
        %2536 = vmatmul.bf16.gmra.mxu0 %v1561
        %v2537 = vpop.f32.mrf.mxu0
        %v2538 = vadd.f32 %v2297, %v2537
        %v2539 = vpop.f32.mrf.mxu0
        %v2540 = vadd.f32 %v2297, %v2539
        %2541 = vmatmul.bf16.gmra.mxu0 %v1563
        %v2542 = vpop.f32.mrf.mxu0
        %v2543 = vadd.f32 %v2297, %v2542
        %v2544 = vpop.f32.mrf.mxu0
        %v2545 = vadd.f32 %v2297, %v2544
        %2546 = vmatmul.bf16.gmra.mxu0 %v1565
        %v2547 = vpop.f32.mrf.mxu0
        %v2548 = vadd.f32 %v2297, %v2547
        %v2549 = vpop.f32.mrf.mxu0
        %v2550 = vadd.f32 %v2297, %v2549
        %2551 = vmatmul.bf16.gmra.mxu0 %v1567
        %v2552 = vpop.f32.mrf.mxu0
        %v2553 = vadd.f32 %v2297, %v2552
        %v2554 = vpop.f32.mrf.mxu0
        %v2555 = vadd.f32 %v2297, %v2554
        %2556 = vmatmul.bf16.gmra.mxu0 %v1569
        %v2557 = vpop.f32.mrf.mxu0
        %v2558 = vadd.f32 %v2297, %v2557
        %v2559 = vpop.f32.mrf.mxu0
        %v2560 = vadd.f32 %v2297, %v2559
        %2561 = vmatmul.bf16.gmra.mxu0 %v1571
        %v2562 = vpop.f32.mrf.mxu0
        %v2563 = vadd.f32 %v2297, %v2562
        %v2564 = vpop.f32.mrf.mxu0
        %v2565 = vadd.f32 %v2297, %v2564
        %2566 = vdwg.mxu0
        %2567 = vmatpush.bf16.msra.mxu0 0
        %2568 = vmatpush.bf16.msra.mxu0 0
        %2569 = vmatpush.bf16.msra.mxu0 0
        %2570 = vmatpush.bf16.msra.mxu0 0
        %2571 = vmatpush.bf16.msra.mxu0 %v2395
        %2572 = vmatpush.bf16.msra.mxu0 %v2393
        %2573 = vmatpush.bf16.msra.mxu0 %v2391
        %2574 = vmatpush.bf16.msra.mxu0 %v2389
        %2575 = vmatmul.bf16.gmra.mxu0 %v1701
        %v2576 = vpop.f32.mrf.mxu0
        %v2577 = vadd.f32 %v2528, %v2576
        %v2578 = vpop.f32.mrf.mxu0
        %v2579 = vadd.f32 %v2530, %v2578
        %2580 = vmatmul.bf16.gmra.mxu0 %v1704
        %v2581 = vpop.f32.mrf.mxu0
        %v2582 = vadd.f32 %v2533, %v2581
        %v2583 = vpop.f32.mrf.mxu0
        %v2584 = vadd.f32 %v2535, %v2583
        %2585 = vmatmul.bf16.gmra.mxu0 %v1707
        %v2586 = vpop.f32.mrf.mxu0
        %v2587 = vadd.f32 %v2538, %v2586
        %v2588 = vpop.f32.mrf.mxu0
        %v2589 = vadd.f32 %v2540, %v2588
        %2590 = vmatmul.bf16.gmra.mxu0 %v1710
        %v2591 = vpop.f32.mrf.mxu0
        %v2592 = vadd.f32 %v2543, %v2591
        %v2593 = vpop.f32.mrf.mxu0
        %v2594 = vadd.f32 %v2545, %v2593
        %2595 = vmatmul.bf16.gmra.mxu0 %v1713
        %v2596 = vpop.f32.mrf.mxu0
        %v2597 = vadd.f32 %v2548, %v2596
        %v2598 = vpop.f32.mrf.mxu0
        %v2599 = vadd.f32 %v2550, %v2598
        %2600 = vmatmul.bf16.gmra.mxu0 %v1716
        %v2601 = vpop.f32.mrf.mxu0
        %v2602 = vadd.f32 %v2553, %v2601
        %v2603 = vpop.f32.mrf.mxu0
        %v2604 = vadd.f32 %v2555, %v2603
        %2605 = vmatmul.bf16.gmra.mxu0 %v1719
        %v2606 = vpop.f32.mrf.mxu0
        %v2607 = vadd.f32 %v2558, %v2606
        %v2608 = vpop.f32.mrf.mxu0
        %v2609 = vadd.f32 %v2560, %v2608
        %2610 = vmatmul.bf16.gmra.mxu0 %v1722
        %v2611 = vpop.f32.mrf.mxu0
        %v2612 = vadd.f32 %v2563, %v2611
        %v2613 = vpop.f32.mrf.mxu0
        %v2614 = vadd.f32 %v2565, %v2613
        %2615 = vdwg.mxu0
        %v2616 = vld [vmem:[%s3] sm:$0xf]
        %v2617 = vld [vmem:[%s3 + $0x4] sm:$0xf]
        %v2618 = vld [vmem:[%s3 + $0x8] sm:$0xf]
        %v2619 = vld [vmem:[%s3 + $0xc] sm:$0xf]
        %v2620 = vld [vmem:[%s3 + $0x10] sm:$0xf]
        %v2621 = vld [vmem:[%s3 + $0x14] sm:$0xf]
        %v2622 = vld [vmem:[%s3 + $0x18] sm:$0xf]
        %v2623 = vld [vmem:[%s3 + $0x1c] sm:$0xf]
        %v2624 = vld [vmem:[%s3 + $0x20] sm:$0xf]
        %v2625 = vld [vmem:[%s3 + $0x24] sm:$0xf]
        %v2626 = vld [vmem:[%s3 + $0x28] sm:$0xf]
        %v2627 = vld [vmem:[%s3 + $0x2c] sm:$0xf]
        %v2628 = vld [vmem:[%s3 + $0x30] sm:$0xf]
        %v2629 = vld [vmem:[%s3 + $0x34] sm:$0xf]
        %v2630 = vld [vmem:[%s3 + $0x38] sm:$0xf]
        %v2631 = vld [vmem:[%s3 + $0x3c] sm:$0xf]
        %v2632 = vld [vmem:[%s3 + $0x40] sm:$0xf]
        %v2633 = vld [vmem:[%s3 + $0x44] sm:$0xf]
        %v2634 = vld [vmem:[%s3 + $0x48] sm:$0xf]
        %v2635 = vld [vmem:[%s3 + $0x4c] sm:$0xf]
        %v2636 = vld [vmem:[%s3 + $0x50] sm:$0xf]
        %v2637 = vld [vmem:[%s3 + $0x54] sm:$0xf]
        %v2638 = vld [vmem:[%s3 + $0x58] sm:$0xf]
        %v2639 = vld [vmem:[%s3 + $0x5c] sm:$0xf]
        %v2640 = vld [vmem:[%s4] sm:$0xff]
        %v2641 = vmul.f32 %v1783, %v2131
        %v2642 = vmul.f32 %v1881, %v2229
        %v2643 = vmul.f32 %v1785, %v2133
        %v2644 = vmul.f32 %v1883, %v2231
        %v2645 = vmul.f32 %v1788, %v2136
        %v2646 = vmul.f32 %v1886, %v2234
        %v2647 = vmul.f32 %v1790, %v2138
        %v2648 = vmul.f32 %v1888, %v2236
        %v2649 = vmul.f32 %v1793, %v2141
        %v2650 = vmul.f32 %v1891, %v2239
        %v2651 = vmul.f32 %v1795, %v2143
        %v2652 = vmul.f32 %v1893, %v2241
        %v2653 = vmul.f32 %v1798, %v2146
        %v2654 = vmul.f32 %v1896, %v2244
        %v2655 = vmul.f32 %v1800, %v2148
        %v2656 = vmul.f32 %v1898, %v2246
        %v2657 = vmul.f32 %v1803, %v2151
        %v2658 = vmul.f32 %v1901, %v2249
        %v2659 = vmul.f32 %v1805, %v2153
        %v2660 = vmul.f32 %v1903, %v2251
        %v2661 = vmul.f32 %v1808, %v2156
        %v2662 = vmul.f32 %v1906, %v2254
        %v2663 = vmul.f32 %v1810, %v2158
        %v2664 = vmul.f32 %v1908, %v2256
        %v2665 = vmul.f32 %v1813, %v2161
        %v2666 = vmul.f32 %v1911, %v2259
        %v2667 = vmul.f32 %v1815, %v2163
        %v2668 = vmul.f32 %v1913, %v2261
        %v2669 = vmul.f32 %v1818, %v2166
        %v2670 = vmul.f32 %v1916, %v2264
        %v2671 = vmul.f32 %v1820, %v2168
        %v2672 = vmul.f32 %v1918, %v2266
        %v2673 = vpack.c.bf16 %v2643, %v2641
        %v2674 = vpack.c.bf16 %v2644, %v2642
        %v2675 = vpack.c.bf16 %v2647, %v2645
        %v2676 = vpack.c.bf16 %v2648, %v2646
        %v2677 = vpack.c.bf16 %v2651, %v2649
        %v2678 = vpack.c.bf16 %v2652, %v2650
        %v2679 = vpack.c.bf16 %v2655, %v2653
        %v2680 = vpack.c.bf16 %v2656, %v2654
        %v2681 = vpack.c.bf16 %v2659, %v2657
        %v2682 = vpack.c.bf16 %v2660, %v2658
        %v2683 = vpack.c.bf16 %v2663, %v2661
        %v2684 = vpack.c.bf16 %v2664, %v2662
        %v2685 = vpack.c.bf16 %v2667, %v2665
        %v2686 = vpack.c.bf16 %v2668, %v2666
        %v2687 = vpack.c.bf16 %v2671, %v2669
        %v2688 = vpack.c.bf16 %v2672, %v2670
        %v2713 = vunpack.c.l.b16 %v2616
        %v2714 = vunpack.c.l.b16 %v2617
        %v2715 = vunpack.c.l.b16 %v2618
        %v2716 = vunpack.c.l.b16 %v2619
        %v2717 = vunpack.c.l.b16 %v2620
        %v2718 = vunpack.c.l.b16 %v2621
        %v2719 = vunpack.c.l.b16 %v2622
        %v2720 = vunpack.c.l.b16 %v2623
        %v2721 = vunpack.c.l.b16 %v2624
        %v2722 = vunpack.c.l.b16 %v2625
        %v2723 = vunpack.c.l.b16 %v2626
        %v2724 = vunpack.c.l.b16 %v2627
        %v2725 = vunpack.c.l.b16 %v2628
        %v2726 = vunpack.c.l.b16 %v2629
        %v2727 = vunpack.c.l.b16 %v2630
        %v2728 = vunpack.c.l.b16 %v2631
        %v2729 = vunpack.c.l.b16 %v2632
        %v2730 = vunpack.c.l.b16 %v2633
        %v2731 = vunpack.c.l.b16 %v2634
        %v2732 = vunpack.c.l.b16 %v2635
        %v2733 = vunpack.c.l.b16 %v2636
        %v2734 = vunpack.c.l.b16 %v2637
        %v2735 = vunpack.c.l.b16 %v2638
        %v2736 = vunpack.c.l.b16 %v2639
        %v2737 = vpack.c.b16 %v2714, %v2713
        %v2738 = vpack.c.b16 %v2716, %v2715
        %v2739 = vpack.c.b16 %v2718, %v2717
        %v2740 = vpack.c.b16 %v2720, %v2719
        %v2741 = vpack.c.b16 %v2722, %v2721
        %v2742 = vpack.c.b16 %v2724, %v2723
        %v2743 = vpack.c.b16 %v2726, %v2725
        %v2744 = vpack.c.b16 %v2728, %v2727
        %v2745 = vpack.c.b16 %v2730, %v2729
        %v2746 = vpack.c.b16 %v2732, %v2731
        %v2747 = vpack.c.b16 %v2734, %v2733
        %v2748 = vpack.c.b16 %v2736, %v2735
        %v2762 = vsel %vm1019, %v2674, 0
        %v2765 = vsel %vm1019, %v2676, 0
        %v2768 = vsel %vm1019, %v2678, 0
        %v2771 = vsel %vm1019, %v2680, 0
        %v2774 = vsel %vm1019, %v2682, 0
        %v2777 = vsel %vm1019, %v2684, 0
        %v2780 = vsel %vm1019, %v2686, 0
        %v2783 = vsel %vm1019, %v2688, 0
        %2785 = vmatpush.bf16.msra.mxu0 %v2744
        %2786 = vmatpush.bf16.msra.mxu0 %v2743
        %2787 = vmatpush.bf16.msra.mxu0 %v2742
        %2788 = vmatpush.bf16.msra.mxu0 %v2741
        %2789 = vmatpush.bf16.msra.mxu0 %v2740
        %2790 = vmatpush.bf16.msra.mxu0 %v2739
        %2791 = vmatpush.bf16.msra.mxu0 %v2738
        %2792 = vmatpush.bf16.msra.mxu0 %v2737
        %2793 = vmatmul.bf16.gmra.mxu0 %v2673
        %v2794 = vpop.f32.mrf.mxu0
        %v2795 = vadd.f32 0.0, %v2794
        %v2796 = vpop.f32.mrf.mxu0
        %v2797 = vadd.f32 0.0, %v2796
        %2798 = vmatmul.bf16.gmra.mxu0 %v2675
        %v2799 = vpop.f32.mrf.mxu0
        %v2800 = vadd.f32 0.0, %v2799
        %v2801 = vpop.f32.mrf.mxu0
        %v2802 = vadd.f32 0.0, %v2801
        %2803 = vmatmul.bf16.gmra.mxu0 %v2677
        %v2804 = vpop.f32.mrf.mxu0
        %v2805 = vadd.f32 0.0, %v2804
        %v2806 = vpop.f32.mrf.mxu0
        %v2807 = vadd.f32 0.0, %v2806
        %2808 = vmatmul.bf16.gmra.mxu0 %v2679
        %v2809 = vpop.f32.mrf.mxu0
        %v2810 = vadd.f32 0.0, %v2809
        %v2811 = vpop.f32.mrf.mxu0
        %v2812 = vadd.f32 0.0, %v2811
        %2813 = vmatmul.bf16.gmra.mxu0 %v2681
        %v2814 = vpop.f32.mrf.mxu0
        %v2815 = vadd.f32 0.0, %v2814
        %v2816 = vpop.f32.mrf.mxu0
        %v2817 = vadd.f32 0.0, %v2816
        %2818 = vmatmul.bf16.gmra.mxu0 %v2683
        %v2819 = vpop.f32.mrf.mxu0
        %v2820 = vadd.f32 0.0, %v2819
        %v2821 = vpop.f32.mrf.mxu0
        %v2822 = vadd.f32 0.0, %v2821
        %2823 = vmatmul.bf16.gmra.mxu0 %v2685
        %v2824 = vpop.f32.mrf.mxu0
        %v2825 = vadd.f32 0.0, %v2824
        %v2826 = vpop.f32.mrf.mxu0
        %v2827 = vadd.f32 0.0, %v2826
        %2828 = vmatmul.bf16.gmra.mxu0 %v2687
        %v2829 = vpop.f32.mrf.mxu0
        %v2830 = vadd.f32 0.0, %v2829
        %v2831 = vpop.f32.mrf.mxu0
        %v2832 = vadd.f32 0.0, %v2831
        %2833 = vdwg.mxu0
        %2834 = vmatpush.bf16.msra.mxu0 0
        %2835 = vmatpush.bf16.msra.mxu0 0
        %2836 = vmatpush.bf16.msra.mxu0 0
        %2837 = vmatpush.bf16.msra.mxu0 0
        %2838 = vmatpush.bf16.msra.mxu0 %v2748
        %2839 = vmatpush.bf16.msra.mxu0 %v2747
        %2840 = vmatpush.bf16.msra.mxu0 %v2746
        %2841 = vmatpush.bf16.msra.mxu0 %v2745
        %2842 = vmatmul.bf16.gmra.mxu0 %v2762
        %v2843 = vpop.f32.mrf.mxu0
        %v2844 = vadd.f32 %v2795, %v2843
        %v2845 = vpop.f32.mrf.mxu0
        %v2846 = vadd.f32 %v2797, %v2845
        %2847 = vmatmul.bf16.gmra.mxu0 %v2765
        %v2848 = vpop.f32.mrf.mxu0
        %v2849 = vadd.f32 %v2800, %v2848
        %v2850 = vpop.f32.mrf.mxu0
        %v2851 = vadd.f32 %v2802, %v2850
        %2852 = vmatmul.bf16.gmra.mxu0 %v2768
        %v2853 = vpop.f32.mrf.mxu0
        %v2854 = vadd.f32 %v2805, %v2853
        %v2855 = vpop.f32.mrf.mxu0
        %v2856 = vadd.f32 %v2807, %v2855
        %2857 = vmatmul.bf16.gmra.mxu0 %v2771
        %v2858 = vpop.f32.mrf.mxu0
        %v2859 = vadd.f32 %v2810, %v2858
        %v2860 = vpop.f32.mrf.mxu0
        %v2861 = vadd.f32 %v2812, %v2860
        %2862 = vmatmul.bf16.gmra.mxu0 %v2774
        %v2863 = vpop.f32.mrf.mxu0
        %v2864 = vadd.f32 %v2815, %v2863
        %v2865 = vpop.f32.mrf.mxu0
        %v2866 = vadd.f32 %v2817, %v2865
        %2867 = vmatmul.bf16.gmra.mxu0 %v2777
        %v2868 = vpop.f32.mrf.mxu0
        %v2869 = vadd.f32 %v2820, %v2868
        %v2870 = vpop.f32.mrf.mxu0
        %v2871 = vadd.f32 %v2822, %v2870
        %2872 = vmatmul.bf16.gmra.mxu0 %v2780
        %v2873 = vpop.f32.mrf.mxu0
        %v2874 = vadd.f32 %v2825, %v2873
        %v2875 = vpop.f32.mrf.mxu0
        %v2876 = vadd.f32 %v2827, %v2875
        %2877 = vmatmul.bf16.gmra.mxu0 %v2783
        %v2878 = vpop.f32.mrf.mxu0
        %v2879 = vadd.f32 %v2830, %v2878
        %v2880 = vpop.f32.mrf.mxu0
        %v2881 = vadd.f32 %v2832, %v2880
        %2882 = vdwg.mxu0
        %v2883 = vmul.f32 %v1783, %v2151
        %v2884 = vmul.f32 %v1881, %v2249
        %v2885 = vmul.f32 %v1785, %v2153
        %v2886 = vmul.f32 %v1883, %v2251
        %v2887 = vmul.f32 %v1788, %v2156
        %v2888 = vmul.f32 %v1886, %v2254
        %v2889 = vmul.f32 %v1790, %v2158
        %v2890 = vmul.f32 %v1888, %v2256
        %v2891 = vmul.f32 %v1793, %v2161
        %v2892 = vmul.f32 %v1891, %v2259
        %v2893 = vmul.f32 %v1795, %v2163
        %v2894 = vmul.f32 %v1893, %v2261
        %v2895 = vmul.f32 %v1798, %v2166
        %v2896 = vmul.f32 %v1896, %v2264
        %v2897 = vmul.f32 %v1800, %v2168
        %v2898 = vmul.f32 %v1898, %v2266
        %v2899 = vmul.f32 %v1803, %v2131
        %v2900 = vmul.f32 %v1901, %v2229
        %v2901 = vmul.f32 %v1805, %v2133
        %v2902 = vmul.f32 %v1903, %v2231
        %v2903 = vmul.f32 %v1808, %v2136
        %v2904 = vmul.f32 %v1906, %v2234
        %v2905 = vmul.f32 %v1810, %v2138
        %v2906 = vmul.f32 %v1908, %v2236
        %v2907 = vmul.f32 %v1813, %v2141
        %v2908 = vmul.f32 %v1911, %v2239
        %v2909 = vmul.f32 %v1815, %v2143
        %v2910 = vmul.f32 %v1913, %v2241
        %v2911 = vmul.f32 %v1818, %v2146
        %v2912 = vmul.f32 %v1916, %v2244
        %v2913 = vmul.f32 %v1820, %v2148
        %v2914 = vmul.f32 %v1918, %v2246
        %v2915 = vpack.c.bf16 %v2885, %v2883
        %v2916 = vpack.c.bf16 %v2886, %v2884
        %v2917 = vpack.c.bf16 %v2889, %v2887
        %v2918 = vpack.c.bf16 %v2890, %v2888
        %v2919 = vpack.c.bf16 %v2893, %v2891
        %v2920 = vpack.c.bf16 %v2894, %v2892
        %v2921 = vpack.c.bf16 %v2897, %v2895
        %v2922 = vpack.c.bf16 %v2898, %v2896
        %v2923 = vpack.c.bf16 %v2901, %v2899
        %v2924 = vpack.c.bf16 %v2902, %v2900
        %v2925 = vpack.c.bf16 %v2905, %v2903
        %v2926 = vpack.c.bf16 %v2906, %v2904
        %v2927 = vpack.c.bf16 %v2909, %v2907
        %v2928 = vpack.c.bf16 %v2910, %v2908
        %v2929 = vpack.c.bf16 %v2913, %v2911
        %v2930 = vpack.c.bf16 %v2914, %v2912
        %v2932 = vsel %vm1019, %v2916, 0
        %v2935 = vsel %vm1019, %v2918, 0
        %v2938 = vsel %vm1019, %v2920, 0
        %v2941 = vsel %vm1019, %v2922, 0
        %v2944 = vsel %vm1019, %v2924, 0
        %v2947 = vsel %vm1019, %v2926, 0
        %v2950 = vsel %vm1019, %v2928, 0
        %v2953 = vsel %vm1019, %v2930, 0
        %2955 = vmatpush.bf16.msra.mxu0 %v2744
        %2956 = vmatpush.bf16.msra.mxu0 %v2743
        %2957 = vmatpush.bf16.msra.mxu0 %v2742
        %2958 = vmatpush.bf16.msra.mxu0 %v2741
        %2959 = vmatpush.bf16.msra.mxu0 %v2740
        %2960 = vmatpush.bf16.msra.mxu0 %v2739
        %2961 = vmatpush.bf16.msra.mxu0 %v2738
        %2962 = vmatpush.bf16.msra.mxu0 %v2737
        %2963 = vmatmul.bf16.gmra.mxu0 %v2915
        %v2964 = vpop.f32.mrf.mxu0
        %v2965 = vadd.f32 0.0, %v2964
        %v2966 = vpop.f32.mrf.mxu0
        %v2967 = vadd.f32 0.0, %v2966
        %2968 = vmatmul.bf16.gmra.mxu0 %v2917
        %v2969 = vpop.f32.mrf.mxu0
        %v2970 = vadd.f32 0.0, %v2969
        %v2971 = vpop.f32.mrf.mxu0
        %v2972 = vadd.f32 0.0, %v2971
        %2973 = vmatmul.bf16.gmra.mxu0 %v2919
        %v2974 = vpop.f32.mrf.mxu0
        %v2975 = vadd.f32 0.0, %v2974
        %v2976 = vpop.f32.mrf.mxu0
        %v2977 = vadd.f32 0.0, %v2976
        %2978 = vmatmul.bf16.gmra.mxu0 %v2921
        %v2979 = vpop.f32.mrf.mxu0
        %v2980 = vadd.f32 0.0, %v2979
        %v2981 = vpop.f32.mrf.mxu0
        %v2982 = vadd.f32 0.0, %v2981
        %2983 = vmatmul.bf16.gmra.mxu0 %v2923
        %v2984 = vpop.f32.mrf.mxu0
        %v2985 = vadd.f32 0.0, %v2984
        %v2986 = vpop.f32.mrf.mxu0
        %v2987 = vadd.f32 0.0, %v2986
        %2988 = vmatmul.bf16.gmra.mxu0 %v2925
        %v2989 = vpop.f32.mrf.mxu0
        %v2990 = vadd.f32 0.0, %v2989
        %v2991 = vpop.f32.mrf.mxu0
        %v2992 = vadd.f32 0.0, %v2991
        %2993 = vmatmul.bf16.gmra.mxu0 %v2927
        %v2994 = vpop.f32.mrf.mxu0
        %v2995 = vadd.f32 0.0, %v2994
        %v2996 = vpop.f32.mrf.mxu0
        %v2997 = vadd.f32 0.0, %v2996
        %2998 = vmatmul.bf16.gmra.mxu0 %v2929
        %v2999 = vpop.f32.mrf.mxu0
        %v3000 = vadd.f32 0.0, %v2999
        %v3001 = vpop.f32.mrf.mxu0
        %v3002 = vadd.f32 0.0, %v3001
        %3003 = vdwg.mxu0
        %3004 = vmatpush.bf16.msra.mxu0 0
        %3005 = vmatpush.bf16.msra.mxu0 0
        %3006 = vmatpush.bf16.msra.mxu0 0
        %3007 = vmatpush.bf16.msra.mxu0 0
        %3008 = vmatpush.bf16.msra.mxu0 %v2748
        %3009 = vmatpush.bf16.msra.mxu0 %v2747
        %3010 = vmatpush.bf16.msra.mxu0 %v2746
        %3011 = vmatpush.bf16.msra.mxu0 %v2745
        %3012 = vmatmul.bf16.gmra.mxu0 %v2932
        %v3013 = vpop.f32.mrf.mxu0
        %v3014 = vadd.f32 %v2965, %v3013
        %v3015 = vpop.f32.mrf.mxu0
        %v3016 = vadd.f32 %v2967, %v3015
        %3017 = vmatmul.bf16.gmra.mxu0 %v2935
        %v3018 = vpop.f32.mrf.mxu0
        %v3019 = vadd.f32 %v2970, %v3018
        %v3020 = vpop.f32.mrf.mxu0
        %v3021 = vadd.f32 %v2972, %v3020
        %3022 = vmatmul.bf16.gmra.mxu0 %v2938
        %v3023 = vpop.f32.mrf.mxu0
        %v3024 = vadd.f32 %v2975, %v3023
        %v3025 = vpop.f32.mrf.mxu0
        %v3026 = vadd.f32 %v2977, %v3025
        %3027 = vmatmul.bf16.gmra.mxu0 %v2941
        %v3028 = vpop.f32.mrf.mxu0
        %v3029 = vadd.f32 %v2980, %v3028
        %v3030 = vpop.f32.mrf.mxu0
        %v3031 = vadd.f32 %v2982, %v3030
        %3032 = vmatmul.bf16.gmra.mxu0 %v2944
        %v3033 = vpop.f32.mrf.mxu0
        %v3034 = vadd.f32 %v2985, %v3033
        %v3035 = vpop.f32.mrf.mxu0
        %v3036 = vadd.f32 %v2987, %v3035
        %3037 = vmatmul.bf16.gmra.mxu0 %v2947
        %v3038 = vpop.f32.mrf.mxu0
        %v3039 = vadd.f32 %v2990, %v3038
        %v3040 = vpop.f32.mrf.mxu0
        %v3041 = vadd.f32 %v2992, %v3040
        %3042 = vmatmul.bf16.gmra.mxu0 %v2950
        %v3043 = vpop.f32.mrf.mxu0
        %v3044 = vadd.f32 %v2995, %v3043
        %v3045 = vpop.f32.mrf.mxu0
        %v3046 = vadd.f32 %v2997, %v3045
        %3047 = vmatmul.bf16.gmra.mxu0 %v2953
        %v3048 = vpop.f32.mrf.mxu0
        %v3049 = vadd.f32 %v3000, %v3048
        %v3050 = vpop.f32.mrf.mxu0
        %v3051 = vadd.f32 %v3002, %v3050
        %3052 = vdwg.mxu0
        %v3053 = vmax.f32 %v2844, %v3014
        %v3054 = vmax.f32 %v2846, %v3016
        %v3055 = vmax.f32 %v2849, %v3019
        %v3056 = vmax.f32 %v2851, %v3021
        %v3057 = vmax.f32 %v2854, %v3024
        %v3058 = vmax.f32 %v2856, %v3026
        %v3059 = vmax.f32 %v2859, %v3029
        %v3060 = vmax.f32 %v2861, %v3031
        %v3061 = vmax.f32 %v2864, %v3034
        %v3062 = vmax.f32 %v2866, %v3036
        %v3063 = vmax.f32 %v2869, %v3039
        %v3064 = vmax.f32 %v2871, %v3041
        %v3065 = vmax.f32 %v2874, %v3044
        %v3066 = vmax.f32 %v2876, %v3046
        %v3067 = vmax.f32 %v2879, %v3049
        %v3068 = vmax.f32 %v2881, %v3051
        %v3069 = vsub.f32 %v2844, %v3053
        %v3070 = vsub.f32 %v2846, %v3054
        %v3071 = vsub.f32 %v2849, %v3055
        %v3072 = vsub.f32 %v2851, %v3056
        %v3073 = vsub.f32 %v2854, %v3057
        %v3074 = vsub.f32 %v2856, %v3058
        %v3075 = vsub.f32 %v2859, %v3059
        %v3076 = vsub.f32 %v2861, %v3060
        %v3077 = vsub.f32 %v2864, %v3061
        %v3078 = vsub.f32 %v2866, %v3062
        %v3079 = vsub.f32 %v2869, %v3063
        %v3080 = vsub.f32 %v2871, %v3064
        %v3081 = vsub.f32 %v2874, %v3065
        %v3082 = vsub.f32 %v2876, %v3066
        %v3083 = vsub.f32 %v2879, %v3067
        %v3084 = vsub.f32 %v2881, %v3068
        %v3085 = vmul.f32 %v3069, 1.442695
        %v3086 = vpow.pop %v3085
        %v3087 = vmul.f32 %v3070, 1.442695
        %v3088 = vpow.pop %v3087
        %v3089 = vmul.f32 %v3071, 1.442695
        %v3090 = vpow.pop %v3089
        %v3091 = vmul.f32 %v3072, 1.442695
        %v3092 = vpow.pop %v3091
        %v3093 = vmul.f32 %v3073, 1.442695
        %v3094 = vpow.pop %v3093
        %v3095 = vmul.f32 %v3074, 1.442695
        %v3096 = vpow.pop %v3095
        %v3097 = vmul.f32 %v3075, 1.442695
        %v3098 = vpow.pop %v3097
        %v3099 = vmul.f32 %v3076, 1.442695
        %v3100 = vpow.pop %v3099
        %v3101 = vmul.f32 %v3077, 1.442695
        %v3102 = vpow.pop %v3101
        %v3103 = vmul.f32 %v3078, 1.442695
        %v3104 = vpow.pop %v3103
        %v3105 = vmul.f32 %v3079, 1.442695
        %v3106 = vpow.pop %v3105
        %v3107 = vmul.f32 %v3080, 1.442695
        %v3108 = vpow.pop %v3107
        %v3109 = vmul.f32 %v3081, 1.442695
        %v3110 = vpow.pop %v3109
        %v3111 = vmul.f32 %v3082, 1.442695
        %v3112 = vpow.pop %v3111
        %v3113 = vmul.f32 %v3083, 1.442695
        %v3114 = vpow.pop %v3113
        %v3115 = vmul.f32 %v3084, 1.442695
        %v3116 = vpow.pop %v3115
        %v3117 = vsub.f32 %v3014, %v3053
        %v3118 = vsub.f32 %v3016, %v3054
        %v3119 = vsub.f32 %v3019, %v3055
        %v3120 = vsub.f32 %v3021, %v3056
        %v3121 = vsub.f32 %v3024, %v3057
        %v3122 = vsub.f32 %v3026, %v3058
        %v3123 = vsub.f32 %v3029, %v3059
        %v3124 = vsub.f32 %v3031, %v3060
        %v3125 = vsub.f32 %v3034, %v3061
        %v3126 = vsub.f32 %v3036, %v3062
        %v3127 = vsub.f32 %v3039, %v3063
        %v3128 = vsub.f32 %v3041, %v3064
        %v3129 = vsub.f32 %v3044, %v3065
        %v3130 = vsub.f32 %v3046, %v3066
        %v3131 = vsub.f32 %v3049, %v3067
        %v3132 = vsub.f32 %v3051, %v3068
        %v3133 = vmul.f32 %v3117, 1.442695
        %v3134 = vpow.pop %v3133
        %v3135 = vmul.f32 %v3118, 1.442695
        %v3136 = vpow.pop %v3135
        %v3137 = vmul.f32 %v3119, 1.442695
        %v3138 = vpow.pop %v3137
        %v3139 = vmul.f32 %v3120, 1.442695
        %v3140 = vpow.pop %v3139
        %v3141 = vmul.f32 %v3121, 1.442695
        %v3142 = vpow.pop %v3141
        %v3143 = vmul.f32 %v3122, 1.442695
        %v3144 = vpow.pop %v3143
        %v3145 = vmul.f32 %v3123, 1.442695
        %v3146 = vpow.pop %v3145
        %v3147 = vmul.f32 %v3124, 1.442695
        %v3148 = vpow.pop %v3147
        %v3149 = vmul.f32 %v3125, 1.442695
        %v3150 = vpow.pop %v3149
        %v3151 = vmul.f32 %v3126, 1.442695
        %v3152 = vpow.pop %v3151
        %v3153 = vmul.f32 %v3127, 1.442695
        %v3154 = vpow.pop %v3153
        %v3155 = vmul.f32 %v3128, 1.442695
        %v3156 = vpow.pop %v3155
        %v3157 = vmul.f32 %v3129, 1.442695
        %v3158 = vpow.pop %v3157
        %v3159 = vmul.f32 %v3130, 1.442695
        %v3160 = vpow.pop %v3159
        %v3161 = vmul.f32 %v3131, 1.442695
        %v3162 = vpow.pop %v3161
        %v3163 = vmul.f32 %v3132, 1.442695
        %v3164 = vpow.pop %v3163
        %v3165 = vadd.f32 %v3086, %v3134
        %v3166 = vadd.f32 %v3088, %v3136
        %v3167 = vadd.f32 %v3090, %v3138
        %v3168 = vadd.f32 %v3092, %v3140
        %v3169 = vadd.f32 %v3094, %v3142
        %v3170 = vadd.f32 %v3096, %v3144
        %v3171 = vadd.f32 %v3098, %v3146
        %v3172 = vadd.f32 %v3100, %v3148
        %v3173 = vadd.f32 %v3102, %v3150
        %v3174 = vadd.f32 %v3104, %v3152
        %v3175 = vadd.f32 %v3106, %v3154
        %v3176 = vadd.f32 %v3108, %v3156
        %v3177 = vadd.f32 %v3110, %v3158
        %v3178 = vadd.f32 %v3112, %v3160
        %v3179 = vadd.f32 %v3114, %v3162
        %v3180 = vadd.f32 %v3116, %v3164
        %v3181 = vrcp.pop %v3165
        %v3182 = vmul.f32 %v3165, %v3181
        %v3183 = vsub.f32 1.0, %v3182
        %v3184 = vmul.f32 %v3181, %v3183
        %v3185 = vadd.f32 %v3181, %v3184
        %vm3186 = vweird.f32 %v3165
        %vm3187 = vweird.f32 %v3181
        %vm3188 = vmor %vm3186, %vm3187
        %v3189 = vsel %vm3188, %v3181, %v3185
        %v3190 = vand.u32 2147483647, %v3165
        %vm3191 = vcmp.eq.f32.partialorder %v3190, 8.507059e+37
        %v3192 = vand.u32 %v3165, 2147483648
        %v3193 = vor.u32 1.1754944e-38, %v3192
        %v3194 = vsel %vm3191, %v3193, %v3189
        %v3195 = vmul.f32 1.0, %v3194
        %v3196 = vrcp.pop %v3166
        %v3197 = vmul.f32 %v3166, %v3196
        %v3198 = vsub.f32 1.0, %v3197
        %v3199 = vmul.f32 %v3196, %v3198
        %v3200 = vadd.f32 %v3196, %v3199
        %vm3201 = vweird.f32 %v3166
        %vm3202 = vweird.f32 %v3196
        %vm3203 = vmor %vm3201, %vm3202
        %v3204 = vsel %vm3203, %v3196, %v3200
        %v3205 = vand.u32 2147483647, %v3166
        %vm3206 = vcmp.eq.f32.partialorder %v3205, 8.507059e+37
        %v3207 = vand.u32 %v3166, 2147483648
        %v3208 = vor.u32 1.1754944e-38, %v3207
        %v3209 = vsel %vm3206, %v3208, %v3204
        %v3210 = vmul.f32 1.0, %v3209
        %v3211 = vrcp.pop %v3167
        %v3212 = vmul.f32 %v3167, %v3211
        %v3213 = vsub.f32 1.0, %v3212
        %v3214 = vmul.f32 %v3211, %v3213
        %v3215 = vadd.f32 %v3211, %v3214
        %vm3216 = vweird.f32 %v3167
        %vm3217 = vweird.f32 %v3211
        %vm3218 = vmor %vm3216, %vm3217
        %v3219 = vsel %vm3218, %v3211, %v3215
        %v3220 = vand.u32 2147483647, %v3167
        %vm3221 = vcmp.eq.f32.partialorder %v3220, 8.507059e+37
        %v3222 = vand.u32 %v3167, 2147483648
        %v3223 = vor.u32 1.1754944e-38, %v3222
        %v3224 = vsel %vm3221, %v3223, %v3219
        %v3225 = vmul.f32 1.0, %v3224
        %v3226 = vrcp.pop %v3168
        %v3227 = vmul.f32 %v3168, %v3226
        %v3228 = vsub.f32 1.0, %v3227
        %v3229 = vmul.f32 %v3226, %v3228
        %v3230 = vadd.f32 %v3226, %v3229
        %vm3231 = vweird.f32 %v3168
        %vm3232 = vweird.f32 %v3226
        %vm3233 = vmor %vm3231, %vm3232
        %v3234 = vsel %vm3233, %v3226, %v3230
        %v3235 = vand.u32 2147483647, %v3168
        %vm3236 = vcmp.eq.f32.partialorder %v3235, 8.507059e+37
        %v3237 = vand.u32 %v3168, 2147483648
        %v3238 = vor.u32 1.1754944e-38, %v3237
        %v3239 = vsel %vm3236, %v3238, %v3234
        %v3240 = vmul.f32 1.0, %v3239
        %v3241 = vrcp.pop %v3169
        %v3242 = vmul.f32 %v3169, %v3241
        %v3243 = vsub.f32 1.0, %v3242
        %v3244 = vmul.f32 %v3241, %v3243
        %v3245 = vadd.f32 %v3241, %v3244
        %vm3246 = vweird.f32 %v3169
        %vm3247 = vweird.f32 %v3241
        %vm3248 = vmor %vm3246, %vm3247
        %v3249 = vsel %vm3248, %v3241, %v3245
        %v3250 = vand.u32 2147483647, %v3169
        %vm3251 = vcmp.eq.f32.partialorder %v3250, 8.507059e+37
        %v3252 = vand.u32 %v3169, 2147483648
        %v3253 = vor.u32 1.1754944e-38, %v3252
        %v3254 = vsel %vm3251, %v3253, %v3249
        %v3255 = vmul.f32 1.0, %v3254
        %v3256 = vrcp.pop %v3170
        %v3257 = vmul.f32 %v3170, %v3256
        %v3258 = vsub.f32 1.0, %v3257
        %v3259 = vmul.f32 %v3256, %v3258
        %v3260 = vadd.f32 %v3256, %v3259
        %vm3261 = vweird.f32 %v3170
        %vm3262 = vweird.f32 %v3256
        %vm3263 = vmor %vm3261, %vm3262
        %v3264 = vsel %vm3263, %v3256, %v3260
        %v3265 = vand.u32 2147483647, %v3170
        %vm3266 = vcmp.eq.f32.partialorder %v3265, 8.507059e+37
        %v3267 = vand.u32 %v3170, 2147483648
        %v3268 = vor.u32 1.1754944e-38, %v3267
        %v3269 = vsel %vm3266, %v3268, %v3264
        %v3270 = vmul.f32 1.0, %v3269
        %v3271 = vrcp.pop %v3171
        %v3272 = vmul.f32 %v3171, %v3271
        %v3273 = vsub.f32 1.0, %v3272
        %v3274 = vmul.f32 %v3271, %v3273
        %v3275 = vadd.f32 %v3271, %v3274
        %vm3276 = vweird.f32 %v3171
        %vm3277 = vweird.f32 %v3271
        %vm3278 = vmor %vm3276, %vm3277
        %v3279 = vsel %vm3278, %v3271, %v3275
        %v3280 = vand.u32 2147483647, %v3171
        %vm3281 = vcmp.eq.f32.partialorder %v3280, 8.507059e+37
        %v3282 = vand.u32 %v3171, 2147483648
        %v3283 = vor.u32 1.1754944e-38, %v3282
        %v3284 = vsel %vm3281, %v3283, %v3279
        %v3285 = vmul.f32 1.0, %v3284
        %v3286 = vrcp.pop %v3172
        %v3287 = vmul.f32 %v3172, %v3286
        %v3288 = vsub.f32 1.0, %v3287
        %v3289 = vmul.f32 %v3286, %v3288
        %v3290 = vadd.f32 %v3286, %v3289
        %vm3291 = vweird.f32 %v3172
        %vm3292 = vweird.f32 %v3286
        %vm3293 = vmor %vm3291, %vm3292
        %v3294 = vsel %vm3293, %v3286, %v3290
        %v3295 = vand.u32 2147483647, %v3172
        %vm3296 = vcmp.eq.f32.partialorder %v3295, 8.507059e+37
        %v3297 = vand.u32 %v3172, 2147483648
        %v3298 = vor.u32 1.1754944e-38, %v3297
        %v3299 = vsel %vm3296, %v3298, %v3294
        %v3300 = vmul.f32 1.0, %v3299
        %v3301 = vrcp.pop %v3173
        %v3302 = vmul.f32 %v3173, %v3301
        %v3303 = vsub.f32 1.0, %v3302
        %v3304 = vmul.f32 %v3301, %v3303
        %v3305 = vadd.f32 %v3301, %v3304
        %vm3306 = vweird.f32 %v3173
        %vm3307 = vweird.f32 %v3301
        %vm3308 = vmor %vm3306, %vm3307
        %v3309 = vsel %vm3308, %v3301, %v3305
        %v3310 = vand.u32 2147483647, %v3173
        %vm3311 = vcmp.eq.f32.partialorder %v3310, 8.507059e+37
        %v3312 = vand.u32 %v3173, 2147483648
        %v3313 = vor.u32 1.1754944e-38, %v3312
        %v3314 = vsel %vm3311, %v3313, %v3309
        %v3315 = vmul.f32 1.0, %v3314
        %v3316 = vrcp.pop %v3174
        %v3317 = vmul.f32 %v3174, %v3316
        %v3318 = vsub.f32 1.0, %v3317
        %v3319 = vmul.f32 %v3316, %v3318
        %v3320 = vadd.f32 %v3316, %v3319
        %vm3321 = vweird.f32 %v3174
        %vm3322 = vweird.f32 %v3316
        %vm3323 = vmor %vm3321, %vm3322
        %v3324 = vsel %vm3323, %v3316, %v3320
        %v3325 = vand.u32 2147483647, %v3174
        %vm3326 = vcmp.eq.f32.partialorder %v3325, 8.507059e+37
        %v3327 = vand.u32 %v3174, 2147483648
        %v3328 = vor.u32 1.1754944e-38, %v3327
        %v3329 = vsel %vm3326, %v3328, %v3324
        %v3330 = vmul.f32 1.0, %v3329
        %v3331 = vrcp.pop %v3175
        %v3332 = vmul.f32 %v3175, %v3331
        %v3333 = vsub.f32 1.0, %v3332
        %v3334 = vmul.f32 %v3331, %v3333
        %v3335 = vadd.f32 %v3331, %v3334
        %vm3336 = vweird.f32 %v3175
        %vm3337 = vweird.f32 %v3331
        %vm3338 = vmor %vm3336, %vm3337
        %v3339 = vsel %vm3338, %v3331, %v3335
        %v3340 = vand.u32 2147483647, %v3175
        %vm3341 = vcmp.eq.f32.partialorder %v3340, 8.507059e+37
        %v3342 = vand.u32 %v3175, 2147483648
        %v3343 = vor.u32 1.1754944e-38, %v3342
        %v3344 = vsel %vm3341, %v3343, %v3339
        %v3345 = vmul.f32 1.0, %v3344
        %v3346 = vrcp.pop %v3176
        %v3347 = vmul.f32 %v3176, %v3346
        %v3348 = vsub.f32 1.0, %v3347
        %v3349 = vmul.f32 %v3346, %v3348
        %v3350 = vadd.f32 %v3346, %v3349
        %vm3351 = vweird.f32 %v3176
        %vm3352 = vweird.f32 %v3346
        %vm3353 = vmor %vm3351, %vm3352
        %v3354 = vsel %vm3353, %v3346, %v3350
        %v3355 = vand.u32 2147483647, %v3176
        %vm3356 = vcmp.eq.f32.partialorder %v3355, 8.507059e+37
        %v3357 = vand.u32 %v3176, 2147483648
        %v3358 = vor.u32 1.1754944e-38, %v3357
        %v3359 = vsel %vm3356, %v3358, %v3354
        %v3360 = vmul.f32 1.0, %v3359
        %v3361 = vrcp.pop %v3177
        %v3362 = vmul.f32 %v3177, %v3361
        %v3363 = vsub.f32 1.0, %v3362
        %v3364 = vmul.f32 %v3361, %v3363
        %v3365 = vadd.f32 %v3361, %v3364
        %vm3366 = vweird.f32 %v3177
        %vm3367 = vweird.f32 %v3361
        %vm3368 = vmor %vm3366, %vm3367
        %v3369 = vsel %vm3368, %v3361, %v3365
        %v3370 = vand.u32 2147483647, %v3177
        %vm3371 = vcmp.eq.f32.partialorder %v3370, 8.507059e+37
        %v3372 = vand.u32 %v3177, 2147483648
        %v3373 = vor.u32 1.1754944e-38, %v3372
        %v3374 = vsel %vm3371, %v3373, %v3369
        %v3375 = vmul.f32 1.0, %v3374
        %v3376 = vrcp.pop %v3178
        %v3377 = vmul.f32 %v3178, %v3376
        %v3378 = vsub.f32 1.0, %v3377
        %v3379 = vmul.f32 %v3376, %v3378
        %v3380 = vadd.f32 %v3376, %v3379
        %vm3381 = vweird.f32 %v3178
        %vm3382 = vweird.f32 %v3376
        %vm3383 = vmor %vm3381, %vm3382
        %v3384 = vsel %vm3383, %v3376, %v3380
        %v3385 = vand.u32 2147483647, %v3178
        %vm3386 = vcmp.eq.f32.partialorder %v3385, 8.507059e+37
        %v3387 = vand.u32 %v3178, 2147483648
        %v3388 = vor.u32 1.1754944e-38, %v3387
        %v3389 = vsel %vm3386, %v3388, %v3384
        %v3390 = vmul.f32 1.0, %v3389
        %v3391 = vrcp.pop %v3179
        %v3392 = vmul.f32 %v3179, %v3391
        %v3393 = vsub.f32 1.0, %v3392
        %v3394 = vmul.f32 %v3391, %v3393
        %v3395 = vadd.f32 %v3391, %v3394
        %vm3396 = vweird.f32 %v3179
        %vm3397 = vweird.f32 %v3391
        %vm3398 = vmor %vm3396, %vm3397
        %v3399 = vsel %vm3398, %v3391, %v3395
        %v3400 = vand.u32 2147483647, %v3179
        %vm3401 = vcmp.eq.f32.partialorder %v3400, 8.507059e+37
        %v3402 = vand.u32 %v3179, 2147483648
        %v3403 = vor.u32 1.1754944e-38, %v3402
        %v3404 = vsel %vm3401, %v3403, %v3399
        %v3405 = vmul.f32 1.0, %v3404
        %v3406 = vrcp.pop %v3180
        %v3407 = vmul.f32 %v3180, %v3406
        %v3408 = vsub.f32 1.0, %v3407
        %v3409 = vmul.f32 %v3406, %v3408
        %v3410 = vadd.f32 %v3406, %v3409
        %vm3411 = vweird.f32 %v3180
        %vm3412 = vweird.f32 %v3406
        %vm3413 = vmor %vm3411, %vm3412
        %v3414 = vsel %vm3413, %v3406, %v3410
        %v3415 = vand.u32 2147483647, %v3180
        %vm3416 = vcmp.eq.f32.partialorder %v3415, 8.507059e+37
        %v3417 = vand.u32 %v3180, 2147483648
        %v3418 = vor.u32 1.1754944e-38, %v3417
        %v3419 = vsel %vm3416, %v3418, %v3414
        %v3420 = vmul.f32 1.0, %v3419
        %v3421 = vmul.f32 %v3086, %v3195
        %v3422 = vmul.f32 %v3088, %v3210
        %v3423 = vmul.f32 %v3090, %v3225
        %v3424 = vmul.f32 %v3092, %v3240
        %v3425 = vmul.f32 %v3094, %v3255
        %v3426 = vmul.f32 %v3096, %v3270
        %v3427 = vmul.f32 %v3098, %v3285
        %v3428 = vmul.f32 %v3100, %v3300
        %v3429 = vmul.f32 %v3102, %v3315
        %v3430 = vmul.f32 %v3104, %v3330
        %v3431 = vmul.f32 %v3106, %v3345
        %v3432 = vmul.f32 %v3108, %v3360
        %v3433 = vmul.f32 %v3110, %v3375
        %v3434 = vmul.f32 %v3112, %v3390
        %v3435 = vmul.f32 %v3114, %v3405
        %v3436 = vmul.f32 %v3116, %v3420
        %v3437 = vpack.c.bf16 %v3422, %v3421
        %v3438 = vpack.c.bf16 %v3424, %v3423
        %v3439 = vpack.c.bf16 %v3426, %v3425
        %v3440 = vpack.c.bf16 %v3428, %v3427
        %v3441 = vpack.c.bf16 %v3430, %v3429
        %v3442 = vpack.c.bf16 %v3432, %v3431
        %v3443 = vpack.c.bf16 %v3434, %v3433
        %v3444 = vpack.c.bf16 %v3436, %v3435
        %v3446 = vunpack.c.l.b16 %v2640
        %v3447 = vunpack.c.h.b16 %v2640
        %v3448 = vpack.c.b16 %v3446, %v3446
        %v3449 = vpack.c.b16 %v3447, %v3447
        %vm3450 = vcmask 64512
        %v3452 = vsel %vm3450, %v3437, 0
        %v3455 = vsel %vm3450, %v3438, 0
        %v3458 = vsel %vm3450, %v3439, 0
        %v3461 = vsel %vm3450, %v3440, 0
        %v3464 = vsel %vm3450, %v3441, 0
        %v3467 = vsel %vm3450, %v3442, 0
        %v3470 = vsel %vm3450, %v3443, 0
        %v3473 = vsel %vm3450, %v3444, 0
        %vm3475 = vcmask 1043456
        %v3477 = vsel %vm3475, %v3448, 0
        %v3480 = vsel %vm3475, %v3449, 0
        %3482 = vmatpush.bf16.msra.mxu0 0
        %3483 = vmatpush.bf16.msra.mxu0 0
        %3484 = vmatpush.bf16.msra.mxu0 0
        %3485 = vmatpush.bf16.msra.mxu0 0
        %3486 = vmatpush.bf16.msra.mxu0 0
        %3487 = vmatpush.bf16.msra.mxu0 0
        %3488 = vmatpush.bf16.msra.mxu0 0
        %3489 = vmatpush.bf16.msra.mxu0 %v3477
        %3490 = vmatmul.bf16.gmra.mxu0 %v3452
        %v3491 = vpop.f32.mrf.mxu0
        %v3492 = vadd.f32 0.0, %v3491
        %v3493 = vpop.f32.mrf.mxu0
        %v3494 = vadd.f32 0.0, %v3493
        %3495 = vmatmul.bf16.gmra.mxu0 %v3455
        %v3496 = vpop.f32.mrf.mxu0
        %v3497 = vadd.f32 0.0, %v3496
        %v3498 = vpop.f32.mrf.mxu0
        %v3499 = vadd.f32 0.0, %v3498
        %3500 = vmatmul.bf16.gmra.mxu0 %v3458
        %v3501 = vpop.f32.mrf.mxu0
        %v3502 = vadd.f32 0.0, %v3501
        %v3503 = vpop.f32.mrf.mxu0
        %v3504 = vadd.f32 0.0, %v3503
        %3505 = vmatmul.bf16.gmra.mxu0 %v3461
        %v3506 = vpop.f32.mrf.mxu0
        %v3507 = vadd.f32 0.0, %v3506
        %v3508 = vpop.f32.mrf.mxu0
        %v3509 = vadd.f32 0.0, %v3508
        %3510 = vmatmul.bf16.gmra.mxu0 %v3464
        %v3511 = vpop.f32.mrf.mxu0
        %v3512 = vadd.f32 0.0, %v3511
        %v3513 = vpop.f32.mrf.mxu0
        %v3514 = vadd.f32 0.0, %v3513
        %3515 = vmatmul.bf16.gmra.mxu0 %v3467
        %v3516 = vpop.f32.mrf.mxu0
        %v3517 = vadd.f32 0.0, %v3516
        %v3518 = vpop.f32.mrf.mxu0
        %v3519 = vadd.f32 0.0, %v3518
        %3520 = vmatmul.bf16.gmra.mxu0 %v3470
        %v3521 = vpop.f32.mrf.mxu0
        %v3522 = vadd.f32 0.0, %v3521
        %v3523 = vpop.f32.mrf.mxu0
        %v3524 = vadd.f32 0.0, %v3523
        %3525 = vmatmul.bf16.gmra.mxu0 %v3473
        %v3526 = vpop.f32.mrf.mxu0
        %v3527 = vadd.f32 0.0, %v3526
        %v3528 = vpop.f32.mrf.mxu0
        %v3529 = vadd.f32 0.0, %v3528
        %3530 = vdwg.mxu0
        %3531 = vmatpush.bf16.msra.mxu0 0
        %3532 = vmatpush.bf16.msra.mxu0 0
        %3533 = vmatpush.bf16.msra.mxu0 0
        %3534 = vmatpush.bf16.msra.mxu0 0
        %3535 = vmatpush.bf16.msra.mxu0 0
        %3536 = vmatpush.bf16.msra.mxu0 0
        %3537 = vmatpush.bf16.msra.mxu0 0
        %3538 = vmatpush.bf16.msra.mxu0 %v3480
        %3539 = vmatmul.bf16.gmra.mxu0 %v3452
        %v3540 = vpop.f32.mrf.mxu0
        %v3541 = vadd.f32 0.0, %v3540
        %v3542 = vpop.f32.mrf.mxu0
        %v3543 = vadd.f32 0.0, %v3542
        %3544 = vmatmul.bf16.gmra.mxu0 %v3455
        %v3545 = vpop.f32.mrf.mxu0
        %v3546 = vadd.f32 0.0, %v3545
        %v3547 = vpop.f32.mrf.mxu0
        %v3548 = vadd.f32 0.0, %v3547
        %3549 = vmatmul.bf16.gmra.mxu0 %v3458
        %v3550 = vpop.f32.mrf.mxu0
        %v3551 = vadd.f32 0.0, %v3550
        %v3552 = vpop.f32.mrf.mxu0
        %v3553 = vadd.f32 0.0, %v3552
        %3554 = vmatmul.bf16.gmra.mxu0 %v3461
        %v3555 = vpop.f32.mrf.mxu0
        %v3556 = vadd.f32 0.0, %v3555
        %v3557 = vpop.f32.mrf.mxu0
        %v3558 = vadd.f32 0.0, %v3557
        %3559 = vmatmul.bf16.gmra.mxu0 %v3464
        %v3560 = vpop.f32.mrf.mxu0
        %v3561 = vadd.f32 0.0, %v3560
        %v3562 = vpop.f32.mrf.mxu0
        %v3563 = vadd.f32 0.0, %v3562
        %3564 = vmatmul.bf16.gmra.mxu0 %v3467
        %v3565 = vpop.f32.mrf.mxu0
        %v3566 = vadd.f32 0.0, %v3565
        %v3567 = vpop.f32.mrf.mxu0
        %v3568 = vadd.f32 0.0, %v3567
        %3569 = vmatmul.bf16.gmra.mxu0 %v3470
        %v3570 = vpop.f32.mrf.mxu0
        %v3571 = vadd.f32 0.0, %v3570
        %v3572 = vpop.f32.mrf.mxu0
        %v3573 = vadd.f32 0.0, %v3572
        %3574 = vmatmul.bf16.gmra.mxu0 %v3473
        %v3575 = vpop.f32.mrf.mxu0
        %v3576 = vadd.f32 0.0, %v3575
        %v3577 = vpop.f32.mrf.mxu0
        %v3578 = vadd.f32 0.0, %v3577
        %3579 = vdwg.mxu0
        %v3580 = vmul.f32 %v3492, %v2479
        %v3581 = vmul.f32 %v3541, %v2577
        %v3582 = vmul.f32 %v3494, %v2481
        %v3583 = vmul.f32 %v3543, %v2579
        %v3584 = vmul.f32 %v3497, %v2484
        %v3585 = vmul.f32 %v3546, %v2582
        %v3586 = vmul.f32 %v3499, %v2486
        %v3587 = vmul.f32 %v3548, %v2584
        %v3588 = vmul.f32 %v3502, %v2489
        %v3589 = vmul.f32 %v3551, %v2587
        %v3590 = vmul.f32 %v3504, %v2491
        %v3591 = vmul.f32 %v3553, %v2589
        %v3592 = vmul.f32 %v3507, %v2494
        %v3593 = vmul.f32 %v3556, %v2592
        %v3594 = vmul.f32 %v3509, %v2496
        %v3595 = vmul.f32 %v3558, %v2594
        %v3596 = vmul.f32 %v3512, %v2499
        %v3597 = vmul.f32 %v3561, %v2597
        %v3598 = vmul.f32 %v3514, %v2501
        %v3599 = vmul.f32 %v3563, %v2599
        %v3600 = vmul.f32 %v3517, %v2504
        %v3601 = vmul.f32 %v3566, %v2602
        %v3602 = vmul.f32 %v3519, %v2506
        %v3603 = vmul.f32 %v3568, %v2604
        %v3604 = vmul.f32 %v3522, %v2509
        %v3605 = vmul.f32 %v3571, %v2607
        %v3606 = vmul.f32 %v3524, %v2511
        %v3607 = vmul.f32 %v3573, %v2609
        %v3608 = vmul.f32 %v3527, %v2514
        %v3609 = vmul.f32 %v3576, %v2612
        %v3610 = vmul.f32 %v3529, %v2516
        %v3611 = vmul.f32 %v3578, %v2614
        %v3612 = vmul.f32 %v3134, %v3195
        %v3613 = vmul.f32 %v3136, %v3210
        %v3614 = vmul.f32 %v3138, %v3225
        %v3615 = vmul.f32 %v3140, %v3240
        %v3616 = vmul.f32 %v3142, %v3255
        %v3617 = vmul.f32 %v3144, %v3270
        %v3618 = vmul.f32 %v3146, %v3285
        %v3619 = vmul.f32 %v3148, %v3300
        %v3620 = vmul.f32 %v3150, %v3315
        %v3621 = vmul.f32 %v3152, %v3330
        %v3622 = vmul.f32 %v3154, %v3345
        %v3623 = vmul.f32 %v3156, %v3360
        %v3624 = vmul.f32 %v3158, %v3375
        %v3625 = vmul.f32 %v3160, %v3390
        %v3626 = vmul.f32 %v3162, %v3405
        %v3627 = vmul.f32 %v3164, %v3420
        %v3628 = vpack.c.bf16 %v3613, %v3612
        %v3629 = vpack.c.bf16 %v3615, %v3614
        %v3630 = vpack.c.bf16 %v3617, %v3616
        %v3631 = vpack.c.bf16 %v3619, %v3618
        %v3632 = vpack.c.bf16 %v3621, %v3620
        %v3633 = vpack.c.bf16 %v3623, %v3622
        %v3634 = vpack.c.bf16 %v3625, %v3624
        %v3635 = vpack.c.bf16 %v3627, %v3626
        %v3637 = vsel %vm3450, %v3628, 0
        %v3640 = vsel %vm3450, %v3629, 0
        %v3643 = vsel %vm3450, %v3630, 0
        %v3646 = vsel %vm3450, %v3631, 0
        %v3649 = vsel %vm3450, %v3632, 0
        %v3652 = vsel %vm3450, %v3633, 0
        %v3655 = vsel %vm3450, %v3634, 0
        %v3658 = vsel %vm3450, %v3635, 0
        %3660 = vmatpush.bf16.msra.mxu0 0
        %3661 = vmatpush.bf16.msra.mxu0 0
        %3662 = vmatpush.bf16.msra.mxu0 0
        %3663 = vmatpush.bf16.msra.mxu0 0
        %3664 = vmatpush.bf16.msra.mxu0 0
        %3665 = vmatpush.bf16.msra.mxu0 0
        %3666 = vmatpush.bf16.msra.mxu0 0
        %3667 = vmatpush.bf16.msra.mxu0 %v3477
        %3668 = vmatmul.bf16.gmra.mxu0 %v3637
        %v3669 = vpop.f32.mrf.mxu0
        %v3670 = vadd.f32 0.0, %v3669
        %v3671 = vpop.f32.mrf.mxu0
        %v3672 = vadd.f32 0.0, %v3671
        %3673 = vmatmul.bf16.gmra.mxu0 %v3640
        %v3674 = vpop.f32.mrf.mxu0
        %v3675 = vadd.f32 0.0, %v3674
        %v3676 = vpop.f32.mrf.mxu0
        %v3677 = vadd.f32 0.0, %v3676
        %3678 = vmatmul.bf16.gmra.mxu0 %v3643
        %v3679 = vpop.f32.mrf.mxu0
        %v3680 = vadd.f32 0.0, %v3679
        %v3681 = vpop.f32.mrf.mxu0
        %v3682 = vadd.f32 0.0, %v3681
        %3683 = vmatmul.bf16.gmra.mxu0 %v3646
        %v3684 = vpop.f32.mrf.mxu0
        %v3685 = vadd.f32 0.0, %v3684
        %v3686 = vpop.f32.mrf.mxu0
        %v3687 = vadd.f32 0.0, %v3686
        %3688 = vmatmul.bf16.gmra.mxu0 %v3649
        %v3689 = vpop.f32.mrf.mxu0
        %v3690 = vadd.f32 0.0, %v3689
        %v3691 = vpop.f32.mrf.mxu0
        %v3692 = vadd.f32 0.0, %v3691
        %3693 = vmatmul.bf16.gmra.mxu0 %v3652
        %v3694 = vpop.f32.mrf.mxu0
        %v3695 = vadd.f32 0.0, %v3694
        %v3696 = vpop.f32.mrf.mxu0
        %v3697 = vadd.f32 0.0, %v3696
        %3698 = vmatmul.bf16.gmra.mxu0 %v3655
        %v3699 = vpop.f32.mrf.mxu0
        %v3700 = vadd.f32 0.0, %v3699
        %v3701 = vpop.f32.mrf.mxu0
        %v3702 = vadd.f32 0.0, %v3701
        %3703 = vmatmul.bf16.gmra.mxu0 %v3658
        %v3704 = vpop.f32.mrf.mxu0
        %v3705 = vadd.f32 0.0, %v3704
        %v3706 = vpop.f32.mrf.mxu0
        %v3707 = vadd.f32 0.0, %v3706
        %3708 = vdwg.mxu0
        %3709 = vmatpush.bf16.msra.mxu0 0
        %3710 = vmatpush.bf16.msra.mxu0 0
        %3711 = vmatpush.bf16.msra.mxu0 0
        %3712 = vmatpush.bf16.msra.mxu0 0
        %3713 = vmatpush.bf16.msra.mxu0 0
        %3714 = vmatpush.bf16.msra.mxu0 0
        %3715 = vmatpush.bf16.msra.mxu0 0
        %3716 = vmatpush.bf16.msra.mxu0 %v3480
        %3717 = vmatmul.bf16.gmra.mxu0 %v3637
        %v3718 = vpop.f32.mrf.mxu0
        %v3719 = vadd.f32 0.0, %v3718
        %v3720 = vpop.f32.mrf.mxu0
        %v3721 = vadd.f32 0.0, %v3720
        %3722 = vmatmul.bf16.gmra.mxu0 %v3640
        %v3723 = vpop.f32.mrf.mxu0
        %v3724 = vadd.f32 0.0, %v3723
        %v3725 = vpop.f32.mrf.mxu0
        %v3726 = vadd.f32 0.0, %v3725
        %3727 = vmatmul.bf16.gmra.mxu0 %v3643
        %v3728 = vpop.f32.mrf.mxu0
        %v3729 = vadd.f32 0.0, %v3728
        %v3730 = vpop.f32.mrf.mxu0
        %v3731 = vadd.f32 0.0, %v3730
        %3732 = vmatmul.bf16.gmra.mxu0 %v3646
        %v3733 = vpop.f32.mrf.mxu0
        %v3734 = vadd.f32 0.0, %v3733
        %v3735 = vpop.f32.mrf.mxu0
        %v3736 = vadd.f32 0.0, %v3735
        %3737 = vmatmul.bf16.gmra.mxu0 %v3649
        %v3738 = vpop.f32.mrf.mxu0
        %v3739 = vadd.f32 0.0, %v3738
        %v3740 = vpop.f32.mrf.mxu0
        %v3741 = vadd.f32 0.0, %v3740
        %3742 = vmatmul.bf16.gmra.mxu0 %v3652
        %v3743 = vpop.f32.mrf.mxu0
        %v3744 = vadd.f32 0.0, %v3743
        %v3745 = vpop.f32.mrf.mxu0
        %v3746 = vadd.f32 0.0, %v3745
        %3747 = vmatmul.bf16.gmra.mxu0 %v3655
        %v3748 = vpop.f32.mrf.mxu0
        %v3749 = vadd.f32 0.0, %v3748
        %v3750 = vpop.f32.mrf.mxu0
        %v3751 = vadd.f32 0.0, %v3750
        %3752 = vmatmul.bf16.gmra.mxu0 %v3658
        %v3753 = vpop.f32.mrf.mxu0
        %v3754 = vadd.f32 0.0, %v3753
        %v3755 = vpop.f32.mrf.mxu0
        %v3756 = vadd.f32 0.0, %v3755
        %3757 = vdwg.mxu0
        %v3758 = vmul.f32 %v3670, %v2499
        %v3759 = vmul.f32 %v3719, %v2597
        %v3760 = vmul.f32 %v3672, %v2501
        %v3761 = vmul.f32 %v3721, %v2599
        %v3762 = vmul.f32 %v3675, %v2504
        %v3763 = vmul.f32 %v3724, %v2602
        %v3764 = vmul.f32 %v3677, %v2506
        %v3765 = vmul.f32 %v3726, %v2604
        %v3766 = vmul.f32 %v3680, %v2509
        %v3767 = vmul.f32 %v3729, %v2607
        %v3768 = vmul.f32 %v3682, %v2511
        %v3769 = vmul.f32 %v3731, %v2609
        %v3770 = vmul.f32 %v3685, %v2514
        %v3771 = vmul.f32 %v3734, %v2612
        %v3772 = vmul.f32 %v3687, %v2516
        %v3773 = vmul.f32 %v3736, %v2614
        %v3774 = vmul.f32 %v3690, %v2479
        %v3775 = vmul.f32 %v3739, %v2577
        %v3776 = vmul.f32 %v3692, %v2481
        %v3777 = vmul.f32 %v3741, %v2579
        %v3778 = vmul.f32 %v3695, %v2484
        %v3779 = vmul.f32 %v3744, %v2582
        %v3780 = vmul.f32 %v3697, %v2486
        %v3781 = vmul.f32 %v3746, %v2584
        %v3782 = vmul.f32 %v3700, %v2489
        %v3783 = vmul.f32 %v3749, %v2587
        %v3784 = vmul.f32 %v3702, %v2491
        %v3785 = vmul.f32 %v3751, %v2589
        %v3786 = vmul.f32 %v3705, %v2494
        %v3787 = vmul.f32 %v3754, %v2592
        %v3788 = vmul.f32 %v3707, %v2496
        %v3789 = vmul.f32 %v3756, %v2594
        %v3790 = vadd.f32 %v3580, %v3758
        %v3791 = vadd.f32 %v3581, %v3759
        %v3792 = vadd.f32 %v3582, %v3760
        %v3793 = vadd.f32 %v3583, %v3761
        %v3794 = vadd.f32 %v3584, %v3762
        %v3795 = vadd.f32 %v3585, %v3763
        %v3796 = vadd.f32 %v3586, %v3764
        %v3797 = vadd.f32 %v3587, %v3765
        %v3798 = vadd.f32 %v3588, %v3766
        %v3799 = vadd.f32 %v3589, %v3767
        %v3800 = vadd.f32 %v3590, %v3768
        %v3801 = vadd.f32 %v3591, %v3769
        %v3802 = vadd.f32 %v3592, %v3770
        %v3803 = vadd.f32 %v3593, %v3771
        %v3804 = vadd.f32 %v3594, %v3772
        %v3805 = vadd.f32 %v3595, %v3773
        %v3806 = vadd.f32 %v3596, %v3774
        %v3807 = vadd.f32 %v3597, %v3775
        %v3808 = vadd.f32 %v3598, %v3776
        %v3809 = vadd.f32 %v3599, %v3777
        %v3810 = vadd.f32 %v3600, %v3778
        %v3811 = vadd.f32 %v3601, %v3779
        %v3812 = vadd.f32 %v3602, %v3780
        %v3813 = vadd.f32 %v3603, %v3781
        %v3814 = vadd.f32 %v3604, %v3782
        %v3815 = vadd.f32 %v3605, %v3783
        %v3816 = vadd.f32 %v3606, %v3784
        %v3817 = vadd.f32 %v3607, %v3785
        %v3818 = vadd.f32 %v3608, %v3786
        %v3819 = vadd.f32 %v3609, %v3787
        %v3820 = vadd.f32 %v3610, %v3788
        %v3821 = vadd.f32 %v3611, %v3789
        %s3822 = scalar_lea.vmem %s538, 576
        %v3823 = vld [vmem:[%s3822] sm:$0xff]
        %v3824 = vld [vmem:[%s3822 + $0x8] sm:$0xff]
        %v3825 = vld [vmem:[%s3822 + $0x10] sm:$0xff]
        %v3826 = vld [vmem:[%s3822 + $0x18] sm:$0xff]
        %v3827 = vld [vmem:[%s3822 + $0x20] sm:$0xff]
        %v3828 = vld [vmem:[%s3822 + $0x28] sm:$0xff]
        %v3829 = vld [vmem:[%s3822 + $0x30] sm:$0xff]
        %v3830 = vld [vmem:[%s3822 + $0x38] sm:$0xff]
        %v3831 = vld [vmem:[%s3822 + $0x40] sm:$0xff]
        %v3832 = vld [vmem:[%s3822 + $0x48] sm:$0xff]
        %v3833 = vld [vmem:[%s3822 + $0x50] sm:$0xff]
        %v3834 = vld [vmem:[%s3822 + $0x58] sm:$0xff]
        %v3835 = vld [vmem:[%s3822 + $0x60] sm:$0xff]
        %v3836 = vld [vmem:[%s3822 + $0x68] sm:$0xff]
        %v3837 = vld [vmem:[%s3822 + $0x70] sm:$0xff]
        %v3838 = vld [vmem:[%s3822 + $0x78] sm:$0xff]
        %v3839 = vld [vmem:[%s3822 + $0x80] sm:$0xff]
        %v3840 = vld [vmem:[%s3822 + $0x88] sm:$0xff]
        %v3841 = vld [vmem:[%s3822 + $0x90] sm:$0xff]
        %v3842 = vld [vmem:[%s3822 + $0x98] sm:$0xff]
        %v3843 = vld [vmem:[%s3822 + $0xa0] sm:$0xff]
        %v3844 = vld [vmem:[%s3822 + $0xa8] sm:$0xff]
        %v3845 = vld [vmem:[%s3822 + $0xb0] sm:$0xff]
        %v3846 = vld [vmem:[%s3822 + $0xb8] sm:$0xff]
        %v3847 = vpack.c.bf16 %v3792, %v3790
        %v3848 = vpack.c.bf16 %v3793, %v3791
        %v3849 = vpack.c.bf16 %v3796, %v3794
        %v3850 = vpack.c.bf16 %v3797, %v3795
        %v3851 = vpack.c.bf16 %v3800, %v3798
        %v3852 = vpack.c.bf16 %v3801, %v3799
        %v3853 = vpack.c.bf16 %v3804, %v3802
        %v3854 = vpack.c.bf16 %v3805, %v3803
        %v3855 = vpack.c.bf16 %v3808, %v3806
        %v3856 = vpack.c.bf16 %v3809, %v3807
        %v3857 = vpack.c.bf16 %v3812, %v3810
        %v3858 = vpack.c.bf16 %v3813, %v3811
        %v3859 = vpack.c.bf16 %v3816, %v3814
        %v3860 = vpack.c.bf16 %v3817, %v3815
        %v3861 = vpack.c.bf16 %v3820, %v3818
        %v3862 = vpack.c.bf16 %v3821, %v3819
        %v3887 = vunpack.c.l.b16 %v3823
        %v3888 = vunpack.c.h.b16 %v3823
        %v3889 = vunpack.c.l.b16 %v3824
        %v3890 = vunpack.c.h.b16 %v3824
        %v3891 = vunpack.c.l.b16 %v3825
        %v3892 = vunpack.c.h.b16 %v3825
        %v3893 = vunpack.c.l.b16 %v3826
        %v3894 = vunpack.c.h.b16 %v3826
        %v3895 = vunpack.c.l.b16 %v3827
        %v3896 = vunpack.c.h.b16 %v3827
        %v3897 = vunpack.c.l.b16 %v3828
        %v3898 = vunpack.c.h.b16 %v3828
        %v3899 = vunpack.c.l.b16 %v3829
        %v3900 = vunpack.c.h.b16 %v3829
        %v3901 = vunpack.c.l.b16 %v3830
        %v3902 = vunpack.c.h.b16 %v3830
        %v3903 = vunpack.c.l.b16 %v3831
        %v3904 = vunpack.c.h.b16 %v3831
        %v3905 = vunpack.c.l.b16 %v3832
        %v3906 = vunpack.c.h.b16 %v3832
        %v3907 = vunpack.c.l.b16 %v3833
        %v3908 = vunpack.c.h.b16 %v3833
        %v3909 = vunpack.c.l.b16 %v3834
        %v3910 = vunpack.c.h.b16 %v3834
        %v3911 = vunpack.c.l.b16 %v3835
        %v3912 = vunpack.c.h.b16 %v3835
        %v3913 = vunpack.c.l.b16 %v3836
        %v3914 = vunpack.c.h.b16 %v3836
        %v3915 = vunpack.c.l.b16 %v3837
        %v3916 = vunpack.c.h.b16 %v3837
        %v3917 = vunpack.c.l.b16 %v3838
        %v3918 = vunpack.c.h.b16 %v3838
        %v3919 = vunpack.c.l.b16 %v3839
        %v3920 = vunpack.c.h.b16 %v3839
        %v3921 = vunpack.c.l.b16 %v3840
        %v3922 = vunpack.c.h.b16 %v3840
        %v3923 = vunpack.c.l.b16 %v3841
        %v3924 = vunpack.c.h.b16 %v3841
        %v3925 = vunpack.c.l.b16 %v3842
        %v3926 = vunpack.c.h.b16 %v3842
        %v3927 = vunpack.c.l.b16 %v3843
        %v3928 = vunpack.c.h.b16 %v3843
        %v3929 = vunpack.c.l.b16 %v3844
        %v3930 = vunpack.c.h.b16 %v3844
        %v3931 = vunpack.c.l.b16 %v3845
        %v3932 = vunpack.c.h.b16 %v3845
        %v3933 = vunpack.c.l.b16 %v3846
        %v3934 = vunpack.c.h.b16 %v3846
        %v3935 = vpack.c.b16 %v3889, %v3887
        %v3936 = vpack.c.b16 %v3890, %v3888
        %v3937 = vpack.c.b16 %v3893, %v3891
        %v3938 = vpack.c.b16 %v3894, %v3892
        %v3939 = vpack.c.b16 %v3897, %v3895
        %v3940 = vpack.c.b16 %v3898, %v3896
        %v3941 = vpack.c.b16 %v3901, %v3899
        %v3942 = vpack.c.b16 %v3902, %v3900
        %v3943 = vpack.c.b16 %v3905, %v3903
        %v3944 = vpack.c.b16 %v3906, %v3904
        %v3945 = vpack.c.b16 %v3909, %v3907
        %v3946 = vpack.c.b16 %v3910, %v3908
        %v3947 = vpack.c.b16 %v3913, %v3911
        %v3948 = vpack.c.b16 %v3914, %v3912
        %v3949 = vpack.c.b16 %v3917, %v3915
        %v3950 = vpack.c.b16 %v3918, %v3916
        %v3951 = vpack.c.b16 %v3921, %v3919
        %v3952 = vpack.c.b16 %v3922, %v3920
        %v3953 = vpack.c.b16 %v3925, %v3923
        %v3954 = vpack.c.b16 %v3926, %v3924
        %v3955 = vpack.c.b16 %v3929, %v3927
        %v3956 = vpack.c.b16 %v3930, %v3928
        %v3957 = vpack.c.b16 %v3933, %v3931
        %v3958 = vpack.c.b16 %v3934, %v3932
        %v3984 = vsel %vm1019, %v3848, 0
        %v3987 = vsel %vm1019, %v3850, 0
        %v3990 = vsel %vm1019, %v3852, 0
        %v3993 = vsel %vm1019, %v3854, 0
        %v3996 = vsel %vm1019, %v3856, 0
        %v3999 = vsel %vm1019, %v3858, 0
        %v4002 = vsel %vm1019, %v3860, 0
        %v4005 = vsel %vm1019, %v3862, 0
        %4007 = vmatpush.bf16.msra.mxu0 %v3949
        %4008 = vmatpush.bf16.msra.mxu0 %v3947
        %4009 = vmatpush.bf16.msra.mxu0 %v3945
        %4010 = vmatpush.bf16.msra.mxu0 %v3943
        %4011 = vmatpush.bf16.msra.mxu0 %v3941
        %4012 = vmatpush.bf16.msra.mxu0 %v3939
        %4013 = vmatpush.bf16.msra.mxu0 %v3937
        %4014 = vmatpush.bf16.msra.mxu0 %v3935
        %4015 = vmatmul.bf16.gmra.mxu0 %v3847
        %v4016 = vpop.f32.mrf.mxu0
        %v4017 = vadd.f32 0.0, %v4016
        %v4018 = vpop.f32.mrf.mxu0
        %v4019 = vadd.f32 0.0, %v4018
        %4020 = vmatmul.bf16.gmra.mxu0 %v3849
        %v4021 = vpop.f32.mrf.mxu0
        %v4022 = vadd.f32 0.0, %v4021
        %v4023 = vpop.f32.mrf.mxu0
        %v4024 = vadd.f32 0.0, %v4023
        %4025 = vmatmul.bf16.gmra.mxu0 %v3851
        %v4026 = vpop.f32.mrf.mxu0
        %v4027 = vadd.f32 0.0, %v4026
        %v4028 = vpop.f32.mrf.mxu0
        %v4029 = vadd.f32 0.0, %v4028
        %4030 = vmatmul.bf16.gmra.mxu0 %v3853
        %v4031 = vpop.f32.mrf.mxu0
        %v4032 = vadd.f32 0.0, %v4031
        %v4033 = vpop.f32.mrf.mxu0
        %v4034 = vadd.f32 0.0, %v4033
        %4035 = vmatmul.bf16.gmra.mxu0 %v3855
        %v4036 = vpop.f32.mrf.mxu0
        %v4037 = vadd.f32 0.0, %v4036
        %v4038 = vpop.f32.mrf.mxu0
        %v4039 = vadd.f32 0.0, %v4038
        %4040 = vmatmul.bf16.gmra.mxu0 %v3857
        %v4041 = vpop.f32.mrf.mxu0
        %v4042 = vadd.f32 0.0, %v4041
        %v4043 = vpop.f32.mrf.mxu0
        %v4044 = vadd.f32 0.0, %v4043
        %4045 = vmatmul.bf16.gmra.mxu0 %v3859
        %v4046 = vpop.f32.mrf.mxu0
        %v4047 = vadd.f32 0.0, %v4046
        %v4048 = vpop.f32.mrf.mxu0
        %v4049 = vadd.f32 0.0, %v4048
        %4050 = vmatmul.bf16.gmra.mxu0 %v3861
        %v4051 = vpop.f32.mrf.mxu0
        %v4052 = vadd.f32 0.0, %v4051
        %v4053 = vpop.f32.mrf.mxu0
        %v4054 = vadd.f32 0.0, %v4053
        %4055 = vdwg.mxu0
        %4056 = vmatpush.bf16.msra.mxu0 0
        %4057 = vmatpush.bf16.msra.mxu0 0
        %4058 = vmatpush.bf16.msra.mxu0 0
        %4059 = vmatpush.bf16.msra.mxu0 0
        %4060 = vmatpush.bf16.msra.mxu0 %v3957
        %4061 = vmatpush.bf16.msra.mxu0 %v3955
        %4062 = vmatpush.bf16.msra.mxu0 %v3953
        %4063 = vmatpush.bf16.msra.mxu0 %v3951
        %4064 = vmatmul.bf16.gmra.mxu0 %v3984
        %v4065 = vpop.f32.mrf.mxu0
        %v4066 = vadd.f32 %v4017, %v4065
        %v4067 = vpop.f32.mrf.mxu0
        %v4068 = vadd.f32 %v4019, %v4067
        %4069 = vmatmul.bf16.gmra.mxu0 %v3987
        %v4070 = vpop.f32.mrf.mxu0
        %v4071 = vadd.f32 %v4022, %v4070
        %v4072 = vpop.f32.mrf.mxu0
        %v4073 = vadd.f32 %v4024, %v4072
        %4074 = vmatmul.bf16.gmra.mxu0 %v3990
        %v4075 = vpop.f32.mrf.mxu0
        %v4076 = vadd.f32 %v4027, %v4075
        %v4077 = vpop.f32.mrf.mxu0
        %v4078 = vadd.f32 %v4029, %v4077
        %4079 = vmatmul.bf16.gmra.mxu0 %v3993
        %v4080 = vpop.f32.mrf.mxu0
        %v4081 = vadd.f32 %v4032, %v4080
        %v4082 = vpop.f32.mrf.mxu0
        %v4083 = vadd.f32 %v4034, %v4082
        %4084 = vmatmul.bf16.gmra.mxu0 %v3996
        %v4085 = vpop.f32.mrf.mxu0
        %v4086 = vadd.f32 %v4037, %v4085
        %v4087 = vpop.f32.mrf.mxu0
        %v4088 = vadd.f32 %v4039, %v4087
        %4089 = vmatmul.bf16.gmra.mxu0 %v3999
        %v4090 = vpop.f32.mrf.mxu0
        %v4091 = vadd.f32 %v4042, %v4090
        %v4092 = vpop.f32.mrf.mxu0
        %v4093 = vadd.f32 %v4044, %v4092
        %4094 = vmatmul.bf16.gmra.mxu0 %v4002
        %v4095 = vpop.f32.mrf.mxu0
        %v4096 = vadd.f32 %v4047, %v4095
        %v4097 = vpop.f32.mrf.mxu0
        %v4098 = vadd.f32 %v4049, %v4097
        %4099 = vmatmul.bf16.gmra.mxu0 %v4005
        %v4100 = vpop.f32.mrf.mxu0
        %v4101 = vadd.f32 %v4052, %v4100
        %v4102 = vpop.f32.mrf.mxu0
        %v4103 = vadd.f32 %v4054, %v4102
        %4104 = vdwg.mxu0
        %4105 = vmatpush.bf16.msra.mxu0 %v3950
        %4106 = vmatpush.bf16.msra.mxu0 %v3948
        %4107 = vmatpush.bf16.msra.mxu0 %v3946
        %4108 = vmatpush.bf16.msra.mxu0 %v3944
        %4109 = vmatpush.bf16.msra.mxu0 %v3942
        %4110 = vmatpush.bf16.msra.mxu0 %v3940
        %4111 = vmatpush.bf16.msra.mxu0 %v3938
        %4112 = vmatpush.bf16.msra.mxu0 %v3936
        %4113 = vmatmul.bf16.gmra.mxu0 %v3847
        %v4114 = vpop.f32.mrf.mxu0
        %v4115 = vadd.f32 0.0, %v4114
        %v4116 = vpop.f32.mrf.mxu0
        %v4117 = vadd.f32 0.0, %v4116
        %4118 = vmatmul.bf16.gmra.mxu0 %v3849
        %v4119 = vpop.f32.mrf.mxu0
        %v4120 = vadd.f32 0.0, %v4119
        %v4121 = vpop.f32.mrf.mxu0
        %v4122 = vadd.f32 0.0, %v4121
        %4123 = vmatmul.bf16.gmra.mxu0 %v3851
        %v4124 = vpop.f32.mrf.mxu0
        %v4125 = vadd.f32 0.0, %v4124
        %v4126 = vpop.f32.mrf.mxu0
        %v4127 = vadd.f32 0.0, %v4126
        %4128 = vmatmul.bf16.gmra.mxu0 %v3853
        %v4129 = vpop.f32.mrf.mxu0
        %v4130 = vadd.f32 0.0, %v4129
        %v4131 = vpop.f32.mrf.mxu0
        %v4132 = vadd.f32 0.0, %v4131
        %4133 = vmatmul.bf16.gmra.mxu0 %v3855
        %v4134 = vpop.f32.mrf.mxu0
        %v4135 = vadd.f32 0.0, %v4134
        %v4136 = vpop.f32.mrf.mxu0
        %v4137 = vadd.f32 0.0, %v4136
        %4138 = vmatmul.bf16.gmra.mxu0 %v3857
        %v4139 = vpop.f32.mrf.mxu0
        %v4140 = vadd.f32 0.0, %v4139
        %v4141 = vpop.f32.mrf.mxu0
        %v4142 = vadd.f32 0.0, %v4141
        %4143 = vmatmul.bf16.gmra.mxu0 %v3859
        %v4144 = vpop.f32.mrf.mxu0
        %v4145 = vadd.f32 0.0, %v4144
        %v4146 = vpop.f32.mrf.mxu0
        %v4147 = vadd.f32 0.0, %v4146
        %4148 = vmatmul.bf16.gmra.mxu0 %v3861
        %v4149 = vpop.f32.mrf.mxu0
        %v4150 = vadd.f32 0.0, %v4149
        %v4151 = vpop.f32.mrf.mxu0
        %v4152 = vadd.f32 0.0, %v4151
        %4153 = vdwg.mxu0
        %4154 = vmatpush.bf16.msra.mxu0 0
        %4155 = vmatpush.bf16.msra.mxu0 0
        %4156 = vmatpush.bf16.msra.mxu0 0
        %4157 = vmatpush.bf16.msra.mxu0 0
        %4158 = vmatpush.bf16.msra.mxu0 %v3958
        %4159 = vmatpush.bf16.msra.mxu0 %v3956
        %4160 = vmatpush.bf16.msra.mxu0 %v3954
        %4161 = vmatpush.bf16.msra.mxu0 %v3952
        %4162 = vmatmul.bf16.gmra.mxu0 %v3984
        %v4163 = vpop.f32.mrf.mxu0
        %v4164 = vadd.f32 %v4115, %v4163
        %v4165 = vpop.f32.mrf.mxu0
        %v4166 = vadd.f32 %v4117, %v4165
        %4167 = vmatmul.bf16.gmra.mxu0 %v3987
        %v4168 = vpop.f32.mrf.mxu0
        %v4169 = vadd.f32 %v4120, %v4168
        %v4170 = vpop.f32.mrf.mxu0
        %v4171 = vadd.f32 %v4122, %v4170
        %4172 = vmatmul.bf16.gmra.mxu0 %v3990
        %v4173 = vpop.f32.mrf.mxu0
        %v4174 = vadd.f32 %v4125, %v4173
        %v4175 = vpop.f32.mrf.mxu0
        %v4176 = vadd.f32 %v4127, %v4175
        %4177 = vmatmul.bf16.gmra.mxu0 %v3993
        %v4178 = vpop.f32.mrf.mxu0
        %v4179 = vadd.f32 %v4130, %v4178
        %v4180 = vpop.f32.mrf.mxu0
        %v4181 = vadd.f32 %v4132, %v4180
        %4182 = vmatmul.bf16.gmra.mxu0 %v3996
        %v4183 = vpop.f32.mrf.mxu0
        %v4184 = vadd.f32 %v4135, %v4183
        %v4185 = vpop.f32.mrf.mxu0
        %v4186 = vadd.f32 %v4137, %v4185
        %4187 = vmatmul.bf16.gmra.mxu0 %v3999
        %v4188 = vpop.f32.mrf.mxu0
        %v4189 = vadd.f32 %v4140, %v4188
        %v4190 = vpop.f32.mrf.mxu0
        %v4191 = vadd.f32 %v4142, %v4190
        %4192 = vmatmul.bf16.gmra.mxu0 %v4002
        %v4193 = vpop.f32.mrf.mxu0
        %v4194 = vadd.f32 %v4145, %v4193
        %v4195 = vpop.f32.mrf.mxu0
        %v4196 = vadd.f32 %v4147, %v4195
        %4197 = vmatmul.bf16.gmra.mxu0 %v4005
        %v4198 = vpop.f32.mrf.mxu0
        %v4199 = vadd.f32 %v4150, %v4198
        %v4200 = vpop.f32.mrf.mxu0
        %v4201 = vadd.f32 %v4152, %v4200
        %4202 = vdwg.mxu0
        %v4203 = vadd.f32 %v984, %v4066
        %v4204 = vadd.f32 %v985, %v4164
        %v4205 = vadd.f32 %v986, %v4068
        %v4206 = vadd.f32 %v987, %v4166
        %v4207 = vadd.f32 %v988, %v4071
        %v4208 = vadd.f32 %v989, %v4169
        %v4209 = vadd.f32 %v990, %v4073
        %v4210 = vadd.f32 %v991, %v4171
        %v4211 = vadd.f32 %v992, %v4076
        %v4212 = vadd.f32 %v993, %v4174
        %v4213 = vadd.f32 %v994, %v4078
        %v4214 = vadd.f32 %v995, %v4176
        %v4215 = vadd.f32 %v996, %v4081
        %v4216 = vadd.f32 %v997, %v4179
        %v4217 = vadd.f32 %v998, %v4083
        %v4218 = vadd.f32 %v999, %v4181
        %v4219 = vadd.f32 %v1000, %v4086
        %v4220 = vadd.f32 %v1001, %v4184
        %v4221 = vadd.f32 %v1002, %v4088
        %v4222 = vadd.f32 %v1003, %v4186
        %v4223 = vadd.f32 %v1004, %v4091
        %v4224 = vadd.f32 %v1005, %v4189
        %v4225 = vadd.f32 %v1006, %v4093
        %v4226 = vadd.f32 %v1007, %v4191
        %v4227 = vadd.f32 %v1008, %v4096
        %v4228 = vadd.f32 %v1009, %v4194
        %v4229 = vadd.f32 %v1010, %v4098
        %v4230 = vadd.f32 %v1011, %v4196
        %v4231 = vadd.f32 %v1012, %v4101
        %v4232 = vadd.f32 %v1013, %v4199
        %v4233 = vadd.f32 %v1014, %v4103
        %v4234 = vadd.f32 %v1015, %v4201
        %s4235 = scalar_lea.vmem %s553, 5
        %v4236 = vld [vmem:[%s4235] ss:$8 sm:$0x3]
        %v4238 = vperm.slane %v4236, 0
        %v4239 = vperm.slane %v4236, 1
        %v4242 = vadd.f32 %v4203, %v4238
        %v4243 = vadd.f32 %v4204, %v4239
        %v4244 = vadd.f32 %v4205, %v4238
        %v4245 = vadd.f32 %v4206, %v4239
        %v4246 = vadd.f32 %v4207, %v4238
        %v4247 = vadd.f32 %v4208, %v4239
        %v4248 = vadd.f32 %v4209, %v4238
        %v4249 = vadd.f32 %v4210, %v4239
        %v4250 = vadd.f32 %v4211, %v4238
        %v4251 = vadd.f32 %v4212, %v4239
        %v4252 = vadd.f32 %v4213, %v4238
        %v4253 = vadd.f32 %v4214, %v4239
        %v4254 = vadd.f32 %v4215, %v4238
        %v4255 = vadd.f32 %v4216, %v4239
        %v4256 = vadd.f32 %v4217, %v4238
        %v4257 = vadd.f32 %v4218, %v4239
        %v4258 = vadd.f32 %v4219, %v4238
        %v4259 = vadd.f32 %v4220, %v4239
        %v4260 = vadd.f32 %v4221, %v4238
        %v4261 = vadd.f32 %v4222, %v4239
        %v4262 = vadd.f32 %v4223, %v4238
        %v4263 = vadd.f32 %v4224, %v4239
        %v4264 = vadd.f32 %v4225, %v4238
        %v4265 = vadd.f32 %v4226, %v4239
        %v4266 = vadd.f32 %v4227, %v4238
        %v4267 = vadd.f32 %v4228, %v4239
        %v4268 = vadd.f32 %v4229, %v4238
        %v4269 = vadd.f32 %v4230, %v4239
        %v4270 = vadd.f32 %v4231, %v4238
        %v4271 = vadd.f32 %v4232, %v4239
        %v4272 = vadd.f32 %v4233, %v4238
        %v4273 = vadd.f32 %v4234, %v4239
        %s4274 = scalar_lea.vmem %s553, 6
        %v4275 = vld [vmem:[%s4274] ss:$8 sm:$0x3]
        %s4276 = scalar_lea.vmem %s553, 7
        %v4277 = vld [vmem:[%s4276] ss:$8 sm:$0x3]
        %v4278 = vsel %vm1019, %v4243, 0.0
        %v4279 = vadd.f32 %v4242, %v4278
        %4280 = vadd.xlane.f32.xlu0 %v4279
        %v4281 = vpop.xlane.xlu0 %4280
        %v4282 = vsel %vm1019, %v4245, 0.0
        %v4283 = vadd.f32 %v4244, %v4282
        %4284 = vadd.xlane.f32.xlu0 %v4283
        %v4285 = vpop.xlane.xlu0 %4284
        %v4286 = vsel %vm1019, %v4247, 0.0
        %v4287 = vadd.f32 %v4246, %v4286
        %4288 = vadd.xlane.f32.xlu0 %v4287
        %v4289 = vpop.xlane.xlu0 %4288
        %v4290 = vsel %vm1019, %v4249, 0.0
        %v4291 = vadd.f32 %v4248, %v4290
        %4292 = vadd.xlane.f32.xlu0 %v4291
        %v4293 = vpop.xlane.xlu0 %4292
        %v4294 = vsel %vm1019, %v4251, 0.0
        %v4295 = vadd.f32 %v4250, %v4294
        %4296 = vadd.xlane.f32.xlu0 %v4295
        %v4297 = vpop.xlane.xlu0 %4296
        %v4298 = vsel %vm1019, %v4253, 0.0
        %v4299 = vadd.f32 %v4252, %v4298
        %4300 = vadd.xlane.f32.xlu0 %v4299
        %v4301 = vpop.xlane.xlu0 %4300
        %v4302 = vsel %vm1019, %v4255, 0.0
        %v4303 = vadd.f32 %v4254, %v4302
        %4304 = vadd.xlane.f32.xlu0 %v4303
        %v4305 = vpop.xlane.xlu0 %4304
        %v4306 = vsel %vm1019, %v4257, 0.0
        %v4307 = vadd.f32 %v4256, %v4306
        %4308 = vadd.xlane.f32.xlu0 %v4307
        %v4309 = vpop.xlane.xlu0 %4308
        %v4310 = vsel %vm1019, %v4259, 0.0
        %v4311 = vadd.f32 %v4258, %v4310
        %4312 = vadd.xlane.f32.xlu0 %v4311
        %v4313 = vpop.xlane.xlu0 %4312
        %v4314 = vsel %vm1019, %v4261, 0.0
        %v4315 = vadd.f32 %v4260, %v4314
        %4316 = vadd.xlane.f32.xlu0 %v4315
        %v4317 = vpop.xlane.xlu0 %4316
        %v4318 = vsel %vm1019, %v4263, 0.0
        %v4319 = vadd.f32 %v4262, %v4318
        %4320 = vadd.xlane.f32.xlu0 %v4319
        %v4321 = vpop.xlane.xlu0 %4320
        %v4322 = vsel %vm1019, %v4265, 0.0
        %v4323 = vadd.f32 %v4264, %v4322
        %4324 = vadd.xlane.f32.xlu0 %v4323
        %v4325 = vpop.xlane.xlu0 %4324
        %v4326 = vsel %vm1019, %v4267, 0.0
        %v4327 = vadd.f32 %v4266, %v4326
        %4328 = vadd.xlane.f32.xlu0 %v4327
        %v4329 = vpop.xlane.xlu0 %4328
        %v4330 = vsel %vm1019, %v4269, 0.0
        %v4331 = vadd.f32 %v4268, %v4330
        %4332 = vadd.xlane.f32.xlu0 %v4331
        %v4333 = vpop.xlane.xlu0 %4332
        %v4334 = vsel %vm1019, %v4271, 0.0
        %v4335 = vadd.f32 %v4270, %v4334
        %4336 = vadd.xlane.f32.xlu0 %v4335
        %v4337 = vpop.xlane.xlu0 %4336
        %v4338 = vsel %vm1019, %v4273, 0.0
        %v4339 = vadd.f32 %v4272, %v4338
        %4340 = vadd.xlane.f32.xlu0 %v4339
        %v4341 = vpop.xlane.xlu0 %4340
        %v4342 = vmul.f32 %v4281, %v1090
        %v4343 = vmul.f32 %v4285, %v1090
        %v4344 = vmul.f32 %v4289, %v1090
        %v4345 = vmul.f32 %v4293, %v1090
        %v4346 = vmul.f32 %v4297, %v1090
        %v4347 = vmul.f32 %v4301, %v1090
        %v4348 = vmul.f32 %v4305, %v1090
        %v4349 = vmul.f32 %v4309, %v1090
        %v4350 = vmul.f32 %v4313, %v1090
        %v4351 = vmul.f32 %v4317, %v1090
        %v4352 = vmul.f32 %v4321, %v1090
        %v4353 = vmul.f32 %v4325, %v1090
        %v4354 = vmul.f32 %v4329, %v1090
        %v4355 = vmul.f32 %v4333, %v1090
        %v4356 = vmul.f32 %v4337, %v1090
        %v4357 = vmul.f32 %v4341, %v1090
        %v4358 = vsub.f32 %v4242, %v4342
        %v4359 = vsub.f32 %v4243, %v4342
        %v4360 = vsub.f32 %v4244, %v4343
        %v4361 = vsub.f32 %v4245, %v4343
        %v4362 = vsub.f32 %v4246, %v4344
        %v4363 = vsub.f32 %v4247, %v4344
        %v4364 = vsub.f32 %v4248, %v4345
        %v4365 = vsub.f32 %v4249, %v4345
        %v4366 = vsub.f32 %v4250, %v4346
        %v4367 = vsub.f32 %v4251, %v4346
        %v4368 = vsub.f32 %v4252, %v4347
        %v4369 = vsub.f32 %v4253, %v4347
        %v4370 = vsub.f32 %v4254, %v4348
        %v4371 = vsub.f32 %v4255, %v4348
        %v4372 = vsub.f32 %v4256, %v4349
        %v4373 = vsub.f32 %v4257, %v4349
        %v4374 = vsub.f32 %v4258, %v4350
        %v4375 = vsub.f32 %v4259, %v4350
        %v4376 = vsub.f32 %v4260, %v4351
        %v4377 = vsub.f32 %v4261, %v4351
        %v4378 = vsub.f32 %v4262, %v4352
        %v4379 = vsub.f32 %v4263, %v4352
        %v4380 = vsub.f32 %v4264, %v4353
        %v4381 = vsub.f32 %v4265, %v4353
        %v4382 = vsub.f32 %v4266, %v4354
        %v4383 = vsub.f32 %v4267, %v4354
        %v4384 = vsub.f32 %v4268, %v4355
        %v4385 = vsub.f32 %v4269, %v4355
        %v4386 = vsub.f32 %v4270, %v4356
        %v4387 = vsub.f32 %v4271, %v4356
        %v4388 = vsub.f32 %v4272, %v4357
        %v4389 = vsub.f32 %v4273, %v4357
        %v4390 = vmul.f32 %v4358, %v4358
        %v4391 = vmul.f32 %v4359, %v4359
        %v4392 = vmul.f32 %v4360, %v4360
        %v4393 = vmul.f32 %v4361, %v4361
        %v4394 = vmul.f32 %v4362, %v4362
        %v4395 = vmul.f32 %v4363, %v4363
        %v4396 = vmul.f32 %v4364, %v4364
        %v4397 = vmul.f32 %v4365, %v4365
        %v4398 = vmul.f32 %v4366, %v4366
        %v4399 = vmul.f32 %v4367, %v4367
        %v4400 = vmul.f32 %v4368, %v4368
        %v4401 = vmul.f32 %v4369, %v4369
        %v4402 = vmul.f32 %v4370, %v4370
        %v4403 = vmul.f32 %v4371, %v4371
        %v4404 = vmul.f32 %v4372, %v4372
        %v4405 = vmul.f32 %v4373, %v4373
        %v4406 = vmul.f32 %v4374, %v4374
        %v4407 = vmul.f32 %v4375, %v4375
        %v4408 = vmul.f32 %v4376, %v4376
        %v4409 = vmul.f32 %v4377, %v4377
        %v4410 = vmul.f32 %v4378, %v4378
        %v4411 = vmul.f32 %v4379, %v4379
        %v4412 = vmul.f32 %v4380, %v4380
        %v4413 = vmul.f32 %v4381, %v4381
        %v4414 = vmul.f32 %v4382, %v4382
        %v4415 = vmul.f32 %v4383, %v4383
        %v4416 = vmul.f32 %v4384, %v4384
        %v4417 = vmul.f32 %v4385, %v4385
        %v4418 = vmul.f32 %v4386, %v4386
        %v4419 = vmul.f32 %v4387, %v4387
        %v4420 = vmul.f32 %v4388, %v4388
        %v4421 = vmul.f32 %v4389, %v4389
        %v4422 = vsel %vm1019, %v4391, 0.0
        %v4423 = vadd.f32 %v4390, %v4422
        %4424 = vadd.xlane.f32.xlu0 %v4423
        %v4425 = vpop.xlane.xlu0 %4424
        %v4426 = vsel %vm1019, %v4393, 0.0
        %v4427 = vadd.f32 %v4392, %v4426
        %4428 = vadd.xlane.f32.xlu0 %v4427
        %v4429 = vpop.xlane.xlu0 %4428
        %v4430 = vsel %vm1019, %v4395, 0.0
        %v4431 = vadd.f32 %v4394, %v4430
        %4432 = vadd.xlane.f32.xlu0 %v4431
        %v4433 = vpop.xlane.xlu0 %4432
        %v4434 = vsel %vm1019, %v4397, 0.0
        %v4435 = vadd.f32 %v4396, %v4434
        %4436 = vadd.xlane.f32.xlu0 %v4435
        %v4437 = vpop.xlane.xlu0 %4436
        %v4438 = vsel %vm1019, %v4399, 0.0
        %v4439 = vadd.f32 %v4398, %v4438
        %4440 = vadd.xlane.f32.xlu0 %v4439
        %v4441 = vpop.xlane.xlu0 %4440
        %v4442 = vsel %vm1019, %v4401, 0.0
        %v4443 = vadd.f32 %v4400, %v4442
        %4444 = vadd.xlane.f32.xlu0 %v4443
        %v4445 = vpop.xlane.xlu0 %4444
        %v4446 = vsel %vm1019, %v4403, 0.0
        %v4447 = vadd.f32 %v4402, %v4446
        %4448 = vadd.xlane.f32.xlu0 %v4447
        %v4449 = vpop.xlane.xlu0 %4448
        %v4450 = vsel %vm1019, %v4405, 0.0
        %v4451 = vadd.f32 %v4404, %v4450
        %4452 = vadd.xlane.f32.xlu0 %v4451
        %v4453 = vpop.xlane.xlu0 %4452
        %v4454 = vsel %vm1019, %v4407, 0.0
        %v4455 = vadd.f32 %v4406, %v4454
        %4456 = vadd.xlane.f32.xlu0 %v4455
        %v4457 = vpop.xlane.xlu0 %4456
        %v4458 = vsel %vm1019, %v4409, 0.0
        %v4459 = vadd.f32 %v4408, %v4458
        %4460 = vadd.xlane.f32.xlu0 %v4459
        %v4461 = vpop.xlane.xlu0 %4460
        %v4462 = vsel %vm1019, %v4411, 0.0
        %v4463 = vadd.f32 %v4410, %v4462
        %4464 = vadd.xlane.f32.xlu0 %v4463
        %v4465 = vpop.xlane.xlu0 %4464
        %v4466 = vsel %vm1019, %v4413, 0.0
        %v4467 = vadd.f32 %v4412, %v4466
        %4468 = vadd.xlane.f32.xlu0 %v4467
        %v4469 = vpop.xlane.xlu0 %4468
        %v4470 = vsel %vm1019, %v4415, 0.0
        %v4471 = vadd.f32 %v4414, %v4470
        %4472 = vadd.xlane.f32.xlu0 %v4471
        %v4473 = vpop.xlane.xlu0 %4472
        %v4474 = vsel %vm1019, %v4417, 0.0
        %v4475 = vadd.f32 %v4416, %v4474
        %4476 = vadd.xlane.f32.xlu0 %v4475
        %v4477 = vpop.xlane.xlu0 %4476
        %v4478 = vsel %vm1019, %v4419, 0.0
        %v4479 = vadd.f32 %v4418, %v4478
        %4480 = vadd.xlane.f32.xlu0 %v4479
        %v4481 = vpop.xlane.xlu0 %4480
        %v4482 = vsel %vm1019, %v4421, 0.0
        %v4483 = vadd.f32 %v4420, %v4482
        %4484 = vadd.xlane.f32.xlu0 %v4483
        %v4485 = vpop.xlane.xlu0 %4484
        %v4486 = vmul.f32 %v4425, %v1090
        %v4487 = vmul.f32 %v4429, %v1090
        %v4488 = vmul.f32 %v4433, %v1090
        %v4489 = vmul.f32 %v4437, %v1090
        %v4490 = vmul.f32 %v4441, %v1090
        %v4491 = vmul.f32 %v4445, %v1090
        %v4492 = vmul.f32 %v4449, %v1090
        %v4493 = vmul.f32 %v4453, %v1090
        %v4494 = vmul.f32 %v4457, %v1090
        %v4495 = vmul.f32 %v4461, %v1090
        %v4496 = vmul.f32 %v4465, %v1090
        %v4497 = vmul.f32 %v4469, %v1090
        %v4498 = vmul.f32 %v4473, %v1090
        %v4499 = vmul.f32 %v4477, %v1090
        %v4500 = vmul.f32 %v4481, %v1090
        %v4501 = vmul.f32 %v4485, %v1090
        %v4502 = vadd.f32 %v4486, 1e-05
        %v4503 = vadd.f32 %v4487, 1e-05
        %v4504 = vadd.f32 %v4488, 1e-05
        %v4505 = vadd.f32 %v4489, 1e-05
        %v4506 = vadd.f32 %v4490, 1e-05
        %v4507 = vadd.f32 %v4491, 1e-05
        %v4508 = vadd.f32 %v4492, 1e-05
        %v4509 = vadd.f32 %v4493, 1e-05
        %v4510 = vadd.f32 %v4494, 1e-05
        %v4511 = vadd.f32 %v4495, 1e-05
        %v4512 = vadd.f32 %v4496, 1e-05
        %v4513 = vadd.f32 %v4497, 1e-05
        %v4514 = vadd.f32 %v4498, 1e-05
        %v4515 = vadd.f32 %v4499, 1e-05
        %v4516 = vadd.f32 %v4500, 1e-05
        %v4517 = vadd.f32 %v4501, 1e-05
        %v4518 = vrsqrt.pop %v4502
        %v4519 = vmul.f32 %v4518, %v4502
        %v4520 = vmul.f32 %v4519, %v4518
        %v4521 = vmul.f32 0.5, %v4520
        %v4522 = vsub.f32 1.5, %v4521
        %v4523 = vmul.f32 %v4518, %v4522
        %vm4524 = vweird.f32 %v4502
        %vm4525 = vweird.f32 %v4518
        %vm4526 = vmor %vm4524, %vm4525
        %v4527 = vsel %vm4526, %v4518, %v4523
        %v4528 = vrsqrt.pop %v4503
        %v4529 = vmul.f32 %v4528, %v4503
        %v4530 = vmul.f32 %v4529, %v4528
        %v4531 = vmul.f32 0.5, %v4530
        %v4532 = vsub.f32 1.5, %v4531
        %v4533 = vmul.f32 %v4528, %v4532
        %vm4534 = vweird.f32 %v4503
        %vm4535 = vweird.f32 %v4528
        %vm4536 = vmor %vm4534, %vm4535
        %v4537 = vsel %vm4536, %v4528, %v4533
        %v4538 = vrsqrt.pop %v4504
        %v4539 = vmul.f32 %v4538, %v4504
        %v4540 = vmul.f32 %v4539, %v4538
        %v4541 = vmul.f32 0.5, %v4540
        %v4542 = vsub.f32 1.5, %v4541
        %v4543 = vmul.f32 %v4538, %v4542
        %vm4544 = vweird.f32 %v4504
        %vm4545 = vweird.f32 %v4538
        %vm4546 = vmor %vm4544, %vm4545
        %v4547 = vsel %vm4546, %v4538, %v4543
        %v4548 = vrsqrt.pop %v4505
        %v4549 = vmul.f32 %v4548, %v4505
        %v4550 = vmul.f32 %v4549, %v4548
        %v4551 = vmul.f32 0.5, %v4550
        %v4552 = vsub.f32 1.5, %v4551
        %v4553 = vmul.f32 %v4548, %v4552
        %vm4554 = vweird.f32 %v4505
        %vm4555 = vweird.f32 %v4548
        %vm4556 = vmor %vm4554, %vm4555
        %v4557 = vsel %vm4556, %v4548, %v4553
        %v4558 = vrsqrt.pop %v4506
        %v4559 = vmul.f32 %v4558, %v4506
        %v4560 = vmul.f32 %v4559, %v4558
        %v4561 = vmul.f32 0.5, %v4560
        %v4562 = vsub.f32 1.5, %v4561
        %v4563 = vmul.f32 %v4558, %v4562
        %vm4564 = vweird.f32 %v4506
        %vm4565 = vweird.f32 %v4558
        %vm4566 = vmor %vm4564, %vm4565
        %v4567 = vsel %vm4566, %v4558, %v4563
        %v4568 = vrsqrt.pop %v4507
        %v4569 = vmul.f32 %v4568, %v4507
        %v4570 = vmul.f32 %v4569, %v4568
        %v4571 = vmul.f32 0.5, %v4570
        %v4572 = vsub.f32 1.5, %v4571
        %v4573 = vmul.f32 %v4568, %v4572
        %vm4574 = vweird.f32 %v4507
        %vm4575 = vweird.f32 %v4568
        %vm4576 = vmor %vm4574, %vm4575
        %v4577 = vsel %vm4576, %v4568, %v4573
        %v4578 = vrsqrt.pop %v4508
        %v4579 = vmul.f32 %v4578, %v4508
        %v4580 = vmul.f32 %v4579, %v4578
        %v4581 = vmul.f32 0.5, %v4580
        %v4582 = vsub.f32 1.5, %v4581
        %v4583 = vmul.f32 %v4578, %v4582
        %vm4584 = vweird.f32 %v4508
        %vm4585 = vweird.f32 %v4578
        %vm4586 = vmor %vm4584, %vm4585
        %v4587 = vsel %vm4586, %v4578, %v4583
        %v4588 = vrsqrt.pop %v4509
        %v4589 = vmul.f32 %v4588, %v4509
        %v4590 = vmul.f32 %v4589, %v4588
        %v4591 = vmul.f32 0.5, %v4590
        %v4592 = vsub.f32 1.5, %v4591
        %v4593 = vmul.f32 %v4588, %v4592
        %vm4594 = vweird.f32 %v4509
        %vm4595 = vweird.f32 %v4588
        %vm4596 = vmor %vm4594, %vm4595
        %v4597 = vsel %vm4596, %v4588, %v4593
        %v4598 = vrsqrt.pop %v4510
        %v4599 = vmul.f32 %v4598, %v4510
        %v4600 = vmul.f32 %v4599, %v4598
        %v4601 = vmul.f32 0.5, %v4600
        %v4602 = vsub.f32 1.5, %v4601
        %v4603 = vmul.f32 %v4598, %v4602
        %vm4604 = vweird.f32 %v4510
        %vm4605 = vweird.f32 %v4598
        %vm4606 = vmor %vm4604, %vm4605
        %v4607 = vsel %vm4606, %v4598, %v4603
        %v4608 = vrsqrt.pop %v4511
        %v4609 = vmul.f32 %v4608, %v4511
        %v4610 = vmul.f32 %v4609, %v4608
        %v4611 = vmul.f32 0.5, %v4610
        %v4612 = vsub.f32 1.5, %v4611
        %v4613 = vmul.f32 %v4608, %v4612
        %vm4614 = vweird.f32 %v4511
        %vm4615 = vweird.f32 %v4608
        %vm4616 = vmor %vm4614, %vm4615
        %v4617 = vsel %vm4616, %v4608, %v4613
        %v4618 = vrsqrt.pop %v4512
        %v4619 = vmul.f32 %v4618, %v4512
        %v4620 = vmul.f32 %v4619, %v4618
        %v4621 = vmul.f32 0.5, %v4620
        %v4622 = vsub.f32 1.5, %v4621
        %v4623 = vmul.f32 %v4618, %v4622
        %vm4624 = vweird.f32 %v4512
        %vm4625 = vweird.f32 %v4618
        %vm4626 = vmor %vm4624, %vm4625
        %v4627 = vsel %vm4626, %v4618, %v4623
        %v4628 = vrsqrt.pop %v4513
        %v4629 = vmul.f32 %v4628, %v4513
        %v4630 = vmul.f32 %v4629, %v4628
        %v4631 = vmul.f32 0.5, %v4630
        %v4632 = vsub.f32 1.5, %v4631
        %v4633 = vmul.f32 %v4628, %v4632
        %vm4634 = vweird.f32 %v4513
        %vm4635 = vweird.f32 %v4628
        %vm4636 = vmor %vm4634, %vm4635
        %v4637 = vsel %vm4636, %v4628, %v4633
        %v4638 = vrsqrt.pop %v4514
        %v4639 = vmul.f32 %v4638, %v4514
        %v4640 = vmul.f32 %v4639, %v4638
        %v4641 = vmul.f32 0.5, %v4640
        %v4642 = vsub.f32 1.5, %v4641
        %v4643 = vmul.f32 %v4638, %v4642
        %vm4644 = vweird.f32 %v4514
        %vm4645 = vweird.f32 %v4638
        %vm4646 = vmor %vm4644, %vm4645
        %v4647 = vsel %vm4646, %v4638, %v4643
        %v4648 = vrsqrt.pop %v4515
        %v4649 = vmul.f32 %v4648, %v4515
        %v4650 = vmul.f32 %v4649, %v4648
        %v4651 = vmul.f32 0.5, %v4650
        %v4652 = vsub.f32 1.5, %v4651
        %v4653 = vmul.f32 %v4648, %v4652
        %vm4654 = vweird.f32 %v4515
        %vm4655 = vweird.f32 %v4648
        %vm4656 = vmor %vm4654, %vm4655
        %v4657 = vsel %vm4656, %v4648, %v4653
        %v4658 = vrsqrt.pop %v4516
        %v4659 = vmul.f32 %v4658, %v4516
        %v4660 = vmul.f32 %v4659, %v4658
        %v4661 = vmul.f32 0.5, %v4660
        %v4662 = vsub.f32 1.5, %v4661
        %v4663 = vmul.f32 %v4658, %v4662
        %vm4664 = vweird.f32 %v4516
        %vm4665 = vweird.f32 %v4658
        %vm4666 = vmor %vm4664, %vm4665
        %v4667 = vsel %vm4666, %v4658, %v4663
        %v4668 = vrsqrt.pop %v4517
        %v4669 = vmul.f32 %v4668, %v4517
        %v4670 = vmul.f32 %v4669, %v4668
        %v4671 = vmul.f32 0.5, %v4670
        %v4672 = vsub.f32 1.5, %v4671
        %v4673 = vmul.f32 %v4668, %v4672
        %vm4674 = vweird.f32 %v4517
        %vm4675 = vweird.f32 %v4668
        %vm4676 = vmor %vm4674, %vm4675
        %v4677 = vsel %vm4676, %v4668, %v4673
        %v4678 = vmul.f32 %v4358, %v4527
        %v4679 = vmul.f32 %v4359, %v4527
        %v4680 = vmul.f32 %v4360, %v4537
        %v4681 = vmul.f32 %v4361, %v4537
        %v4682 = vmul.f32 %v4362, %v4547
        %v4683 = vmul.f32 %v4363, %v4547
        %v4684 = vmul.f32 %v4364, %v4557
        %v4685 = vmul.f32 %v4365, %v4557
        %v4686 = vmul.f32 %v4366, %v4567
        %v4687 = vmul.f32 %v4367, %v4567
        %v4688 = vmul.f32 %v4368, %v4577
        %v4689 = vmul.f32 %v4369, %v4577
        %v4690 = vmul.f32 %v4370, %v4587
        %v4691 = vmul.f32 %v4371, %v4587
        %v4692 = vmul.f32 %v4372, %v4597
        %v4693 = vmul.f32 %v4373, %v4597
        %v4694 = vmul.f32 %v4374, %v4607
        %v4695 = vmul.f32 %v4375, %v4607
        %v4696 = vmul.f32 %v4376, %v4617
        %v4697 = vmul.f32 %v4377, %v4617
        %v4698 = vmul.f32 %v4378, %v4627
        %v4699 = vmul.f32 %v4379, %v4627
        %v4700 = vmul.f32 %v4380, %v4637
        %v4701 = vmul.f32 %v4381, %v4637
        %v4702 = vmul.f32 %v4382, %v4647
        %v4703 = vmul.f32 %v4383, %v4647
        %v4704 = vmul.f32 %v4384, %v4657
        %v4705 = vmul.f32 %v4385, %v4657
        %v4706 = vmul.f32 %v4386, %v4667
        %v4707 = vmul.f32 %v4387, %v4667
        %v4708 = vmul.f32 %v4388, %v4677
        %v4709 = vmul.f32 %v4389, %v4677
        %v4711 = vperm.slane %v4275, 0
        %v4712 = vperm.slane %v4275, 1
        %v4715 = vmul.f32 %v4678, %v4711
        %v4716 = vmul.f32 %v4679, %v4712
        %v4717 = vmul.f32 %v4680, %v4711
        %v4718 = vmul.f32 %v4681, %v4712
        %v4719 = vmul.f32 %v4682, %v4711
        %v4720 = vmul.f32 %v4683, %v4712
        %v4721 = vmul.f32 %v4684, %v4711
        %v4722 = vmul.f32 %v4685, %v4712
        %v4723 = vmul.f32 %v4686, %v4711
        %v4724 = vmul.f32 %v4687, %v4712
        %v4725 = vmul.f32 %v4688, %v4711
        %v4726 = vmul.f32 %v4689, %v4712
        %v4727 = vmul.f32 %v4690, %v4711
        %v4728 = vmul.f32 %v4691, %v4712
        %v4729 = vmul.f32 %v4692, %v4711
        %v4730 = vmul.f32 %v4693, %v4712
        %v4731 = vmul.f32 %v4694, %v4711
        %v4732 = vmul.f32 %v4695, %v4712
        %v4733 = vmul.f32 %v4696, %v4711
        %v4734 = vmul.f32 %v4697, %v4712
        %v4735 = vmul.f32 %v4698, %v4711
        %v4736 = vmul.f32 %v4699, %v4712
        %v4737 = vmul.f32 %v4700, %v4711
        %v4738 = vmul.f32 %v4701, %v4712
        %v4739 = vmul.f32 %v4702, %v4711
        %v4740 = vmul.f32 %v4703, %v4712
        %v4741 = vmul.f32 %v4704, %v4711
        %v4742 = vmul.f32 %v4705, %v4712
        %v4743 = vmul.f32 %v4706, %v4711
        %v4744 = vmul.f32 %v4707, %v4712
        %v4745 = vmul.f32 %v4708, %v4711
        %v4746 = vmul.f32 %v4709, %v4712
        %v4748 = vperm.slane %v4277, 0
        %v4749 = vperm.slane %v4277, 1
        %v4752 = vadd.f32 %v4715, %v4748
        %v4753 = vadd.f32 %v4716, %v4749
        %v4754 = vadd.f32 %v4717, %v4748
        %v4755 = vadd.f32 %v4718, %v4749
        %v4756 = vadd.f32 %v4719, %v4748
        %v4757 = vadd.f32 %v4720, %v4749
        %v4758 = vadd.f32 %v4721, %v4748
        %v4759 = vadd.f32 %v4722, %v4749
        %v4760 = vadd.f32 %v4723, %v4748
        %v4761 = vadd.f32 %v4724, %v4749
        %v4762 = vadd.f32 %v4725, %v4748
        %v4763 = vadd.f32 %v4726, %v4749
        %v4764 = vadd.f32 %v4727, %v4748
        %v4765 = vadd.f32 %v4728, %v4749
        %v4766 = vadd.f32 %v4729, %v4748
        %v4767 = vadd.f32 %v4730, %v4749
        %v4768 = vadd.f32 %v4731, %v4748
        %v4769 = vadd.f32 %v4732, %v4749
        %v4770 = vadd.f32 %v4733, %v4748
        %v4771 = vadd.f32 %v4734, %v4749
        %v4772 = vadd.f32 %v4735, %v4748
        %v4773 = vadd.f32 %v4736, %v4749
        %v4774 = vadd.f32 %v4737, %v4748
        %v4775 = vadd.f32 %v4738, %v4749
        %v4776 = vadd.f32 %v4739, %v4748
        %v4777 = vadd.f32 %v4740, %v4749
        %v4778 = vadd.f32 %v4741, %v4748
        %v4779 = vadd.f32 %v4742, %v4749
        %v4780 = vadd.f32 %v4743, %v4748
        %v4781 = vadd.f32 %v4744, %v4749
        %v4782 = vadd.f32 %v4745, %v4748
        %v4783 = vadd.f32 %v4746, %v4749
        %v4784 = vld [vmem:[%s543] sm:$0xff]
        %v4785 = vld [vmem:[%s543 + $0x8] sm:$0xff]
        %v4786 = vld [vmem:[%s543 + $0x10] sm:$0xff]
        %v4787 = vld [vmem:[%s543 + $0x18] sm:$0xff]
        %v4788 = vld [vmem:[%s543 + $0x20] sm:$0xff]
        %v4789 = vld [vmem:[%s543 + $0x28] sm:$0xff]
        %v4790 = vld [vmem:[%s543 + $0x30] sm:$0xff]
        %v4791 = vld [vmem:[%s543 + $0x38] sm:$0xff]
        %v4792 = vld [vmem:[%s543 + $0x40] sm:$0xff]
        %v4793 = vld [vmem:[%s543 + $0x48] sm:$0xff]
        %v4794 = vld [vmem:[%s543 + $0x50] sm:$0xff]
        %v4795 = vld [vmem:[%s543 + $0x58] sm:$0xff]
        %v4796 = vld [vmem:[%s543 + $0x60] sm:$0xff]
        %v4797 = vld [vmem:[%s543 + $0x68] sm:$0xff]
        %v4798 = vld [vmem:[%s543 + $0x70] sm:$0xff]
        %v4799 = vld [vmem:[%s543 + $0x78] sm:$0xff]
        %v4800 = vld [vmem:[%s543 + $0x80] sm:$0xff]
        %v4801 = vld [vmem:[%s543 + $0x88] sm:$0xff]
        %v4802 = vld [vmem:[%s543 + $0x90] sm:$0xff]
        %v4803 = vld [vmem:[%s543 + $0x98] sm:$0xff]
        %v4804 = vld [vmem:[%s543 + $0xa0] sm:$0xff]
        %v4805 = vld [vmem:[%s543 + $0xa8] sm:$0xff]
        %v4806 = vld [vmem:[%s543 + $0xb0] sm:$0xff]
        %v4807 = vld [vmem:[%s543 + $0xb8] sm:$0xff]
        %v4808 = vld [vmem:[%s543 + $0xc0] sm:$0xff]
        %v4809 = vld [vmem:[%s543 + $0xc8] sm:$0xff]
        %v4810 = vld [vmem:[%s543 + $0xd0] sm:$0xff]
        %v4811 = vld [vmem:[%s543 + $0xd8] sm:$0xff]
        %v4812 = vld [vmem:[%s543 + $0xe0] sm:$0xff]
        %v4813 = vld [vmem:[%s543 + $0xe8] sm:$0xff]
        %v4814 = vld [vmem:[%s543 + $0xf0] sm:$0xff]
        %v4815 = vld [vmem:[%s543 + $0xf8] sm:$0xff]
        %v4816 = vld [vmem:[%s543 + $0x100] sm:$0xff]
        %v4817 = vld [vmem:[%s543 + $0x108] sm:$0xff]
        %v4818 = vld [vmem:[%s543 + $0x110] sm:$0xff]
        %v4819 = vld [vmem:[%s543 + $0x118] sm:$0xff]
        %v4820 = vld [vmem:[%s543 + $0x120] sm:$0xff]
        %v4821 = vld [vmem:[%s543 + $0x128] sm:$0xff]
        %v4822 = vld [vmem:[%s543 + $0x130] sm:$0xff]
        %v4823 = vld [vmem:[%s543 + $0x138] sm:$0xff]
        %v4824 = vld [vmem:[%s543 + $0x140] sm:$0xff]
        %v4825 = vld [vmem:[%s543 + $0x148] sm:$0xff]
        %v4826 = vld [vmem:[%s543 + $0x150] sm:$0xff]
        %v4827 = vld [vmem:[%s543 + $0x158] sm:$0xff]
        %v4828 = vld [vmem:[%s543 + $0x160] sm:$0xff]
        %v4829 = vld [vmem:[%s543 + $0x168] sm:$0xff]
        %v4830 = vld [vmem:[%s543 + $0x170] sm:$0xff]
        %v4831 = vld [vmem:[%s543 + $0x178] sm:$0xff]
        %v4832 = vld [vmem:[%s543 + $0x180] sm:$0xff]
        %v4833 = vld [vmem:[%s543 + $0x188] sm:$0xff]
        %v4834 = vld [vmem:[%s543 + $0x190] sm:$0xff]
        %v4835 = vld [vmem:[%s543 + $0x198] sm:$0xff]
        %v4836 = vld [vmem:[%s543 + $0x1a0] sm:$0xff]
        %v4837 = vld [vmem:[%s543 + $0x1a8] sm:$0xff]
        %v4838 = vld [vmem:[%s543 + $0x1b0] sm:$0xff]
        %v4839 = vld [vmem:[%s543 + $0x1b8] sm:$0xff]
        %v4840 = vld [vmem:[%s543 + $0x1c0] sm:$0xff]
        %v4841 = vld [vmem:[%s543 + $0x1c8] sm:$0xff]
        %v4842 = vld [vmem:[%s543 + $0x1d0] sm:$0xff]
        %v4843 = vld [vmem:[%s543 + $0x1d8] sm:$0xff]
        %v4844 = vld [vmem:[%s543 + $0x1e0] sm:$0xff]
        %v4845 = vld [vmem:[%s543 + $0x1e8] sm:$0xff]
        %v4846 = vld [vmem:[%s543 + $0x1f0] sm:$0xff]
        %v4847 = vld [vmem:[%s543 + $0x1f8] sm:$0xff]
        %v4848 = vld [vmem:[%s543 + $0x200] sm:$0xff]
        %v4849 = vld [vmem:[%s543 + $0x208] sm:$0xff]
        %v4850 = vld [vmem:[%s543 + $0x210] sm:$0xff]
        %v4851 = vld [vmem:[%s543 + $0x218] sm:$0xff]
        %v4852 = vld [vmem:[%s543 + $0x220] sm:$0xff]
        %v4853 = vld [vmem:[%s543 + $0x228] sm:$0xff]
        %v4854 = vld [vmem:[%s543 + $0x230] sm:$0xff]
        %v4855 = vld [vmem:[%s543 + $0x238] sm:$0xff]
        %v4856 = vpack.c.bf16 %v4754, %v4752
        %v4857 = vpack.c.bf16 %v4755, %v4753
        %v4858 = vpack.c.bf16 %v4758, %v4756
        %v4859 = vpack.c.bf16 %v4759, %v4757
        %v4860 = vpack.c.bf16 %v4762, %v4760
        %v4861 = vpack.c.bf16 %v4763, %v4761
        %v4862 = vpack.c.bf16 %v4766, %v4764
        %v4863 = vpack.c.bf16 %v4767, %v4765
        %v4864 = vpack.c.bf16 %v4770, %v4768
        %v4865 = vpack.c.bf16 %v4771, %v4769
        %v4866 = vpack.c.bf16 %v4774, %v4772
        %v4867 = vpack.c.bf16 %v4775, %v4773
        %v4868 = vpack.c.bf16 %v4778, %v4776
        %v4869 = vpack.c.bf16 %v4779, %v4777
        %v4870 = vpack.c.bf16 %v4782, %v4780
        %v4871 = vpack.c.bf16 %v4783, %v4781
        %v4872 = vld [vmem:[%s557] sm:$0x3f]
        %v4874 = vperm.slane %v4872, 0
        %v4875 = vperm.slane %v4872, 1
        %v4876 = vperm.slane %v4872, 2
        %v4877 = vperm.slane %v4872, 3
        %v4878 = vperm.slane %v4872, 4
        %v4879 = vperm.slane %v4872, 5
        %v4958 = vunpack.c.l.b16 %v4784
        %v4959 = vunpack.c.h.b16 %v4784
        %v4960 = vunpack.c.l.b16 %v4785
        %v4961 = vunpack.c.h.b16 %v4785
        %v4962 = vunpack.c.l.b16 %v4786
        %v4963 = vunpack.c.h.b16 %v4786
        %v4964 = vunpack.c.l.b16 %v4787
        %v4965 = vunpack.c.h.b16 %v4787
        %v4966 = vunpack.c.l.b16 %v4788
        %v4967 = vunpack.c.h.b16 %v4788
        %v4968 = vunpack.c.l.b16 %v4789
        %v4969 = vunpack.c.h.b16 %v4789
        %v4970 = vunpack.c.l.b16 %v4790
        %v4971 = vunpack.c.h.b16 %v4790
        %v4972 = vunpack.c.l.b16 %v4791
        %v4973 = vunpack.c.h.b16 %v4791
        %v4974 = vunpack.c.l.b16 %v4792
        %v4975 = vunpack.c.h.b16 %v4792
        %v4976 = vunpack.c.l.b16 %v4793
        %v4977 = vunpack.c.h.b16 %v4793
        %v4978 = vunpack.c.l.b16 %v4794
        %v4979 = vunpack.c.h.b16 %v4794
        %v4980 = vunpack.c.l.b16 %v4795
        %v4981 = vunpack.c.h.b16 %v4795
        %v4982 = vunpack.c.l.b16 %v4796
        %v4983 = vunpack.c.h.b16 %v4796
        %v4984 = vunpack.c.l.b16 %v4797
        %v4985 = vunpack.c.h.b16 %v4797
        %v4986 = vunpack.c.l.b16 %v4798
        %v4987 = vunpack.c.h.b16 %v4798
        %v4988 = vunpack.c.l.b16 %v4799
        %v4989 = vunpack.c.h.b16 %v4799
        %v4990 = vunpack.c.l.b16 %v4800
        %v4991 = vunpack.c.h.b16 %v4800
        %v4992 = vunpack.c.l.b16 %v4801
        %v4993 = vunpack.c.h.b16 %v4801
        %v4994 = vunpack.c.l.b16 %v4802
        %v4995 = vunpack.c.h.b16 %v4802
        %v4996 = vunpack.c.l.b16 %v4803
        %v4997 = vunpack.c.h.b16 %v4803
        %v4998 = vunpack.c.l.b16 %v4804
        %v4999 = vunpack.c.h.b16 %v4804
        %v5000 = vunpack.c.l.b16 %v4805
        %v5001 = vunpack.c.h.b16 %v4805
        %v5002 = vunpack.c.l.b16 %v4806
        %v5003 = vunpack.c.h.b16 %v4806
        %v5004 = vunpack.c.l.b16 %v4807
        %v5005 = vunpack.c.h.b16 %v4807
        %v5006 = vunpack.c.l.b16 %v4808
        %v5007 = vunpack.c.h.b16 %v4808
        %v5008 = vunpack.c.l.b16 %v4809
        %v5009 = vunpack.c.h.b16 %v4809
        %v5010 = vunpack.c.l.b16 %v4810
        %v5011 = vunpack.c.h.b16 %v4810
        %v5012 = vunpack.c.l.b16 %v4811
        %v5013 = vunpack.c.h.b16 %v4811
        %v5014 = vunpack.c.l.b16 %v4812
        %v5015 = vunpack.c.h.b16 %v4812
        %v5016 = vunpack.c.l.b16 %v4813
        %v5017 = vunpack.c.h.b16 %v4813
        %v5018 = vunpack.c.l.b16 %v4814
        %v5019 = vunpack.c.h.b16 %v4814
        %v5020 = vunpack.c.l.b16 %v4815
        %v5021 = vunpack.c.h.b16 %v4815
        %v5022 = vunpack.c.l.b16 %v4816
        %v5023 = vunpack.c.h.b16 %v4816
        %v5024 = vunpack.c.l.b16 %v4817
        %v5025 = vunpack.c.h.b16 %v4817
        %v5026 = vunpack.c.l.b16 %v4818
        %v5027 = vunpack.c.h.b16 %v4818
        %v5028 = vunpack.c.l.b16 %v4819
        %v5029 = vunpack.c.h.b16 %v4819
        %v5030 = vunpack.c.l.b16 %v4820
        %v5031 = vunpack.c.h.b16 %v4820
        %v5032 = vunpack.c.l.b16 %v4821
        %v5033 = vunpack.c.h.b16 %v4821
        %v5034 = vunpack.c.l.b16 %v4822
        %v5035 = vunpack.c.h.b16 %v4822
        %v5036 = vunpack.c.l.b16 %v4823
        %v5037 = vunpack.c.h.b16 %v4823
        %v5038 = vunpack.c.l.b16 %v4824
        %v5039 = vunpack.c.h.b16 %v4824
        %v5040 = vunpack.c.l.b16 %v4825
        %v5041 = vunpack.c.h.b16 %v4825
        %v5042 = vunpack.c.l.b16 %v4826
        %v5043 = vunpack.c.h.b16 %v4826
        %v5044 = vunpack.c.l.b16 %v4827
        %v5045 = vunpack.c.h.b16 %v4827
        %v5046 = vunpack.c.l.b16 %v4828
        %v5047 = vunpack.c.h.b16 %v4828
        %v5048 = vunpack.c.l.b16 %v4829
        %v5049 = vunpack.c.h.b16 %v4829
        %v5050 = vunpack.c.l.b16 %v4830
        %v5051 = vunpack.c.h.b16 %v4830
        %v5052 = vunpack.c.l.b16 %v4831
        %v5053 = vunpack.c.h.b16 %v4831
        %v5054 = vunpack.c.l.b16 %v4832
        %v5055 = vunpack.c.h.b16 %v4832
        %v5056 = vunpack.c.l.b16 %v4833
        %v5057 = vunpack.c.h.b16 %v4833
        %v5058 = vunpack.c.l.b16 %v4834
        %v5059 = vunpack.c.h.b16 %v4834
        %v5060 = vunpack.c.l.b16 %v4835
        %v5061 = vunpack.c.h.b16 %v4835
        %v5062 = vunpack.c.l.b16 %v4836
        %v5063 = vunpack.c.h.b16 %v4836
        %v5064 = vunpack.c.l.b16 %v4837
        %v5065 = vunpack.c.h.b16 %v4837
        %v5066 = vunpack.c.l.b16 %v4838
        %v5067 = vunpack.c.h.b16 %v4838
        %v5068 = vunpack.c.l.b16 %v4839
        %v5069 = vunpack.c.h.b16 %v4839
        %v5070 = vunpack.c.l.b16 %v4840
        %v5071 = vunpack.c.h.b16 %v4840
        %v5072 = vunpack.c.l.b16 %v4841
        %v5073 = vunpack.c.h.b16 %v4841
        %v5074 = vunpack.c.l.b16 %v4842
        %v5075 = vunpack.c.h.b16 %v4842
        %v5076 = vunpack.c.l.b16 %v4843
        %v5077 = vunpack.c.h.b16 %v4843
        %v5078 = vunpack.c.l.b16 %v4844
        %v5079 = vunpack.c.h.b16 %v4844
        %v5080 = vunpack.c.l.b16 %v4845
        %v5081 = vunpack.c.h.b16 %v4845
        %v5082 = vunpack.c.l.b16 %v4846
        %v5083 = vunpack.c.h.b16 %v4846
        %v5084 = vunpack.c.l.b16 %v4847
        %v5085 = vunpack.c.h.b16 %v4847
        %v5086 = vunpack.c.l.b16 %v4848
        %v5087 = vunpack.c.h.b16 %v4848
        %v5088 = vunpack.c.l.b16 %v4849
        %v5089 = vunpack.c.h.b16 %v4849
        %v5090 = vunpack.c.l.b16 %v4850
        %v5091 = vunpack.c.h.b16 %v4850
        %v5092 = vunpack.c.l.b16 %v4851
        %v5093 = vunpack.c.h.b16 %v4851
        %v5094 = vunpack.c.l.b16 %v4852
        %v5095 = vunpack.c.h.b16 %v4852
        %v5096 = vunpack.c.l.b16 %v4853
        %v5097 = vunpack.c.h.b16 %v4853
        %v5098 = vunpack.c.l.b16 %v4854
        %v5099 = vunpack.c.h.b16 %v4854
        %v5100 = vunpack.c.l.b16 %v4855
        %v5101 = vunpack.c.h.b16 %v4855
        %v5102 = vpack.c.b16 %v4964, %v4958
        %v5103 = vpack.c.b16 %v4965, %v4959
        %v5104 = vpack.c.b16 %v4966, %v4960
        %v5105 = vpack.c.b16 %v4967, %v4961
        %v5106 = vpack.c.b16 %v4968, %v4962
        %v5107 = vpack.c.b16 %v4969, %v4963
        %v5108 = vpack.c.b16 %v4976, %v4970
        %v5109 = vpack.c.b16 %v4977, %v4971
        %v5110 = vpack.c.b16 %v4978, %v4972
        %v5111 = vpack.c.b16 %v4979, %v4973
        %v5112 = vpack.c.b16 %v4980, %v4974
        %v5113 = vpack.c.b16 %v4981, %v4975
        %v5114 = vpack.c.b16 %v4988, %v4982
        %v5115 = vpack.c.b16 %v4989, %v4983
        %v5116 = vpack.c.b16 %v4990, %v4984
        %v5117 = vpack.c.b16 %v4991, %v4985
        %v5118 = vpack.c.b16 %v4992, %v4986
        %v5119 = vpack.c.b16 %v4993, %v4987
        %v5120 = vpack.c.b16 %v5000, %v4994
        %v5121 = vpack.c.b16 %v5001, %v4995
        %v5122 = vpack.c.b16 %v5002, %v4996
        %v5123 = vpack.c.b16 %v5003, %v4997
        %v5124 = vpack.c.b16 %v5004, %v4998
        %v5125 = vpack.c.b16 %v5005, %v4999
        %v5126 = vpack.c.b16 %v5012, %v5006
        %v5127 = vpack.c.b16 %v5013, %v5007
        %v5128 = vpack.c.b16 %v5014, %v5008
        %v5129 = vpack.c.b16 %v5015, %v5009
        %v5130 = vpack.c.b16 %v5016, %v5010
        %v5131 = vpack.c.b16 %v5017, %v5011
        %v5132 = vpack.c.b16 %v5024, %v5018
        %v5133 = vpack.c.b16 %v5025, %v5019
        %v5134 = vpack.c.b16 %v5026, %v5020
        %v5135 = vpack.c.b16 %v5027, %v5021
        %v5136 = vpack.c.b16 %v5028, %v5022
        %v5137 = vpack.c.b16 %v5029, %v5023
        %v5138 = vpack.c.b16 %v5036, %v5030
        %v5139 = vpack.c.b16 %v5037, %v5031
        %v5140 = vpack.c.b16 %v5038, %v5032
        %v5141 = vpack.c.b16 %v5039, %v5033
        %v5142 = vpack.c.b16 %v5040, %v5034
        %v5143 = vpack.c.b16 %v5041, %v5035
        %v5144 = vpack.c.b16 %v5048, %v5042
        %v5145 = vpack.c.b16 %v5049, %v5043
        %v5146 = vpack.c.b16 %v5050, %v5044
        %v5147 = vpack.c.b16 %v5051, %v5045
        %v5148 = vpack.c.b16 %v5052, %v5046
        %v5149 = vpack.c.b16 %v5053, %v5047
        %v5150 = vpack.c.b16 %v5060, %v5054
        %v5151 = vpack.c.b16 %v5061, %v5055
        %v5152 = vpack.c.b16 %v5062, %v5056
        %v5153 = vpack.c.b16 %v5063, %v5057
        %v5154 = vpack.c.b16 %v5064, %v5058
        %v5155 = vpack.c.b16 %v5065, %v5059
        %v5156 = vpack.c.b16 %v5072, %v5066
        %v5157 = vpack.c.b16 %v5073, %v5067
        %v5158 = vpack.c.b16 %v5074, %v5068
        %v5159 = vpack.c.b16 %v5075, %v5069
        %v5160 = vpack.c.b16 %v5076, %v5070
        %v5161 = vpack.c.b16 %v5077, %v5071
        %v5162 = vpack.c.b16 %v5084, %v5078
        %v5163 = vpack.c.b16 %v5085, %v5079
        %v5164 = vpack.c.b16 %v5086, %v5080
        %v5165 = vpack.c.b16 %v5087, %v5081
        %v5166 = vpack.c.b16 %v5088, %v5082
        %v5167 = vpack.c.b16 %v5089, %v5083
        %v5168 = vpack.c.b16 %v5096, %v5090
        %v5169 = vpack.c.b16 %v5097, %v5091
        %v5170 = vpack.c.b16 %v5098, %v5092
        %v5171 = vpack.c.b16 %v5099, %v5093
        %v5172 = vpack.c.b16 %v5100, %v5094
        %v5173 = vpack.c.b16 %v5101, %v5095
        %v5247 = vsel %vm1019, %v4857, 0
        %v5250 = vsel %vm1019, %v4859, 0
        %v5253 = vsel %vm1019, %v4861, 0
        %v5256 = vsel %vm1019, %v4863, 0
        %v5259 = vsel %vm1019, %v4865, 0
        %v5262 = vsel %vm1019, %v4867, 0
        %v5265 = vsel %vm1019, %v4869, 0
        %v5268 = vsel %vm1019, %v4871, 0
        %5270 = vmatpush.bf16.msra.mxu0 %v5144
        %5271 = vmatpush.bf16.msra.mxu0 %v5138
        %5272 = vmatpush.bf16.msra.mxu0 %v5132
        %5273 = vmatpush.bf16.msra.mxu0 %v5126
        %5274 = vmatpush.bf16.msra.mxu0 %v5120
        %5275 = vmatpush.bf16.msra.mxu0 %v5114
        %5276 = vmatpush.bf16.msra.mxu0 %v5108
        %5277 = vmatpush.bf16.msra.mxu0 %v5102
        %5278 = vmatmul.bf16.gmra.mxu0 %v4856
        %v5279 = vpop.f32.mrf.mxu0
        %v5280 = vadd.f32 %v4874, %v5279
        %v5281 = vpop.f32.mrf.mxu0
        %v5282 = vadd.f32 %v4874, %v5281
        %5283 = vmatmul.bf16.gmra.mxu0 %v4858
        %v5284 = vpop.f32.mrf.mxu0
        %v5285 = vadd.f32 %v4874, %v5284
        %v5286 = vpop.f32.mrf.mxu0
        %v5287 = vadd.f32 %v4874, %v5286
        %5288 = vmatmul.bf16.gmra.mxu0 %v4860
        %v5289 = vpop.f32.mrf.mxu0
        %v5290 = vadd.f32 %v4874, %v5289
        %v5291 = vpop.f32.mrf.mxu0
        %v5292 = vadd.f32 %v4874, %v5291
        %5293 = vmatmul.bf16.gmra.mxu0 %v4862
        %v5294 = vpop.f32.mrf.mxu0
        %v5295 = vadd.f32 %v4874, %v5294
        %v5296 = vpop.f32.mrf.mxu0
        %v5297 = vadd.f32 %v4874, %v5296
        %5298 = vmatmul.bf16.gmra.mxu0 %v4864
        %v5299 = vpop.f32.mrf.mxu0
        %v5300 = vadd.f32 %v4874, %v5299
        %v5301 = vpop.f32.mrf.mxu0
        %v5302 = vadd.f32 %v4874, %v5301
        %5303 = vmatmul.bf16.gmra.mxu0 %v4866
        %v5304 = vpop.f32.mrf.mxu0
        %v5305 = vadd.f32 %v4874, %v5304
        %v5306 = vpop.f32.mrf.mxu0
        %v5307 = vadd.f32 %v4874, %v5306
        %5308 = vmatmul.bf16.gmra.mxu0 %v4868
        %v5309 = vpop.f32.mrf.mxu0
        %v5310 = vadd.f32 %v4874, %v5309
        %v5311 = vpop.f32.mrf.mxu0
        %v5312 = vadd.f32 %v4874, %v5311
        %5313 = vmatmul.bf16.gmra.mxu0 %v4870
        %v5314 = vpop.f32.mrf.mxu0
        %v5315 = vadd.f32 %v4874, %v5314
        %v5316 = vpop.f32.mrf.mxu0
        %v5317 = vadd.f32 %v4874, %v5316
        %5318 = vdwg.mxu0
        %5319 = vmatpush.bf16.msra.mxu0 0
        %5320 = vmatpush.bf16.msra.mxu0 0
        %5321 = vmatpush.bf16.msra.mxu0 0
        %5322 = vmatpush.bf16.msra.mxu0 0
        %5323 = vmatpush.bf16.msra.mxu0 %v5168
        %5324 = vmatpush.bf16.msra.mxu0 %v5162
        %5325 = vmatpush.bf16.msra.mxu0 %v5156
        %5326 = vmatpush.bf16.msra.mxu0 %v5150
        %5327 = vmatmul.bf16.gmra.mxu0 %v5247
        %v5328 = vpop.f32.mrf.mxu0
        %v5329 = vadd.f32 %v5280, %v5328
        %v5330 = vpop.f32.mrf.mxu0
        %v5331 = vadd.f32 %v5282, %v5330
        %5332 = vmatmul.bf16.gmra.mxu0 %v5250
        %v5333 = vpop.f32.mrf.mxu0
        %v5334 = vadd.f32 %v5285, %v5333
        %v5335 = vpop.f32.mrf.mxu0
        %v5336 = vadd.f32 %v5287, %v5335
        %5337 = vmatmul.bf16.gmra.mxu0 %v5253
        %v5338 = vpop.f32.mrf.mxu0
        %v5339 = vadd.f32 %v5290, %v5338
        %v5340 = vpop.f32.mrf.mxu0
        %v5341 = vadd.f32 %v5292, %v5340
        %5342 = vmatmul.bf16.gmra.mxu0 %v5256
        %v5343 = vpop.f32.mrf.mxu0
        %v5344 = vadd.f32 %v5295, %v5343
        %v5345 = vpop.f32.mrf.mxu0
        %v5346 = vadd.f32 %v5297, %v5345
        %5347 = vmatmul.bf16.gmra.mxu0 %v5259
        %v5348 = vpop.f32.mrf.mxu0
        %v5349 = vadd.f32 %v5300, %v5348
        %v5350 = vpop.f32.mrf.mxu0
        %v5351 = vadd.f32 %v5302, %v5350
        %5352 = vmatmul.bf16.gmra.mxu0 %v5262
        %v5353 = vpop.f32.mrf.mxu0
        %v5354 = vadd.f32 %v5305, %v5353
        %v5355 = vpop.f32.mrf.mxu0
        %v5356 = vadd.f32 %v5307, %v5355
        %5357 = vmatmul.bf16.gmra.mxu0 %v5265
        %v5358 = vpop.f32.mrf.mxu0
        %v5359 = vadd.f32 %v5310, %v5358
        %v5360 = vpop.f32.mrf.mxu0
        %v5361 = vadd.f32 %v5312, %v5360
        %5362 = vmatmul.bf16.gmra.mxu0 %v5268
        %v5363 = vpop.f32.mrf.mxu0
        %v5364 = vadd.f32 %v5315, %v5363
        %v5365 = vpop.f32.mrf.mxu0
        %v5366 = vadd.f32 %v5317, %v5365
        %5367 = vdwg.mxu0
        %5368 = vmatpush.bf16.msra.mxu0 %v5145
        %5369 = vmatpush.bf16.msra.mxu0 %v5139
        %5370 = vmatpush.bf16.msra.mxu0 %v5133
        %5371 = vmatpush.bf16.msra.mxu0 %v5127
        %5372 = vmatpush.bf16.msra.mxu0 %v5121
        %5373 = vmatpush.bf16.msra.mxu0 %v5115
        %5374 = vmatpush.bf16.msra.mxu0 %v5109
        %5375 = vmatpush.bf16.msra.mxu0 %v5103
        %5376 = vmatmul.bf16.gmra.mxu0 %v4856
        %v5377 = vpop.f32.mrf.mxu0
        %v5378 = vadd.f32 %v4875, %v5377
        %v5379 = vpop.f32.mrf.mxu0
        %v5380 = vadd.f32 %v4875, %v5379
        %5381 = vmatmul.bf16.gmra.mxu0 %v4858
        %v5382 = vpop.f32.mrf.mxu0
        %v5383 = vadd.f32 %v4875, %v5382
        %v5384 = vpop.f32.mrf.mxu0
        %v5385 = vadd.f32 %v4875, %v5384
        %5386 = vmatmul.bf16.gmra.mxu0 %v4860
        %v5387 = vpop.f32.mrf.mxu0
        %v5388 = vadd.f32 %v4875, %v5387
        %v5389 = vpop.f32.mrf.mxu0
        %v5390 = vadd.f32 %v4875, %v5389
        %5391 = vmatmul.bf16.gmra.mxu0 %v4862
        %v5392 = vpop.f32.mrf.mxu0
        %v5393 = vadd.f32 %v4875, %v5392
        %v5394 = vpop.f32.mrf.mxu0
        %v5395 = vadd.f32 %v4875, %v5394
        %5396 = vmatmul.bf16.gmra.mxu0 %v4864
        %v5397 = vpop.f32.mrf.mxu0
        %v5398 = vadd.f32 %v4875, %v5397
        %v5399 = vpop.f32.mrf.mxu0
        %v5400 = vadd.f32 %v4875, %v5399
        %5401 = vmatmul.bf16.gmra.mxu0 %v4866
        %v5402 = vpop.f32.mrf.mxu0
        %v5403 = vadd.f32 %v4875, %v5402
        %v5404 = vpop.f32.mrf.mxu0
        %v5405 = vadd.f32 %v4875, %v5404
        %5406 = vmatmul.bf16.gmra.mxu0 %v4868
        %v5407 = vpop.f32.mrf.mxu0
        %v5408 = vadd.f32 %v4875, %v5407
        %v5409 = vpop.f32.mrf.mxu0
        %v5410 = vadd.f32 %v4875, %v5409
        %5411 = vmatmul.bf16.gmra.mxu0 %v4870
        %v5412 = vpop.f32.mrf.mxu0
        %v5413 = vadd.f32 %v4875, %v5412
        %v5414 = vpop.f32.mrf.mxu0
        %v5415 = vadd.f32 %v4875, %v5414
        %5416 = vdwg.mxu0
        %5417 = vmatpush.bf16.msra.mxu0 0
        %5418 = vmatpush.bf16.msra.mxu0 0
        %5419 = vmatpush.bf16.msra.mxu0 0
        %5420 = vmatpush.bf16.msra.mxu0 0
        %5421 = vmatpush.bf16.msra.mxu0 %v5169
        %5422 = vmatpush.bf16.msra.mxu0 %v5163
        %5423 = vmatpush.bf16.msra.mxu0 %v5157
        %5424 = vmatpush.bf16.msra.mxu0 %v5151
        %5425 = vmatmul.bf16.gmra.mxu0 %v5247
        %v5426 = vpop.f32.mrf.mxu0
        %v5427 = vadd.f32 %v5378, %v5426
        %v5428 = vpop.f32.mrf.mxu0
        %v5429 = vadd.f32 %v5380, %v5428
        %5430 = vmatmul.bf16.gmra.mxu0 %v5250
        %v5431 = vpop.f32.mrf.mxu0
        %v5432 = vadd.f32 %v5383, %v5431
        %v5433 = vpop.f32.mrf.mxu0
        %v5434 = vadd.f32 %v5385, %v5433
        %5435 = vmatmul.bf16.gmra.mxu0 %v5253
        %v5436 = vpop.f32.mrf.mxu0
        %v5437 = vadd.f32 %v5388, %v5436
        %v5438 = vpop.f32.mrf.mxu0
        %v5439 = vadd.f32 %v5390, %v5438
        %5440 = vmatmul.bf16.gmra.mxu0 %v5256
        %v5441 = vpop.f32.mrf.mxu0
        %v5442 = vadd.f32 %v5393, %v5441
        %v5443 = vpop.f32.mrf.mxu0
        %v5444 = vadd.f32 %v5395, %v5443
        %5445 = vmatmul.bf16.gmra.mxu0 %v5259
        %v5446 = vpop.f32.mrf.mxu0
        %v5447 = vadd.f32 %v5398, %v5446
        %v5448 = vpop.f32.mrf.mxu0
        %v5449 = vadd.f32 %v5400, %v5448
        %5450 = vmatmul.bf16.gmra.mxu0 %v5262
        %v5451 = vpop.f32.mrf.mxu0
        %v5452 = vadd.f32 %v5403, %v5451
        %v5453 = vpop.f32.mrf.mxu0
        %v5454 = vadd.f32 %v5405, %v5453
        %5455 = vmatmul.bf16.gmra.mxu0 %v5265
        %v5456 = vpop.f32.mrf.mxu0
        %v5457 = vadd.f32 %v5408, %v5456
        %v5458 = vpop.f32.mrf.mxu0
        %v5459 = vadd.f32 %v5410, %v5458
        %5460 = vmatmul.bf16.gmra.mxu0 %v5268
        %v5461 = vpop.f32.mrf.mxu0
        %v5462 = vadd.f32 %v5413, %v5461
        %v5463 = vpop.f32.mrf.mxu0
        %v5464 = vadd.f32 %v5415, %v5463
        %5465 = vdwg.mxu0
        %5466 = vmatpush.bf16.msra.mxu0 %v5146
        %5467 = vmatpush.bf16.msra.mxu0 %v5140
        %5468 = vmatpush.bf16.msra.mxu0 %v5134
        %5469 = vmatpush.bf16.msra.mxu0 %v5128
        %5470 = vmatpush.bf16.msra.mxu0 %v5122
        %5471 = vmatpush.bf16.msra.mxu0 %v5116
        %5472 = vmatpush.bf16.msra.mxu0 %v5110
        %5473 = vmatpush.bf16.msra.mxu0 %v5104
        %5474 = vmatmul.bf16.gmra.mxu0 %v4856
        %v5475 = vpop.f32.mrf.mxu0
        %v5476 = vadd.f32 %v4876, %v5475
        %v5477 = vpop.f32.mrf.mxu0
        %v5478 = vadd.f32 %v4876, %v5477
        %5479 = vmatmul.bf16.gmra.mxu0 %v4858
        %v5480 = vpop.f32.mrf.mxu0
        %v5481 = vadd.f32 %v4876, %v5480
        %v5482 = vpop.f32.mrf.mxu0
        %v5483 = vadd.f32 %v4876, %v5482
        %5484 = vmatmul.bf16.gmra.mxu0 %v4860
        %v5485 = vpop.f32.mrf.mxu0
        %v5486 = vadd.f32 %v4876, %v5485
        %v5487 = vpop.f32.mrf.mxu0
        %v5488 = vadd.f32 %v4876, %v5487
        %5489 = vmatmul.bf16.gmra.mxu0 %v4862
        %v5490 = vpop.f32.mrf.mxu0
        %v5491 = vadd.f32 %v4876, %v5490
        %v5492 = vpop.f32.mrf.mxu0
        %v5493 = vadd.f32 %v4876, %v5492
        %5494 = vmatmul.bf16.gmra.mxu0 %v4864
        %v5495 = vpop.f32.mrf.mxu0
        %v5496 = vadd.f32 %v4876, %v5495
        %v5497 = vpop.f32.mrf.mxu0
        %v5498 = vadd.f32 %v4876, %v5497
        %5499 = vmatmul.bf16.gmra.mxu0 %v4866
        %v5500 = vpop.f32.mrf.mxu0
        %v5501 = vadd.f32 %v4876, %v5500
        %v5502 = vpop.f32.mrf.mxu0
        %v5503 = vadd.f32 %v4876, %v5502
        %5504 = vmatmul.bf16.gmra.mxu0 %v4868
        %v5505 = vpop.f32.mrf.mxu0
        %v5506 = vadd.f32 %v4876, %v5505
        %v5507 = vpop.f32.mrf.mxu0
        %v5508 = vadd.f32 %v4876, %v5507
        %5509 = vmatmul.bf16.gmra.mxu0 %v4870
        %v5510 = vpop.f32.mrf.mxu0
        %v5511 = vadd.f32 %v4876, %v5510
        %v5512 = vpop.f32.mrf.mxu0
        %v5513 = vadd.f32 %v4876, %v5512
        %5514 = vdwg.mxu0
        %5515 = vmatpush.bf16.msra.mxu0 0
        %5516 = vmatpush.bf16.msra.mxu0 0
        %5517 = vmatpush.bf16.msra.mxu0 0
        %5518 = vmatpush.bf16.msra.mxu0 0
        %5519 = vmatpush.bf16.msra.mxu0 %v5170
        %5520 = vmatpush.bf16.msra.mxu0 %v5164
        %5521 = vmatpush.bf16.msra.mxu0 %v5158
        %5522 = vmatpush.bf16.msra.mxu0 %v5152
        %5523 = vmatmul.bf16.gmra.mxu0 %v5247
        %v5524 = vpop.f32.mrf.mxu0
        %v5525 = vadd.f32 %v5476, %v5524
        %v5526 = vpop.f32.mrf.mxu0
        %v5527 = vadd.f32 %v5478, %v5526
        %5528 = vmatmul.bf16.gmra.mxu0 %v5250
        %v5529 = vpop.f32.mrf.mxu0
        %v5530 = vadd.f32 %v5481, %v5529
        %v5531 = vpop.f32.mrf.mxu0
        %v5532 = vadd.f32 %v5483, %v5531
        %5533 = vmatmul.bf16.gmra.mxu0 %v5253
        %v5534 = vpop.f32.mrf.mxu0
        %v5535 = vadd.f32 %v5486, %v5534
        %v5536 = vpop.f32.mrf.mxu0
        %v5537 = vadd.f32 %v5488, %v5536
        %5538 = vmatmul.bf16.gmra.mxu0 %v5256
        %v5539 = vpop.f32.mrf.mxu0
        %v5540 = vadd.f32 %v5491, %v5539
        %v5541 = vpop.f32.mrf.mxu0
        %v5542 = vadd.f32 %v5493, %v5541
        %5543 = vmatmul.bf16.gmra.mxu0 %v5259
        %v5544 = vpop.f32.mrf.mxu0
        %v5545 = vadd.f32 %v5496, %v5544
        %v5546 = vpop.f32.mrf.mxu0
        %v5547 = vadd.f32 %v5498, %v5546
        %5548 = vmatmul.bf16.gmra.mxu0 %v5262
        %v5549 = vpop.f32.mrf.mxu0
        %v5550 = vadd.f32 %v5501, %v5549
        %v5551 = vpop.f32.mrf.mxu0
        %v5552 = vadd.f32 %v5503, %v5551
        %5553 = vmatmul.bf16.gmra.mxu0 %v5265
        %v5554 = vpop.f32.mrf.mxu0
        %v5555 = vadd.f32 %v5506, %v5554
        %v5556 = vpop.f32.mrf.mxu0
        %v5557 = vadd.f32 %v5508, %v5556
        %5558 = vmatmul.bf16.gmra.mxu0 %v5268
        %v5559 = vpop.f32.mrf.mxu0
        %v5560 = vadd.f32 %v5511, %v5559
        %v5561 = vpop.f32.mrf.mxu0
        %v5562 = vadd.f32 %v5513, %v5561
        %5563 = vdwg.mxu0
        %5564 = vmatpush.bf16.msra.mxu0 %v5147
        %5565 = vmatpush.bf16.msra.mxu0 %v5141
        %5566 = vmatpush.bf16.msra.mxu0 %v5135
        %5567 = vmatpush.bf16.msra.mxu0 %v5129
        %5568 = vmatpush.bf16.msra.mxu0 %v5123
        %5569 = vmatpush.bf16.msra.mxu0 %v5117
        %5570 = vmatpush.bf16.msra.mxu0 %v5111
        %5571 = vmatpush.bf16.msra.mxu0 %v5105
        %5572 = vmatmul.bf16.gmra.mxu0 %v4856
        %v5573 = vpop.f32.mrf.mxu0
        %v5574 = vadd.f32 %v4877, %v5573
        %v5575 = vpop.f32.mrf.mxu0
        %v5576 = vadd.f32 %v4877, %v5575
        %5577 = vmatmul.bf16.gmra.mxu0 %v4858
        %v5578 = vpop.f32.mrf.mxu0
        %v5579 = vadd.f32 %v4877, %v5578
        %v5580 = vpop.f32.mrf.mxu0
        %v5581 = vadd.f32 %v4877, %v5580
        %5582 = vmatmul.bf16.gmra.mxu0 %v4860
        %v5583 = vpop.f32.mrf.mxu0
        %v5584 = vadd.f32 %v4877, %v5583
        %v5585 = vpop.f32.mrf.mxu0
        %v5586 = vadd.f32 %v4877, %v5585
        %5587 = vmatmul.bf16.gmra.mxu0 %v4862
        %v5588 = vpop.f32.mrf.mxu0
        %v5589 = vadd.f32 %v4877, %v5588
        %v5590 = vpop.f32.mrf.mxu0
        %v5591 = vadd.f32 %v4877, %v5590
        %5592 = vmatmul.bf16.gmra.mxu0 %v4864
        %v5593 = vpop.f32.mrf.mxu0
        %v5594 = vadd.f32 %v4877, %v5593
        %v5595 = vpop.f32.mrf.mxu0
        %v5596 = vadd.f32 %v4877, %v5595
        %5597 = vmatmul.bf16.gmra.mxu0 %v4866
        %v5598 = vpop.f32.mrf.mxu0
        %v5599 = vadd.f32 %v4877, %v5598
        %v5600 = vpop.f32.mrf.mxu0
        %v5601 = vadd.f32 %v4877, %v5600
        %5602 = vmatmul.bf16.gmra.mxu0 %v4868
        %v5603 = vpop.f32.mrf.mxu0
        %v5604 = vadd.f32 %v4877, %v5603
        %v5605 = vpop.f32.mrf.mxu0
        %v5606 = vadd.f32 %v4877, %v5605
        %5607 = vmatmul.bf16.gmra.mxu0 %v4870
        %v5608 = vpop.f32.mrf.mxu0
        %v5609 = vadd.f32 %v4877, %v5608
        %v5610 = vpop.f32.mrf.mxu0
        %v5611 = vadd.f32 %v4877, %v5610
        %5612 = vdwg.mxu0
        %5613 = vmatpush.bf16.msra.mxu0 0
        %5614 = vmatpush.bf16.msra.mxu0 0
        %5615 = vmatpush.bf16.msra.mxu0 0
        %5616 = vmatpush.bf16.msra.mxu0 0
        %5617 = vmatpush.bf16.msra.mxu0 %v5171
        %5618 = vmatpush.bf16.msra.mxu0 %v5165
        %5619 = vmatpush.bf16.msra.mxu0 %v5159
        %5620 = vmatpush.bf16.msra.mxu0 %v5153
        %5621 = vmatmul.bf16.gmra.mxu0 %v5247
        %v5622 = vpop.f32.mrf.mxu0
        %v5623 = vadd.f32 %v5574, %v5622
        %v5624 = vpop.f32.mrf.mxu0
        %v5625 = vadd.f32 %v5576, %v5624
        %5626 = vmatmul.bf16.gmra.mxu0 %v5250
        %v5627 = vpop.f32.mrf.mxu0
        %v5628 = vadd.f32 %v5579, %v5627
        %v5629 = vpop.f32.mrf.mxu0
        %v5630 = vadd.f32 %v5581, %v5629
        %5631 = vmatmul.bf16.gmra.mxu0 %v5253
        %v5632 = vpop.f32.mrf.mxu0
        %v5633 = vadd.f32 %v5584, %v5632
        %v5634 = vpop.f32.mrf.mxu0
        %v5635 = vadd.f32 %v5586, %v5634
        %5636 = vmatmul.bf16.gmra.mxu0 %v5256
        %v5637 = vpop.f32.mrf.mxu0
        %v5638 = vadd.f32 %v5589, %v5637
        %v5639 = vpop.f32.mrf.mxu0
        %v5640 = vadd.f32 %v5591, %v5639
        %5641 = vmatmul.bf16.gmra.mxu0 %v5259
        %v5642 = vpop.f32.mrf.mxu0
        %v5643 = vadd.f32 %v5594, %v5642
        %v5644 = vpop.f32.mrf.mxu0
        %v5645 = vadd.f32 %v5596, %v5644
        %5646 = vmatmul.bf16.gmra.mxu0 %v5262
        %v5647 = vpop.f32.mrf.mxu0
        %v5648 = vadd.f32 %v5599, %v5647
        %v5649 = vpop.f32.mrf.mxu0
        %v5650 = vadd.f32 %v5601, %v5649
        %5651 = vmatmul.bf16.gmra.mxu0 %v5265
        %v5652 = vpop.f32.mrf.mxu0
        %v5653 = vadd.f32 %v5604, %v5652
        %v5654 = vpop.f32.mrf.mxu0
        %v5655 = vadd.f32 %v5606, %v5654
        %5656 = vmatmul.bf16.gmra.mxu0 %v5268
        %v5657 = vpop.f32.mrf.mxu0
        %v5658 = vadd.f32 %v5609, %v5657
        %v5659 = vpop.f32.mrf.mxu0
        %v5660 = vadd.f32 %v5611, %v5659
        %5661 = vdwg.mxu0
        %5662 = vmatpush.bf16.msra.mxu0 %v5148
        %5663 = vmatpush.bf16.msra.mxu0 %v5142
        %5664 = vmatpush.bf16.msra.mxu0 %v5136
        %5665 = vmatpush.bf16.msra.mxu0 %v5130
        %5666 = vmatpush.bf16.msra.mxu0 %v5124
        %5667 = vmatpush.bf16.msra.mxu0 %v5118
        %5668 = vmatpush.bf16.msra.mxu0 %v5112
        %5669 = vmatpush.bf16.msra.mxu0 %v5106
        %5670 = vmatmul.bf16.gmra.mxu0 %v4856
        %v5671 = vpop.f32.mrf.mxu0
        %v5672 = vadd.f32 %v4878, %v5671
        %v5673 = vpop.f32.mrf.mxu0
        %v5674 = vadd.f32 %v4878, %v5673
        %5675 = vmatmul.bf16.gmra.mxu0 %v4858
        %v5676 = vpop.f32.mrf.mxu0
        %v5677 = vadd.f32 %v4878, %v5676
        %v5678 = vpop.f32.mrf.mxu0
        %v5679 = vadd.f32 %v4878, %v5678
        %5680 = vmatmul.bf16.gmra.mxu0 %v4860
        %v5681 = vpop.f32.mrf.mxu0
        %v5682 = vadd.f32 %v4878, %v5681
        %v5683 = vpop.f32.mrf.mxu0
        %v5684 = vadd.f32 %v4878, %v5683
        %5685 = vmatmul.bf16.gmra.mxu0 %v4862
        %v5686 = vpop.f32.mrf.mxu0
        %v5687 = vadd.f32 %v4878, %v5686
        %v5688 = vpop.f32.mrf.mxu0
        %v5689 = vadd.f32 %v4878, %v5688
        %5690 = vmatmul.bf16.gmra.mxu0 %v4864
        %v5691 = vpop.f32.mrf.mxu0
        %v5692 = vadd.f32 %v4878, %v5691
        %v5693 = vpop.f32.mrf.mxu0
        %v5694 = vadd.f32 %v4878, %v5693
        %5695 = vmatmul.bf16.gmra.mxu0 %v4866
        %v5696 = vpop.f32.mrf.mxu0
        %v5697 = vadd.f32 %v4878, %v5696
        %v5698 = vpop.f32.mrf.mxu0
        %v5699 = vadd.f32 %v4878, %v5698
        %5700 = vmatmul.bf16.gmra.mxu0 %v4868
        %v5701 = vpop.f32.mrf.mxu0
        %v5702 = vadd.f32 %v4878, %v5701
        %v5703 = vpop.f32.mrf.mxu0
        %v5704 = vadd.f32 %v4878, %v5703
        %5705 = vmatmul.bf16.gmra.mxu0 %v4870
        %v5706 = vpop.f32.mrf.mxu0
        %v5707 = vadd.f32 %v4878, %v5706
        %v5708 = vpop.f32.mrf.mxu0
        %v5709 = vadd.f32 %v4878, %v5708
        %5710 = vdwg.mxu0
        %5711 = vmatpush.bf16.msra.mxu0 0
        %5712 = vmatpush.bf16.msra.mxu0 0
        %5713 = vmatpush.bf16.msra.mxu0 0
        %5714 = vmatpush.bf16.msra.mxu0 0
        %5715 = vmatpush.bf16.msra.mxu0 %v5172
        %5716 = vmatpush.bf16.msra.mxu0 %v5166
        %5717 = vmatpush.bf16.msra.mxu0 %v5160
        %5718 = vmatpush.bf16.msra.mxu0 %v5154
        %5719 = vmatmul.bf16.gmra.mxu0 %v5247
        %v5720 = vpop.f32.mrf.mxu0
        %v5721 = vadd.f32 %v5672, %v5720
        %v5722 = vpop.f32.mrf.mxu0
        %v5723 = vadd.f32 %v5674, %v5722
        %5724 = vmatmul.bf16.gmra.mxu0 %v5250
        %v5725 = vpop.f32.mrf.mxu0
        %v5726 = vadd.f32 %v5677, %v5725
        %v5727 = vpop.f32.mrf.mxu0
        %v5728 = vadd.f32 %v5679, %v5727
        %5729 = vmatmul.bf16.gmra.mxu0 %v5253
        %v5730 = vpop.f32.mrf.mxu0
        %v5731 = vadd.f32 %v5682, %v5730
        %v5732 = vpop.f32.mrf.mxu0
        %v5733 = vadd.f32 %v5684, %v5732
        %5734 = vmatmul.bf16.gmra.mxu0 %v5256
        %v5735 = vpop.f32.mrf.mxu0
        %v5736 = vadd.f32 %v5687, %v5735
        %v5737 = vpop.f32.mrf.mxu0
        %v5738 = vadd.f32 %v5689, %v5737
        %5739 = vmatmul.bf16.gmra.mxu0 %v5259
        %v5740 = vpop.f32.mrf.mxu0
        %v5741 = vadd.f32 %v5692, %v5740
        %v5742 = vpop.f32.mrf.mxu0
        %v5743 = vadd.f32 %v5694, %v5742
        %5744 = vmatmul.bf16.gmra.mxu0 %v5262
        %v5745 = vpop.f32.mrf.mxu0
        %v5746 = vadd.f32 %v5697, %v5745
        %v5747 = vpop.f32.mrf.mxu0
        %v5748 = vadd.f32 %v5699, %v5747
        %5749 = vmatmul.bf16.gmra.mxu0 %v5265
        %v5750 = vpop.f32.mrf.mxu0
        %v5751 = vadd.f32 %v5702, %v5750
        %v5752 = vpop.f32.mrf.mxu0
        %v5753 = vadd.f32 %v5704, %v5752
        %5754 = vmatmul.bf16.gmra.mxu0 %v5268
        %v5755 = vpop.f32.mrf.mxu0
        %v5756 = vadd.f32 %v5707, %v5755
        %v5757 = vpop.f32.mrf.mxu0
        %v5758 = vadd.f32 %v5709, %v5757
        %5759 = vdwg.mxu0
        %5760 = vmatpush.bf16.msra.mxu0 %v5149
        %5761 = vmatpush.bf16.msra.mxu0 %v5143
        %5762 = vmatpush.bf16.msra.mxu0 %v5137
        %5763 = vmatpush.bf16.msra.mxu0 %v5131
        %5764 = vmatpush.bf16.msra.mxu0 %v5125
        %5765 = vmatpush.bf16.msra.mxu0 %v5119
        %5766 = vmatpush.bf16.msra.mxu0 %v5113
        %5767 = vmatpush.bf16.msra.mxu0 %v5107
        %5768 = vmatmul.bf16.gmra.mxu0 %v4856
        %v5769 = vpop.f32.mrf.mxu0
        %v5770 = vadd.f32 %v4879, %v5769
        %v5771 = vpop.f32.mrf.mxu0
        %v5772 = vadd.f32 %v4879, %v5771
        %5773 = vmatmul.bf16.gmra.mxu0 %v4858
        %v5774 = vpop.f32.mrf.mxu0
        %v5775 = vadd.f32 %v4879, %v5774
        %v5776 = vpop.f32.mrf.mxu0
        %v5777 = vadd.f32 %v4879, %v5776
        %5778 = vmatmul.bf16.gmra.mxu0 %v4860
        %v5779 = vpop.f32.mrf.mxu0
        %v5780 = vadd.f32 %v4879, %v5779
        %v5781 = vpop.f32.mrf.mxu0
        %v5782 = vadd.f32 %v4879, %v5781
        %5783 = vmatmul.bf16.gmra.mxu0 %v4862
        %v5784 = vpop.f32.mrf.mxu0
        %v5785 = vadd.f32 %v4879, %v5784
        %v5786 = vpop.f32.mrf.mxu0
        %v5787 = vadd.f32 %v4879, %v5786
        %5788 = vmatmul.bf16.gmra.mxu0 %v4864
        %v5789 = vpop.f32.mrf.mxu0
        %v5790 = vadd.f32 %v4879, %v5789
        %v5791 = vpop.f32.mrf.mxu0
        %v5792 = vadd.f32 %v4879, %v5791
        %5793 = vmatmul.bf16.gmra.mxu0 %v4866
        %v5794 = vpop.f32.mrf.mxu0
        %v5795 = vadd.f32 %v4879, %v5794
        %v5796 = vpop.f32.mrf.mxu0
        %v5797 = vadd.f32 %v4879, %v5796
        %5798 = vmatmul.bf16.gmra.mxu0 %v4868
        %v5799 = vpop.f32.mrf.mxu0
        %v5800 = vadd.f32 %v4879, %v5799
        %v5801 = vpop.f32.mrf.mxu0
        %v5802 = vadd.f32 %v4879, %v5801
        %5803 = vmatmul.bf16.gmra.mxu0 %v4870
        %v5804 = vpop.f32.mrf.mxu0
        %v5805 = vadd.f32 %v4879, %v5804
        %v5806 = vpop.f32.mrf.mxu0
        %v5807 = vadd.f32 %v4879, %v5806
        %5808 = vdwg.mxu0
        %5809 = vmatpush.bf16.msra.mxu0 0
        %5810 = vmatpush.bf16.msra.mxu0 0
        %5811 = vmatpush.bf16.msra.mxu0 0
        %5812 = vmatpush.bf16.msra.mxu0 0
        %5813 = vmatpush.bf16.msra.mxu0 %v5173
        %5814 = vmatpush.bf16.msra.mxu0 %v5167
        %5815 = vmatpush.bf16.msra.mxu0 %v5161
        %5816 = vmatpush.bf16.msra.mxu0 %v5155
        %5817 = vmatmul.bf16.gmra.mxu0 %v5247
        %v5818 = vpop.f32.mrf.mxu0
        %v5819 = vadd.f32 %v5770, %v5818
        %v5820 = vpop.f32.mrf.mxu0
        %v5821 = vadd.f32 %v5772, %v5820
        %5822 = vmatmul.bf16.gmra.mxu0 %v5250
        %v5823 = vpop.f32.mrf.mxu0
        %v5824 = vadd.f32 %v5775, %v5823
        %v5825 = vpop.f32.mrf.mxu0
        %v5826 = vadd.f32 %v5777, %v5825
        %5827 = vmatmul.bf16.gmra.mxu0 %v5253
        %v5828 = vpop.f32.mrf.mxu0
        %v5829 = vadd.f32 %v5780, %v5828
        %v5830 = vpop.f32.mrf.mxu0
        %v5831 = vadd.f32 %v5782, %v5830
        %5832 = vmatmul.bf16.gmra.mxu0 %v5256
        %v5833 = vpop.f32.mrf.mxu0
        %v5834 = vadd.f32 %v5785, %v5833
        %v5835 = vpop.f32.mrf.mxu0
        %v5836 = vadd.f32 %v5787, %v5835
        %5837 = vmatmul.bf16.gmra.mxu0 %v5259
        %v5838 = vpop.f32.mrf.mxu0
        %v5839 = vadd.f32 %v5790, %v5838
        %v5840 = vpop.f32.mrf.mxu0
        %v5841 = vadd.f32 %v5792, %v5840
        %5842 = vmatmul.bf16.gmra.mxu0 %v5262
        %v5843 = vpop.f32.mrf.mxu0
        %v5844 = vadd.f32 %v5795, %v5843
        %v5845 = vpop.f32.mrf.mxu0
        %v5846 = vadd.f32 %v5797, %v5845
        %5847 = vmatmul.bf16.gmra.mxu0 %v5265
        %v5848 = vpop.f32.mrf.mxu0
        %v5849 = vadd.f32 %v5800, %v5848
        %v5850 = vpop.f32.mrf.mxu0
        %v5851 = vadd.f32 %v5802, %v5850
        %5852 = vmatmul.bf16.gmra.mxu0 %v5268
        %v5853 = vpop.f32.mrf.mxu0
        %v5854 = vadd.f32 %v5805, %v5853
        %v5855 = vpop.f32.mrf.mxu0
        %v5856 = vadd.f32 %v5807, %v5855
        %5857 = vdwg.mxu0
        %v5858 = vmul.f32 %v5329, 1.702
        %v5859 = vmul.f32 %v5427, 1.702
        %v5860 = vmul.f32 %v5525, 1.702
        %v5861 = vmul.f32 %v5623, 1.702
        %v5862 = vmul.f32 %v5721, 1.702
        %v5863 = vmul.f32 %v5819, 1.702
        %v5864 = vmul.f32 %v5331, 1.702
        %v5865 = vmul.f32 %v5429, 1.702
        %v5866 = vmul.f32 %v5527, 1.702
        %v5867 = vmul.f32 %v5625, 1.702
        %v5868 = vmul.f32 %v5723, 1.702
        %v5869 = vmul.f32 %v5821, 1.702
        %v5870 = vmul.f32 %v5334, 1.702
        %v5871 = vmul.f32 %v5432, 1.702
        %v5872 = vmul.f32 %v5530, 1.702
        %v5873 = vmul.f32 %v5628, 1.702
        %v5874 = vmul.f32 %v5726, 1.702
        %v5875 = vmul.f32 %v5824, 1.702
        %v5876 = vmul.f32 %v5336, 1.702
        %v5877 = vmul.f32 %v5434, 1.702
        %v5878 = vmul.f32 %v5532, 1.702
        %v5879 = vmul.f32 %v5630, 1.702
        %v5880 = vmul.f32 %v5728, 1.702
        %v5881 = vmul.f32 %v5826, 1.702
        %v5882 = vmul.f32 %v5339, 1.702
        %v5883 = vmul.f32 %v5437, 1.702
        %v5884 = vmul.f32 %v5535, 1.702
        %v5885 = vmul.f32 %v5633, 1.702
        %v5886 = vmul.f32 %v5731, 1.702
        %v5887 = vmul.f32 %v5829, 1.702
        %v5888 = vmul.f32 %v5341, 1.702
        %v5889 = vmul.f32 %v5439, 1.702
        %v5890 = vmul.f32 %v5537, 1.702
        %v5891 = vmul.f32 %v5635, 1.702
        %v5892 = vmul.f32 %v5733, 1.702
        %v5893 = vmul.f32 %v5831, 1.702
        %v5894 = vmul.f32 %v5344, 1.702
        %v5895 = vmul.f32 %v5442, 1.702
        %v5896 = vmul.f32 %v5540, 1.702
        %v5897 = vmul.f32 %v5638, 1.702
        %v5898 = vmul.f32 %v5736, 1.702
        %v5899 = vmul.f32 %v5834, 1.702
        %v5900 = vmul.f32 %v5346, 1.702
        %v5901 = vmul.f32 %v5444, 1.702
        %v5902 = vmul.f32 %v5542, 1.702
        %v5903 = vmul.f32 %v5640, 1.702
        %v5904 = vmul.f32 %v5738, 1.702
        %v5905 = vmul.f32 %v5836, 1.702
        %v5906 = vmul.f32 %v5349, 1.702
        %v5907 = vmul.f32 %v5447, 1.702
        %v5908 = vmul.f32 %v5545, 1.702
        %v5909 = vmul.f32 %v5643, 1.702
        %v5910 = vmul.f32 %v5741, 1.702
        %v5911 = vmul.f32 %v5839, 1.702
        %v5912 = vmul.f32 %v5351, 1.702
        %v5913 = vmul.f32 %v5449, 1.702
        %v5914 = vmul.f32 %v5547, 1.702
        %v5915 = vmul.f32 %v5645, 1.702
        %v5916 = vmul.f32 %v5743, 1.702
        %v5917 = vmul.f32 %v5841, 1.702
        %v5918 = vmul.f32 %v5354, 1.702
        %v5919 = vmul.f32 %v5452, 1.702
        %v5920 = vmul.f32 %v5550, 1.702
        %v5921 = vmul.f32 %v5648, 1.702
        %v5922 = vmul.f32 %v5746, 1.702
        %v5923 = vmul.f32 %v5844, 1.702
        %v5924 = vmul.f32 %v5356, 1.702
        %v5925 = vmul.f32 %v5454, 1.702
        %v5926 = vmul.f32 %v5552, 1.702
        %v5927 = vmul.f32 %v5650, 1.702
        %v5928 = vmul.f32 %v5748, 1.702
        %v5929 = vmul.f32 %v5846, 1.702
        %v5930 = vmul.f32 %v5359, 1.702
        %v5931 = vmul.f32 %v5457, 1.702
        %v5932 = vmul.f32 %v5555, 1.702
        %v5933 = vmul.f32 %v5653, 1.702
        %v5934 = vmul.f32 %v5751, 1.702
        %v5935 = vmul.f32 %v5849, 1.702
        %v5936 = vmul.f32 %v5361, 1.702
        %v5937 = vmul.f32 %v5459, 1.702
        %v5938 = vmul.f32 %v5557, 1.702
        %v5939 = vmul.f32 %v5655, 1.702
        %v5940 = vmul.f32 %v5753, 1.702
        %v5941 = vmul.f32 %v5851, 1.702
        %v5942 = vmul.f32 %v5364, 1.702
        %v5943 = vmul.f32 %v5462, 1.702
        %v5944 = vmul.f32 %v5560, 1.702
        %v5945 = vmul.f32 %v5658, 1.702
        %v5946 = vmul.f32 %v5756, 1.702
        %v5947 = vmul.f32 %v5854, 1.702
        %v5948 = vmul.f32 %v5366, 1.702
        %v5949 = vmul.f32 %v5464, 1.702
        %v5950 = vmul.f32 %v5562, 1.702
        %v5951 = vmul.f32 %v5660, 1.702
        %v5952 = vmul.f32 %v5758, 1.702
        %v5953 = vmul.f32 %v5856, 1.702
        %v5954 = vxor.u32 %v5858, 2147483648
        %v5955 = vxor.u32 %v5859, 2147483648
        %v5956 = vxor.u32 %v5860, 2147483648
        %v5957 = vxor.u32 %v5861, 2147483648
        %v5958 = vxor.u32 %v5862, 2147483648
        %v5959 = vxor.u32 %v5863, 2147483648
        %v5960 = vxor.u32 %v5864, 2147483648
        %v5961 = vxor.u32 %v5865, 2147483648
        %v5962 = vxor.u32 %v5866, 2147483648
        %v5963 = vxor.u32 %v5867, 2147483648
        %v5964 = vxor.u32 %v5868, 2147483648
        %v5965 = vxor.u32 %v5869, 2147483648
        %v5966 = vxor.u32 %v5870, 2147483648
        %v5967 = vxor.u32 %v5871, 2147483648
        %v5968 = vxor.u32 %v5872, 2147483648
        %v5969 = vxor.u32 %v5873, 2147483648
        %v5970 = vxor.u32 %v5874, 2147483648
        %v5971 = vxor.u32 %v5875, 2147483648
        %v5972 = vxor.u32 %v5876, 2147483648
        %v5973 = vxor.u32 %v5877, 2147483648
        %v5974 = vxor.u32 %v5878, 2147483648
        %v5975 = vxor.u32 %v5879, 2147483648
        %v5976 = vxor.u32 %v5880, 2147483648
        %v5977 = vxor.u32 %v5881, 2147483648
        %v5978 = vxor.u32 %v5882, 2147483648
        %v5979 = vxor.u32 %v5883, 2147483648
        %v5980 = vxor.u32 %v5884, 2147483648
        %v5981 = vxor.u32 %v5885, 2147483648
        %v5982 = vxor.u32 %v5886, 2147483648
        %v5983 = vxor.u32 %v5887, 2147483648
        %v5984 = vxor.u32 %v5888, 2147483648
        %v5985 = vxor.u32 %v5889, 2147483648
        %v5986 = vxor.u32 %v5890, 2147483648
        %v5987 = vxor.u32 %v5891, 2147483648
        %v5988 = vxor.u32 %v5892, 2147483648
        %v5989 = vxor.u32 %v5893, 2147483648
        %v5990 = vxor.u32 %v5894, 2147483648
        %v5991 = vxor.u32 %v5895, 2147483648
        %v5992 = vxor.u32 %v5896, 2147483648
        %v5993 = vxor.u32 %v5897, 2147483648
        %v5994 = vxor.u32 %v5898, 2147483648
        %v5995 = vxor.u32 %v5899, 2147483648
        %v5996 = vxor.u32 %v5900, 2147483648
        %v5997 = vxor.u32 %v5901, 2147483648
        %v5998 = vxor.u32 %v5902, 2147483648
        %v5999 = vxor.u32 %v5903, 2147483648
        %v6000 = vxor.u32 %v5904, 2147483648
        %v6001 = vxor.u32 %v5905, 2147483648
        %v6002 = vxor.u32 %v5906, 2147483648
        %v6003 = vxor.u32 %v5907, 2147483648
        %v6004 = vxor.u32 %v5908, 2147483648
        %v6005 = vxor.u32 %v5909, 2147483648
        %v6006 = vxor.u32 %v5910, 2147483648
        %v6007 = vxor.u32 %v5911, 2147483648
        %v6008 = vxor.u32 %v5912, 2147483648
        %v6009 = vxor.u32 %v5913, 2147483648
        %v6010 = vxor.u32 %v5914, 2147483648
        %v6011 = vxor.u32 %v5915, 2147483648
        %v6012 = vxor.u32 %v5916, 2147483648
        %v6013 = vxor.u32 %v5917, 2147483648
        %v6014 = vxor.u32 %v5918, 2147483648
        %v6015 = vxor.u32 %v5919, 2147483648
        %v6016 = vxor.u32 %v5920, 2147483648
        %v6017 = vxor.u32 %v5921, 2147483648
        %v6018 = vxor.u32 %v5922, 2147483648
        %v6019 = vxor.u32 %v5923, 2147483648
        %v6020 = vxor.u32 %v5924, 2147483648
        %v6021 = vxor.u32 %v5925, 2147483648
        %v6022 = vxor.u32 %v5926, 2147483648
        %v6023 = vxor.u32 %v5927, 2147483648
        %v6024 = vxor.u32 %v5928, 2147483648
        %v6025 = vxor.u32 %v5929, 2147483648
        %v6026 = vxor.u32 %v5930, 2147483648
        %v6027 = vxor.u32 %v5931, 2147483648
        %v6028 = vxor.u32 %v5932, 2147483648
        %v6029 = vxor.u32 %v5933, 2147483648
        %v6030 = vxor.u32 %v5934, 2147483648
        %v6031 = vxor.u32 %v5935, 2147483648
        %v6032 = vxor.u32 %v5936, 2147483648
        %v6033 = vxor.u32 %v5937, 2147483648
        %v6034 = vxor.u32 %v5938, 2147483648
        %v6035 = vxor.u32 %v5939, 2147483648
        %v6036 = vxor.u32 %v5940, 2147483648
        %v6037 = vxor.u32 %v5941, 2147483648
        %v6038 = vxor.u32 %v5942, 2147483648
        %v6039 = vxor.u32 %v5943, 2147483648
        %v6040 = vxor.u32 %v5944, 2147483648
        %v6041 = vxor.u32 %v5945, 2147483648
        %v6042 = vxor.u32 %v5946, 2147483648
        %v6043 = vxor.u32 %v5947, 2147483648
        %v6044 = vxor.u32 %v5948, 2147483648
        %v6045 = vxor.u32 %v5949, 2147483648
        %v6046 = vxor.u32 %v5950, 2147483648
        %v6047 = vxor.u32 %v5951, 2147483648
        %v6048 = vxor.u32 %v5952, 2147483648
        %v6049 = vxor.u32 %v5953, 2147483648
        %v6050 = vmul.f32 %v5954, 1.442695
        %v6051 = vpow.pop %v6050
        %v6052 = vmul.f32 %v5955, 1.442695
        %v6053 = vpow.pop %v6052
        %v6054 = vmul.f32 %v5956, 1.442695
        %v6055 = vpow.pop %v6054
        %v6056 = vmul.f32 %v5957, 1.442695
        %v6057 = vpow.pop %v6056
        %v6058 = vmul.f32 %v5958, 1.442695
        %v6059 = vpow.pop %v6058
        %v6060 = vmul.f32 %v5959, 1.442695
        %v6061 = vpow.pop %v6060
        %v6062 = vmul.f32 %v5960, 1.442695
        %v6063 = vpow.pop %v6062
        %v6064 = vmul.f32 %v5961, 1.442695
        %v6065 = vpow.pop %v6064
        %v6066 = vmul.f32 %v5962, 1.442695
        %v6067 = vpow.pop %v6066
        %v6068 = vmul.f32 %v5963, 1.442695
        %v6069 = vpow.pop %v6068
        %v6070 = vmul.f32 %v5964, 1.442695
        %v6071 = vpow.pop %v6070
        %v6072 = vmul.f32 %v5965, 1.442695
        %v6073 = vpow.pop %v6072
        %v6074 = vmul.f32 %v5966, 1.442695
        %v6075 = vpow.pop %v6074
        %v6076 = vmul.f32 %v5967, 1.442695
        %v6077 = vpow.pop %v6076
        %v6078 = vmul.f32 %v5968, 1.442695
        %v6079 = vpow.pop %v6078
        %v6080 = vmul.f32 %v5969, 1.442695
        %v6081 = vpow.pop %v6080
        %v6082 = vmul.f32 %v5970, 1.442695
        %v6083 = vpow.pop %v6082
        %v6084 = vmul.f32 %v5971, 1.442695
        %v6085 = vpow.pop %v6084
        %v6086 = vmul.f32 %v5972, 1.442695
        %v6087 = vpow.pop %v6086
        %v6088 = vmul.f32 %v5973, 1.442695
        %v6089 = vpow.pop %v6088
        %v6090 = vmul.f32 %v5974, 1.442695
        %v6091 = vpow.pop %v6090
        %v6092 = vmul.f32 %v5975, 1.442695
        %v6093 = vpow.pop %v6092
        %v6094 = vmul.f32 %v5976, 1.442695
        %v6095 = vpow.pop %v6094
        %v6096 = vmul.f32 %v5977, 1.442695
        %v6097 = vpow.pop %v6096
        %v6098 = vmul.f32 %v5978, 1.442695
        %v6099 = vpow.pop %v6098
        %v6100 = vmul.f32 %v5979, 1.442695
        %v6101 = vpow.pop %v6100
        %v6102 = vmul.f32 %v5980, 1.442695
        %v6103 = vpow.pop %v6102
        %v6104 = vmul.f32 %v5981, 1.442695
        %v6105 = vpow.pop %v6104
        %v6106 = vmul.f32 %v5982, 1.442695
        %v6107 = vpow.pop %v6106
        %v6108 = vmul.f32 %v5983, 1.442695
        %v6109 = vpow.pop %v6108
        %v6110 = vmul.f32 %v5984, 1.442695
        %v6111 = vpow.pop %v6110
        %v6112 = vmul.f32 %v5985, 1.442695
        %v6113 = vpow.pop %v6112
        %v6114 = vmul.f32 %v5986, 1.442695
        %v6115 = vpow.pop %v6114
        %v6116 = vmul.f32 %v5987, 1.442695
        %v6117 = vpow.pop %v6116
        %v6118 = vmul.f32 %v5988, 1.442695
        %v6119 = vpow.pop %v6118
        %v6120 = vmul.f32 %v5989, 1.442695
        %v6121 = vpow.pop %v6120
        %v6122 = vmul.f32 %v5990, 1.442695
        %v6123 = vpow.pop %v6122
        %v6124 = vmul.f32 %v5991, 1.442695
        %v6125 = vpow.pop %v6124
        %v6126 = vmul.f32 %v5992, 1.442695
        %v6127 = vpow.pop %v6126
        %v6128 = vmul.f32 %v5993, 1.442695
        %v6129 = vpow.pop %v6128
        %v6130 = vmul.f32 %v5994, 1.442695
        %v6131 = vpow.pop %v6130
        %v6132 = vmul.f32 %v5995, 1.442695
        %v6133 = vpow.pop %v6132
        %v6134 = vmul.f32 %v5996, 1.442695
        %v6135 = vpow.pop %v6134
        %v6136 = vmul.f32 %v5997, 1.442695
        %v6137 = vpow.pop %v6136
        %v6138 = vmul.f32 %v5998, 1.442695
        %v6139 = vpow.pop %v6138
        %v6140 = vmul.f32 %v5999, 1.442695
        %v6141 = vpow.pop %v6140
        %v6142 = vmul.f32 %v6000, 1.442695
        %v6143 = vpow.pop %v6142
        %v6144 = vmul.f32 %v6001, 1.442695
        %v6145 = vpow.pop %v6144
        %v6146 = vmul.f32 %v6002, 1.442695
        %v6147 = vpow.pop %v6146
        %v6148 = vmul.f32 %v6003, 1.442695
        %v6149 = vpow.pop %v6148
        %v6150 = vmul.f32 %v6004, 1.442695
        %v6151 = vpow.pop %v6150
        %v6152 = vmul.f32 %v6005, 1.442695
        %v6153 = vpow.pop %v6152
        %v6154 = vmul.f32 %v6006, 1.442695
        %v6155 = vpow.pop %v6154
        %v6156 = vmul.f32 %v6007, 1.442695
        %v6157 = vpow.pop %v6156
        %v6158 = vmul.f32 %v6008, 1.442695
        %v6159 = vpow.pop %v6158
        %v6160 = vmul.f32 %v6009, 1.442695
        %v6161 = vpow.pop %v6160
        %v6162 = vmul.f32 %v6010, 1.442695
        %v6163 = vpow.pop %v6162
        %v6164 = vmul.f32 %v6011, 1.442695
        %v6165 = vpow.pop %v6164
        %v6166 = vmul.f32 %v6012, 1.442695
        %v6167 = vpow.pop %v6166
        %v6168 = vmul.f32 %v6013, 1.442695
        %v6169 = vpow.pop %v6168
        %v6170 = vmul.f32 %v6014, 1.442695
        %v6171 = vpow.pop %v6170
        %v6172 = vmul.f32 %v6015, 1.442695
        %v6173 = vpow.pop %v6172
        %v6174 = vmul.f32 %v6016, 1.442695
        %v6175 = vpow.pop %v6174
        %v6176 = vmul.f32 %v6017, 1.442695
        %v6177 = vpow.pop %v6176
        %v6178 = vmul.f32 %v6018, 1.442695
        %v6179 = vpow.pop %v6178
        %v6180 = vmul.f32 %v6019, 1.442695
        %v6181 = vpow.pop %v6180
        %v6182 = vmul.f32 %v6020, 1.442695
        %v6183 = vpow.pop %v6182
        %v6184 = vmul.f32 %v6021, 1.442695
        %v6185 = vpow.pop %v6184
        %v6186 = vmul.f32 %v6022, 1.442695
        %v6187 = vpow.pop %v6186
        %v6188 = vmul.f32 %v6023, 1.442695
        %v6189 = vpow.pop %v6188
        %v6190 = vmul.f32 %v6024, 1.442695
        %v6191 = vpow.pop %v6190
        %v6192 = vmul.f32 %v6025, 1.442695
        %v6193 = vpow.pop %v6192
        %v6194 = vmul.f32 %v6026, 1.442695
        %v6195 = vpow.pop %v6194
        %v6196 = vmul.f32 %v6027, 1.442695
        %v6197 = vpow.pop %v6196
        %v6198 = vmul.f32 %v6028, 1.442695
        %v6199 = vpow.pop %v6198
        %v6200 = vmul.f32 %v6029, 1.442695
        %v6201 = vpow.pop %v6200
        %v6202 = vmul.f32 %v6030, 1.442695
        %v6203 = vpow.pop %v6202
        %v6204 = vmul.f32 %v6031, 1.442695
        %v6205 = vpow.pop %v6204
        %v6206 = vmul.f32 %v6032, 1.442695
        %v6207 = vpow.pop %v6206
        %v6208 = vmul.f32 %v6033, 1.442695
        %v6209 = vpow.pop %v6208
        %v6210 = vmul.f32 %v6034, 1.442695
        %v6211 = vpow.pop %v6210
        %v6212 = vmul.f32 %v6035, 1.442695
        %v6213 = vpow.pop %v6212
        %v6214 = vmul.f32 %v6036, 1.442695
        %v6215 = vpow.pop %v6214
        %v6216 = vmul.f32 %v6037, 1.442695
        %v6217 = vpow.pop %v6216
        %v6218 = vmul.f32 %v6038, 1.442695
        %v6219 = vpow.pop %v6218
        %v6220 = vmul.f32 %v6039, 1.442695
        %v6221 = vpow.pop %v6220
        %v6222 = vmul.f32 %v6040, 1.442695
        %v6223 = vpow.pop %v6222
        %v6224 = vmul.f32 %v6041, 1.442695
        %v6225 = vpow.pop %v6224
        %v6226 = vmul.f32 %v6042, 1.442695
        %v6227 = vpow.pop %v6226
        %v6228 = vmul.f32 %v6043, 1.442695
        %v6229 = vpow.pop %v6228
        %v6230 = vmul.f32 %v6044, 1.442695
        %v6231 = vpow.pop %v6230
        %v6232 = vmul.f32 %v6045, 1.442695
        %v6233 = vpow.pop %v6232
        %v6234 = vmul.f32 %v6046, 1.442695
        %v6235 = vpow.pop %v6234
        %v6236 = vmul.f32 %v6047, 1.442695
        %v6237 = vpow.pop %v6236
        %v6238 = vmul.f32 %v6048, 1.442695
        %v6239 = vpow.pop %v6238
        %v6240 = vmul.f32 %v6049, 1.442695
        %v6241 = vpow.pop %v6240
        %v6242 = vadd.f32 %v6051, 1.0
        %v6243 = vadd.f32 %v6053, 1.0
        %v6244 = vadd.f32 %v6055, 1.0
        %v6245 = vadd.f32 %v6057, 1.0
        %v6246 = vadd.f32 %v6059, 1.0
        %v6247 = vadd.f32 %v6061, 1.0
        %v6248 = vadd.f32 %v6063, 1.0
        %v6249 = vadd.f32 %v6065, 1.0
        %v6250 = vadd.f32 %v6067, 1.0
        %v6251 = vadd.f32 %v6069, 1.0
        %v6252 = vadd.f32 %v6071, 1.0
        %v6253 = vadd.f32 %v6073, 1.0
        %v6254 = vadd.f32 %v6075, 1.0
        %v6255 = vadd.f32 %v6077, 1.0
        %v6256 = vadd.f32 %v6079, 1.0
        %v6257 = vadd.f32 %v6081, 1.0
        %v6258 = vadd.f32 %v6083, 1.0
        %v6259 = vadd.f32 %v6085, 1.0
        %v6260 = vadd.f32 %v6087, 1.0
        %v6261 = vadd.f32 %v6089, 1.0
        %v6262 = vadd.f32 %v6091, 1.0
        %v6263 = vadd.f32 %v6093, 1.0
        %v6264 = vadd.f32 %v6095, 1.0
        %v6265 = vadd.f32 %v6097, 1.0
        %v6266 = vadd.f32 %v6099, 1.0
        %v6267 = vadd.f32 %v6101, 1.0
        %v6268 = vadd.f32 %v6103, 1.0
        %v6269 = vadd.f32 %v6105, 1.0
        %v6270 = vadd.f32 %v6107, 1.0
        %v6271 = vadd.f32 %v6109, 1.0
        %v6272 = vadd.f32 %v6111, 1.0
        %v6273 = vadd.f32 %v6113, 1.0
        %v6274 = vadd.f32 %v6115, 1.0
        %v6275 = vadd.f32 %v6117, 1.0
        %v6276 = vadd.f32 %v6119, 1.0
        %v6277 = vadd.f32 %v6121, 1.0
        %v6278 = vadd.f32 %v6123, 1.0
        %v6279 = vadd.f32 %v6125, 1.0
        %v6280 = vadd.f32 %v6127, 1.0
        %v6281 = vadd.f32 %v6129, 1.0
        %v6282 = vadd.f32 %v6131, 1.0
        %v6283 = vadd.f32 %v6133, 1.0
        %v6284 = vadd.f32 %v6135, 1.0
        %v6285 = vadd.f32 %v6137, 1.0
        %v6286 = vadd.f32 %v6139, 1.0
        %v6287 = vadd.f32 %v6141, 1.0
        %v6288 = vadd.f32 %v6143, 1.0
        %v6289 = vadd.f32 %v6145, 1.0
        %v6290 = vadd.f32 %v6147, 1.0
        %v6291 = vadd.f32 %v6149, 1.0
        %v6292 = vadd.f32 %v6151, 1.0
        %v6293 = vadd.f32 %v6153, 1.0
        %v6294 = vadd.f32 %v6155, 1.0
        %v6295 = vadd.f32 %v6157, 1.0
        %v6296 = vadd.f32 %v6159, 1.0
        %v6297 = vadd.f32 %v6161, 1.0
        %v6298 = vadd.f32 %v6163, 1.0
        %v6299 = vadd.f32 %v6165, 1.0
        %v6300 = vadd.f32 %v6167, 1.0
        %v6301 = vadd.f32 %v6169, 1.0
        %v6302 = vadd.f32 %v6171, 1.0
        %v6303 = vadd.f32 %v6173, 1.0
        %v6304 = vadd.f32 %v6175, 1.0
        %v6305 = vadd.f32 %v6177, 1.0
        %v6306 = vadd.f32 %v6179, 1.0
        %v6307 = vadd.f32 %v6181, 1.0
        %v6308 = vadd.f32 %v6183, 1.0
        %v6309 = vadd.f32 %v6185, 1.0
        %v6310 = vadd.f32 %v6187, 1.0
        %v6311 = vadd.f32 %v6189, 1.0
        %v6312 = vadd.f32 %v6191, 1.0
        %v6313 = vadd.f32 %v6193, 1.0
        %v6314 = vadd.f32 %v6195, 1.0
        %v6315 = vadd.f32 %v6197, 1.0
        %v6316 = vadd.f32 %v6199, 1.0
        %v6317 = vadd.f32 %v6201, 1.0
        %v6318 = vadd.f32 %v6203, 1.0
        %v6319 = vadd.f32 %v6205, 1.0
        %v6320 = vadd.f32 %v6207, 1.0
        %v6321 = vadd.f32 %v6209, 1.0
        %v6322 = vadd.f32 %v6211, 1.0
        %v6323 = vadd.f32 %v6213, 1.0
        %v6324 = vadd.f32 %v6215, 1.0
        %v6325 = vadd.f32 %v6217, 1.0
        %v6326 = vadd.f32 %v6219, 1.0
        %v6327 = vadd.f32 %v6221, 1.0
        %v6328 = vadd.f32 %v6223, 1.0
        %v6329 = vadd.f32 %v6225, 1.0
        %v6330 = vadd.f32 %v6227, 1.0
        %v6331 = vadd.f32 %v6229, 1.0
        %v6332 = vadd.f32 %v6231, 1.0
        %v6333 = vadd.f32 %v6233, 1.0
        %v6334 = vadd.f32 %v6235, 1.0
        %v6335 = vadd.f32 %v6237, 1.0
        %v6336 = vadd.f32 %v6239, 1.0
        %v6337 = vadd.f32 %v6241, 1.0
        %v6338 = vrcp.pop %v6242
        %v6339 = vmul.f32 %v6242, %v6338
        %v6340 = vsub.f32 1.0, %v6339
        %v6341 = vmul.f32 %v6338, %v6340
        %v6342 = vadd.f32 %v6338, %v6341
        %vm6343 = vweird.f32 %v6242
        %vm6344 = vweird.f32 %v6338
        %vm6345 = vmor %vm6343, %vm6344
        %v6346 = vsel %vm6345, %v6338, %v6342
        %v6347 = vand.u32 2147483647, %v6242
        %vm6348 = vcmp.eq.f32.partialorder %v6347, 8.507059e+37
        %v6349 = vand.u32 %v6242, 2147483648
        %v6350 = vor.u32 1.1754944e-38, %v6349
        %v6351 = vsel %vm6348, %v6350, %v6346
        %v6352 = vmul.f32 1.0, %v6351
        %v6353 = vrcp.pop %v6243
        %v6354 = vmul.f32 %v6243, %v6353
        %v6355 = vsub.f32 1.0, %v6354
        %v6356 = vmul.f32 %v6353, %v6355
        %v6357 = vadd.f32 %v6353, %v6356
        %vm6358 = vweird.f32 %v6243
        %vm6359 = vweird.f32 %v6353
        %vm6360 = vmor %vm6358, %vm6359
        %v6361 = vsel %vm6360, %v6353, %v6357
        %v6362 = vand.u32 2147483647, %v6243
        %vm6363 = vcmp.eq.f32.partialorder %v6362, 8.507059e+37
        %v6364 = vand.u32 %v6243, 2147483648
        %v6365 = vor.u32 1.1754944e-38, %v6364
        %v6366 = vsel %vm6363, %v6365, %v6361
        %v6367 = vmul.f32 1.0, %v6366
        %v6368 = vrcp.pop %v6244
        %v6369 = vmul.f32 %v6244, %v6368
        %v6370 = vsub.f32 1.0, %v6369
        %v6371 = vmul.f32 %v6368, %v6370
        %v6372 = vadd.f32 %v6368, %v6371
        %vm6373 = vweird.f32 %v6244
        %vm6374 = vweird.f32 %v6368
        %vm6375 = vmor %vm6373, %vm6374
        %v6376 = vsel %vm6375, %v6368, %v6372
        %v6377 = vand.u32 2147483647, %v6244
        %vm6378 = vcmp.eq.f32.partialorder %v6377, 8.507059e+37
        %v6379 = vand.u32 %v6244, 2147483648
        %v6380 = vor.u32 1.1754944e-38, %v6379
        %v6381 = vsel %vm6378, %v6380, %v6376
        %v6382 = vmul.f32 1.0, %v6381
        %v6383 = vrcp.pop %v6245
        %v6384 = vmul.f32 %v6245, %v6383
        %v6385 = vsub.f32 1.0, %v6384
        %v6386 = vmul.f32 %v6383, %v6385
        %v6387 = vadd.f32 %v6383, %v6386
        %vm6388 = vweird.f32 %v6245
        %vm6389 = vweird.f32 %v6383
        %vm6390 = vmor %vm6388, %vm6389
        %v6391 = vsel %vm6390, %v6383, %v6387
        %v6392 = vand.u32 2147483647, %v6245
        %vm6393 = vcmp.eq.f32.partialorder %v6392, 8.507059e+37
        %v6394 = vand.u32 %v6245, 2147483648
        %v6395 = vor.u32 1.1754944e-38, %v6394
        %v6396 = vsel %vm6393, %v6395, %v6391
        %v6397 = vmul.f32 1.0, %v6396
        %v6398 = vrcp.pop %v6246
        %v6399 = vmul.f32 %v6246, %v6398
        %v6400 = vsub.f32 1.0, %v6399
        %v6401 = vmul.f32 %v6398, %v6400
        %v6402 = vadd.f32 %v6398, %v6401
        %vm6403 = vweird.f32 %v6246
        %vm6404 = vweird.f32 %v6398
        %vm6405 = vmor %vm6403, %vm6404
        %v6406 = vsel %vm6405, %v6398, %v6402
        %v6407 = vand.u32 2147483647, %v6246
        %vm6408 = vcmp.eq.f32.partialorder %v6407, 8.507059e+37
        %v6409 = vand.u32 %v6246, 2147483648
        %v6410 = vor.u32 1.1754944e-38, %v6409
        %v6411 = vsel %vm6408, %v6410, %v6406
        %v6412 = vmul.f32 1.0, %v6411
        %v6413 = vrcp.pop %v6247
        %v6414 = vmul.f32 %v6247, %v6413
        %v6415 = vsub.f32 1.0, %v6414
        %v6416 = vmul.f32 %v6413, %v6415
        %v6417 = vadd.f32 %v6413, %v6416
        %vm6418 = vweird.f32 %v6247
        %vm6419 = vweird.f32 %v6413
        %vm6420 = vmor %vm6418, %vm6419
        %v6421 = vsel %vm6420, %v6413, %v6417
        %v6422 = vand.u32 2147483647, %v6247
        %vm6423 = vcmp.eq.f32.partialorder %v6422, 8.507059e+37
        %v6424 = vand.u32 %v6247, 2147483648
        %v6425 = vor.u32 1.1754944e-38, %v6424
        %v6426 = vsel %vm6423, %v6425, %v6421
        %v6427 = vmul.f32 1.0, %v6426
        %v6428 = vrcp.pop %v6248
        %v6429 = vmul.f32 %v6248, %v6428
        %v6430 = vsub.f32 1.0, %v6429
        %v6431 = vmul.f32 %v6428, %v6430
        %v6432 = vadd.f32 %v6428, %v6431
        %vm6433 = vweird.f32 %v6248
        %vm6434 = vweird.f32 %v6428
        %vm6435 = vmor %vm6433, %vm6434
        %v6436 = vsel %vm6435, %v6428, %v6432
        %v6437 = vand.u32 2147483647, %v6248
        %vm6438 = vcmp.eq.f32.partialorder %v6437, 8.507059e+37
        %v6439 = vand.u32 %v6248, 2147483648
        %v6440 = vor.u32 1.1754944e-38, %v6439
        %v6441 = vsel %vm6438, %v6440, %v6436
        %v6442 = vmul.f32 1.0, %v6441
        %v6443 = vrcp.pop %v6249
        %v6444 = vmul.f32 %v6249, %v6443
        %v6445 = vsub.f32 1.0, %v6444
        %v6446 = vmul.f32 %v6443, %v6445
        %v6447 = vadd.f32 %v6443, %v6446
        %vm6448 = vweird.f32 %v6249
        %vm6449 = vweird.f32 %v6443
        %vm6450 = vmor %vm6448, %vm6449
        %v6451 = vsel %vm6450, %v6443, %v6447
        %v6452 = vand.u32 2147483647, %v6249
        %vm6453 = vcmp.eq.f32.partialorder %v6452, 8.507059e+37
        %v6454 = vand.u32 %v6249, 2147483648
        %v6455 = vor.u32 1.1754944e-38, %v6454
        %v6456 = vsel %vm6453, %v6455, %v6451
        %v6457 = vmul.f32 1.0, %v6456
        %v6458 = vrcp.pop %v6250
        %v6459 = vmul.f32 %v6250, %v6458
        %v6460 = vsub.f32 1.0, %v6459
        %v6461 = vmul.f32 %v6458, %v6460
        %v6462 = vadd.f32 %v6458, %v6461
        %vm6463 = vweird.f32 %v6250
        %vm6464 = vweird.f32 %v6458
        %vm6465 = vmor %vm6463, %vm6464
        %v6466 = vsel %vm6465, %v6458, %v6462
        %v6467 = vand.u32 2147483647, %v6250
        %vm6468 = vcmp.eq.f32.partialorder %v6467, 8.507059e+37
        %v6469 = vand.u32 %v6250, 2147483648
        %v6470 = vor.u32 1.1754944e-38, %v6469
        %v6471 = vsel %vm6468, %v6470, %v6466
        %v6472 = vmul.f32 1.0, %v6471
        %v6473 = vrcp.pop %v6251
        %v6474 = vmul.f32 %v6251, %v6473
        %v6475 = vsub.f32 1.0, %v6474
        %v6476 = vmul.f32 %v6473, %v6475
        %v6477 = vadd.f32 %v6473, %v6476
        %vm6478 = vweird.f32 %v6251
        %vm6479 = vweird.f32 %v6473
        %vm6480 = vmor %vm6478, %vm6479
        %v6481 = vsel %vm6480, %v6473, %v6477
        %v6482 = vand.u32 2147483647, %v6251
        %vm6483 = vcmp.eq.f32.partialorder %v6482, 8.507059e+37
        %v6484 = vand.u32 %v6251, 2147483648
        %v6485 = vor.u32 1.1754944e-38, %v6484
        %v6486 = vsel %vm6483, %v6485, %v6481
        %v6487 = vmul.f32 1.0, %v6486
        %v6488 = vrcp.pop %v6252
        %v6489 = vmul.f32 %v6252, %v6488
        %v6490 = vsub.f32 1.0, %v6489
        %v6491 = vmul.f32 %v6488, %v6490
        %v6492 = vadd.f32 %v6488, %v6491
        %vm6493 = vweird.f32 %v6252
        %vm6494 = vweird.f32 %v6488
        %vm6495 = vmor %vm6493, %vm6494
        %v6496 = vsel %vm6495, %v6488, %v6492
        %v6497 = vand.u32 2147483647, %v6252
        %vm6498 = vcmp.eq.f32.partialorder %v6497, 8.507059e+37
        %v6499 = vand.u32 %v6252, 2147483648
        %v6500 = vor.u32 1.1754944e-38, %v6499
        %v6501 = vsel %vm6498, %v6500, %v6496
        %v6502 = vmul.f32 1.0, %v6501
        %v6503 = vrcp.pop %v6253
        %v6504 = vmul.f32 %v6253, %v6503
        %v6505 = vsub.f32 1.0, %v6504
        %v6506 = vmul.f32 %v6503, %v6505
        %v6507 = vadd.f32 %v6503, %v6506
        %vm6508 = vweird.f32 %v6253
        %vm6509 = vweird.f32 %v6503
        %vm6510 = vmor %vm6508, %vm6509
        %v6511 = vsel %vm6510, %v6503, %v6507
        %v6512 = vand.u32 2147483647, %v6253
        %vm6513 = vcmp.eq.f32.partialorder %v6512, 8.507059e+37
        %v6514 = vand.u32 %v6253, 2147483648
        %v6515 = vor.u32 1.1754944e-38, %v6514
        %v6516 = vsel %vm6513, %v6515, %v6511
        %v6517 = vmul.f32 1.0, %v6516
        %v6518 = vrcp.pop %v6254
        %v6519 = vmul.f32 %v6254, %v6518
        %v6520 = vsub.f32 1.0, %v6519
        %v6521 = vmul.f32 %v6518, %v6520
        %v6522 = vadd.f32 %v6518, %v6521
        %vm6523 = vweird.f32 %v6254
        %vm6524 = vweird.f32 %v6518
        %vm6525 = vmor %vm6523, %vm6524
        %v6526 = vsel %vm6525, %v6518, %v6522
        %v6527 = vand.u32 2147483647, %v6254
        %vm6528 = vcmp.eq.f32.partialorder %v6527, 8.507059e+37
        %v6529 = vand.u32 %v6254, 2147483648
        %v6530 = vor.u32 1.1754944e-38, %v6529
        %v6531 = vsel %vm6528, %v6530, %v6526
        %v6532 = vmul.f32 1.0, %v6531
        %v6533 = vrcp.pop %v6255
        %v6534 = vmul.f32 %v6255, %v6533
        %v6535 = vsub.f32 1.0, %v6534
        %v6536 = vmul.f32 %v6533, %v6535
        %v6537 = vadd.f32 %v6533, %v6536
        %vm6538 = vweird.f32 %v6255
        %vm6539 = vweird.f32 %v6533
        %vm6540 = vmor %vm6538, %vm6539
        %v6541 = vsel %vm6540, %v6533, %v6537
        %v6542 = vand.u32 2147483647, %v6255
        %vm6543 = vcmp.eq.f32.partialorder %v6542, 8.507059e+37
        %v6544 = vand.u32 %v6255, 2147483648
        %v6545 = vor.u32 1.1754944e-38, %v6544
        %v6546 = vsel %vm6543, %v6545, %v6541
        %v6547 = vmul.f32 1.0, %v6546
        %v6548 = vrcp.pop %v6256
        %v6549 = vmul.f32 %v6256, %v6548
        %v6550 = vsub.f32 1.0, %v6549
        %v6551 = vmul.f32 %v6548, %v6550
        %v6552 = vadd.f32 %v6548, %v6551
        %vm6553 = vweird.f32 %v6256
        %vm6554 = vweird.f32 %v6548
        %vm6555 = vmor %vm6553, %vm6554
        %v6556 = vsel %vm6555, %v6548, %v6552
        %v6557 = vand.u32 2147483647, %v6256
        %vm6558 = vcmp.eq.f32.partialorder %v6557, 8.507059e+37
        %v6559 = vand.u32 %v6256, 2147483648
        %v6560 = vor.u32 1.1754944e-38, %v6559
        %v6561 = vsel %vm6558, %v6560, %v6556
        %v6562 = vmul.f32 1.0, %v6561
        %v6563 = vrcp.pop %v6257
        %v6564 = vmul.f32 %v6257, %v6563
        %v6565 = vsub.f32 1.0, %v6564
        %v6566 = vmul.f32 %v6563, %v6565
        %v6567 = vadd.f32 %v6563, %v6566
        %vm6568 = vweird.f32 %v6257
        %vm6569 = vweird.f32 %v6563
        %vm6570 = vmor %vm6568, %vm6569
        %v6571 = vsel %vm6570, %v6563, %v6567
        %v6572 = vand.u32 2147483647, %v6257
        %vm6573 = vcmp.eq.f32.partialorder %v6572, 8.507059e+37
        %v6574 = vand.u32 %v6257, 2147483648
        %v6575 = vor.u32 1.1754944e-38, %v6574
        %v6576 = vsel %vm6573, %v6575, %v6571
        %v6577 = vmul.f32 1.0, %v6576
        %v6578 = vrcp.pop %v6258
        %v6579 = vmul.f32 %v6258, %v6578
        %v6580 = vsub.f32 1.0, %v6579
        %v6581 = vmul.f32 %v6578, %v6580
        %v6582 = vadd.f32 %v6578, %v6581
        %vm6583 = vweird.f32 %v6258
        %vm6584 = vweird.f32 %v6578
        %vm6585 = vmor %vm6583, %vm6584
        %v6586 = vsel %vm6585, %v6578, %v6582
        %v6587 = vand.u32 2147483647, %v6258
        %vm6588 = vcmp.eq.f32.partialorder %v6587, 8.507059e+37
        %v6589 = vand.u32 %v6258, 2147483648
        %v6590 = vor.u32 1.1754944e-38, %v6589
        %v6591 = vsel %vm6588, %v6590, %v6586
        %v6592 = vmul.f32 1.0, %v6591
        %v6593 = vrcp.pop %v6259
        %v6594 = vmul.f32 %v6259, %v6593
        %v6595 = vsub.f32 1.0, %v6594
        %v6596 = vmul.f32 %v6593, %v6595
        %v6597 = vadd.f32 %v6593, %v6596
        %vm6598 = vweird.f32 %v6259
        %vm6599 = vweird.f32 %v6593
        %vm6600 = vmor %vm6598, %vm6599
        %v6601 = vsel %vm6600, %v6593, %v6597
        %v6602 = vand.u32 2147483647, %v6259
        %vm6603 = vcmp.eq.f32.partialorder %v6602, 8.507059e+37
        %v6604 = vand.u32 %v6259, 2147483648
        %v6605 = vor.u32 1.1754944e-38, %v6604
        %v6606 = vsel %vm6603, %v6605, %v6601
        %v6607 = vmul.f32 1.0, %v6606
        %v6608 = vrcp.pop %v6260
        %v6609 = vmul.f32 %v6260, %v6608
        %v6610 = vsub.f32 1.0, %v6609
        %v6611 = vmul.f32 %v6608, %v6610
        %v6612 = vadd.f32 %v6608, %v6611
        %vm6613 = vweird.f32 %v6260
        %vm6614 = vweird.f32 %v6608
        %vm6615 = vmor %vm6613, %vm6614
        %v6616 = vsel %vm6615, %v6608, %v6612
        %v6617 = vand.u32 2147483647, %v6260
        %vm6618 = vcmp.eq.f32.partialorder %v6617, 8.507059e+37
        %v6619 = vand.u32 %v6260, 2147483648
        %v6620 = vor.u32 1.1754944e-38, %v6619
        %v6621 = vsel %vm6618, %v6620, %v6616
        %v6622 = vmul.f32 1.0, %v6621
        %v6623 = vrcp.pop %v6261
        %v6624 = vmul.f32 %v6261, %v6623
        %v6625 = vsub.f32 1.0, %v6624
        %v6626 = vmul.f32 %v6623, %v6625
        %v6627 = vadd.f32 %v6623, %v6626
        %vm6628 = vweird.f32 %v6261
        %vm6629 = vweird.f32 %v6623
        %vm6630 = vmor %vm6628, %vm6629
        %v6631 = vsel %vm6630, %v6623, %v6627
        %v6632 = vand.u32 2147483647, %v6261
        %vm6633 = vcmp.eq.f32.partialorder %v6632, 8.507059e+37
        %v6634 = vand.u32 %v6261, 2147483648
        %v6635 = vor.u32 1.1754944e-38, %v6634
        %v6636 = vsel %vm6633, %v6635, %v6631
        %v6637 = vmul.f32 1.0, %v6636
        %v6638 = vrcp.pop %v6262
        %v6639 = vmul.f32 %v6262, %v6638
        %v6640 = vsub.f32 1.0, %v6639
        %v6641 = vmul.f32 %v6638, %v6640
        %v6642 = vadd.f32 %v6638, %v6641
        %vm6643 = vweird.f32 %v6262
        %vm6644 = vweird.f32 %v6638
        %vm6645 = vmor %vm6643, %vm6644
        %v6646 = vsel %vm6645, %v6638, %v6642
        %v6647 = vand.u32 2147483647, %v6262
        %vm6648 = vcmp.eq.f32.partialorder %v6647, 8.507059e+37
        %v6649 = vand.u32 %v6262, 2147483648
        %v6650 = vor.u32 1.1754944e-38, %v6649
        %v6651 = vsel %vm6648, %v6650, %v6646
        %v6652 = vmul.f32 1.0, %v6651
        %v6653 = vrcp.pop %v6263
        %v6654 = vmul.f32 %v6263, %v6653
        %v6655 = vsub.f32 1.0, %v6654
        %v6656 = vmul.f32 %v6653, %v6655
        %v6657 = vadd.f32 %v6653, %v6656
        %vm6658 = vweird.f32 %v6263
        %vm6659 = vweird.f32 %v6653
        %vm6660 = vmor %vm6658, %vm6659
        %v6661 = vsel %vm6660, %v6653, %v6657
        %v6662 = vand.u32 2147483647, %v6263
        %vm6663 = vcmp.eq.f32.partialorder %v6662, 8.507059e+37
        %v6664 = vand.u32 %v6263, 2147483648
        %v6665 = vor.u32 1.1754944e-38, %v6664
        %v6666 = vsel %vm6663, %v6665, %v6661
        %v6667 = vmul.f32 1.0, %v6666
        %v6668 = vrcp.pop %v6264
        %v6669 = vmul.f32 %v6264, %v6668
        %v6670 = vsub.f32 1.0, %v6669
        %v6671 = vmul.f32 %v6668, %v6670
        %v6672 = vadd.f32 %v6668, %v6671
        %vm6673 = vweird.f32 %v6264
        %vm6674 = vweird.f32 %v6668
        %vm6675 = vmor %vm6673, %vm6674
        %v6676 = vsel %vm6675, %v6668, %v6672
        %v6677 = vand.u32 2147483647, %v6264
        %vm6678 = vcmp.eq.f32.partialorder %v6677, 8.507059e+37
        %v6679 = vand.u32 %v6264, 2147483648
        %v6680 = vor.u32 1.1754944e-38, %v6679
        %v6681 = vsel %vm6678, %v6680, %v6676
        %v6682 = vmul.f32 1.0, %v6681
        %v6683 = vrcp.pop %v6265
        %v6684 = vmul.f32 %v6265, %v6683
        %v6685 = vsub.f32 1.0, %v6684
        %v6686 = vmul.f32 %v6683, %v6685
        %v6687 = vadd.f32 %v6683, %v6686
        %vm6688 = vweird.f32 %v6265
        %vm6689 = vweird.f32 %v6683
        %vm6690 = vmor %vm6688, %vm6689
        %v6691 = vsel %vm6690, %v6683, %v6687
        %v6692 = vand.u32 2147483647, %v6265
        %vm6693 = vcmp.eq.f32.partialorder %v6692, 8.507059e+37
        %v6694 = vand.u32 %v6265, 2147483648
        %v6695 = vor.u32 1.1754944e-38, %v6694
        %v6696 = vsel %vm6693, %v6695, %v6691
        %v6697 = vmul.f32 1.0, %v6696
        %v6698 = vrcp.pop %v6266
        %v6699 = vmul.f32 %v6266, %v6698
        %v6700 = vsub.f32 1.0, %v6699
        %v6701 = vmul.f32 %v6698, %v6700
        %v6702 = vadd.f32 %v6698, %v6701
        %vm6703 = vweird.f32 %v6266
        %vm6704 = vweird.f32 %v6698
        %vm6705 = vmor %vm6703, %vm6704
        %v6706 = vsel %vm6705, %v6698, %v6702
        %v6707 = vand.u32 2147483647, %v6266
        %vm6708 = vcmp.eq.f32.partialorder %v6707, 8.507059e+37
        %v6709 = vand.u32 %v6266, 2147483648
        %v6710 = vor.u32 1.1754944e-38, %v6709
        %v6711 = vsel %vm6708, %v6710, %v6706
        %v6712 = vmul.f32 1.0, %v6711
        %v6713 = vrcp.pop %v6267
        %v6714 = vmul.f32 %v6267, %v6713
        %v6715 = vsub.f32 1.0, %v6714
        %v6716 = vmul.f32 %v6713, %v6715
        %v6717 = vadd.f32 %v6713, %v6716
        %vm6718 = vweird.f32 %v6267
        %vm6719 = vweird.f32 %v6713
        %vm6720 = vmor %vm6718, %vm6719
        %v6721 = vsel %vm6720, %v6713, %v6717
        %v6722 = vand.u32 2147483647, %v6267
        %vm6723 = vcmp.eq.f32.partialorder %v6722, 8.507059e+37
        %v6724 = vand.u32 %v6267, 2147483648
        %v6725 = vor.u32 1.1754944e-38, %v6724
        %v6726 = vsel %vm6723, %v6725, %v6721
        %v6727 = vmul.f32 1.0, %v6726
        %v6728 = vrcp.pop %v6268
        %v6729 = vmul.f32 %v6268, %v6728
        %v6730 = vsub.f32 1.0, %v6729
        %v6731 = vmul.f32 %v6728, %v6730
        %v6732 = vadd.f32 %v6728, %v6731
        %vm6733 = vweird.f32 %v6268
        %vm6734 = vweird.f32 %v6728
        %vm6735 = vmor %vm6733, %vm6734
        %v6736 = vsel %vm6735, %v6728, %v6732
        %v6737 = vand.u32 2147483647, %v6268
        %vm6738 = vcmp.eq.f32.partialorder %v6737, 8.507059e+37
        %v6739 = vand.u32 %v6268, 2147483648
        %v6740 = vor.u32 1.1754944e-38, %v6739
        %v6741 = vsel %vm6738, %v6740, %v6736
        %v6742 = vmul.f32 1.0, %v6741
        %v6743 = vrcp.pop %v6269
        %v6744 = vmul.f32 %v6269, %v6743
        %v6745 = vsub.f32 1.0, %v6744
        %v6746 = vmul.f32 %v6743, %v6745
        %v6747 = vadd.f32 %v6743, %v6746
        %vm6748 = vweird.f32 %v6269
        %vm6749 = vweird.f32 %v6743
        %vm6750 = vmor %vm6748, %vm6749
        %v6751 = vsel %vm6750, %v6743, %v6747
        %v6752 = vand.u32 2147483647, %v6269
        %vm6753 = vcmp.eq.f32.partialorder %v6752, 8.507059e+37
        %v6754 = vand.u32 %v6269, 2147483648
        %v6755 = vor.u32 1.1754944e-38, %v6754
        %v6756 = vsel %vm6753, %v6755, %v6751
        %v6757 = vmul.f32 1.0, %v6756
        %v6758 = vrcp.pop %v6270
        %v6759 = vmul.f32 %v6270, %v6758
        %v6760 = vsub.f32 1.0, %v6759
        %v6761 = vmul.f32 %v6758, %v6760
        %v6762 = vadd.f32 %v6758, %v6761
        %vm6763 = vweird.f32 %v6270
        %vm6764 = vweird.f32 %v6758
        %vm6765 = vmor %vm6763, %vm6764
        %v6766 = vsel %vm6765, %v6758, %v6762
        %v6767 = vand.u32 2147483647, %v6270
        %vm6768 = vcmp.eq.f32.partialorder %v6767, 8.507059e+37
        %v6769 = vand.u32 %v6270, 2147483648
        %v6770 = vor.u32 1.1754944e-38, %v6769
        %v6771 = vsel %vm6768, %v6770, %v6766
        %v6772 = vmul.f32 1.0, %v6771
        %v6773 = vrcp.pop %v6271
        %v6774 = vmul.f32 %v6271, %v6773
        %v6775 = vsub.f32 1.0, %v6774
        %v6776 = vmul.f32 %v6773, %v6775
        %v6777 = vadd.f32 %v6773, %v6776
        %vm6778 = vweird.f32 %v6271
        %vm6779 = vweird.f32 %v6773
        %vm6780 = vmor %vm6778, %vm6779
        %v6781 = vsel %vm6780, %v6773, %v6777
        %v6782 = vand.u32 2147483647, %v6271
        %vm6783 = vcmp.eq.f32.partialorder %v6782, 8.507059e+37
        %v6784 = vand.u32 %v6271, 2147483648
        %v6785 = vor.u32 1.1754944e-38, %v6784
        %v6786 = vsel %vm6783, %v6785, %v6781
        %v6787 = vmul.f32 1.0, %v6786
        %v6788 = vrcp.pop %v6272
        %v6789 = vmul.f32 %v6272, %v6788
        %v6790 = vsub.f32 1.0, %v6789
        %v6791 = vmul.f32 %v6788, %v6790
        %v6792 = vadd.f32 %v6788, %v6791
        %vm6793 = vweird.f32 %v6272
        %vm6794 = vweird.f32 %v6788
        %vm6795 = vmor %vm6793, %vm6794
        %v6796 = vsel %vm6795, %v6788, %v6792
        %v6797 = vand.u32 2147483647, %v6272
        %vm6798 = vcmp.eq.f32.partialorder %v6797, 8.507059e+37
        %v6799 = vand.u32 %v6272, 2147483648
        %v6800 = vor.u32 1.1754944e-38, %v6799
        %v6801 = vsel %vm6798, %v6800, %v6796
        %v6802 = vmul.f32 1.0, %v6801
        %v6803 = vrcp.pop %v6273
        %v6804 = vmul.f32 %v6273, %v6803
        %v6805 = vsub.f32 1.0, %v6804
        %v6806 = vmul.f32 %v6803, %v6805
        %v6807 = vadd.f32 %v6803, %v6806
        %vm6808 = vweird.f32 %v6273
        %vm6809 = vweird.f32 %v6803
        %vm6810 = vmor %vm6808, %vm6809
        %v6811 = vsel %vm6810, %v6803, %v6807
        %v6812 = vand.u32 2147483647, %v6273
        %vm6813 = vcmp.eq.f32.partialorder %v6812, 8.507059e+37
        %v6814 = vand.u32 %v6273, 2147483648
        %v6815 = vor.u32 1.1754944e-38, %v6814
        %v6816 = vsel %vm6813, %v6815, %v6811
        %v6817 = vmul.f32 1.0, %v6816
        %v6818 = vrcp.pop %v6274
        %v6819 = vmul.f32 %v6274, %v6818
        %v6820 = vsub.f32 1.0, %v6819
        %v6821 = vmul.f32 %v6818, %v6820
        %v6822 = vadd.f32 %v6818, %v6821
        %vm6823 = vweird.f32 %v6274
        %vm6824 = vweird.f32 %v6818
        %vm6825 = vmor %vm6823, %vm6824
        %v6826 = vsel %vm6825, %v6818, %v6822
        %v6827 = vand.u32 2147483647, %v6274
        %vm6828 = vcmp.eq.f32.partialorder %v6827, 8.507059e+37
        %v6829 = vand.u32 %v6274, 2147483648
        %v6830 = vor.u32 1.1754944e-38, %v6829
        %v6831 = vsel %vm6828, %v6830, %v6826
        %v6832 = vmul.f32 1.0, %v6831
        %v6833 = vrcp.pop %v6275
        %v6834 = vmul.f32 %v6275, %v6833
        %v6835 = vsub.f32 1.0, %v6834
        %v6836 = vmul.f32 %v6833, %v6835
        %v6837 = vadd.f32 %v6833, %v6836
        %vm6838 = vweird.f32 %v6275
        %vm6839 = vweird.f32 %v6833
        %vm6840 = vmor %vm6838, %vm6839
        %v6841 = vsel %vm6840, %v6833, %v6837
        %v6842 = vand.u32 2147483647, %v6275
        %vm6843 = vcmp.eq.f32.partialorder %v6842, 8.507059e+37
        %v6844 = vand.u32 %v6275, 2147483648
        %v6845 = vor.u32 1.1754944e-38, %v6844
        %v6846 = vsel %vm6843, %v6845, %v6841
        %v6847 = vmul.f32 1.0, %v6846
        %v6848 = vrcp.pop %v6276
        %v6849 = vmul.f32 %v6276, %v6848
        %v6850 = vsub.f32 1.0, %v6849
        %v6851 = vmul.f32 %v6848, %v6850
        %v6852 = vadd.f32 %v6848, %v6851
        %vm6853 = vweird.f32 %v6276
        %vm6854 = vweird.f32 %v6848
        %vm6855 = vmor %vm6853, %vm6854
        %v6856 = vsel %vm6855, %v6848, %v6852
        %v6857 = vand.u32 2147483647, %v6276
        %vm6858 = vcmp.eq.f32.partialorder %v6857, 8.507059e+37
        %v6859 = vand.u32 %v6276, 2147483648
        %v6860 = vor.u32 1.1754944e-38, %v6859
        %v6861 = vsel %vm6858, %v6860, %v6856
        %v6862 = vmul.f32 1.0, %v6861
        %v6863 = vrcp.pop %v6277
        %v6864 = vmul.f32 %v6277, %v6863
        %v6865 = vsub.f32 1.0, %v6864
        %v6866 = vmul.f32 %v6863, %v6865
        %v6867 = vadd.f32 %v6863, %v6866
        %vm6868 = vweird.f32 %v6277
        %vm6869 = vweird.f32 %v6863
        %vm6870 = vmor %vm6868, %vm6869
        %v6871 = vsel %vm6870, %v6863, %v6867
        %v6872 = vand.u32 2147483647, %v6277
        %vm6873 = vcmp.eq.f32.partialorder %v6872, 8.507059e+37
        %v6874 = vand.u32 %v6277, 2147483648
        %v6875 = vor.u32 1.1754944e-38, %v6874
        %v6876 = vsel %vm6873, %v6875, %v6871
        %v6877 = vmul.f32 1.0, %v6876
        %v6878 = vrcp.pop %v6278
        %v6879 = vmul.f32 %v6278, %v6878
        %v6880 = vsub.f32 1.0, %v6879
        %v6881 = vmul.f32 %v6878, %v6880
        %v6882 = vadd.f32 %v6878, %v6881
        %vm6883 = vweird.f32 %v6278
        %vm6884 = vweird.f32 %v6878
        %vm6885 = vmor %vm6883, %vm6884
        %v6886 = vsel %vm6885, %v6878, %v6882
        %v6887 = vand.u32 2147483647, %v6278
        %vm6888 = vcmp.eq.f32.partialorder %v6887, 8.507059e+37
        %v6889 = vand.u32 %v6278, 2147483648
        %v6890 = vor.u32 1.1754944e-38, %v6889
        %v6891 = vsel %vm6888, %v6890, %v6886
        %v6892 = vmul.f32 1.0, %v6891
        %v6893 = vrcp.pop %v6279
        %v6894 = vmul.f32 %v6279, %v6893
        %v6895 = vsub.f32 1.0, %v6894
        %v6896 = vmul.f32 %v6893, %v6895
        %v6897 = vadd.f32 %v6893, %v6896
        %vm6898 = vweird.f32 %v6279
        %vm6899 = vweird.f32 %v6893
        %vm6900 = vmor %vm6898, %vm6899
        %v6901 = vsel %vm6900, %v6893, %v6897
        %v6902 = vand.u32 2147483647, %v6279
        %vm6903 = vcmp.eq.f32.partialorder %v6902, 8.507059e+37
        %v6904 = vand.u32 %v6279, 2147483648
        %v6905 = vor.u32 1.1754944e-38, %v6904
        %v6906 = vsel %vm6903, %v6905, %v6901
        %v6907 = vmul.f32 1.0, %v6906
        %v6908 = vrcp.pop %v6280
        %v6909 = vmul.f32 %v6280, %v6908
        %v6910 = vsub.f32 1.0, %v6909
        %v6911 = vmul.f32 %v6908, %v6910
        %v6912 = vadd.f32 %v6908, %v6911
        %vm6913 = vweird.f32 %v6280
        %vm6914 = vweird.f32 %v6908
        %vm6915 = vmor %vm6913, %vm6914
        %v6916 = vsel %vm6915, %v6908, %v6912
        %v6917 = vand.u32 2147483647, %v6280
        %vm6918 = vcmp.eq.f32.partialorder %v6917, 8.507059e+37
        %v6919 = vand.u32 %v6280, 2147483648
        %v6920 = vor.u32 1.1754944e-38, %v6919
        %v6921 = vsel %vm6918, %v6920, %v6916
        %v6922 = vmul.f32 1.0, %v6921
        %v6923 = vrcp.pop %v6281
        %v6924 = vmul.f32 %v6281, %v6923
        %v6925 = vsub.f32 1.0, %v6924
        %v6926 = vmul.f32 %v6923, %v6925
        %v6927 = vadd.f32 %v6923, %v6926
        %vm6928 = vweird.f32 %v6281
        %vm6929 = vweird.f32 %v6923
        %vm6930 = vmor %vm6928, %vm6929
        %v6931 = vsel %vm6930, %v6923, %v6927
        %v6932 = vand.u32 2147483647, %v6281
        %vm6933 = vcmp.eq.f32.partialorder %v6932, 8.507059e+37
        %v6934 = vand.u32 %v6281, 2147483648
        %v6935 = vor.u32 1.1754944e-38, %v6934
        %v6936 = vsel %vm6933, %v6935, %v6931
        %v6937 = vmul.f32 1.0, %v6936
        %v6938 = vrcp.pop %v6282
        %v6939 = vmul.f32 %v6282, %v6938
        %v6940 = vsub.f32 1.0, %v6939
        %v6941 = vmul.f32 %v6938, %v6940
        %v6942 = vadd.f32 %v6938, %v6941
        %vm6943 = vweird.f32 %v6282
        %vm6944 = vweird.f32 %v6938
        %vm6945 = vmor %vm6943, %vm6944
        %v6946 = vsel %vm6945, %v6938, %v6942
        %v6947 = vand.u32 2147483647, %v6282
        %vm6948 = vcmp.eq.f32.partialorder %v6947, 8.507059e+37
        %v6949 = vand.u32 %v6282, 2147483648
        %v6950 = vor.u32 1.1754944e-38, %v6949
        %v6951 = vsel %vm6948, %v6950, %v6946
        %v6952 = vmul.f32 1.0, %v6951
        %v6953 = vrcp.pop %v6283
        %v6954 = vmul.f32 %v6283, %v6953
        %v6955 = vsub.f32 1.0, %v6954
        %v6956 = vmul.f32 %v6953, %v6955
        %v6957 = vadd.f32 %v6953, %v6956
        %vm6958 = vweird.f32 %v6283
        %vm6959 = vweird.f32 %v6953
        %vm6960 = vmor %vm6958, %vm6959
        %v6961 = vsel %vm6960, %v6953, %v6957
        %v6962 = vand.u32 2147483647, %v6283
        %vm6963 = vcmp.eq.f32.partialorder %v6962, 8.507059e+37
        %v6964 = vand.u32 %v6283, 2147483648
        %v6965 = vor.u32 1.1754944e-38, %v6964
        %v6966 = vsel %vm6963, %v6965, %v6961
        %v6967 = vmul.f32 1.0, %v6966
        %v6968 = vrcp.pop %v6284
        %v6969 = vmul.f32 %v6284, %v6968
        %v6970 = vsub.f32 1.0, %v6969
        %v6971 = vmul.f32 %v6968, %v6970
        %v6972 = vadd.f32 %v6968, %v6971
        %vm6973 = vweird.f32 %v6284
        %vm6974 = vweird.f32 %v6968
        %vm6975 = vmor %vm6973, %vm6974
        %v6976 = vsel %vm6975, %v6968, %v6972
        %v6977 = vand.u32 2147483647, %v6284
        %vm6978 = vcmp.eq.f32.partialorder %v6977, 8.507059e+37
        %v6979 = vand.u32 %v6284, 2147483648
        %v6980 = vor.u32 1.1754944e-38, %v6979
        %v6981 = vsel %vm6978, %v6980, %v6976
        %v6982 = vmul.f32 1.0, %v6981
        %v6983 = vrcp.pop %v6285
        %v6984 = vmul.f32 %v6285, %v6983
        %v6985 = vsub.f32 1.0, %v6984
        %v6986 = vmul.f32 %v6983, %v6985
        %v6987 = vadd.f32 %v6983, %v6986
        %vm6988 = vweird.f32 %v6285
        %vm6989 = vweird.f32 %v6983
        %vm6990 = vmor %vm6988, %vm6989
        %v6991 = vsel %vm6990, %v6983, %v6987
        %v6992 = vand.u32 2147483647, %v6285
        %vm6993 = vcmp.eq.f32.partialorder %v6992, 8.507059e+37
        %v6994 = vand.u32 %v6285, 2147483648
        %v6995 = vor.u32 1.1754944e-38, %v6994
        %v6996 = vsel %vm6993, %v6995, %v6991
        %v6997 = vmul.f32 1.0, %v6996
        %v6998 = vrcp.pop %v6286
        %v6999 = vmul.f32 %v6286, %v6998
        %v7000 = vsub.f32 1.0, %v6999
        %v7001 = vmul.f32 %v6998, %v7000
        %v7002 = vadd.f32 %v6998, %v7001
        %vm7003 = vweird.f32 %v6286
        %vm7004 = vweird.f32 %v6998
        %vm7005 = vmor %vm7003, %vm7004
        %v7006 = vsel %vm7005, %v6998, %v7002
        %v7007 = vand.u32 2147483647, %v6286
        %vm7008 = vcmp.eq.f32.partialorder %v7007, 8.507059e+37
        %v7009 = vand.u32 %v6286, 2147483648
        %v7010 = vor.u32 1.1754944e-38, %v7009
        %v7011 = vsel %vm7008, %v7010, %v7006
        %v7012 = vmul.f32 1.0, %v7011
        %v7013 = vrcp.pop %v6287
        %v7014 = vmul.f32 %v6287, %v7013
        %v7015 = vsub.f32 1.0, %v7014
        %v7016 = vmul.f32 %v7013, %v7015
        %v7017 = vadd.f32 %v7013, %v7016
        %vm7018 = vweird.f32 %v6287
        %vm7019 = vweird.f32 %v7013
        %vm7020 = vmor %vm7018, %vm7019
        %v7021 = vsel %vm7020, %v7013, %v7017
        %v7022 = vand.u32 2147483647, %v6287
        %vm7023 = vcmp.eq.f32.partialorder %v7022, 8.507059e+37
        %v7024 = vand.u32 %v6287, 2147483648
        %v7025 = vor.u32 1.1754944e-38, %v7024
        %v7026 = vsel %vm7023, %v7025, %v7021
        %v7027 = vmul.f32 1.0, %v7026
        %v7028 = vrcp.pop %v6288
        %v7029 = vmul.f32 %v6288, %v7028
        %v7030 = vsub.f32 1.0, %v7029
        %v7031 = vmul.f32 %v7028, %v7030
        %v7032 = vadd.f32 %v7028, %v7031
        %vm7033 = vweird.f32 %v6288
        %vm7034 = vweird.f32 %v7028
        %vm7035 = vmor %vm7033, %vm7034
        %v7036 = vsel %vm7035, %v7028, %v7032
        %v7037 = vand.u32 2147483647, %v6288
        %vm7038 = vcmp.eq.f32.partialorder %v7037, 8.507059e+37
        %v7039 = vand.u32 %v6288, 2147483648
        %v7040 = vor.u32 1.1754944e-38, %v7039
        %v7041 = vsel %vm7038, %v7040, %v7036
        %v7042 = vmul.f32 1.0, %v7041
        %v7043 = vrcp.pop %v6289
        %v7044 = vmul.f32 %v6289, %v7043
        %v7045 = vsub.f32 1.0, %v7044
        %v7046 = vmul.f32 %v7043, %v7045
        %v7047 = vadd.f32 %v7043, %v7046
        %vm7048 = vweird.f32 %v6289
        %vm7049 = vweird.f32 %v7043
        %vm7050 = vmor %vm7048, %vm7049
        %v7051 = vsel %vm7050, %v7043, %v7047
        %v7052 = vand.u32 2147483647, %v6289
        %vm7053 = vcmp.eq.f32.partialorder %v7052, 8.507059e+37
        %v7054 = vand.u32 %v6289, 2147483648
        %v7055 = vor.u32 1.1754944e-38, %v7054
        %v7056 = vsel %vm7053, %v7055, %v7051
        %v7057 = vmul.f32 1.0, %v7056
        %v7058 = vrcp.pop %v6290
        %v7059 = vmul.f32 %v6290, %v7058
        %v7060 = vsub.f32 1.0, %v7059
        %v7061 = vmul.f32 %v7058, %v7060
        %v7062 = vadd.f32 %v7058, %v7061
        %vm7063 = vweird.f32 %v6290
        %vm7064 = vweird.f32 %v7058
        %vm7065 = vmor %vm7063, %vm7064
        %v7066 = vsel %vm7065, %v7058, %v7062
        %v7067 = vand.u32 2147483647, %v6290
        %vm7068 = vcmp.eq.f32.partialorder %v7067, 8.507059e+37
        %v7069 = vand.u32 %v6290, 2147483648
        %v7070 = vor.u32 1.1754944e-38, %v7069
        %v7071 = vsel %vm7068, %v7070, %v7066
        %v7072 = vmul.f32 1.0, %v7071
        %v7073 = vrcp.pop %v6291
        %v7074 = vmul.f32 %v6291, %v7073
        %v7075 = vsub.f32 1.0, %v7074
        %v7076 = vmul.f32 %v7073, %v7075
        %v7077 = vadd.f32 %v7073, %v7076
        %vm7078 = vweird.f32 %v6291
        %vm7079 = vweird.f32 %v7073
        %vm7080 = vmor %vm7078, %vm7079
        %v7081 = vsel %vm7080, %v7073, %v7077
        %v7082 = vand.u32 2147483647, %v6291
        %vm7083 = vcmp.eq.f32.partialorder %v7082, 8.507059e+37
        %v7084 = vand.u32 %v6291, 2147483648
        %v7085 = vor.u32 1.1754944e-38, %v7084
        %v7086 = vsel %vm7083, %v7085, %v7081
        %v7087 = vmul.f32 1.0, %v7086
        %v7088 = vrcp.pop %v6292
        %v7089 = vmul.f32 %v6292, %v7088
        %v7090 = vsub.f32 1.0, %v7089
        %v7091 = vmul.f32 %v7088, %v7090
        %v7092 = vadd.f32 %v7088, %v7091
        %vm7093 = vweird.f32 %v6292
        %vm7094 = vweird.f32 %v7088
        %vm7095 = vmor %vm7093, %vm7094
        %v7096 = vsel %vm7095, %v7088, %v7092
        %v7097 = vand.u32 2147483647, %v6292
        %vm7098 = vcmp.eq.f32.partialorder %v7097, 8.507059e+37
        %v7099 = vand.u32 %v6292, 2147483648
        %v7100 = vor.u32 1.1754944e-38, %v7099
        %v7101 = vsel %vm7098, %v7100, %v7096
        %v7102 = vmul.f32 1.0, %v7101
        %v7103 = vrcp.pop %v6293
        %v7104 = vmul.f32 %v6293, %v7103
        %v7105 = vsub.f32 1.0, %v7104
        %v7106 = vmul.f32 %v7103, %v7105
        %v7107 = vadd.f32 %v7103, %v7106
        %vm7108 = vweird.f32 %v6293
        %vm7109 = vweird.f32 %v7103
        %vm7110 = vmor %vm7108, %vm7109
        %v7111 = vsel %vm7110, %v7103, %v7107
        %v7112 = vand.u32 2147483647, %v6293
        %vm7113 = vcmp.eq.f32.partialorder %v7112, 8.507059e+37
        %v7114 = vand.u32 %v6293, 2147483648
        %v7115 = vor.u32 1.1754944e-38, %v7114
        %v7116 = vsel %vm7113, %v7115, %v7111
        %v7117 = vmul.f32 1.0, %v7116
        %v7118 = vrcp.pop %v6294
        %v7119 = vmul.f32 %v6294, %v7118
        %v7120 = vsub.f32 1.0, %v7119
        %v7121 = vmul.f32 %v7118, %v7120
        %v7122 = vadd.f32 %v7118, %v7121
        %vm7123 = vweird.f32 %v6294
        %vm7124 = vweird.f32 %v7118
        %vm7125 = vmor %vm7123, %vm7124
        %v7126 = vsel %vm7125, %v7118, %v7122
        %v7127 = vand.u32 2147483647, %v6294
        %vm7128 = vcmp.eq.f32.partialorder %v7127, 8.507059e+37
        %v7129 = vand.u32 %v6294, 2147483648
        %v7130 = vor.u32 1.1754944e-38, %v7129
        %v7131 = vsel %vm7128, %v7130, %v7126
        %v7132 = vmul.f32 1.0, %v7131
        %v7133 = vrcp.pop %v6295
        %v7134 = vmul.f32 %v6295, %v7133
        %v7135 = vsub.f32 1.0, %v7134
        %v7136 = vmul.f32 %v7133, %v7135
        %v7137 = vadd.f32 %v7133, %v7136
        %vm7138 = vweird.f32 %v6295
        %vm7139 = vweird.f32 %v7133
        %vm7140 = vmor %vm7138, %vm7139
        %v7141 = vsel %vm7140, %v7133, %v7137
        %v7142 = vand.u32 2147483647, %v6295
        %vm7143 = vcmp.eq.f32.partialorder %v7142, 8.507059e+37
        %v7144 = vand.u32 %v6295, 2147483648
        %v7145 = vor.u32 1.1754944e-38, %v7144
        %v7146 = vsel %vm7143, %v7145, %v7141
        %v7147 = vmul.f32 1.0, %v7146
        %v7148 = vrcp.pop %v6296
        %v7149 = vmul.f32 %v6296, %v7148
        %v7150 = vsub.f32 1.0, %v7149
        %v7151 = vmul.f32 %v7148, %v7150
        %v7152 = vadd.f32 %v7148, %v7151
        %vm7153 = vweird.f32 %v6296
        %vm7154 = vweird.f32 %v7148
        %vm7155 = vmor %vm7153, %vm7154
        %v7156 = vsel %vm7155, %v7148, %v7152
        %v7157 = vand.u32 2147483647, %v6296
        %vm7158 = vcmp.eq.f32.partialorder %v7157, 8.507059e+37
        %v7159 = vand.u32 %v6296, 2147483648
        %v7160 = vor.u32 1.1754944e-38, %v7159
        %v7161 = vsel %vm7158, %v7160, %v7156
        %v7162 = vmul.f32 1.0, %v7161
        %v7163 = vrcp.pop %v6297
        %v7164 = vmul.f32 %v6297, %v7163
        %v7165 = vsub.f32 1.0, %v7164
        %v7166 = vmul.f32 %v7163, %v7165
        %v7167 = vadd.f32 %v7163, %v7166
        %vm7168 = vweird.f32 %v6297
        %vm7169 = vweird.f32 %v7163
        %vm7170 = vmor %vm7168, %vm7169
        %v7171 = vsel %vm7170, %v7163, %v7167
        %v7172 = vand.u32 2147483647, %v6297
        %vm7173 = vcmp.eq.f32.partialorder %v7172, 8.507059e+37
        %v7174 = vand.u32 %v6297, 2147483648
        %v7175 = vor.u32 1.1754944e-38, %v7174
        %v7176 = vsel %vm7173, %v7175, %v7171
        %v7177 = vmul.f32 1.0, %v7176
        %v7178 = vrcp.pop %v6298
        %v7179 = vmul.f32 %v6298, %v7178
        %v7180 = vsub.f32 1.0, %v7179
        %v7181 = vmul.f32 %v7178, %v7180
        %v7182 = vadd.f32 %v7178, %v7181
        %vm7183 = vweird.f32 %v6298
        %vm7184 = vweird.f32 %v7178
        %vm7185 = vmor %vm7183, %vm7184
        %v7186 = vsel %vm7185, %v7178, %v7182
        %v7187 = vand.u32 2147483647, %v6298
        %vm7188 = vcmp.eq.f32.partialorder %v7187, 8.507059e+37
        %v7189 = vand.u32 %v6298, 2147483648
        %v7190 = vor.u32 1.1754944e-38, %v7189
        %v7191 = vsel %vm7188, %v7190, %v7186
        %v7192 = vmul.f32 1.0, %v7191
        %v7193 = vrcp.pop %v6299
        %v7194 = vmul.f32 %v6299, %v7193
        %v7195 = vsub.f32 1.0, %v7194
        %v7196 = vmul.f32 %v7193, %v7195
        %v7197 = vadd.f32 %v7193, %v7196
        %vm7198 = vweird.f32 %v6299
        %vm7199 = vweird.f32 %v7193
        %vm7200 = vmor %vm7198, %vm7199
        %v7201 = vsel %vm7200, %v7193, %v7197
        %v7202 = vand.u32 2147483647, %v6299
        %vm7203 = vcmp.eq.f32.partialorder %v7202, 8.507059e+37
        %v7204 = vand.u32 %v6299, 2147483648
        %v7205 = vor.u32 1.1754944e-38, %v7204
        %v7206 = vsel %vm7203, %v7205, %v7201
        %v7207 = vmul.f32 1.0, %v7206
        %v7208 = vrcp.pop %v6300
        %v7209 = vmul.f32 %v6300, %v7208
        %v7210 = vsub.f32 1.0, %v7209
        %v7211 = vmul.f32 %v7208, %v7210
        %v7212 = vadd.f32 %v7208, %v7211
        %vm7213 = vweird.f32 %v6300
        %vm7214 = vweird.f32 %v7208
        %vm7215 = vmor %vm7213, %vm7214
        %v7216 = vsel %vm7215, %v7208, %v7212
        %v7217 = vand.u32 2147483647, %v6300
        %vm7218 = vcmp.eq.f32.partialorder %v7217, 8.507059e+37
        %v7219 = vand.u32 %v6300, 2147483648
        %v7220 = vor.u32 1.1754944e-38, %v7219
        %v7221 = vsel %vm7218, %v7220, %v7216
        %v7222 = vmul.f32 1.0, %v7221
        %v7223 = vrcp.pop %v6301
        %v7224 = vmul.f32 %v6301, %v7223
        %v7225 = vsub.f32 1.0, %v7224
        %v7226 = vmul.f32 %v7223, %v7225
        %v7227 = vadd.f32 %v7223, %v7226
        %vm7228 = vweird.f32 %v6301
        %vm7229 = vweird.f32 %v7223
        %vm7230 = vmor %vm7228, %vm7229
        %v7231 = vsel %vm7230, %v7223, %v7227
        %v7232 = vand.u32 2147483647, %v6301
        %vm7233 = vcmp.eq.f32.partialorder %v7232, 8.507059e+37
        %v7234 = vand.u32 %v6301, 2147483648
        %v7235 = vor.u32 1.1754944e-38, %v7234
        %v7236 = vsel %vm7233, %v7235, %v7231
        %v7237 = vmul.f32 1.0, %v7236
        %v7238 = vrcp.pop %v6302
        %v7239 = vmul.f32 %v6302, %v7238
        %v7240 = vsub.f32 1.0, %v7239
        %v7241 = vmul.f32 %v7238, %v7240
        %v7242 = vadd.f32 %v7238, %v7241
        %vm7243 = vweird.f32 %v6302
        %vm7244 = vweird.f32 %v7238
        %vm7245 = vmor %vm7243, %vm7244
        %v7246 = vsel %vm7245, %v7238, %v7242
        %v7247 = vand.u32 2147483647, %v6302
        %vm7248 = vcmp.eq.f32.partialorder %v7247, 8.507059e+37
        %v7249 = vand.u32 %v6302, 2147483648
        %v7250 = vor.u32 1.1754944e-38, %v7249
        %v7251 = vsel %vm7248, %v7250, %v7246
        %v7252 = vmul.f32 1.0, %v7251
        %v7253 = vrcp.pop %v6303
        %v7254 = vmul.f32 %v6303, %v7253
        %v7255 = vsub.f32 1.0, %v7254
        %v7256 = vmul.f32 %v7253, %v7255
        %v7257 = vadd.f32 %v7253, %v7256
        %vm7258 = vweird.f32 %v6303
        %vm7259 = vweird.f32 %v7253
        %vm7260 = vmor %vm7258, %vm7259
        %v7261 = vsel %vm7260, %v7253, %v7257
        %v7262 = vand.u32 2147483647, %v6303
        %vm7263 = vcmp.eq.f32.partialorder %v7262, 8.507059e+37
        %v7264 = vand.u32 %v6303, 2147483648
        %v7265 = vor.u32 1.1754944e-38, %v7264
        %v7266 = vsel %vm7263, %v7265, %v7261
        %v7267 = vmul.f32 1.0, %v7266
        %v7268 = vrcp.pop %v6304
        %v7269 = vmul.f32 %v6304, %v7268
        %v7270 = vsub.f32 1.0, %v7269
        %v7271 = vmul.f32 %v7268, %v7270
        %v7272 = vadd.f32 %v7268, %v7271
        %vm7273 = vweird.f32 %v6304
        %vm7274 = vweird.f32 %v7268
        %vm7275 = vmor %vm7273, %vm7274
        %v7276 = vsel %vm7275, %v7268, %v7272
        %v7277 = vand.u32 2147483647, %v6304
        %vm7278 = vcmp.eq.f32.partialorder %v7277, 8.507059e+37
        %v7279 = vand.u32 %v6304, 2147483648
        %v7280 = vor.u32 1.1754944e-38, %v7279
        %v7281 = vsel %vm7278, %v7280, %v7276
        %v7282 = vmul.f32 1.0, %v7281
        %v7283 = vrcp.pop %v6305
        %v7284 = vmul.f32 %v6305, %v7283
        %v7285 = vsub.f32 1.0, %v7284
        %v7286 = vmul.f32 %v7283, %v7285
        %v7287 = vadd.f32 %v7283, %v7286
        %vm7288 = vweird.f32 %v6305
        %vm7289 = vweird.f32 %v7283
        %vm7290 = vmor %vm7288, %vm7289
        %v7291 = vsel %vm7290, %v7283, %v7287
        %v7292 = vand.u32 2147483647, %v6305
        %vm7293 = vcmp.eq.f32.partialorder %v7292, 8.507059e+37
        %v7294 = vand.u32 %v6305, 2147483648
        %v7295 = vor.u32 1.1754944e-38, %v7294
        %v7296 = vsel %vm7293, %v7295, %v7291
        %v7297 = vmul.f32 1.0, %v7296
        %v7298 = vrcp.pop %v6306
        %v7299 = vmul.f32 %v6306, %v7298
        %v7300 = vsub.f32 1.0, %v7299
        %v7301 = vmul.f32 %v7298, %v7300
        %v7302 = vadd.f32 %v7298, %v7301
        %vm7303 = vweird.f32 %v6306
        %vm7304 = vweird.f32 %v7298
        %vm7305 = vmor %vm7303, %vm7304
        %v7306 = vsel %vm7305, %v7298, %v7302
        %v7307 = vand.u32 2147483647, %v6306
        %vm7308 = vcmp.eq.f32.partialorder %v7307, 8.507059e+37
        %v7309 = vand.u32 %v6306, 2147483648
        %v7310 = vor.u32 1.1754944e-38, %v7309
        %v7311 = vsel %vm7308, %v7310, %v7306
        %v7312 = vmul.f32 1.0, %v7311
        %v7313 = vrcp.pop %v6307
        %v7314 = vmul.f32 %v6307, %v7313
        %v7315 = vsub.f32 1.0, %v7314
        %v7316 = vmul.f32 %v7313, %v7315
        %v7317 = vadd.f32 %v7313, %v7316
        %vm7318 = vweird.f32 %v6307
        %vm7319 = vweird.f32 %v7313
        %vm7320 = vmor %vm7318, %vm7319
        %v7321 = vsel %vm7320, %v7313, %v7317
        %v7322 = vand.u32 2147483647, %v6307
        %vm7323 = vcmp.eq.f32.partialorder %v7322, 8.507059e+37
        %v7324 = vand.u32 %v6307, 2147483648
        %v7325 = vor.u32 1.1754944e-38, %v7324
        %v7326 = vsel %vm7323, %v7325, %v7321
        %v7327 = vmul.f32 1.0, %v7326
        %v7328 = vrcp.pop %v6308
        %v7329 = vmul.f32 %v6308, %v7328
        %v7330 = vsub.f32 1.0, %v7329
        %v7331 = vmul.f32 %v7328, %v7330
        %v7332 = vadd.f32 %v7328, %v7331
        %vm7333 = vweird.f32 %v6308
        %vm7334 = vweird.f32 %v7328
        %vm7335 = vmor %vm7333, %vm7334
        %v7336 = vsel %vm7335, %v7328, %v7332
        %v7337 = vand.u32 2147483647, %v6308
        %vm7338 = vcmp.eq.f32.partialorder %v7337, 8.507059e+37
        %v7339 = vand.u32 %v6308, 2147483648
        %v7340 = vor.u32 1.1754944e-38, %v7339
        %v7341 = vsel %vm7338, %v7340, %v7336
        %v7342 = vmul.f32 1.0, %v7341
        %v7343 = vrcp.pop %v6309
        %v7344 = vmul.f32 %v6309, %v7343
        %v7345 = vsub.f32 1.0, %v7344
        %v7346 = vmul.f32 %v7343, %v7345
        %v7347 = vadd.f32 %v7343, %v7346
        %vm7348 = vweird.f32 %v6309
        %vm7349 = vweird.f32 %v7343
        %vm7350 = vmor %vm7348, %vm7349
        %v7351 = vsel %vm7350, %v7343, %v7347
        %v7352 = vand.u32 2147483647, %v6309
        %vm7353 = vcmp.eq.f32.partialorder %v7352, 8.507059e+37
        %v7354 = vand.u32 %v6309, 2147483648
        %v7355 = vor.u32 1.1754944e-38, %v7354
        %v7356 = vsel %vm7353, %v7355, %v7351
        %v7357 = vmul.f32 1.0, %v7356
        %v7358 = vrcp.pop %v6310
        %v7359 = vmul.f32 %v6310, %v7358
        %v7360 = vsub.f32 1.0, %v7359
        %v7361 = vmul.f32 %v7358, %v7360
        %v7362 = vadd.f32 %v7358, %v7361
        %vm7363 = vweird.f32 %v6310
        %vm7364 = vweird.f32 %v7358
        %vm7365 = vmor %vm7363, %vm7364
        %v7366 = vsel %vm7365, %v7358, %v7362
        %v7367 = vand.u32 2147483647, %v6310
        %vm7368 = vcmp.eq.f32.partialorder %v7367, 8.507059e+37
        %v7369 = vand.u32 %v6310, 2147483648
        %v7370 = vor.u32 1.1754944e-38, %v7369
        %v7371 = vsel %vm7368, %v7370, %v7366
        %v7372 = vmul.f32 1.0, %v7371
        %v7373 = vrcp.pop %v6311
        %v7374 = vmul.f32 %v6311, %v7373
        %v7375 = vsub.f32 1.0, %v7374
        %v7376 = vmul.f32 %v7373, %v7375
        %v7377 = vadd.f32 %v7373, %v7376
        %vm7378 = vweird.f32 %v6311
        %vm7379 = vweird.f32 %v7373
        %vm7380 = vmor %vm7378, %vm7379
        %v7381 = vsel %vm7380, %v7373, %v7377
        %v7382 = vand.u32 2147483647, %v6311
        %vm7383 = vcmp.eq.f32.partialorder %v7382, 8.507059e+37
        %v7384 = vand.u32 %v6311, 2147483648
        %v7385 = vor.u32 1.1754944e-38, %v7384
        %v7386 = vsel %vm7383, %v7385, %v7381
        %v7387 = vmul.f32 1.0, %v7386
        %v7388 = vrcp.pop %v6312
        %v7389 = vmul.f32 %v6312, %v7388
        %v7390 = vsub.f32 1.0, %v7389
        %v7391 = vmul.f32 %v7388, %v7390
        %v7392 = vadd.f32 %v7388, %v7391
        %vm7393 = vweird.f32 %v6312
        %vm7394 = vweird.f32 %v7388
        %vm7395 = vmor %vm7393, %vm7394
        %v7396 = vsel %vm7395, %v7388, %v7392
        %v7397 = vand.u32 2147483647, %v6312
        %vm7398 = vcmp.eq.f32.partialorder %v7397, 8.507059e+37
        %v7399 = vand.u32 %v6312, 2147483648
        %v7400 = vor.u32 1.1754944e-38, %v7399
        %v7401 = vsel %vm7398, %v7400, %v7396
        %v7402 = vmul.f32 1.0, %v7401
        %v7403 = vrcp.pop %v6313
        %v7404 = vmul.f32 %v6313, %v7403
        %v7405 = vsub.f32 1.0, %v7404
        %v7406 = vmul.f32 %v7403, %v7405
        %v7407 = vadd.f32 %v7403, %v7406
        %vm7408 = vweird.f32 %v6313
        %vm7409 = vweird.f32 %v7403
        %vm7410 = vmor %vm7408, %vm7409
        %v7411 = vsel %vm7410, %v7403, %v7407
        %v7412 = vand.u32 2147483647, %v6313
        %vm7413 = vcmp.eq.f32.partialorder %v7412, 8.507059e+37
        %v7414 = vand.u32 %v6313, 2147483648
        %v7415 = vor.u32 1.1754944e-38, %v7414
        %v7416 = vsel %vm7413, %v7415, %v7411
        %v7417 = vmul.f32 1.0, %v7416
        %v7418 = vrcp.pop %v6314
        %v7419 = vmul.f32 %v6314, %v7418
        %v7420 = vsub.f32 1.0, %v7419
        %v7421 = vmul.f32 %v7418, %v7420
        %v7422 = vadd.f32 %v7418, %v7421
        %vm7423 = vweird.f32 %v6314
        %vm7424 = vweird.f32 %v7418
        %vm7425 = vmor %vm7423, %vm7424
        %v7426 = vsel %vm7425, %v7418, %v7422
        %v7427 = vand.u32 2147483647, %v6314
        %vm7428 = vcmp.eq.f32.partialorder %v7427, 8.507059e+37
        %v7429 = vand.u32 %v6314, 2147483648
        %v7430 = vor.u32 1.1754944e-38, %v7429
        %v7431 = vsel %vm7428, %v7430, %v7426
        %v7432 = vmul.f32 1.0, %v7431
        %v7433 = vrcp.pop %v6315
        %v7434 = vmul.f32 %v6315, %v7433
        %v7435 = vsub.f32 1.0, %v7434
        %v7436 = vmul.f32 %v7433, %v7435
        %v7437 = vadd.f32 %v7433, %v7436
        %vm7438 = vweird.f32 %v6315
        %vm7439 = vweird.f32 %v7433
        %vm7440 = vmor %vm7438, %vm7439
        %v7441 = vsel %vm7440, %v7433, %v7437
        %v7442 = vand.u32 2147483647, %v6315
        %vm7443 = vcmp.eq.f32.partialorder %v7442, 8.507059e+37
        %v7444 = vand.u32 %v6315, 2147483648
        %v7445 = vor.u32 1.1754944e-38, %v7444
        %v7446 = vsel %vm7443, %v7445, %v7441
        %v7447 = vmul.f32 1.0, %v7446
        %v7448 = vrcp.pop %v6316
        %v7449 = vmul.f32 %v6316, %v7448
        %v7450 = vsub.f32 1.0, %v7449
        %v7451 = vmul.f32 %v7448, %v7450
        %v7452 = vadd.f32 %v7448, %v7451
        %vm7453 = vweird.f32 %v6316
        %vm7454 = vweird.f32 %v7448
        %vm7455 = vmor %vm7453, %vm7454
        %v7456 = vsel %vm7455, %v7448, %v7452
        %v7457 = vand.u32 2147483647, %v6316
        %vm7458 = vcmp.eq.f32.partialorder %v7457, 8.507059e+37
        %v7459 = vand.u32 %v6316, 2147483648
        %v7460 = vor.u32 1.1754944e-38, %v7459
        %v7461 = vsel %vm7458, %v7460, %v7456
        %v7462 = vmul.f32 1.0, %v7461
        %v7463 = vrcp.pop %v6317
        %v7464 = vmul.f32 %v6317, %v7463
        %v7465 = vsub.f32 1.0, %v7464
        %v7466 = vmul.f32 %v7463, %v7465
        %v7467 = vadd.f32 %v7463, %v7466
        %vm7468 = vweird.f32 %v6317
        %vm7469 = vweird.f32 %v7463
        %vm7470 = vmor %vm7468, %vm7469
        %v7471 = vsel %vm7470, %v7463, %v7467
        %v7472 = vand.u32 2147483647, %v6317
        %vm7473 = vcmp.eq.f32.partialorder %v7472, 8.507059e+37
        %v7474 = vand.u32 %v6317, 2147483648
        %v7475 = vor.u32 1.1754944e-38, %v7474
        %v7476 = vsel %vm7473, %v7475, %v7471
        %v7477 = vmul.f32 1.0, %v7476
        %v7478 = vrcp.pop %v6318
        %v7479 = vmul.f32 %v6318, %v7478
        %v7480 = vsub.f32 1.0, %v7479
        %v7481 = vmul.f32 %v7478, %v7480
        %v7482 = vadd.f32 %v7478, %v7481
        %vm7483 = vweird.f32 %v6318
        %vm7484 = vweird.f32 %v7478
        %vm7485 = vmor %vm7483, %vm7484
        %v7486 = vsel %vm7485, %v7478, %v7482
        %v7487 = vand.u32 2147483647, %v6318
        %vm7488 = vcmp.eq.f32.partialorder %v7487, 8.507059e+37
        %v7489 = vand.u32 %v6318, 2147483648
        %v7490 = vor.u32 1.1754944e-38, %v7489
        %v7491 = vsel %vm7488, %v7490, %v7486
        %v7492 = vmul.f32 1.0, %v7491
        %v7493 = vrcp.pop %v6319
        %v7494 = vmul.f32 %v6319, %v7493
        %v7495 = vsub.f32 1.0, %v7494
        %v7496 = vmul.f32 %v7493, %v7495
        %v7497 = vadd.f32 %v7493, %v7496
        %vm7498 = vweird.f32 %v6319
        %vm7499 = vweird.f32 %v7493
        %vm7500 = vmor %vm7498, %vm7499
        %v7501 = vsel %vm7500, %v7493, %v7497
        %v7502 = vand.u32 2147483647, %v6319
        %vm7503 = vcmp.eq.f32.partialorder %v7502, 8.507059e+37
        %v7504 = vand.u32 %v6319, 2147483648
        %v7505 = vor.u32 1.1754944e-38, %v7504
        %v7506 = vsel %vm7503, %v7505, %v7501
        %v7507 = vmul.f32 1.0, %v7506
        %v7508 = vrcp.pop %v6320
        %v7509 = vmul.f32 %v6320, %v7508
        %v7510 = vsub.f32 1.0, %v7509
        %v7511 = vmul.f32 %v7508, %v7510
        %v7512 = vadd.f32 %v7508, %v7511
        %vm7513 = vweird.f32 %v6320
        %vm7514 = vweird.f32 %v7508
        %vm7515 = vmor %vm7513, %vm7514
        %v7516 = vsel %vm7515, %v7508, %v7512
        %v7517 = vand.u32 2147483647, %v6320
        %vm7518 = vcmp.eq.f32.partialorder %v7517, 8.507059e+37
        %v7519 = vand.u32 %v6320, 2147483648
        %v7520 = vor.u32 1.1754944e-38, %v7519
        %v7521 = vsel %vm7518, %v7520, %v7516
        %v7522 = vmul.f32 1.0, %v7521
        %v7523 = vrcp.pop %v6321
        %v7524 = vmul.f32 %v6321, %v7523
        %v7525 = vsub.f32 1.0, %v7524
        %v7526 = vmul.f32 %v7523, %v7525
        %v7527 = vadd.f32 %v7523, %v7526
        %vm7528 = vweird.f32 %v6321
        %vm7529 = vweird.f32 %v7523
        %vm7530 = vmor %vm7528, %vm7529
        %v7531 = vsel %vm7530, %v7523, %v7527
        %v7532 = vand.u32 2147483647, %v6321
        %vm7533 = vcmp.eq.f32.partialorder %v7532, 8.507059e+37
        %v7534 = vand.u32 %v6321, 2147483648
        %v7535 = vor.u32 1.1754944e-38, %v7534
        %v7536 = vsel %vm7533, %v7535, %v7531
        %v7537 = vmul.f32 1.0, %v7536
        %v7538 = vrcp.pop %v6322
        %v7539 = vmul.f32 %v6322, %v7538
        %v7540 = vsub.f32 1.0, %v7539
        %v7541 = vmul.f32 %v7538, %v7540
        %v7542 = vadd.f32 %v7538, %v7541
        %vm7543 = vweird.f32 %v6322
        %vm7544 = vweird.f32 %v7538
        %vm7545 = vmor %vm7543, %vm7544
        %v7546 = vsel %vm7545, %v7538, %v7542
        %v7547 = vand.u32 2147483647, %v6322
        %vm7548 = vcmp.eq.f32.partialorder %v7547, 8.507059e+37
        %v7549 = vand.u32 %v6322, 2147483648
        %v7550 = vor.u32 1.1754944e-38, %v7549
        %v7551 = vsel %vm7548, %v7550, %v7546
        %v7552 = vmul.f32 1.0, %v7551
        %v7553 = vrcp.pop %v6323
        %v7554 = vmul.f32 %v6323, %v7553
        %v7555 = vsub.f32 1.0, %v7554
        %v7556 = vmul.f32 %v7553, %v7555
        %v7557 = vadd.f32 %v7553, %v7556
        %vm7558 = vweird.f32 %v6323
        %vm7559 = vweird.f32 %v7553
        %vm7560 = vmor %vm7558, %vm7559
        %v7561 = vsel %vm7560, %v7553, %v7557
        %v7562 = vand.u32 2147483647, %v6323
        %vm7563 = vcmp.eq.f32.partialorder %v7562, 8.507059e+37
        %v7564 = vand.u32 %v6323, 2147483648
        %v7565 = vor.u32 1.1754944e-38, %v7564
        %v7566 = vsel %vm7563, %v7565, %v7561
        %v7567 = vmul.f32 1.0, %v7566
        %v7568 = vrcp.pop %v6324
        %v7569 = vmul.f32 %v6324, %v7568
        %v7570 = vsub.f32 1.0, %v7569
        %v7571 = vmul.f32 %v7568, %v7570
        %v7572 = vadd.f32 %v7568, %v7571
        %vm7573 = vweird.f32 %v6324
        %vm7574 = vweird.f32 %v7568
        %vm7575 = vmor %vm7573, %vm7574
        %v7576 = vsel %vm7575, %v7568, %v7572
        %v7577 = vand.u32 2147483647, %v6324
        %vm7578 = vcmp.eq.f32.partialorder %v7577, 8.507059e+37
        %v7579 = vand.u32 %v6324, 2147483648
        %v7580 = vor.u32 1.1754944e-38, %v7579
        %v7581 = vsel %vm7578, %v7580, %v7576
        %v7582 = vmul.f32 1.0, %v7581
        %v7583 = vrcp.pop %v6325
        %v7584 = vmul.f32 %v6325, %v7583
        %v7585 = vsub.f32 1.0, %v7584
        %v7586 = vmul.f32 %v7583, %v7585
        %v7587 = vadd.f32 %v7583, %v7586
        %vm7588 = vweird.f32 %v6325
        %vm7589 = vweird.f32 %v7583
        %vm7590 = vmor %vm7588, %vm7589
        %v7591 = vsel %vm7590, %v7583, %v7587
        %v7592 = vand.u32 2147483647, %v6325
        %vm7593 = vcmp.eq.f32.partialorder %v7592, 8.507059e+37
        %v7594 = vand.u32 %v6325, 2147483648
        %v7595 = vor.u32 1.1754944e-38, %v7594
        %v7596 = vsel %vm7593, %v7595, %v7591
        %v7597 = vmul.f32 1.0, %v7596
        %v7598 = vrcp.pop %v6326
        %v7599 = vmul.f32 %v6326, %v7598
        %v7600 = vsub.f32 1.0, %v7599
        %v7601 = vmul.f32 %v7598, %v7600
        %v7602 = vadd.f32 %v7598, %v7601
        %vm7603 = vweird.f32 %v6326
        %vm7604 = vweird.f32 %v7598
        %vm7605 = vmor %vm7603, %vm7604
        %v7606 = vsel %vm7605, %v7598, %v7602
        %v7607 = vand.u32 2147483647, %v6326
        %vm7608 = vcmp.eq.f32.partialorder %v7607, 8.507059e+37
        %v7609 = vand.u32 %v6326, 2147483648
        %v7610 = vor.u32 1.1754944e-38, %v7609
        %v7611 = vsel %vm7608, %v7610, %v7606
        %v7612 = vmul.f32 1.0, %v7611
        %v7613 = vrcp.pop %v6327
        %v7614 = vmul.f32 %v6327, %v7613
        %v7615 = vsub.f32 1.0, %v7614
        %v7616 = vmul.f32 %v7613, %v7615
        %v7617 = vadd.f32 %v7613, %v7616
        %vm7618 = vweird.f32 %v6327
        %vm7619 = vweird.f32 %v7613
        %vm7620 = vmor %vm7618, %vm7619
        %v7621 = vsel %vm7620, %v7613, %v7617
        %v7622 = vand.u32 2147483647, %v6327
        %vm7623 = vcmp.eq.f32.partialorder %v7622, 8.507059e+37
        %v7624 = vand.u32 %v6327, 2147483648
        %v7625 = vor.u32 1.1754944e-38, %v7624
        %v7626 = vsel %vm7623, %v7625, %v7621
        %v7627 = vmul.f32 1.0, %v7626
        %v7628 = vrcp.pop %v6328
        %v7629 = vmul.f32 %v6328, %v7628
        %v7630 = vsub.f32 1.0, %v7629
        %v7631 = vmul.f32 %v7628, %v7630
        %v7632 = vadd.f32 %v7628, %v7631
        %vm7633 = vweird.f32 %v6328
        %vm7634 = vweird.f32 %v7628
        %vm7635 = vmor %vm7633, %vm7634
        %v7636 = vsel %vm7635, %v7628, %v7632
        %v7637 = vand.u32 2147483647, %v6328
        %vm7638 = vcmp.eq.f32.partialorder %v7637, 8.507059e+37
        %v7639 = vand.u32 %v6328, 2147483648
        %v7640 = vor.u32 1.1754944e-38, %v7639
        %v7641 = vsel %vm7638, %v7640, %v7636
        %v7642 = vmul.f32 1.0, %v7641
        %v7643 = vrcp.pop %v6329
        %v7644 = vmul.f32 %v6329, %v7643
        %v7645 = vsub.f32 1.0, %v7644
        %v7646 = vmul.f32 %v7643, %v7645
        %v7647 = vadd.f32 %v7643, %v7646
        %vm7648 = vweird.f32 %v6329
        %vm7649 = vweird.f32 %v7643
        %vm7650 = vmor %vm7648, %vm7649
        %v7651 = vsel %vm7650, %v7643, %v7647
        %v7652 = vand.u32 2147483647, %v6329
        %vm7653 = vcmp.eq.f32.partialorder %v7652, 8.507059e+37
        %v7654 = vand.u32 %v6329, 2147483648
        %v7655 = vor.u32 1.1754944e-38, %v7654
        %v7656 = vsel %vm7653, %v7655, %v7651
        %v7657 = vmul.f32 1.0, %v7656
        %v7658 = vrcp.pop %v6330
        %v7659 = vmul.f32 %v6330, %v7658
        %v7660 = vsub.f32 1.0, %v7659
        %v7661 = vmul.f32 %v7658, %v7660
        %v7662 = vadd.f32 %v7658, %v7661
        %vm7663 = vweird.f32 %v6330
        %vm7664 = vweird.f32 %v7658
        %vm7665 = vmor %vm7663, %vm7664
        %v7666 = vsel %vm7665, %v7658, %v7662
        %v7667 = vand.u32 2147483647, %v6330
        %vm7668 = vcmp.eq.f32.partialorder %v7667, 8.507059e+37
        %v7669 = vand.u32 %v6330, 2147483648
        %v7670 = vor.u32 1.1754944e-38, %v7669
        %v7671 = vsel %vm7668, %v7670, %v7666
        %v7672 = vmul.f32 1.0, %v7671
        %v7673 = vrcp.pop %v6331
        %v7674 = vmul.f32 %v6331, %v7673
        %v7675 = vsub.f32 1.0, %v7674
        %v7676 = vmul.f32 %v7673, %v7675
        %v7677 = vadd.f32 %v7673, %v7676
        %vm7678 = vweird.f32 %v6331
        %vm7679 = vweird.f32 %v7673
        %vm7680 = vmor %vm7678, %vm7679
        %v7681 = vsel %vm7680, %v7673, %v7677
        %v7682 = vand.u32 2147483647, %v6331
        %vm7683 = vcmp.eq.f32.partialorder %v7682, 8.507059e+37
        %v7684 = vand.u32 %v6331, 2147483648
        %v7685 = vor.u32 1.1754944e-38, %v7684
        %v7686 = vsel %vm7683, %v7685, %v7681
        %v7687 = vmul.f32 1.0, %v7686
        %v7688 = vrcp.pop %v6332
        %v7689 = vmul.f32 %v6332, %v7688
        %v7690 = vsub.f32 1.0, %v7689
        %v7691 = vmul.f32 %v7688, %v7690
        %v7692 = vadd.f32 %v7688, %v7691
        %vm7693 = vweird.f32 %v6332
        %vm7694 = vweird.f32 %v7688
        %vm7695 = vmor %vm7693, %vm7694
        %v7696 = vsel %vm7695, %v7688, %v7692
        %v7697 = vand.u32 2147483647, %v6332
        %vm7698 = vcmp.eq.f32.partialorder %v7697, 8.507059e+37
        %v7699 = vand.u32 %v6332, 2147483648
        %v7700 = vor.u32 1.1754944e-38, %v7699
        %v7701 = vsel %vm7698, %v7700, %v7696
        %v7702 = vmul.f32 1.0, %v7701
        %v7703 = vrcp.pop %v6333
        %v7704 = vmul.f32 %v6333, %v7703
        %v7705 = vsub.f32 1.0, %v7704
        %v7706 = vmul.f32 %v7703, %v7705
        %v7707 = vadd.f32 %v7703, %v7706
        %vm7708 = vweird.f32 %v6333
        %vm7709 = vweird.f32 %v7703
        %vm7710 = vmor %vm7708, %vm7709
        %v7711 = vsel %vm7710, %v7703, %v7707
        %v7712 = vand.u32 2147483647, %v6333
        %vm7713 = vcmp.eq.f32.partialorder %v7712, 8.507059e+37
        %v7714 = vand.u32 %v6333, 2147483648
        %v7715 = vor.u32 1.1754944e-38, %v7714
        %v7716 = vsel %vm7713, %v7715, %v7711
        %v7717 = vmul.f32 1.0, %v7716
        %v7718 = vrcp.pop %v6334
        %v7719 = vmul.f32 %v6334, %v7718
        %v7720 = vsub.f32 1.0, %v7719
        %v7721 = vmul.f32 %v7718, %v7720
        %v7722 = vadd.f32 %v7718, %v7721
        %vm7723 = vweird.f32 %v6334
        %vm7724 = vweird.f32 %v7718
        %vm7725 = vmor %vm7723, %vm7724
        %v7726 = vsel %vm7725, %v7718, %v7722
        %v7727 = vand.u32 2147483647, %v6334
        %vm7728 = vcmp.eq.f32.partialorder %v7727, 8.507059e+37
        %v7729 = vand.u32 %v6334, 2147483648
        %v7730 = vor.u32 1.1754944e-38, %v7729
        %v7731 = vsel %vm7728, %v7730, %v7726
        %v7732 = vmul.f32 1.0, %v7731
        %v7733 = vrcp.pop %v6335
        %v7734 = vmul.f32 %v6335, %v7733
        %v7735 = vsub.f32 1.0, %v7734
        %v7736 = vmul.f32 %v7733, %v7735
        %v7737 = vadd.f32 %v7733, %v7736
        %vm7738 = vweird.f32 %v6335
        %vm7739 = vweird.f32 %v7733
        %vm7740 = vmor %vm7738, %vm7739
        %v7741 = vsel %vm7740, %v7733, %v7737
        %v7742 = vand.u32 2147483647, %v6335
        %vm7743 = vcmp.eq.f32.partialorder %v7742, 8.507059e+37
        %v7744 = vand.u32 %v6335, 2147483648
        %v7745 = vor.u32 1.1754944e-38, %v7744
        %v7746 = vsel %vm7743, %v7745, %v7741
        %v7747 = vmul.f32 1.0, %v7746
        %v7748 = vrcp.pop %v6336
        %v7749 = vmul.f32 %v6336, %v7748
        %v7750 = vsub.f32 1.0, %v7749
        %v7751 = vmul.f32 %v7748, %v7750
        %v7752 = vadd.f32 %v7748, %v7751
        %vm7753 = vweird.f32 %v6336
        %vm7754 = vweird.f32 %v7748
        %vm7755 = vmor %vm7753, %vm7754
        %v7756 = vsel %vm7755, %v7748, %v7752
        %v7757 = vand.u32 2147483647, %v6336
        %vm7758 = vcmp.eq.f32.partialorder %v7757, 8.507059e+37
        %v7759 = vand.u32 %v6336, 2147483648
        %v7760 = vor.u32 1.1754944e-38, %v7759
        %v7761 = vsel %vm7758, %v7760, %v7756
        %v7762 = vmul.f32 1.0, %v7761
        %v7763 = vrcp.pop %v6337
        %v7764 = vmul.f32 %v6337, %v7763
        %v7765 = vsub.f32 1.0, %v7764
        %v7766 = vmul.f32 %v7763, %v7765
        %v7767 = vadd.f32 %v7763, %v7766
        %vm7768 = vweird.f32 %v6337
        %vm7769 = vweird.f32 %v7763
        %vm7770 = vmor %vm7768, %vm7769
        %v7771 = vsel %vm7770, %v7763, %v7767
        %v7772 = vand.u32 2147483647, %v6337
        %vm7773 = vcmp.eq.f32.partialorder %v7772, 8.507059e+37
        %v7774 = vand.u32 %v6337, 2147483648
        %v7775 = vor.u32 1.1754944e-38, %v7774
        %v7776 = vsel %vm7773, %v7775, %v7771
        %v7777 = vmul.f32 1.0, %v7776
        %v7778 = vmul.f32 %v5329, %v6352
        %v7779 = vmul.f32 %v5427, %v6367
        %v7780 = vmul.f32 %v5525, %v6382
        %v7781 = vmul.f32 %v5623, %v6397
        %v7782 = vmul.f32 %v5721, %v6412
        %v7783 = vmul.f32 %v5819, %v6427
        %v7784 = vmul.f32 %v5331, %v6442
        %v7785 = vmul.f32 %v5429, %v6457
        %v7786 = vmul.f32 %v5527, %v6472
        %v7787 = vmul.f32 %v5625, %v6487
        %v7788 = vmul.f32 %v5723, %v6502
        %v7789 = vmul.f32 %v5821, %v6517
        %v7790 = vmul.f32 %v5334, %v6532
        %v7791 = vmul.f32 %v5432, %v6547
        %v7792 = vmul.f32 %v5530, %v6562
        %v7793 = vmul.f32 %v5628, %v6577
        %v7794 = vmul.f32 %v5726, %v6592
        %v7795 = vmul.f32 %v5824, %v6607
        %v7796 = vmul.f32 %v5336, %v6622
        %v7797 = vmul.f32 %v5434, %v6637
        %v7798 = vmul.f32 %v5532, %v6652
        %v7799 = vmul.f32 %v5630, %v6667
        %v7800 = vmul.f32 %v5728, %v6682
        %v7801 = vmul.f32 %v5826, %v6697
        %v7802 = vmul.f32 %v5339, %v6712
        %v7803 = vmul.f32 %v5437, %v6727
        %v7804 = vmul.f32 %v5535, %v6742
        %v7805 = vmul.f32 %v5633, %v6757
        %v7806 = vmul.f32 %v5731, %v6772
        %v7807 = vmul.f32 %v5829, %v6787
        %v7808 = vmul.f32 %v5341, %v6802
        %v7809 = vmul.f32 %v5439, %v6817
        %v7810 = vmul.f32 %v5537, %v6832
        %v7811 = vmul.f32 %v5635, %v6847
        %v7812 = vmul.f32 %v5733, %v6862
        %v7813 = vmul.f32 %v5831, %v6877
        %v7814 = vmul.f32 %v5344, %v6892
        %v7815 = vmul.f32 %v5442, %v6907
        %v7816 = vmul.f32 %v5540, %v6922
        %v7817 = vmul.f32 %v5638, %v6937
        %v7818 = vmul.f32 %v5736, %v6952
        %v7819 = vmul.f32 %v5834, %v6967
        %v7820 = vmul.f32 %v5346, %v6982
        %v7821 = vmul.f32 %v5444, %v6997
        %v7822 = vmul.f32 %v5542, %v7012
        %v7823 = vmul.f32 %v5640, %v7027
        %v7824 = vmul.f32 %v5738, %v7042
        %v7825 = vmul.f32 %v5836, %v7057
        %v7826 = vmul.f32 %v5349, %v7072
        %v7827 = vmul.f32 %v5447, %v7087
        %v7828 = vmul.f32 %v5545, %v7102
        %v7829 = vmul.f32 %v5643, %v7117
        %v7830 = vmul.f32 %v5741, %v7132
        %v7831 = vmul.f32 %v5839, %v7147
        %v7832 = vmul.f32 %v5351, %v7162
        %v7833 = vmul.f32 %v5449, %v7177
        %v7834 = vmul.f32 %v5547, %v7192
        %v7835 = vmul.f32 %v5645, %v7207
        %v7836 = vmul.f32 %v5743, %v7222
        %v7837 = vmul.f32 %v5841, %v7237
        %v7838 = vmul.f32 %v5354, %v7252
        %v7839 = vmul.f32 %v5452, %v7267
        %v7840 = vmul.f32 %v5550, %v7282
        %v7841 = vmul.f32 %v5648, %v7297
        %v7842 = vmul.f32 %v5746, %v7312
        %v7843 = vmul.f32 %v5844, %v7327
        %v7844 = vmul.f32 %v5356, %v7342
        %v7845 = vmul.f32 %v5454, %v7357
        %v7846 = vmul.f32 %v5552, %v7372
        %v7847 = vmul.f32 %v5650, %v7387
        %v7848 = vmul.f32 %v5748, %v7402
        %v7849 = vmul.f32 %v5846, %v7417
        %v7850 = vmul.f32 %v5359, %v7432
        %v7851 = vmul.f32 %v5457, %v7447
        %v7852 = vmul.f32 %v5555, %v7462
        %v7853 = vmul.f32 %v5653, %v7477
        %v7854 = vmul.f32 %v5751, %v7492
        %v7855 = vmul.f32 %v5849, %v7507
        %v7856 = vmul.f32 %v5361, %v7522
        %v7857 = vmul.f32 %v5459, %v7537
        %v7858 = vmul.f32 %v5557, %v7552
        %v7859 = vmul.f32 %v5655, %v7567
        %v7860 = vmul.f32 %v5753, %v7582
        %v7861 = vmul.f32 %v5851, %v7597
        %v7862 = vmul.f32 %v5364, %v7612
        %v7863 = vmul.f32 %v5462, %v7627
        %v7864 = vmul.f32 %v5560, %v7642
        %v7865 = vmul.f32 %v5658, %v7657
        %v7866 = vmul.f32 %v5756, %v7672
        %v7867 = vmul.f32 %v5854, %v7687
        %v7868 = vmul.f32 %v5366, %v7702
        %v7869 = vmul.f32 %v5464, %v7717
        %v7870 = vmul.f32 %v5562, %v7732
        %v7871 = vmul.f32 %v5660, %v7747
        %v7872 = vmul.f32 %v5758, %v7762
        %v7873 = vmul.f32 %v5856, %v7777
        %v7874 = vld [vmem:[%s548] sm:$0xff]
        %v7875 = vld [vmem:[%s548 + $0x8] sm:$0xff]
        %v7876 = vld [vmem:[%s548 + $0x10] sm:$0xff]
        %v7877 = vld [vmem:[%s548 + $0x18] sm:$0xff]
        %v7878 = vld [vmem:[%s548 + $0x20] sm:$0xff]
        %v7879 = vld [vmem:[%s548 + $0x28] sm:$0xff]
        %v7880 = vld [vmem:[%s548 + $0x30] sm:$0xff]
        %v7881 = vld [vmem:[%s548 + $0x38] sm:$0xff]
        %v7882 = vld [vmem:[%s548 + $0x40] sm:$0xff]
        %v7883 = vld [vmem:[%s548 + $0x48] sm:$0xff]
        %v7884 = vld [vmem:[%s548 + $0x50] sm:$0xff]
        %v7885 = vld [vmem:[%s548 + $0x58] sm:$0xff]
        %v7886 = vld [vmem:[%s548 + $0x60] sm:$0xff]
        %v7887 = vld [vmem:[%s548 + $0x68] sm:$0xff]
        %v7888 = vld [vmem:[%s548 + $0x70] sm:$0xff]
        %v7889 = vld [vmem:[%s548 + $0x78] sm:$0xff]
        %v7890 = vld [vmem:[%s548 + $0x80] sm:$0xff]
        %v7891 = vld [vmem:[%s548 + $0x88] sm:$0xff]
        %v7892 = vld [vmem:[%s548 + $0x90] sm:$0xff]
        %v7893 = vld [vmem:[%s548 + $0x98] sm:$0xff]
        %v7894 = vld [vmem:[%s548 + $0xa0] sm:$0xff]
        %v7895 = vld [vmem:[%s548 + $0xa8] sm:$0xff]
        %v7896 = vld [vmem:[%s548 + $0xb0] sm:$0xff]
        %v7897 = vld [vmem:[%s548 + $0xb8] sm:$0xff]
        %v7898 = vld [vmem:[%s548 + $0xc0] sm:$0xff]
        %v7899 = vld [vmem:[%s548 + $0xc8] sm:$0xff]
        %v7900 = vld [vmem:[%s548 + $0xd0] sm:$0xff]
        %v7901 = vld [vmem:[%s548 + $0xd8] sm:$0xff]
        %v7902 = vld [vmem:[%s548 + $0xe0] sm:$0xff]
        %v7903 = vld [vmem:[%s548 + $0xe8] sm:$0xff]
        %v7904 = vld [vmem:[%s548 + $0xf0] sm:$0xff]
        %v7905 = vld [vmem:[%s548 + $0xf8] sm:$0xff]
        %v7906 = vld [vmem:[%s548 + $0x100] sm:$0xff]
        %v7907 = vld [vmem:[%s548 + $0x108] sm:$0xff]
        %v7908 = vld [vmem:[%s548 + $0x110] sm:$0xff]
        %v7909 = vld [vmem:[%s548 + $0x118] sm:$0xff]
        %v7910 = vld [vmem:[%s548 + $0x120] sm:$0xff]
        %v7911 = vld [vmem:[%s548 + $0x128] sm:$0xff]
        %v7912 = vld [vmem:[%s548 + $0x130] sm:$0xff]
        %v7913 = vld [vmem:[%s548 + $0x138] sm:$0xff]
        %v7914 = vld [vmem:[%s548 + $0x140] sm:$0xff]
        %v7915 = vld [vmem:[%s548 + $0x148] sm:$0xff]
        %v7916 = vld [vmem:[%s548 + $0x150] sm:$0xff]
        %v7917 = vld [vmem:[%s548 + $0x158] sm:$0xff]
        %v7918 = vld [vmem:[%s548 + $0x160] sm:$0xff]
        %v7919 = vld [vmem:[%s548 + $0x168] sm:$0xff]
        %v7920 = vld [vmem:[%s548 + $0x170] sm:$0xff]
        %v7921 = vld [vmem:[%s548 + $0x178] sm:$0xff]
        %v7922 = vld [vmem:[%s548 + $0x180] sm:$0xff]
        %v7923 = vld [vmem:[%s548 + $0x188] sm:$0xff]
        %v7924 = vld [vmem:[%s548 + $0x190] sm:$0xff]
        %v7925 = vld [vmem:[%s548 + $0x198] sm:$0xff]
        %v7926 = vld [vmem:[%s548 + $0x1a0] sm:$0xff]
        %v7927 = vld [vmem:[%s548 + $0x1a8] sm:$0xff]
        %v7928 = vld [vmem:[%s548 + $0x1b0] sm:$0xff]
        %v7929 = vld [vmem:[%s548 + $0x1b8] sm:$0xff]
        %v7930 = vld [vmem:[%s548 + $0x1c0] sm:$0xff]
        %v7931 = vld [vmem:[%s548 + $0x1c8] sm:$0xff]
        %v7932 = vld [vmem:[%s548 + $0x1d0] sm:$0xff]
        %v7933 = vld [vmem:[%s548 + $0x1d8] sm:$0xff]
        %v7934 = vld [vmem:[%s548 + $0x1e0] sm:$0xff]
        %v7935 = vld [vmem:[%s548 + $0x1e8] sm:$0xff]
        %v7936 = vld [vmem:[%s548 + $0x1f0] sm:$0xff]
        %v7937 = vld [vmem:[%s548 + $0x1f8] sm:$0xff]
        %v7938 = vld [vmem:[%s548 + $0x200] sm:$0xff]
        %v7939 = vld [vmem:[%s548 + $0x208] sm:$0xff]
        %v7940 = vld [vmem:[%s548 + $0x210] sm:$0xff]
        %v7941 = vld [vmem:[%s548 + $0x218] sm:$0xff]
        %v7942 = vld [vmem:[%s548 + $0x220] sm:$0xff]
        %v7943 = vld [vmem:[%s548 + $0x228] sm:$0xff]
        %v7944 = vld [vmem:[%s548 + $0x230] sm:$0xff]
        %v7945 = vld [vmem:[%s548 + $0x238] sm:$0xff]
        %v7946 = vld [vmem:[%s548 + $0x240] sm:$0xff]
        %v7947 = vld [vmem:[%s548 + $0x248] sm:$0xff]
        %v7948 = vld [vmem:[%s548 + $0x250] sm:$0xff]
        %v7949 = vld [vmem:[%s548 + $0x258] sm:$0xff]
        %v7950 = vld [vmem:[%s548 + $0x260] sm:$0xff]
        %v7951 = vld [vmem:[%s548 + $0x268] sm:$0xff]
        %v7952 = vld [vmem:[%s548 + $0x270] sm:$0xff]
        %v7953 = vld [vmem:[%s548 + $0x278] sm:$0xff]
        %v7954 = vld [vmem:[%s548 + $0x280] sm:$0xff]
        %v7955 = vld [vmem:[%s548 + $0x288] sm:$0xff]
        %v7956 = vld [vmem:[%s548 + $0x290] sm:$0xff]
        %v7957 = vld [vmem:[%s548 + $0x298] sm:$0xff]
        %v7958 = vld [vmem:[%s548 + $0x2a0] sm:$0xff]
        %v7959 = vld [vmem:[%s548 + $0x2a8] sm:$0xff]
        %v7960 = vld [vmem:[%s548 + $0x2b0] sm:$0xff]
        %v7961 = vld [vmem:[%s548 + $0x2b8] sm:$0xff]
        %v7962 = vld [vmem:[%s548 + $0x2c0] sm:$0xff]
        %v7963 = vld [vmem:[%s548 + $0x2c8] sm:$0xff]
        %v7964 = vld [vmem:[%s548 + $0x2d0] sm:$0xff]
        %v7965 = vld [vmem:[%s548 + $0x2d8] sm:$0xff]
        %v7966 = vld [vmem:[%s548 + $0x2e0] sm:$0xff]
        %v7967 = vld [vmem:[%s548 + $0x2e8] sm:$0xff]
        %v7968 = vld [vmem:[%s548 + $0x2f0] sm:$0xff]
        %v7969 = vld [vmem:[%s548 + $0x2f8] sm:$0xff]
        %v7970 = vpack.c.bf16 %v7784, %v7778
        %v7971 = vpack.c.bf16 %v7785, %v7779
        %v7972 = vpack.c.bf16 %v7786, %v7780
        %v7973 = vpack.c.bf16 %v7787, %v7781
        %v7974 = vpack.c.bf16 %v7788, %v7782
        %v7975 = vpack.c.bf16 %v7789, %v7783
        %v7976 = vpack.c.bf16 %v7796, %v7790
        %v7977 = vpack.c.bf16 %v7797, %v7791
        %v7978 = vpack.c.bf16 %v7798, %v7792
        %v7979 = vpack.c.bf16 %v7799, %v7793
        %v7980 = vpack.c.bf16 %v7800, %v7794
        %v7981 = vpack.c.bf16 %v7801, %v7795
        %v7982 = vpack.c.bf16 %v7808, %v7802
        %v7983 = vpack.c.bf16 %v7809, %v7803
        %v7984 = vpack.c.bf16 %v7810, %v7804
        %v7985 = vpack.c.bf16 %v7811, %v7805
        %v7986 = vpack.c.bf16 %v7812, %v7806
        %v7987 = vpack.c.bf16 %v7813, %v7807
        %v7988 = vpack.c.bf16 %v7820, %v7814
        %v7989 = vpack.c.bf16 %v7821, %v7815
        %v7990 = vpack.c.bf16 %v7822, %v7816
        %v7991 = vpack.c.bf16 %v7823, %v7817
        %v7992 = vpack.c.bf16 %v7824, %v7818
        %v7993 = vpack.c.bf16 %v7825, %v7819
        %v7994 = vpack.c.bf16 %v7832, %v7826
        %v7995 = vpack.c.bf16 %v7833, %v7827
        %v7996 = vpack.c.bf16 %v7834, %v7828
        %v7997 = vpack.c.bf16 %v7835, %v7829
        %v7998 = vpack.c.bf16 %v7836, %v7830
        %v7999 = vpack.c.bf16 %v7837, %v7831
        %v8000 = vpack.c.bf16 %v7844, %v7838
        %v8001 = vpack.c.bf16 %v7845, %v7839
        %v8002 = vpack.c.bf16 %v7846, %v7840
        %v8003 = vpack.c.bf16 %v7847, %v7841
        %v8004 = vpack.c.bf16 %v7848, %v7842
        %v8005 = vpack.c.bf16 %v7849, %v7843
        %v8006 = vpack.c.bf16 %v7856, %v7850
        %v8007 = vpack.c.bf16 %v7857, %v7851
        %v8008 = vpack.c.bf16 %v7858, %v7852
        %v8009 = vpack.c.bf16 %v7859, %v7853
        %v8010 = vpack.c.bf16 %v7860, %v7854
        %v8011 = vpack.c.bf16 %v7861, %v7855
        %v8012 = vpack.c.bf16 %v7868, %v7862
        %v8013 = vpack.c.bf16 %v7869, %v7863
        %v8014 = vpack.c.bf16 %v7870, %v7864
        %v8015 = vpack.c.bf16 %v7871, %v7865
        %v8016 = vpack.c.bf16 %v7872, %v7866
        %v8017 = vpack.c.bf16 %v7873, %v7867
        %v8114 = vunpack.c.l.b16 %v7874
        %v8115 = vunpack.c.h.b16 %v7874
        %v8116 = vunpack.c.l.b16 %v7875
        %v8117 = vunpack.c.h.b16 %v7875
        %v8118 = vunpack.c.l.b16 %v7876
        %v8119 = vunpack.c.h.b16 %v7876
        %v8120 = vunpack.c.l.b16 %v7877
        %v8121 = vunpack.c.h.b16 %v7877
        %v8122 = vunpack.c.l.b16 %v7878
        %v8123 = vunpack.c.h.b16 %v7878
        %v8124 = vunpack.c.l.b16 %v7879
        %v8125 = vunpack.c.h.b16 %v7879
        %v8126 = vunpack.c.l.b16 %v7880
        %v8127 = vunpack.c.h.b16 %v7880
        %v8128 = vunpack.c.l.b16 %v7881
        %v8129 = vunpack.c.h.b16 %v7881
        %v8130 = vunpack.c.l.b16 %v7882
        %v8131 = vunpack.c.h.b16 %v7882
        %v8132 = vunpack.c.l.b16 %v7883
        %v8133 = vunpack.c.h.b16 %v7883
        %v8134 = vunpack.c.l.b16 %v7884
        %v8135 = vunpack.c.h.b16 %v7884
        %v8136 = vunpack.c.l.b16 %v7885
        %v8137 = vunpack.c.h.b16 %v7885
        %v8138 = vunpack.c.l.b16 %v7886
        %v8139 = vunpack.c.h.b16 %v7886
        %v8140 = vunpack.c.l.b16 %v7887
        %v8141 = vunpack.c.h.b16 %v7887
        %v8142 = vunpack.c.l.b16 %v7888
        %v8143 = vunpack.c.h.b16 %v7888
        %v8144 = vunpack.c.l.b16 %v7889
        %v8145 = vunpack.c.h.b16 %v7889
        %v8146 = vunpack.c.l.b16 %v7890
        %v8147 = vunpack.c.h.b16 %v7890
        %v8148 = vunpack.c.l.b16 %v7891
        %v8149 = vunpack.c.h.b16 %v7891
        %v8150 = vunpack.c.l.b16 %v7892
        %v8151 = vunpack.c.h.b16 %v7892
        %v8152 = vunpack.c.l.b16 %v7893
        %v8153 = vunpack.c.h.b16 %v7893
        %v8154 = vunpack.c.l.b16 %v7894
        %v8155 = vunpack.c.h.b16 %v7894
        %v8156 = vunpack.c.l.b16 %v7895
        %v8157 = vunpack.c.h.b16 %v7895
        %v8158 = vunpack.c.l.b16 %v7896
        %v8159 = vunpack.c.h.b16 %v7896
        %v8160 = vunpack.c.l.b16 %v7897
        %v8161 = vunpack.c.h.b16 %v7897
        %v8162 = vunpack.c.l.b16 %v7898
        %v8163 = vunpack.c.h.b16 %v7898
        %v8164 = vunpack.c.l.b16 %v7899
        %v8165 = vunpack.c.h.b16 %v7899
        %v8166 = vunpack.c.l.b16 %v7900
        %v8167 = vunpack.c.h.b16 %v7900
        %v8168 = vunpack.c.l.b16 %v7901
        %v8169 = vunpack.c.h.b16 %v7901
        %v8170 = vunpack.c.l.b16 %v7902
        %v8171 = vunpack.c.h.b16 %v7902
        %v8172 = vunpack.c.l.b16 %v7903
        %v8173 = vunpack.c.h.b16 %v7903
        %v8174 = vunpack.c.l.b16 %v7904
        %v8175 = vunpack.c.h.b16 %v7904
        %v8176 = vunpack.c.l.b16 %v7905
        %v8177 = vunpack.c.h.b16 %v7905
        %v8178 = vunpack.c.l.b16 %v7906
        %v8179 = vunpack.c.h.b16 %v7906
        %v8180 = vunpack.c.l.b16 %v7907
        %v8181 = vunpack.c.h.b16 %v7907
        %v8182 = vunpack.c.l.b16 %v7908
        %v8183 = vunpack.c.h.b16 %v7908
        %v8184 = vunpack.c.l.b16 %v7909
        %v8185 = vunpack.c.h.b16 %v7909
        %v8186 = vunpack.c.l.b16 %v7910
        %v8187 = vunpack.c.h.b16 %v7910
        %v8188 = vunpack.c.l.b16 %v7911
        %v8189 = vunpack.c.h.b16 %v7911
        %v8190 = vunpack.c.l.b16 %v7912
        %v8191 = vunpack.c.h.b16 %v7912
        %v8192 = vunpack.c.l.b16 %v7913
        %v8193 = vunpack.c.h.b16 %v7913
        %v8194 = vunpack.c.l.b16 %v7914
        %v8195 = vunpack.c.h.b16 %v7914
        %v8196 = vunpack.c.l.b16 %v7915
        %v8197 = vunpack.c.h.b16 %v7915
        %v8198 = vunpack.c.l.b16 %v7916
        %v8199 = vunpack.c.h.b16 %v7916
        %v8200 = vunpack.c.l.b16 %v7917
        %v8201 = vunpack.c.h.b16 %v7917
        %v8202 = vunpack.c.l.b16 %v7918
        %v8203 = vunpack.c.h.b16 %v7918
        %v8204 = vunpack.c.l.b16 %v7919
        %v8205 = vunpack.c.h.b16 %v7919
        %v8206 = vunpack.c.l.b16 %v7920
        %v8207 = vunpack.c.h.b16 %v7920
        %v8208 = vunpack.c.l.b16 %v7921
        %v8209 = vunpack.c.h.b16 %v7921
        %v8210 = vunpack.c.l.b16 %v7922
        %v8211 = vunpack.c.h.b16 %v7922
        %v8212 = vunpack.c.l.b16 %v7923
        %v8213 = vunpack.c.h.b16 %v7923
        %v8214 = vunpack.c.l.b16 %v7924
        %v8215 = vunpack.c.h.b16 %v7924
        %v8216 = vunpack.c.l.b16 %v7925
        %v8217 = vunpack.c.h.b16 %v7925
        %v8218 = vunpack.c.l.b16 %v7926
        %v8219 = vunpack.c.h.b16 %v7926
        %v8220 = vunpack.c.l.b16 %v7927
        %v8221 = vunpack.c.h.b16 %v7927
        %v8222 = vunpack.c.l.b16 %v7928
        %v8223 = vunpack.c.h.b16 %v7928
        %v8224 = vunpack.c.l.b16 %v7929
        %v8225 = vunpack.c.h.b16 %v7929
        %v8226 = vunpack.c.l.b16 %v7930
        %v8227 = vunpack.c.h.b16 %v7930
        %v8228 = vunpack.c.l.b16 %v7931
        %v8229 = vunpack.c.h.b16 %v7931
        %v8230 = vunpack.c.l.b16 %v7932
        %v8231 = vunpack.c.h.b16 %v7932
        %v8232 = vunpack.c.l.b16 %v7933
        %v8233 = vunpack.c.h.b16 %v7933
        %v8234 = vunpack.c.l.b16 %v7934
        %v8235 = vunpack.c.h.b16 %v7934
        %v8236 = vunpack.c.l.b16 %v7935
        %v8237 = vunpack.c.h.b16 %v7935
        %v8238 = vunpack.c.l.b16 %v7936
        %v8239 = vunpack.c.h.b16 %v7936
        %v8240 = vunpack.c.l.b16 %v7937
        %v8241 = vunpack.c.h.b16 %v7937
        %v8242 = vunpack.c.l.b16 %v7938
        %v8243 = vunpack.c.h.b16 %v7938
        %v8244 = vunpack.c.l.b16 %v7939
        %v8245 = vunpack.c.h.b16 %v7939
        %v8246 = vunpack.c.l.b16 %v7940
        %v8247 = vunpack.c.h.b16 %v7940
        %v8248 = vunpack.c.l.b16 %v7941
        %v8249 = vunpack.c.h.b16 %v7941
        %v8250 = vunpack.c.l.b16 %v7942
        %v8251 = vunpack.c.h.b16 %v7942
        %v8252 = vunpack.c.l.b16 %v7943
        %v8253 = vunpack.c.h.b16 %v7943
        %v8254 = vunpack.c.l.b16 %v7944
        %v8255 = vunpack.c.h.b16 %v7944
        %v8256 = vunpack.c.l.b16 %v7945
        %v8257 = vunpack.c.h.b16 %v7945
        %v8258 = vunpack.c.l.b16 %v7946
        %v8259 = vunpack.c.h.b16 %v7946
        %v8260 = vunpack.c.l.b16 %v7947
        %v8261 = vunpack.c.h.b16 %v7947
        %v8262 = vunpack.c.l.b16 %v7948
        %v8263 = vunpack.c.h.b16 %v7948
        %v8264 = vunpack.c.l.b16 %v7949
        %v8265 = vunpack.c.h.b16 %v7949
        %v8266 = vunpack.c.l.b16 %v7950
        %v8267 = vunpack.c.h.b16 %v7950
        %v8268 = vunpack.c.l.b16 %v7951
        %v8269 = vunpack.c.h.b16 %v7951
        %v8270 = vunpack.c.l.b16 %v7952
        %v8271 = vunpack.c.h.b16 %v7952
        %v8272 = vunpack.c.l.b16 %v7953
        %v8273 = vunpack.c.h.b16 %v7953
        %v8274 = vunpack.c.l.b16 %v7954
        %v8275 = vunpack.c.h.b16 %v7954
        %v8276 = vunpack.c.l.b16 %v7955
        %v8277 = vunpack.c.h.b16 %v7955
        %v8278 = vunpack.c.l.b16 %v7956
        %v8279 = vunpack.c.h.b16 %v7956
        %v8280 = vunpack.c.l.b16 %v7957
        %v8281 = vunpack.c.h.b16 %v7957
        %v8282 = vunpack.c.l.b16 %v7958
        %v8283 = vunpack.c.h.b16 %v7958
        %v8284 = vunpack.c.l.b16 %v7959
        %v8285 = vunpack.c.h.b16 %v7959
        %v8286 = vunpack.c.l.b16 %v7960
        %v8287 = vunpack.c.h.b16 %v7960
        %v8288 = vunpack.c.l.b16 %v7961
        %v8289 = vunpack.c.h.b16 %v7961
        %v8290 = vunpack.c.l.b16 %v7962
        %v8291 = vunpack.c.h.b16 %v7962
        %v8292 = vunpack.c.l.b16 %v7963
        %v8293 = vunpack.c.h.b16 %v7963
        %v8294 = vunpack.c.l.b16 %v7964
        %v8295 = vunpack.c.h.b16 %v7964
        %v8296 = vunpack.c.l.b16 %v7965
        %v8297 = vunpack.c.h.b16 %v7965
        %v8298 = vunpack.c.l.b16 %v7966
        %v8299 = vunpack.c.h.b16 %v7966
        %v8300 = vunpack.c.l.b16 %v7967
        %v8301 = vunpack.c.h.b16 %v7967
        %v8302 = vunpack.c.l.b16 %v7968
        %v8303 = vunpack.c.h.b16 %v7968
        %v8304 = vunpack.c.l.b16 %v7969
        %v8305 = vunpack.c.h.b16 %v7969
        %v8306 = vpack.c.b16 %v8116, %v8114
        %v8307 = vpack.c.b16 %v8117, %v8115
        %v8308 = vpack.c.b16 %v8120, %v8118
        %v8309 = vpack.c.b16 %v8121, %v8119
        %v8310 = vpack.c.b16 %v8124, %v8122
        %v8311 = vpack.c.b16 %v8125, %v8123
        %v8312 = vpack.c.b16 %v8128, %v8126
        %v8313 = vpack.c.b16 %v8129, %v8127
        %v8314 = vpack.c.b16 %v8132, %v8130
        %v8315 = vpack.c.b16 %v8133, %v8131
        %v8316 = vpack.c.b16 %v8136, %v8134
        %v8317 = vpack.c.b16 %v8137, %v8135
        %v8318 = vpack.c.b16 %v8140, %v8138
        %v8319 = vpack.c.b16 %v8141, %v8139
        %v8320 = vpack.c.b16 %v8144, %v8142
        %v8321 = vpack.c.b16 %v8145, %v8143
        %v8322 = vpack.c.b16 %v8148, %v8146
        %v8323 = vpack.c.b16 %v8149, %v8147
        %v8324 = vpack.c.b16 %v8152, %v8150
        %v8325 = vpack.c.b16 %v8153, %v8151
        %v8326 = vpack.c.b16 %v8156, %v8154
        %v8327 = vpack.c.b16 %v8157, %v8155
        %v8328 = vpack.c.b16 %v8160, %v8158
        %v8329 = vpack.c.b16 %v8161, %v8159
        %v8330 = vpack.c.b16 %v8164, %v8162
        %v8331 = vpack.c.b16 %v8165, %v8163
        %v8332 = vpack.c.b16 %v8168, %v8166
        %v8333 = vpack.c.b16 %v8169, %v8167
        %v8334 = vpack.c.b16 %v8172, %v8170
        %v8335 = vpack.c.b16 %v8173, %v8171
        %v8336 = vpack.c.b16 %v8176, %v8174
        %v8337 = vpack.c.b16 %v8177, %v8175
        %v8338 = vpack.c.b16 %v8180, %v8178
        %v8339 = vpack.c.b16 %v8181, %v8179
        %v8340 = vpack.c.b16 %v8184, %v8182
        %v8341 = vpack.c.b16 %v8185, %v8183
        %v8342 = vpack.c.b16 %v8188, %v8186
        %v8343 = vpack.c.b16 %v8189, %v8187
        %v8344 = vpack.c.b16 %v8192, %v8190
        %v8345 = vpack.c.b16 %v8193, %v8191
        %v8346 = vpack.c.b16 %v8196, %v8194
        %v8347 = vpack.c.b16 %v8197, %v8195
        %v8348 = vpack.c.b16 %v8200, %v8198
        %v8349 = vpack.c.b16 %v8201, %v8199
        %v8350 = vpack.c.b16 %v8204, %v8202
        %v8351 = vpack.c.b16 %v8205, %v8203
        %v8352 = vpack.c.b16 %v8208, %v8206
        %v8353 = vpack.c.b16 %v8209, %v8207
        %v8354 = vpack.c.b16 %v8212, %v8210
        %v8355 = vpack.c.b16 %v8213, %v8211
        %v8356 = vpack.c.b16 %v8216, %v8214
        %v8357 = vpack.c.b16 %v8217, %v8215
        %v8358 = vpack.c.b16 %v8220, %v8218
        %v8359 = vpack.c.b16 %v8221, %v8219
        %v8360 = vpack.c.b16 %v8224, %v8222
        %v8361 = vpack.c.b16 %v8225, %v8223
        %v8362 = vpack.c.b16 %v8228, %v8226
        %v8363 = vpack.c.b16 %v8229, %v8227
        %v8364 = vpack.c.b16 %v8232, %v8230
        %v8365 = vpack.c.b16 %v8233, %v8231
        %v8366 = vpack.c.b16 %v8236, %v8234
        %v8367 = vpack.c.b16 %v8237, %v8235
        %v8368 = vpack.c.b16 %v8240, %v8238
        %v8369 = vpack.c.b16 %v8241, %v8239
        %v8370 = vpack.c.b16 %v8244, %v8242
        %v8371 = vpack.c.b16 %v8245, %v8243
        %v8372 = vpack.c.b16 %v8248, %v8246
        %v8373 = vpack.c.b16 %v8249, %v8247
        %v8374 = vpack.c.b16 %v8252, %v8250
        %v8375 = vpack.c.b16 %v8253, %v8251
        %v8376 = vpack.c.b16 %v8256, %v8254
        %v8377 = vpack.c.b16 %v8257, %v8255
        %v8378 = vpack.c.b16 %v8260, %v8258
        %v8379 = vpack.c.b16 %v8261, %v8259
        %v8380 = vpack.c.b16 %v8264, %v8262
        %v8381 = vpack.c.b16 %v8265, %v8263
        %v8382 = vpack.c.b16 %v8268, %v8266
        %v8383 = vpack.c.b16 %v8269, %v8267
        %v8384 = vpack.c.b16 %v8272, %v8270
        %v8385 = vpack.c.b16 %v8273, %v8271
        %v8386 = vpack.c.b16 %v8276, %v8274
        %v8387 = vpack.c.b16 %v8277, %v8275
        %v8388 = vpack.c.b16 %v8280, %v8278
        %v8389 = vpack.c.b16 %v8281, %v8279
        %v8390 = vpack.c.b16 %v8284, %v8282
        %v8391 = vpack.c.b16 %v8285, %v8283
        %v8392 = vpack.c.b16 %v8288, %v8286
        %v8393 = vpack.c.b16 %v8289, %v8287
        %v8394 = vpack.c.b16 %v8292, %v8290
        %v8395 = vpack.c.b16 %v8293, %v8291
        %v8396 = vpack.c.b16 %v8296, %v8294
        %v8397 = vpack.c.b16 %v8297, %v8295
        %v8398 = vpack.c.b16 %v8300, %v8298
        %v8399 = vpack.c.b16 %v8301, %v8299
        %v8400 = vpack.c.b16 %v8304, %v8302
        %v8401 = vpack.c.b16 %v8305, %v8303
        %8498 = vmatpush.bf16.msra.mxu0 %v8320
        %8499 = vmatpush.bf16.msra.mxu0 %v8318
        %8500 = vmatpush.bf16.msra.mxu0 %v8316
        %8501 = vmatpush.bf16.msra.mxu0 %v8314
        %8502 = vmatpush.bf16.msra.mxu0 %v8312
        %8503 = vmatpush.bf16.msra.mxu0 %v8310
        %8504 = vmatpush.bf16.msra.mxu0 %v8308
        %8505 = vmatpush.bf16.msra.mxu0 %v8306
        %8506 = vmatmul.bf16.gmra.mxu0 %v7970
        %v8507 = vpop.f32.mrf.mxu0
        %v8508 = vadd.f32 0.0, %v8507
        %v8509 = vpop.f32.mrf.mxu0
        %v8510 = vadd.f32 0.0, %v8509
        %8511 = vmatmul.bf16.gmra.mxu0 %v7976
        %v8512 = vpop.f32.mrf.mxu0
        %v8513 = vadd.f32 0.0, %v8512
        %v8514 = vpop.f32.mrf.mxu0
        %v8515 = vadd.f32 0.0, %v8514
        %8516 = vmatmul.bf16.gmra.mxu0 %v7982
        %v8517 = vpop.f32.mrf.mxu0
        %v8518 = vadd.f32 0.0, %v8517
        %v8519 = vpop.f32.mrf.mxu0
        %v8520 = vadd.f32 0.0, %v8519
        %8521 = vmatmul.bf16.gmra.mxu0 %v7988
        %v8522 = vpop.f32.mrf.mxu0
        %v8523 = vadd.f32 0.0, %v8522
        %v8524 = vpop.f32.mrf.mxu0
        %v8525 = vadd.f32 0.0, %v8524
        %8526 = vmatmul.bf16.gmra.mxu0 %v7994
        %v8527 = vpop.f32.mrf.mxu0
        %v8528 = vadd.f32 0.0, %v8527
        %v8529 = vpop.f32.mrf.mxu0
        %v8530 = vadd.f32 0.0, %v8529
        %8531 = vmatmul.bf16.gmra.mxu0 %v8000
        %v8532 = vpop.f32.mrf.mxu0
        %v8533 = vadd.f32 0.0, %v8532
        %v8534 = vpop.f32.mrf.mxu0
        %v8535 = vadd.f32 0.0, %v8534
        %8536 = vmatmul.bf16.gmra.mxu0 %v8006
        %v8537 = vpop.f32.mrf.mxu0
        %v8538 = vadd.f32 0.0, %v8537
        %v8539 = vpop.f32.mrf.mxu0
        %v8540 = vadd.f32 0.0, %v8539
        %8541 = vmatmul.bf16.gmra.mxu0 %v8012
        %v8542 = vpop.f32.mrf.mxu0
        %v8543 = vadd.f32 0.0, %v8542
        %v8544 = vpop.f32.mrf.mxu0
        %v8545 = vadd.f32 0.0, %v8544
        %8546 = vdwg.mxu0
        %8547 = vmatpush.bf16.msra.mxu0 %v8336
        %8548 = vmatpush.bf16.msra.mxu0 %v8334
        %8549 = vmatpush.bf16.msra.mxu0 %v8332
        %8550 = vmatpush.bf16.msra.mxu0 %v8330
        %8551 = vmatpush.bf16.msra.mxu0 %v8328
        %8552 = vmatpush.bf16.msra.mxu0 %v8326
        %8553 = vmatpush.bf16.msra.mxu0 %v8324
        %8554 = vmatpush.bf16.msra.mxu0 %v8322
        %8555 = vmatmul.bf16.gmra.mxu0 %v7971
        %v8556 = vpop.f32.mrf.mxu0
        %v8557 = vadd.f32 %v8508, %v8556
        %v8558 = vpop.f32.mrf.mxu0
        %v8559 = vadd.f32 %v8510, %v8558
        %8560 = vmatmul.bf16.gmra.mxu0 %v7977
        %v8561 = vpop.f32.mrf.mxu0
        %v8562 = vadd.f32 %v8513, %v8561
        %v8563 = vpop.f32.mrf.mxu0
        %v8564 = vadd.f32 %v8515, %v8563
        %8565 = vmatmul.bf16.gmra.mxu0 %v7983
        %v8566 = vpop.f32.mrf.mxu0
        %v8567 = vadd.f32 %v8518, %v8566
        %v8568 = vpop.f32.mrf.mxu0
        %v8569 = vadd.f32 %v8520, %v8568
        %8570 = vmatmul.bf16.gmra.mxu0 %v7989
        %v8571 = vpop.f32.mrf.mxu0
        %v8572 = vadd.f32 %v8523, %v8571
        %v8573 = vpop.f32.mrf.mxu0
        %v8574 = vadd.f32 %v8525, %v8573
        %8575 = vmatmul.bf16.gmra.mxu0 %v7995
        %v8576 = vpop.f32.mrf.mxu0
        %v8577 = vadd.f32 %v8528, %v8576
        %v8578 = vpop.f32.mrf.mxu0
        %v8579 = vadd.f32 %v8530, %v8578
        %8580 = vmatmul.bf16.gmra.mxu0 %v8001
        %v8581 = vpop.f32.mrf.mxu0
        %v8582 = vadd.f32 %v8533, %v8581
        %v8583 = vpop.f32.mrf.mxu0
        %v8584 = vadd.f32 %v8535, %v8583
        %8585 = vmatmul.bf16.gmra.mxu0 %v8007
        %v8586 = vpop.f32.mrf.mxu0
        %v8587 = vadd.f32 %v8538, %v8586
        %v8588 = vpop.f32.mrf.mxu0
        %v8589 = vadd.f32 %v8540, %v8588
        %8590 = vmatmul.bf16.gmra.mxu0 %v8013
        %v8591 = vpop.f32.mrf.mxu0
        %v8592 = vadd.f32 %v8543, %v8591
        %v8593 = vpop.f32.mrf.mxu0
        %v8594 = vadd.f32 %v8545, %v8593
        %8595 = vdwg.mxu0
        %8596 = vmatpush.bf16.msra.mxu0 %v8352
        %8597 = vmatpush.bf16.msra.mxu0 %v8350
        %8598 = vmatpush.bf16.msra.mxu0 %v8348
        %8599 = vmatpush.bf16.msra.mxu0 %v8346
        %8600 = vmatpush.bf16.msra.mxu0 %v8344
        %8601 = vmatpush.bf16.msra.mxu0 %v8342
        %8602 = vmatpush.bf16.msra.mxu0 %v8340
        %8603 = vmatpush.bf16.msra.mxu0 %v8338
        %8604 = vmatmul.bf16.gmra.mxu0 %v7972
        %v8605 = vpop.f32.mrf.mxu0
        %v8606 = vadd.f32 %v8557, %v8605
        %v8607 = vpop.f32.mrf.mxu0
        %v8608 = vadd.f32 %v8559, %v8607
        %8609 = vmatmul.bf16.gmra.mxu0 %v7978
        %v8610 = vpop.f32.mrf.mxu0
        %v8611 = vadd.f32 %v8562, %v8610
        %v8612 = vpop.f32.mrf.mxu0
        %v8613 = vadd.f32 %v8564, %v8612
        %8614 = vmatmul.bf16.gmra.mxu0 %v7984
        %v8615 = vpop.f32.mrf.mxu0
        %v8616 = vadd.f32 %v8567, %v8615
        %v8617 = vpop.f32.mrf.mxu0
        %v8618 = vadd.f32 %v8569, %v8617
        %8619 = vmatmul.bf16.gmra.mxu0 %v7990
        %v8620 = vpop.f32.mrf.mxu0
        %v8621 = vadd.f32 %v8572, %v8620
        %v8622 = vpop.f32.mrf.mxu0
        %v8623 = vadd.f32 %v8574, %v8622
        %8624 = vmatmul.bf16.gmra.mxu0 %v7996
        %v8625 = vpop.f32.mrf.mxu0
        %v8626 = vadd.f32 %v8577, %v8625
        %v8627 = vpop.f32.mrf.mxu0
        %v8628 = vadd.f32 %v8579, %v8627
        %8629 = vmatmul.bf16.gmra.mxu0 %v8002
        %v8630 = vpop.f32.mrf.mxu0
        %v8631 = vadd.f32 %v8582, %v8630
        %v8632 = vpop.f32.mrf.mxu0
        %v8633 = vadd.f32 %v8584, %v8632
        %8634 = vmatmul.bf16.gmra.mxu0 %v8008
        %v8635 = vpop.f32.mrf.mxu0
        %v8636 = vadd.f32 %v8587, %v8635
        %v8637 = vpop.f32.mrf.mxu0
        %v8638 = vadd.f32 %v8589, %v8637
        %8639 = vmatmul.bf16.gmra.mxu0 %v8014
        %v8640 = vpop.f32.mrf.mxu0
        %v8641 = vadd.f32 %v8592, %v8640
        %v8642 = vpop.f32.mrf.mxu0
        %v8643 = vadd.f32 %v8594, %v8642
        %8644 = vdwg.mxu0
        %8645 = vmatpush.bf16.msra.mxu0 %v8368
        %8646 = vmatpush.bf16.msra.mxu0 %v8366
        %8647 = vmatpush.bf16.msra.mxu0 %v8364
        %8648 = vmatpush.bf16.msra.mxu0 %v8362
        %8649 = vmatpush.bf16.msra.mxu0 %v8360
        %8650 = vmatpush.bf16.msra.mxu0 %v8358
        %8651 = vmatpush.bf16.msra.mxu0 %v8356
        %8652 = vmatpush.bf16.msra.mxu0 %v8354
        %8653 = vmatmul.bf16.gmra.mxu0 %v7973
        %v8654 = vpop.f32.mrf.mxu0
        %v8655 = vadd.f32 %v8606, %v8654
        %v8656 = vpop.f32.mrf.mxu0
        %v8657 = vadd.f32 %v8608, %v8656
        %8658 = vmatmul.bf16.gmra.mxu0 %v7979
        %v8659 = vpop.f32.mrf.mxu0
        %v8660 = vadd.f32 %v8611, %v8659
        %v8661 = vpop.f32.mrf.mxu0
        %v8662 = vadd.f32 %v8613, %v8661
        %8663 = vmatmul.bf16.gmra.mxu0 %v7985
        %v8664 = vpop.f32.mrf.mxu0
        %v8665 = vadd.f32 %v8616, %v8664
        %v8666 = vpop.f32.mrf.mxu0
        %v8667 = vadd.f32 %v8618, %v8666
        %8668 = vmatmul.bf16.gmra.mxu0 %v7991
        %v8669 = vpop.f32.mrf.mxu0
        %v8670 = vadd.f32 %v8621, %v8669
        %v8671 = vpop.f32.mrf.mxu0
        %v8672 = vadd.f32 %v8623, %v8671
        %8673 = vmatmul.bf16.gmra.mxu0 %v7997
        %v8674 = vpop.f32.mrf.mxu0
        %v8675 = vadd.f32 %v8626, %v8674
        %v8676 = vpop.f32.mrf.mxu0
        %v8677 = vadd.f32 %v8628, %v8676
        %8678 = vmatmul.bf16.gmra.mxu0 %v8003
        %v8679 = vpop.f32.mrf.mxu0
        %v8680 = vadd.f32 %v8631, %v8679
        %v8681 = vpop.f32.mrf.mxu0
        %v8682 = vadd.f32 %v8633, %v8681
        %8683 = vmatmul.bf16.gmra.mxu0 %v8009
        %v8684 = vpop.f32.mrf.mxu0
        %v8685 = vadd.f32 %v8636, %v8684
        %v8686 = vpop.f32.mrf.mxu0
        %v8687 = vadd.f32 %v8638, %v8686
        %8688 = vmatmul.bf16.gmra.mxu0 %v8015
        %v8689 = vpop.f32.mrf.mxu0
        %v8690 = vadd.f32 %v8641, %v8689
        %v8691 = vpop.f32.mrf.mxu0
        %v8692 = vadd.f32 %v8643, %v8691
        %8693 = vdwg.mxu0
        %8694 = vmatpush.bf16.msra.mxu0 %v8384
        %8695 = vmatpush.bf16.msra.mxu0 %v8382
        %8696 = vmatpush.bf16.msra.mxu0 %v8380
        %8697 = vmatpush.bf16.msra.mxu0 %v8378
        %8698 = vmatpush.bf16.msra.mxu0 %v8376
        %8699 = vmatpush.bf16.msra.mxu0 %v8374
        %8700 = vmatpush.bf16.msra.mxu0 %v8372
        %8701 = vmatpush.bf16.msra.mxu0 %v8370
        %8702 = vmatmul.bf16.gmra.mxu0 %v7974
        %v8703 = vpop.f32.mrf.mxu0
        %v8704 = vadd.f32 %v8655, %v8703
        %v8705 = vpop.f32.mrf.mxu0
        %v8706 = vadd.f32 %v8657, %v8705
        %8707 = vmatmul.bf16.gmra.mxu0 %v7980
        %v8708 = vpop.f32.mrf.mxu0
        %v8709 = vadd.f32 %v8660, %v8708
        %v8710 = vpop.f32.mrf.mxu0
        %v8711 = vadd.f32 %v8662, %v8710
        %8712 = vmatmul.bf16.gmra.mxu0 %v7986
        %v8713 = vpop.f32.mrf.mxu0
        %v8714 = vadd.f32 %v8665, %v8713
        %v8715 = vpop.f32.mrf.mxu0
        %v8716 = vadd.f32 %v8667, %v8715
        %8717 = vmatmul.bf16.gmra.mxu0 %v7992
        %v8718 = vpop.f32.mrf.mxu0
        %v8719 = vadd.f32 %v8670, %v8718
        %v8720 = vpop.f32.mrf.mxu0
        %v8721 = vadd.f32 %v8672, %v8720
        %8722 = vmatmul.bf16.gmra.mxu0 %v7998
        %v8723 = vpop.f32.mrf.mxu0
        %v8724 = vadd.f32 %v8675, %v8723
        %v8725 = vpop.f32.mrf.mxu0
        %v8726 = vadd.f32 %v8677, %v8725
        %8727 = vmatmul.bf16.gmra.mxu0 %v8004
        %v8728 = vpop.f32.mrf.mxu0
        %v8729 = vadd.f32 %v8680, %v8728
        %v8730 = vpop.f32.mrf.mxu0
        %v8731 = vadd.f32 %v8682, %v8730
        %8732 = vmatmul.bf16.gmra.mxu0 %v8010
        %v8733 = vpop.f32.mrf.mxu0
        %v8734 = vadd.f32 %v8685, %v8733
        %v8735 = vpop.f32.mrf.mxu0
        %v8736 = vadd.f32 %v8687, %v8735
        %8737 = vmatmul.bf16.gmra.mxu0 %v8016
        %v8738 = vpop.f32.mrf.mxu0
        %v8739 = vadd.f32 %v8690, %v8738
        %v8740 = vpop.f32.mrf.mxu0
        %v8741 = vadd.f32 %v8692, %v8740
        %8742 = vdwg.mxu0
        %8743 = vmatpush.bf16.msra.mxu0 %v8400
        %8744 = vmatpush.bf16.msra.mxu0 %v8398
        %8745 = vmatpush.bf16.msra.mxu0 %v8396
        %8746 = vmatpush.bf16.msra.mxu0 %v8394
        %8747 = vmatpush.bf16.msra.mxu0 %v8392
        %8748 = vmatpush.bf16.msra.mxu0 %v8390
        %8749 = vmatpush.bf16.msra.mxu0 %v8388
        %8750 = vmatpush.bf16.msra.mxu0 %v8386
        %8751 = vmatmul.bf16.gmra.mxu0 %v7975
        %v8752 = vpop.f32.mrf.mxu0
        %v8753 = vadd.f32 %v8704, %v8752
        %v8754 = vpop.f32.mrf.mxu0
        %v8755 = vadd.f32 %v8706, %v8754
        %8756 = vmatmul.bf16.gmra.mxu0 %v7981
        %v8757 = vpop.f32.mrf.mxu0
        %v8758 = vadd.f32 %v8709, %v8757
        %v8759 = vpop.f32.mrf.mxu0
        %v8760 = vadd.f32 %v8711, %v8759
        %8761 = vmatmul.bf16.gmra.mxu0 %v7987
        %v8762 = vpop.f32.mrf.mxu0
        %v8763 = vadd.f32 %v8714, %v8762
        %v8764 = vpop.f32.mrf.mxu0
        %v8765 = vadd.f32 %v8716, %v8764
        %8766 = vmatmul.bf16.gmra.mxu0 %v7993
        %v8767 = vpop.f32.mrf.mxu0
        %v8768 = vadd.f32 %v8719, %v8767
        %v8769 = vpop.f32.mrf.mxu0
        %v8770 = vadd.f32 %v8721, %v8769
        %8771 = vmatmul.bf16.gmra.mxu0 %v7999
        %v8772 = vpop.f32.mrf.mxu0
        %v8773 = vadd.f32 %v8724, %v8772
        %v8774 = vpop.f32.mrf.mxu0
        %v8775 = vadd.f32 %v8726, %v8774
        %8776 = vmatmul.bf16.gmra.mxu0 %v8005
        %v8777 = vpop.f32.mrf.mxu0
        %v8778 = vadd.f32 %v8729, %v8777
        %v8779 = vpop.f32.mrf.mxu0
        %v8780 = vadd.f32 %v8731, %v8779
        %8781 = vmatmul.bf16.gmra.mxu0 %v8011
        %v8782 = vpop.f32.mrf.mxu0
        %v8783 = vadd.f32 %v8734, %v8782
        %v8784 = vpop.f32.mrf.mxu0
        %v8785 = vadd.f32 %v8736, %v8784
        %8786 = vmatmul.bf16.gmra.mxu0 %v8017
        %v8787 = vpop.f32.mrf.mxu0
        %v8788 = vadd.f32 %v8739, %v8787
        %v8789 = vpop.f32.mrf.mxu0
        %v8790 = vadd.f32 %v8741, %v8789
        %8791 = vdwg.mxu0
        %8792 = vmatpush.bf16.msra.mxu0 %v8321
        %8793 = vmatpush.bf16.msra.mxu0 %v8319
        %8794 = vmatpush.bf16.msra.mxu0 %v8317
        %8795 = vmatpush.bf16.msra.mxu0 %v8315
        %8796 = vmatpush.bf16.msra.mxu0 %v8313
        %8797 = vmatpush.bf16.msra.mxu0 %v8311
        %8798 = vmatpush.bf16.msra.mxu0 %v8309
        %8799 = vmatpush.bf16.msra.mxu0 %v8307
        %8800 = vmatmul.bf16.gmra.mxu0 %v7970
        %v8801 = vpop.f32.mrf.mxu0
        %v8802 = vadd.f32 0.0, %v8801
        %v8803 = vpop.f32.mrf.mxu0
        %v8804 = vadd.f32 0.0, %v8803
        %8805 = vmatmul.bf16.gmra.mxu0 %v7976
        %v8806 = vpop.f32.mrf.mxu0
        %v8807 = vadd.f32 0.0, %v8806
        %v8808 = vpop.f32.mrf.mxu0
        %v8809 = vadd.f32 0.0, %v8808
        %8810 = vmatmul.bf16.gmra.mxu0 %v7982
        %v8811 = vpop.f32.mrf.mxu0
        %v8812 = vadd.f32 0.0, %v8811
        %v8813 = vpop.f32.mrf.mxu0
        %v8814 = vadd.f32 0.0, %v8813
        %8815 = vmatmul.bf16.gmra.mxu0 %v7988
        %v8816 = vpop.f32.mrf.mxu0
        %v8817 = vadd.f32 0.0, %v8816
        %v8818 = vpop.f32.mrf.mxu0
        %v8819 = vadd.f32 0.0, %v8818
        %8820 = vmatmul.bf16.gmra.mxu0 %v7994
        %v8821 = vpop.f32.mrf.mxu0
        %v8822 = vadd.f32 0.0, %v8821
        %v8823 = vpop.f32.mrf.mxu0
        %v8824 = vadd.f32 0.0, %v8823
        %8825 = vmatmul.bf16.gmra.mxu0 %v8000
        %v8826 = vpop.f32.mrf.mxu0
        %v8827 = vadd.f32 0.0, %v8826
        %v8828 = vpop.f32.mrf.mxu0
        %v8829 = vadd.f32 0.0, %v8828
        %8830 = vmatmul.bf16.gmra.mxu0 %v8006
        %v8831 = vpop.f32.mrf.mxu0
        %v8832 = vadd.f32 0.0, %v8831
        %v8833 = vpop.f32.mrf.mxu0
        %v8834 = vadd.f32 0.0, %v8833
        %8835 = vmatmul.bf16.gmra.mxu0 %v8012
        %v8836 = vpop.f32.mrf.mxu0
        %v8837 = vadd.f32 0.0, %v8836
        %v8838 = vpop.f32.mrf.mxu0
        %v8839 = vadd.f32 0.0, %v8838
        %8840 = vdwg.mxu0
        %8841 = vmatpush.bf16.msra.mxu0 %v8337
        %8842 = vmatpush.bf16.msra.mxu0 %v8335
        %8843 = vmatpush.bf16.msra.mxu0 %v8333
        %8844 = vmatpush.bf16.msra.mxu0 %v8331
        %8845 = vmatpush.bf16.msra.mxu0 %v8329
        %8846 = vmatpush.bf16.msra.mxu0 %v8327
        %8847 = vmatpush.bf16.msra.mxu0 %v8325
        %8848 = vmatpush.bf16.msra.mxu0 %v8323
        %8849 = vmatmul.bf16.gmra.mxu0 %v7971
        %v8850 = vpop.f32.mrf.mxu0
        %v8851 = vadd.f32 %v8802, %v8850
        %v8852 = vpop.f32.mrf.mxu0
        %v8853 = vadd.f32 %v8804, %v8852
        %8854 = vmatmul.bf16.gmra.mxu0 %v7977
        %v8855 = vpop.f32.mrf.mxu0
        %v8856 = vadd.f32 %v8807, %v8855
        %v8857 = vpop.f32.mrf.mxu0
        %v8858 = vadd.f32 %v8809, %v8857
        %8859 = vmatmul.bf16.gmra.mxu0 %v7983
        %v8860 = vpop.f32.mrf.mxu0
        %v8861 = vadd.f32 %v8812, %v8860
        %v8862 = vpop.f32.mrf.mxu0
        %v8863 = vadd.f32 %v8814, %v8862
        %8864 = vmatmul.bf16.gmra.mxu0 %v7989
        %v8865 = vpop.f32.mrf.mxu0
        %v8866 = vadd.f32 %v8817, %v8865
        %v8867 = vpop.f32.mrf.mxu0
        %v8868 = vadd.f32 %v8819, %v8867
        %8869 = vmatmul.bf16.gmra.mxu0 %v7995
        %v8870 = vpop.f32.mrf.mxu0
        %v8871 = vadd.f32 %v8822, %v8870
        %v8872 = vpop.f32.mrf.mxu0
        %v8873 = vadd.f32 %v8824, %v8872
        %8874 = vmatmul.bf16.gmra.mxu0 %v8001
        %v8875 = vpop.f32.mrf.mxu0
        %v8876 = vadd.f32 %v8827, %v8875
        %v8877 = vpop.f32.mrf.mxu0
        %v8878 = vadd.f32 %v8829, %v8877
        %8879 = vmatmul.bf16.gmra.mxu0 %v8007
        %v8880 = vpop.f32.mrf.mxu0
        %v8881 = vadd.f32 %v8832, %v8880
        %v8882 = vpop.f32.mrf.mxu0
        %v8883 = vadd.f32 %v8834, %v8882
        %8884 = vmatmul.bf16.gmra.mxu0 %v8013
        %v8885 = vpop.f32.mrf.mxu0
        %v8886 = vadd.f32 %v8837, %v8885
        %v8887 = vpop.f32.mrf.mxu0
        %v8888 = vadd.f32 %v8839, %v8887
        %8889 = vdwg.mxu0
        %8890 = vmatpush.bf16.msra.mxu0 %v8353
        %8891 = vmatpush.bf16.msra.mxu0 %v8351
        %8892 = vmatpush.bf16.msra.mxu0 %v8349
        %8893 = vmatpush.bf16.msra.mxu0 %v8347
        %8894 = vmatpush.bf16.msra.mxu0 %v8345
        %8895 = vmatpush.bf16.msra.mxu0 %v8343
        %8896 = vmatpush.bf16.msra.mxu0 %v8341
        %8897 = vmatpush.bf16.msra.mxu0 %v8339
        %8898 = vmatmul.bf16.gmra.mxu0 %v7972
        %v8899 = vpop.f32.mrf.mxu0
        %v8900 = vadd.f32 %v8851, %v8899
        %v8901 = vpop.f32.mrf.mxu0
        %v8902 = vadd.f32 %v8853, %v8901
        %8903 = vmatmul.bf16.gmra.mxu0 %v7978
        %v8904 = vpop.f32.mrf.mxu0
        %v8905 = vadd.f32 %v8856, %v8904
        %v8906 = vpop.f32.mrf.mxu0
        %v8907 = vadd.f32 %v8858, %v8906
        %8908 = vmatmul.bf16.gmra.mxu0 %v7984
        %v8909 = vpop.f32.mrf.mxu0
        %v8910 = vadd.f32 %v8861, %v8909
        %v8911 = vpop.f32.mrf.mxu0
        %v8912 = vadd.f32 %v8863, %v8911
        %8913 = vmatmul.bf16.gmra.mxu0 %v7990
        %v8914 = vpop.f32.mrf.mxu0
        %v8915 = vadd.f32 %v8866, %v8914
        %v8916 = vpop.f32.mrf.mxu0
        %v8917 = vadd.f32 %v8868, %v8916
        %8918 = vmatmul.bf16.gmra.mxu0 %v7996
        %v8919 = vpop.f32.mrf.mxu0
        %v8920 = vadd.f32 %v8871, %v8919
        %v8921 = vpop.f32.mrf.mxu0
        %v8922 = vadd.f32 %v8873, %v8921
        %8923 = vmatmul.bf16.gmra.mxu0 %v8002
        %v8924 = vpop.f32.mrf.mxu0
        %v8925 = vadd.f32 %v8876, %v8924
        %v8926 = vpop.f32.mrf.mxu0
        %v8927 = vadd.f32 %v8878, %v8926
        %8928 = vmatmul.bf16.gmra.mxu0 %v8008
        %v8929 = vpop.f32.mrf.mxu0
        %v8930 = vadd.f32 %v8881, %v8929
        %v8931 = vpop.f32.mrf.mxu0
        %v8932 = vadd.f32 %v8883, %v8931
        %8933 = vmatmul.bf16.gmra.mxu0 %v8014
        %v8934 = vpop.f32.mrf.mxu0
        %v8935 = vadd.f32 %v8886, %v8934
        %v8936 = vpop.f32.mrf.mxu0
        %v8937 = vadd.f32 %v8888, %v8936
        %8938 = vdwg.mxu0
        %8939 = vmatpush.bf16.msra.mxu0 %v8369
        %8940 = vmatpush.bf16.msra.mxu0 %v8367
        %8941 = vmatpush.bf16.msra.mxu0 %v8365
        %8942 = vmatpush.bf16.msra.mxu0 %v8363
        %8943 = vmatpush.bf16.msra.mxu0 %v8361
        %8944 = vmatpush.bf16.msra.mxu0 %v8359
        %8945 = vmatpush.bf16.msra.mxu0 %v8357
        %8946 = vmatpush.bf16.msra.mxu0 %v8355
        %8947 = vmatmul.bf16.gmra.mxu0 %v7973
        %v8948 = vpop.f32.mrf.mxu0
        %v8949 = vadd.f32 %v8900, %v8948
        %v8950 = vpop.f32.mrf.mxu0
        %v8951 = vadd.f32 %v8902, %v8950
        %8952 = vmatmul.bf16.gmra.mxu0 %v7979
        %v8953 = vpop.f32.mrf.mxu0
        %v8954 = vadd.f32 %v8905, %v8953
        %v8955 = vpop.f32.mrf.mxu0
        %v8956 = vadd.f32 %v8907, %v8955
        %8957 = vmatmul.bf16.gmra.mxu0 %v7985
        %v8958 = vpop.f32.mrf.mxu0
        %v8959 = vadd.f32 %v8910, %v8958
        %v8960 = vpop.f32.mrf.mxu0
        %v8961 = vadd.f32 %v8912, %v8960
        %8962 = vmatmul.bf16.gmra.mxu0 %v7991
        %v8963 = vpop.f32.mrf.mxu0
        %v8964 = vadd.f32 %v8915, %v8963
        %v8965 = vpop.f32.mrf.mxu0
        %v8966 = vadd.f32 %v8917, %v8965
        %8967 = vmatmul.bf16.gmra.mxu0 %v7997
        %v8968 = vpop.f32.mrf.mxu0
        %v8969 = vadd.f32 %v8920, %v8968
        %v8970 = vpop.f32.mrf.mxu0
        %v8971 = vadd.f32 %v8922, %v8970
        %8972 = vmatmul.bf16.gmra.mxu0 %v8003
        %v8973 = vpop.f32.mrf.mxu0
        %v8974 = vadd.f32 %v8925, %v8973
        %v8975 = vpop.f32.mrf.mxu0
        %v8976 = vadd.f32 %v8927, %v8975
        %8977 = vmatmul.bf16.gmra.mxu0 %v8009
        %v8978 = vpop.f32.mrf.mxu0
        %v8979 = vadd.f32 %v8930, %v8978
        %v8980 = vpop.f32.mrf.mxu0
        %v8981 = vadd.f32 %v8932, %v8980
        %8982 = vmatmul.bf16.gmra.mxu0 %v8015
        %v8983 = vpop.f32.mrf.mxu0
        %v8984 = vadd.f32 %v8935, %v8983
        %v8985 = vpop.f32.mrf.mxu0
        %v8986 = vadd.f32 %v8937, %v8985
        %8987 = vdwg.mxu0
        %8988 = vmatpush.bf16.msra.mxu0 %v8385
        %8989 = vmatpush.bf16.msra.mxu0 %v8383
        %8990 = vmatpush.bf16.msra.mxu0 %v8381
        %8991 = vmatpush.bf16.msra.mxu0 %v8379
        %8992 = vmatpush.bf16.msra.mxu0 %v8377
        %8993 = vmatpush.bf16.msra.mxu0 %v8375
        %8994 = vmatpush.bf16.msra.mxu0 %v8373
        %8995 = vmatpush.bf16.msra.mxu0 %v8371
        %8996 = vmatmul.bf16.gmra.mxu0 %v7974
        %v8997 = vpop.f32.mrf.mxu0
        %v8998 = vadd.f32 %v8949, %v8997
        %v8999 = vpop.f32.mrf.mxu0
        %v9000 = vadd.f32 %v8951, %v8999
        %9001 = vmatmul.bf16.gmra.mxu0 %v7980
        %v9002 = vpop.f32.mrf.mxu0
        %v9003 = vadd.f32 %v8954, %v9002
        %v9004 = vpop.f32.mrf.mxu0
        %v9005 = vadd.f32 %v8956, %v9004
        %9006 = vmatmul.bf16.gmra.mxu0 %v7986
        %v9007 = vpop.f32.mrf.mxu0
        %v9008 = vadd.f32 %v8959, %v9007
        %v9009 = vpop.f32.mrf.mxu0
        %v9010 = vadd.f32 %v8961, %v9009
        %9011 = vmatmul.bf16.gmra.mxu0 %v7992
        %v9012 = vpop.f32.mrf.mxu0
        %v9013 = vadd.f32 %v8964, %v9012
        %v9014 = vpop.f32.mrf.mxu0
        %v9015 = vadd.f32 %v8966, %v9014
        %9016 = vmatmul.bf16.gmra.mxu0 %v7998
        %v9017 = vpop.f32.mrf.mxu0
        %v9018 = vadd.f32 %v8969, %v9017
        %v9019 = vpop.f32.mrf.mxu0
        %v9020 = vadd.f32 %v8971, %v9019
        %9021 = vmatmul.bf16.gmra.mxu0 %v8004
        %v9022 = vpop.f32.mrf.mxu0
        %v9023 = vadd.f32 %v8974, %v9022
        %v9024 = vpop.f32.mrf.mxu0
        %v9025 = vadd.f32 %v8976, %v9024
        %9026 = vmatmul.bf16.gmra.mxu0 %v8010
        %v9027 = vpop.f32.mrf.mxu0
        %v9028 = vadd.f32 %v8979, %v9027
        %v9029 = vpop.f32.mrf.mxu0
        %v9030 = vadd.f32 %v8981, %v9029
        %9031 = vmatmul.bf16.gmra.mxu0 %v8016
        %v9032 = vpop.f32.mrf.mxu0
        %v9033 = vadd.f32 %v8984, %v9032
        %v9034 = vpop.f32.mrf.mxu0
        %v9035 = vadd.f32 %v8986, %v9034
        %9036 = vdwg.mxu0
        %9037 = vmatpush.bf16.msra.mxu0 %v8401
        %9038 = vmatpush.bf16.msra.mxu0 %v8399
        %9039 = vmatpush.bf16.msra.mxu0 %v8397
        %9040 = vmatpush.bf16.msra.mxu0 %v8395
        %9041 = vmatpush.bf16.msra.mxu0 %v8393
        %9042 = vmatpush.bf16.msra.mxu0 %v8391
        %9043 = vmatpush.bf16.msra.mxu0 %v8389
        %9044 = vmatpush.bf16.msra.mxu0 %v8387
        %9045 = vmatmul.bf16.gmra.mxu0 %v7975
        %v9046 = vpop.f32.mrf.mxu0
        %v9047 = vadd.f32 %v8998, %v9046
        %v9048 = vpop.f32.mrf.mxu0
        %v9049 = vadd.f32 %v9000, %v9048
        %9050 = vmatmul.bf16.gmra.mxu0 %v7981
        %v9051 = vpop.f32.mrf.mxu0
        %v9052 = vadd.f32 %v9003, %v9051
        %v9053 = vpop.f32.mrf.mxu0
        %v9054 = vadd.f32 %v9005, %v9053
        %9055 = vmatmul.bf16.gmra.mxu0 %v7987
        %v9056 = vpop.f32.mrf.mxu0
        %v9057 = vadd.f32 %v9008, %v9056
        %v9058 = vpop.f32.mrf.mxu0
        %v9059 = vadd.f32 %v9010, %v9058
        %9060 = vmatmul.bf16.gmra.mxu0 %v7993
        %v9061 = vpop.f32.mrf.mxu0
        %v9062 = vadd.f32 %v9013, %v9061
        %v9063 = vpop.f32.mrf.mxu0
        %v9064 = vadd.f32 %v9015, %v9063
        %9065 = vmatmul.bf16.gmra.mxu0 %v7999
        %v9066 = vpop.f32.mrf.mxu0
        %v9067 = vadd.f32 %v9018, %v9066
        %v9068 = vpop.f32.mrf.mxu0
        %v9069 = vadd.f32 %v9020, %v9068
        %9070 = vmatmul.bf16.gmra.mxu0 %v8005
        %v9071 = vpop.f32.mrf.mxu0
        %v9072 = vadd.f32 %v9023, %v9071
        %v9073 = vpop.f32.mrf.mxu0
        %v9074 = vadd.f32 %v9025, %v9073
        %9075 = vmatmul.bf16.gmra.mxu0 %v8011
        %v9076 = vpop.f32.mrf.mxu0
        %v9077 = vadd.f32 %v9028, %v9076
        %v9078 = vpop.f32.mrf.mxu0
        %v9079 = vadd.f32 %v9030, %v9078
        %9080 = vmatmul.bf16.gmra.mxu0 %v8017
        %v9081 = vpop.f32.mrf.mxu0
        %v9082 = vadd.f32 %v9033, %v9081
        %v9083 = vpop.f32.mrf.mxu0
        %v9084 = vadd.f32 %v9035, %v9083
        %9085 = vdwg.mxu0
        %v9086 = vadd.f32 %v4242, %v8753
        %v9087 = vadd.f32 %v4243, %v9047
        %v9088 = vadd.f32 %v4244, %v8755
        %v9089 = vadd.f32 %v4245, %v9049
        %v9090 = vadd.f32 %v4246, %v8758
        %v9091 = vadd.f32 %v4247, %v9052
        %v9092 = vadd.f32 %v4248, %v8760
        %v9093 = vadd.f32 %v4249, %v9054
        %v9094 = vadd.f32 %v4250, %v8763
        %v9095 = vadd.f32 %v4251, %v9057
        %v9096 = vadd.f32 %v4252, %v8765
        %v9097 = vadd.f32 %v4253, %v9059
        %v9098 = vadd.f32 %v4254, %v8768
        %v9099 = vadd.f32 %v4255, %v9062
        %v9100 = vadd.f32 %v4256, %v8770
        %v9101 = vadd.f32 %v4257, %v9064
        %v9102 = vadd.f32 %v4258, %v8773
        %v9103 = vadd.f32 %v4259, %v9067
        %v9104 = vadd.f32 %v4260, %v8775
        %v9105 = vadd.f32 %v4261, %v9069
        %v9106 = vadd.f32 %v4262, %v8778
        %v9107 = vadd.f32 %v4263, %v9072
        %v9108 = vadd.f32 %v4264, %v8780
        %v9109 = vadd.f32 %v4265, %v9074
        %v9110 = vadd.f32 %v4266, %v8783
        %v9111 = vadd.f32 %v4267, %v9077
        %v9112 = vadd.f32 %v4268, %v8785
        %v9113 = vadd.f32 %v4269, %v9079
        %v9114 = vadd.f32 %v4270, %v8788
        %v9115 = vadd.f32 %v4271, %v9082
        %v9116 = vadd.f32 %v4272, %v8790
        %v9117 = vadd.f32 %v4273, %v9084
        %s9118 = scalar_lea.vmem %s553, 16
        %v9119 = vld [vmem:[%s9118] ss:$8 sm:$0x3]
        %v9121 = vperm.slane %v9119, 0
        %v9122 = vperm.slane %v9119, 1
        %v9125 = vadd.f32 %v9086, %v9121
        %v9126 = vadd.f32 %v9087, %v9122
        %v9127 = vadd.f32 %v9088, %v9121
        %v9128 = vadd.f32 %v9089, %v9122
        %v9129 = vadd.f32 %v9090, %v9121
        %v9130 = vadd.f32 %v9091, %v9122
        %v9131 = vadd.f32 %v9092, %v9121
        %v9132 = vadd.f32 %v9093, %v9122
        %v9133 = vadd.f32 %v9094, %v9121
        %v9134 = vadd.f32 %v9095, %v9122
        %v9135 = vadd.f32 %v9096, %v9121
        %v9136 = vadd.f32 %v9097, %v9122
        %v9137 = vadd.f32 %v9098, %v9121
        %v9138 = vadd.f32 %v9099, %v9122
        %v9139 = vadd.f32 %v9100, %v9121
        %v9140 = vadd.f32 %v9101, %v9122
        %v9141 = vadd.f32 %v9102, %v9121
        %v9142 = vadd.f32 %v9103, %v9122
        %v9143 = vadd.f32 %v9104, %v9121
        %v9144 = vadd.f32 %v9105, %v9122
        %v9145 = vadd.f32 %v9106, %v9121
        %v9146 = vadd.f32 %v9107, %v9122
        %v9147 = vadd.f32 %v9108, %v9121
        %v9148 = vadd.f32 %v9109, %v9122
        %v9149 = vadd.f32 %v9110, %v9121
        %v9150 = vadd.f32 %v9111, %v9122
        %v9151 = vadd.f32 %v9112, %v9121
        %v9152 = vadd.f32 %v9113, %v9122
        %v9153 = vadd.f32 %v9114, %v9121
        %v9154 = vadd.f32 %v9115, %v9122
        %v9155 = vadd.f32 %v9116, %v9121
        %v9156 = vadd.f32 %v9117, %v9122
        %9157 = vst [vmem:[#allocation2] sm:$0xff] %v9125
        %9158 = vst.msk [vmem:[#allocation2 + $0x8] sm:$0xff] %vm1019, %v9126
        %9159 = vst [vmem:[#allocation2 + $0x10] sm:$0xff] %v9127
        %9160 = vst.msk [vmem:[#allocation2 + $0x18] sm:$0xff] %vm1019, %v9128
        %9161 = vst [vmem:[#allocation2 + $0x20] sm:$0xff] %v9129
        %9162 = vst.msk [vmem:[#allocation2 + $0x28] sm:$0xff] %vm1019, %v9130
        %9163 = vst [vmem:[#allocation2 + $0x30] sm:$0xff] %v9131
        %9164 = vst.msk [vmem:[#allocation2 + $0x38] sm:$0xff] %vm1019, %v9132
        %9165 = vst [vmem:[#allocation2 + $0x40] sm:$0xff] %v9133
        %9166 = vst.msk [vmem:[#allocation2 + $0x48] sm:$0xff] %vm1019, %v9134
        %9167 = vst [vmem:[#allocation2 + $0x50] sm:$0xff] %v9135
        %9168 = vst.msk [vmem:[#allocation2 + $0x58] sm:$0xff] %vm1019, %v9136
        %9169 = vst [vmem:[#allocation2 + $0x60] sm:$0xff] %v9137
        %9170 = vst.msk [vmem:[#allocation2 + $0x68] sm:$0xff] %vm1019, %v9138
        %9171 = vst [vmem:[#allocation2 + $0x70] sm:$0xff] %v9139
        %9172 = vst.msk [vmem:[#allocation2 + $0x78] sm:$0xff] %vm1019, %v9140
        %9173 = vst [vmem:[#allocation2 + $0x80] sm:$0xff] %v9141
        %9174 = vst.msk [vmem:[#allocation2 + $0x88] sm:$0xff] %vm1019, %v9142
        %9175 = vst [vmem:[#allocation2 + $0x90] sm:$0xff] %v9143
        %9176 = vst.msk [vmem:[#allocation2 + $0x98] sm:$0xff] %vm1019, %v9144
        %9177 = vst [vmem:[#allocation2 + $0xa0] sm:$0xff] %v9145
        %9178 = vst.msk [vmem:[#allocation2 + $0xa8] sm:$0xff] %vm1019, %v9146
        %9179 = vst [vmem:[#allocation2 + $0xb0] sm:$0xff] %v9147
        %9180 = vst.msk [vmem:[#allocation2 + $0xb8] sm:$0xff] %vm1019, %v9148
        %9181 = vst [vmem:[#allocation2 + $0xc0] sm:$0xff] %v9149
        %9182 = vst.msk [vmem:[#allocation2 + $0xc8] sm:$0xff] %vm1019, %v9150
        %9183 = vst [vmem:[#allocation2 + $0xd0] sm:$0xff] %v9151
        %9184 = vst.msk [vmem:[#allocation2 + $0xd8] sm:$0xff] %vm1019, %v9152
        %9185 = vst [vmem:[#allocation2 + $0xe0] sm:$0xff] %v9153
        %9186 = vst.msk [vmem:[#allocation2 + $0xe8] sm:$0xff] %vm1019, %v9154
        %9187 = vst [vmem:[#allocation2 + $0xf0] sm:$0xff] %v9155
        %9188 = vst.msk [vmem:[#allocation2 + $0xf8] sm:$0xff] %vm1019, %v9156
        %p9189 = scmp.eq.s32.totalorder %s27, 1
        // Predicated region
        $region85: #{forward.1} parent=79 // pred_check
          %p9190 = pneg %p9189
        $region86: #{forward.1} parent=79 // pred_check_branch
          %9192 = sbr.rel (%p9190) target = $region88
        $region87: #{forward.1} parent=79 // pred_region
          %s9193 = scalar_lea.vmem %s11, 1
          %v9194 = vld [vmem:[%s9193] ss:$4 sm:$0x3]
          %s9195 = scalar_lea.vmem %s11, 2
          %v9196 = vld [vmem:[%s9195] ss:$4 sm:$0x3]
          %v9197 = vsel %vm1019, %v9126, 0.0
          %v9198 = vadd.f32 %v9125, %v9197
          %9199 = vadd.xlane.f32.xlu0 %v9198
          %v9200 = vpop.xlane.xlu0 %9199
          %v9201 = vsel %vm1019, %v9128, 0.0
          %v9202 = vadd.f32 %v9127, %v9201
          %9203 = vadd.xlane.f32.xlu0 %v9202
          %v9204 = vpop.xlane.xlu0 %9203
          %v9205 = vsel %vm1019, %v9130, 0.0
          %v9206 = vadd.f32 %v9129, %v9205
          %9207 = vadd.xlane.f32.xlu0 %v9206
          %v9208 = vpop.xlane.xlu0 %9207
          %v9209 = vsel %vm1019, %v9132, 0.0
          %v9210 = vadd.f32 %v9131, %v9209
          %9211 = vadd.xlane.f32.xlu0 %v9210
          %v9212 = vpop.xlane.xlu0 %9211
          %v9213 = vsel %vm1019, %v9134, 0.0
          %v9214 = vadd.f32 %v9133, %v9213
          %9215 = vadd.xlane.f32.xlu0 %v9214
          %v9216 = vpop.xlane.xlu0 %9215
          %v9217 = vsel %vm1019, %v9136, 0.0
          %v9218 = vadd.f32 %v9135, %v9217
          %9219 = vadd.xlane.f32.xlu0 %v9218
          %v9220 = vpop.xlane.xlu0 %9219
          %v9221 = vsel %vm1019, %v9138, 0.0
          %v9222 = vadd.f32 %v9137, %v9221
          %9223 = vadd.xlane.f32.xlu0 %v9222
          %v9224 = vpop.xlane.xlu0 %9223
          %v9225 = vsel %vm1019, %v9140, 0.0
          %v9226 = vadd.f32 %v9139, %v9225
          %9227 = vadd.xlane.f32.xlu0 %v9226
          %v9228 = vpop.xlane.xlu0 %9227
          %v9229 = vsel %vm1019, %v9142, 0.0
          %v9230 = vadd.f32 %v9141, %v9229
          %9231 = vadd.xlane.f32.xlu0 %v9230
          %v9232 = vpop.xlane.xlu0 %9231
          %v9233 = vsel %vm1019, %v9144, 0.0
          %v9234 = vadd.f32 %v9143, %v9233
          %9235 = vadd.xlane.f32.xlu0 %v9234
          %v9236 = vpop.xlane.xlu0 %9235
          %v9237 = vsel %vm1019, %v9146, 0.0
          %v9238 = vadd.f32 %v9145, %v9237
          %9239 = vadd.xlane.f32.xlu0 %v9238
          %v9240 = vpop.xlane.xlu0 %9239
          %v9241 = vsel %vm1019, %v9148, 0.0
          %v9242 = vadd.f32 %v9147, %v9241
          %9243 = vadd.xlane.f32.xlu0 %v9242
          %v9244 = vpop.xlane.xlu0 %9243
          %v9245 = vsel %vm1019, %v9150, 0.0
          %v9246 = vadd.f32 %v9149, %v9245
          %9247 = vadd.xlane.f32.xlu0 %v9246
          %v9248 = vpop.xlane.xlu0 %9247
          %v9249 = vsel %vm1019, %v9152, 0.0
          %v9250 = vadd.f32 %v9151, %v9249
          %9251 = vadd.xlane.f32.xlu0 %v9250
          %v9252 = vpop.xlane.xlu0 %9251
          %v9253 = vsel %vm1019, %v9154, 0.0
          %v9254 = vadd.f32 %v9153, %v9253
          %9255 = vadd.xlane.f32.xlu0 %v9254
          %v9256 = vpop.xlane.xlu0 %9255
          %v9257 = vsel %vm1019, %v9156, 0.0
          %v9258 = vadd.f32 %v9155, %v9257
          %9259 = vadd.xlane.f32.xlu0 %v9258
          %v9260 = vpop.xlane.xlu0 %9259
          %v9261 = vmul.f32 %v9200, %v1090
          %v9262 = vmul.f32 %v9204, %v1090
          %v9263 = vmul.f32 %v9208, %v1090
          %v9264 = vmul.f32 %v9212, %v1090
          %v9265 = vmul.f32 %v9216, %v1090
          %v9266 = vmul.f32 %v9220, %v1090
          %v9267 = vmul.f32 %v9224, %v1090
          %v9268 = vmul.f32 %v9228, %v1090
          %v9269 = vmul.f32 %v9232, %v1090
          %v9270 = vmul.f32 %v9236, %v1090
          %v9271 = vmul.f32 %v9240, %v1090
          %v9272 = vmul.f32 %v9244, %v1090
          %v9273 = vmul.f32 %v9248, %v1090
          %v9274 = vmul.f32 %v9252, %v1090
          %v9275 = vmul.f32 %v9256, %v1090
          %v9276 = vmul.f32 %v9260, %v1090
          %v9277 = vsub.f32 %v9125, %v9261
          %v9278 = vsub.f32 %v9126, %v9261
          %v9279 = vsub.f32 %v9127, %v9262
          %v9280 = vsub.f32 %v9128, %v9262
          %v9281 = vsub.f32 %v9129, %v9263
          %v9282 = vsub.f32 %v9130, %v9263
          %v9283 = vsub.f32 %v9131, %v9264
          %v9284 = vsub.f32 %v9132, %v9264
          %v9285 = vsub.f32 %v9133, %v9265
          %v9286 = vsub.f32 %v9134, %v9265
          %v9287 = vsub.f32 %v9135, %v9266
          %v9288 = vsub.f32 %v9136, %v9266
          %v9289 = vsub.f32 %v9137, %v9267
          %v9290 = vsub.f32 %v9138, %v9267
          %v9291 = vsub.f32 %v9139, %v9268
          %v9292 = vsub.f32 %v9140, %v9268
          %v9293 = vsub.f32 %v9141, %v9269
          %v9294 = vsub.f32 %v9142, %v9269
          %v9295 = vsub.f32 %v9143, %v9270
          %v9296 = vsub.f32 %v9144, %v9270
          %v9297 = vsub.f32 %v9145, %v9271
          %v9298 = vsub.f32 %v9146, %v9271
          %v9299 = vsub.f32 %v9147, %v9272
          %v9300 = vsub.f32 %v9148, %v9272
          %v9301 = vsub.f32 %v9149, %v9273
          %v9302 = vsub.f32 %v9150, %v9273
          %v9303 = vsub.f32 %v9151, %v9274
          %v9304 = vsub.f32 %v9152, %v9274
          %v9305 = vsub.f32 %v9153, %v9275
          %v9306 = vsub.f32 %v9154, %v9275
          %v9307 = vsub.f32 %v9155, %v9276
          %v9308 = vsub.f32 %v9156, %v9276
          %v9309 = vmul.f32 %v9277, %v9277
          %v9310 = vmul.f32 %v9278, %v9278
          %v9311 = vmul.f32 %v9279, %v9279
          %v9312 = vmul.f32 %v9280, %v9280
          %v9313 = vmul.f32 %v9281, %v9281
          %v9314 = vmul.f32 %v9282, %v9282
          %v9315 = vmul.f32 %v9283, %v9283
          %v9316 = vmul.f32 %v9284, %v9284
          %v9317 = vmul.f32 %v9285, %v9285
          %v9318 = vmul.f32 %v9286, %v9286
          %v9319 = vmul.f32 %v9287, %v9287
          %v9320 = vmul.f32 %v9288, %v9288
          %v9321 = vmul.f32 %v9289, %v9289
          %v9322 = vmul.f32 %v9290, %v9290
          %v9323 = vmul.f32 %v9291, %v9291
          %v9324 = vmul.f32 %v9292, %v9292
          %v9325 = vmul.f32 %v9293, %v9293
          %v9326 = vmul.f32 %v9294, %v9294
          %v9327 = vmul.f32 %v9295, %v9295
          %v9328 = vmul.f32 %v9296, %v9296
          %v9329 = vmul.f32 %v9297, %v9297
          %v9330 = vmul.f32 %v9298, %v9298
          %v9331 = vmul.f32 %v9299, %v9299
          %v9332 = vmul.f32 %v9300, %v9300
          %v9333 = vmul.f32 %v9301, %v9301
          %v9334 = vmul.f32 %v9302, %v9302
          %v9335 = vmul.f32 %v9303, %v9303
          %v9336 = vmul.f32 %v9304, %v9304
          %v9337 = vmul.f32 %v9305, %v9305
          %v9338 = vmul.f32 %v9306, %v9306
          %v9339 = vmul.f32 %v9307, %v9307
          %v9340 = vmul.f32 %v9308, %v9308
          %v9341 = vsel %vm1019, %v9310, 0.0
          %v9342 = vadd.f32 %v9309, %v9341
          %9343 = vadd.xlane.f32.xlu0 %v9342
          %v9344 = vpop.xlane.xlu0 %9343
          %v9345 = vsel %vm1019, %v9312, 0.0
          %v9346 = vadd.f32 %v9311, %v9345
          %9347 = vadd.xlane.f32.xlu0 %v9346
          %v9348 = vpop.xlane.xlu0 %9347
          %v9349 = vsel %vm1019, %v9314, 0.0
          %v9350 = vadd.f32 %v9313, %v9349
          %9351 = vadd.xlane.f32.xlu0 %v9350
          %v9352 = vpop.xlane.xlu0 %9351
          %v9353 = vsel %vm1019, %v9316, 0.0
          %v9354 = vadd.f32 %v9315, %v9353
          %9355 = vadd.xlane.f32.xlu0 %v9354
          %v9356 = vpop.xlane.xlu0 %9355
          %v9357 = vsel %vm1019, %v9318, 0.0
          %v9358 = vadd.f32 %v9317, %v9357
          %9359 = vadd.xlane.f32.xlu0 %v9358
          %v9360 = vpop.xlane.xlu0 %9359
          %v9361 = vsel %vm1019, %v9320, 0.0
          %v9362 = vadd.f32 %v9319, %v9361
          %9363 = vadd.xlane.f32.xlu0 %v9362
          %v9364 = vpop.xlane.xlu0 %9363
          %v9365 = vsel %vm1019, %v9322, 0.0
          %v9366 = vadd.f32 %v9321, %v9365
          %9367 = vadd.xlane.f32.xlu0 %v9366
          %v9368 = vpop.xlane.xlu0 %9367
          %v9369 = vsel %vm1019, %v9324, 0.0
          %v9370 = vadd.f32 %v9323, %v9369
          %9371 = vadd.xlane.f32.xlu0 %v9370
          %v9372 = vpop.xlane.xlu0 %9371
          %v9373 = vsel %vm1019, %v9326, 0.0
          %v9374 = vadd.f32 %v9325, %v9373
          %9375 = vadd.xlane.f32.xlu0 %v9374
          %v9376 = vpop.xlane.xlu0 %9375
          %v9377 = vsel %vm1019, %v9328, 0.0
          %v9378 = vadd.f32 %v9327, %v9377
          %9379 = vadd.xlane.f32.xlu0 %v9378
          %v9380 = vpop.xlane.xlu0 %9379
          %v9381 = vsel %vm1019, %v9330, 0.0
          %v9382 = vadd.f32 %v9329, %v9381
          %9383 = vadd.xlane.f32.xlu0 %v9382
          %v9384 = vpop.xlane.xlu0 %9383
          %v9385 = vsel %vm1019, %v9332, 0.0
          %v9386 = vadd.f32 %v9331, %v9385
          %9387 = vadd.xlane.f32.xlu0 %v9386
          %v9388 = vpop.xlane.xlu0 %9387
          %v9389 = vsel %vm1019, %v9334, 0.0
          %v9390 = vadd.f32 %v9333, %v9389
          %9391 = vadd.xlane.f32.xlu0 %v9390
          %v9392 = vpop.xlane.xlu0 %9391
          %v9393 = vsel %vm1019, %v9336, 0.0
          %v9394 = vadd.f32 %v9335, %v9393
          %9395 = vadd.xlane.f32.xlu0 %v9394
          %v9396 = vpop.xlane.xlu0 %9395
          %v9397 = vsel %vm1019, %v9338, 0.0
          %v9398 = vadd.f32 %v9337, %v9397
          %9399 = vadd.xlane.f32.xlu0 %v9398
          %v9400 = vpop.xlane.xlu0 %9399
          %v9401 = vsel %vm1019, %v9340, 0.0
          %v9402 = vadd.f32 %v9339, %v9401
          %9403 = vadd.xlane.f32.xlu0 %v9402
          %v9404 = vpop.xlane.xlu0 %9403
          %v9405 = vmul.f32 %v9344, %v1090
          %v9406 = vmul.f32 %v9348, %v1090
          %v9407 = vmul.f32 %v9352, %v1090
          %v9408 = vmul.f32 %v9356, %v1090
          %v9409 = vmul.f32 %v9360, %v1090
          %v9410 = vmul.f32 %v9364, %v1090
          %v9411 = vmul.f32 %v9368, %v1090
          %v9412 = vmul.f32 %v9372, %v1090
          %v9413 = vmul.f32 %v9376, %v1090
          %v9414 = vmul.f32 %v9380, %v1090
          %v9415 = vmul.f32 %v9384, %v1090
          %v9416 = vmul.f32 %v9388, %v1090
          %v9417 = vmul.f32 %v9392, %v1090
          %v9418 = vmul.f32 %v9396, %v1090
          %v9419 = vmul.f32 %v9400, %v1090
          %v9420 = vmul.f32 %v9404, %v1090
          %v9421 = vadd.f32 %v9405, 1e-05
          %v9422 = vadd.f32 %v9406, 1e-05
          %v9423 = vadd.f32 %v9407, 1e-05
          %v9424 = vadd.f32 %v9408, 1e-05
          %v9425 = vadd.f32 %v9409, 1e-05
          %v9426 = vadd.f32 %v9410, 1e-05
          %v9427 = vadd.f32 %v9411, 1e-05
          %v9428 = vadd.f32 %v9412, 1e-05
          %v9429 = vadd.f32 %v9413, 1e-05
          %v9430 = vadd.f32 %v9414, 1e-05
          %v9431 = vadd.f32 %v9415, 1e-05
          %v9432 = vadd.f32 %v9416, 1e-05
          %v9433 = vadd.f32 %v9417, 1e-05
          %v9434 = vadd.f32 %v9418, 1e-05
          %v9435 = vadd.f32 %v9419, 1e-05
          %v9436 = vadd.f32 %v9420, 1e-05
          %v9437 = vrsqrt.pop %v9421
          %v9438 = vmul.f32 %v9437, %v9421
          %v9439 = vmul.f32 %v9438, %v9437
          %v9440 = vmul.f32 0.5, %v9439
          %v9441 = vsub.f32 1.5, %v9440
          %v9442 = vmul.f32 %v9437, %v9441
          %vm9443 = vweird.f32 %v9421
          %vm9444 = vweird.f32 %v9437
          %vm9445 = vmor %vm9443, %vm9444
          %v9446 = vsel %vm9445, %v9437, %v9442
          %v9447 = vrsqrt.pop %v9422
          %v9448 = vmul.f32 %v9447, %v9422
          %v9449 = vmul.f32 %v9448, %v9447
          %v9450 = vmul.f32 0.5, %v9449
          %v9451 = vsub.f32 1.5, %v9450
          %v9452 = vmul.f32 %v9447, %v9451
          %vm9453 = vweird.f32 %v9422
          %vm9454 = vweird.f32 %v9447
          %vm9455 = vmor %vm9453, %vm9454
          %v9456 = vsel %vm9455, %v9447, %v9452
          %v9457 = vrsqrt.pop %v9423
          %v9458 = vmul.f32 %v9457, %v9423
          %v9459 = vmul.f32 %v9458, %v9457
          %v9460 = vmul.f32 0.5, %v9459
          %v9461 = vsub.f32 1.5, %v9460
          %v9462 = vmul.f32 %v9457, %v9461
          %vm9463 = vweird.f32 %v9423
          %vm9464 = vweird.f32 %v9457
          %vm9465 = vmor %vm9463, %vm9464
          %v9466 = vsel %vm9465, %v9457, %v9462
          %v9467 = vrsqrt.pop %v9424
          %v9468 = vmul.f32 %v9467, %v9424
          %v9469 = vmul.f32 %v9468, %v9467
          %v9470 = vmul.f32 0.5, %v9469
          %v9471 = vsub.f32 1.5, %v9470
          %v9472 = vmul.f32 %v9467, %v9471
          %vm9473 = vweird.f32 %v9424
          %vm9474 = vweird.f32 %v9467
          %vm9475 = vmor %vm9473, %vm9474
          %v9476 = vsel %vm9475, %v9467, %v9472
          %v9477 = vrsqrt.pop %v9425
          %v9478 = vmul.f32 %v9477, %v9425
          %v9479 = vmul.f32 %v9478, %v9477
          %v9480 = vmul.f32 0.5, %v9479
          %v9481 = vsub.f32 1.5, %v9480
          %v9482 = vmul.f32 %v9477, %v9481
          %vm9483 = vweird.f32 %v9425
          %vm9484 = vweird.f32 %v9477
          %vm9485 = vmor %vm9483, %vm9484
          %v9486 = vsel %vm9485, %v9477, %v9482
          %v9487 = vrsqrt.pop %v9426
          %v9488 = vmul.f32 %v9487, %v9426
          %v9489 = vmul.f32 %v9488, %v9487
          %v9490 = vmul.f32 0.5, %v9489
          %v9491 = vsub.f32 1.5, %v9490
          %v9492 = vmul.f32 %v9487, %v9491
          %vm9493 = vweird.f32 %v9426
          %vm9494 = vweird.f32 %v9487
          %vm9495 = vmor %vm9493, %vm9494
          %v9496 = vsel %vm9495, %v9487, %v9492
          %v9497 = vrsqrt.pop %v9427
          %v9498 = vmul.f32 %v9497, %v9427
          %v9499 = vmul.f32 %v9498, %v9497
          %v9500 = vmul.f32 0.5, %v9499
          %v9501 = vsub.f32 1.5, %v9500
          %v9502 = vmul.f32 %v9497, %v9501
          %vm9503 = vweird.f32 %v9427
          %vm9504 = vweird.f32 %v9497
          %vm9505 = vmor %vm9503, %vm9504
          %v9506 = vsel %vm9505, %v9497, %v9502
          %v9507 = vrsqrt.pop %v9428
          %v9508 = vmul.f32 %v9507, %v9428
          %v9509 = vmul.f32 %v9508, %v9507
          %v9510 = vmul.f32 0.5, %v9509
          %v9511 = vsub.f32 1.5, %v9510
          %v9512 = vmul.f32 %v9507, %v9511
          %vm9513 = vweird.f32 %v9428
          %vm9514 = vweird.f32 %v9507
          %vm9515 = vmor %vm9513, %vm9514
          %v9516 = vsel %vm9515, %v9507, %v9512
          %v9517 = vrsqrt.pop %v9429
          %v9518 = vmul.f32 %v9517, %v9429
          %v9519 = vmul.f32 %v9518, %v9517
          %v9520 = vmul.f32 0.5, %v9519
          %v9521 = vsub.f32 1.5, %v9520
          %v9522 = vmul.f32 %v9517, %v9521
          %vm9523 = vweird.f32 %v9429
          %vm9524 = vweird.f32 %v9517
          %vm9525 = vmor %vm9523, %vm9524
          %v9526 = vsel %vm9525, %v9517, %v9522
          %v9527 = vrsqrt.pop %v9430
          %v9528 = vmul.f32 %v9527, %v9430
          %v9529 = vmul.f32 %v9528, %v9527
          %v9530 = vmul.f32 0.5, %v9529
          %v9531 = vsub.f32 1.5, %v9530
          %v9532 = vmul.f32 %v9527, %v9531
          %vm9533 = vweird.f32 %v9430
          %vm9534 = vweird.f32 %v9527
          %vm9535 = vmor %vm9533, %vm9534
          %v9536 = vsel %vm9535, %v9527, %v9532
          %v9537 = vrsqrt.pop %v9431
          %v9538 = vmul.f32 %v9537, %v9431
          %v9539 = vmul.f32 %v9538, %v9537
          %v9540 = vmul.f32 0.5, %v9539
          %v9541 = vsub.f32 1.5, %v9540
          %v9542 = vmul.f32 %v9537, %v9541
          %vm9543 = vweird.f32 %v9431
          %vm9544 = vweird.f32 %v9537
          %vm9545 = vmor %vm9543, %vm9544
          %v9546 = vsel %vm9545, %v9537, %v9542
          %v9547 = vrsqrt.pop %v9432
          %v9548 = vmul.f32 %v9547, %v9432
          %v9549 = vmul.f32 %v9548, %v9547
          %v9550 = vmul.f32 0.5, %v9549
          %v9551 = vsub.f32 1.5, %v9550
          %v9552 = vmul.f32 %v9547, %v9551
          %vm9553 = vweird.f32 %v9432
          %vm9554 = vweird.f32 %v9547
          %vm9555 = vmor %vm9553, %vm9554
          %v9556 = vsel %vm9555, %v9547, %v9552
          %v9557 = vrsqrt.pop %v9433
          %v9558 = vmul.f32 %v9557, %v9433
          %v9559 = vmul.f32 %v9558, %v9557
          %v9560 = vmul.f32 0.5, %v9559
          %v9561 = vsub.f32 1.5, %v9560
          %v9562 = vmul.f32 %v9557, %v9561
          %vm9563 = vweird.f32 %v9433
          %vm9564 = vweird.f32 %v9557
          %vm9565 = vmor %vm9563, %vm9564
          %v9566 = vsel %vm9565, %v9557, %v9562
          %v9567 = vrsqrt.pop %v9434
          %v9568 = vmul.f32 %v9567, %v9434
          %v9569 = vmul.f32 %v9568, %v9567
          %v9570 = vmul.f32 0.5, %v9569
          %v9571 = vsub.f32 1.5, %v9570
          %v9572 = vmul.f32 %v9567, %v9571
          %vm9573 = vweird.f32 %v9434
          %vm9574 = vweird.f32 %v9567
          %vm9575 = vmor %vm9573, %vm9574
          %v9576 = vsel %vm9575, %v9567, %v9572
          %v9577 = vrsqrt.pop %v9435
          %v9578 = vmul.f32 %v9577, %v9435
          %v9579 = vmul.f32 %v9578, %v9577
          %v9580 = vmul.f32 0.5, %v9579
          %v9581 = vsub.f32 1.5, %v9580
          %v9582 = vmul.f32 %v9577, %v9581
          %vm9583 = vweird.f32 %v9435
          %vm9584 = vweird.f32 %v9577
          %vm9585 = vmor %vm9583, %vm9584
          %v9586 = vsel %vm9585, %v9577, %v9582
          %v9587 = vrsqrt.pop %v9436
          %v9588 = vmul.f32 %v9587, %v9436
          %v9589 = vmul.f32 %v9588, %v9587
          %v9590 = vmul.f32 0.5, %v9589
          %v9591 = vsub.f32 1.5, %v9590
          %v9592 = vmul.f32 %v9587, %v9591
          %vm9593 = vweird.f32 %v9436
          %vm9594 = vweird.f32 %v9587
          %vm9595 = vmor %vm9593, %vm9594
          %v9596 = vsel %vm9595, %v9587, %v9592
          %v9597 = vmul.f32 %v9277, %v9446
          %v9598 = vmul.f32 %v9278, %v9446
          %v9599 = vmul.f32 %v9279, %v9456
          %v9600 = vmul.f32 %v9280, %v9456
          %v9601 = vmul.f32 %v9281, %v9466
          %v9602 = vmul.f32 %v9282, %v9466
          %v9603 = vmul.f32 %v9283, %v9476
          %v9604 = vmul.f32 %v9284, %v9476
          %v9605 = vmul.f32 %v9285, %v9486
          %v9606 = vmul.f32 %v9286, %v9486
          %v9607 = vmul.f32 %v9287, %v9496
          %v9608 = vmul.f32 %v9288, %v9496
          %v9609 = vmul.f32 %v9289, %v9506
          %v9610 = vmul.f32 %v9290, %v9506
          %v9611 = vmul.f32 %v9291, %v9516
          %v9612 = vmul.f32 %v9292, %v9516
          %v9613 = vmul.f32 %v9293, %v9526
          %v9614 = vmul.f32 %v9294, %v9526
          %v9615 = vmul.f32 %v9295, %v9536
          %v9616 = vmul.f32 %v9296, %v9536
          %v9617 = vmul.f32 %v9297, %v9546
          %v9618 = vmul.f32 %v9298, %v9546
          %v9619 = vmul.f32 %v9299, %v9556
          %v9620 = vmul.f32 %v9300, %v9556
          %v9621 = vmul.f32 %v9301, %v9566
          %v9622 = vmul.f32 %v9302, %v9566
          %v9623 = vmul.f32 %v9303, %v9576
          %v9624 = vmul.f32 %v9304, %v9576
          %v9625 = vmul.f32 %v9305, %v9586
          %v9626 = vmul.f32 %v9306, %v9586
          %v9627 = vmul.f32 %v9307, %v9596
          %v9628 = vmul.f32 %v9308, %v9596
          %v9630 = vperm.slane %v9194, 0
          %v9631 = vperm.slane %v9194, 1
          %v9634 = vmul.f32 %v9597, %v9630
          %v9635 = vmul.f32 %v9598, %v9631
          %v9636 = vmul.f32 %v9599, %v9630
          %v9637 = vmul.f32 %v9600, %v9631
          %v9638 = vmul.f32 %v9601, %v9630
          %v9639 = vmul.f32 %v9602, %v9631
          %v9640 = vmul.f32 %v9603, %v9630
          %v9641 = vmul.f32 %v9604, %v9631
          %v9642 = vmul.f32 %v9605, %v9630
          %v9643 = vmul.f32 %v9606, %v9631
          %v9644 = vmul.f32 %v9607, %v9630
          %v9645 = vmul.f32 %v9608, %v9631
          %v9646 = vmul.f32 %v9609, %v9630
          %v9647 = vmul.f32 %v9610, %v9631
          %v9648 = vmul.f32 %v9611, %v9630
          %v9649 = vmul.f32 %v9612, %v9631
          %v9650 = vmul.f32 %v9613, %v9630
          %v9651 = vmul.f32 %v9614, %v9631
          %v9652 = vmul.f32 %v9615, %v9630
          %v9653 = vmul.f32 %v9616, %v9631
          %v9654 = vmul.f32 %v9617, %v9630
          %v9655 = vmul.f32 %v9618, %v9631
          %v9656 = vmul.f32 %v9619, %v9630
          %v9657 = vmul.f32 %v9620, %v9631
          %v9658 = vmul.f32 %v9621, %v9630
          %v9659 = vmul.f32 %v9622, %v9631
          %v9660 = vmul.f32 %v9623, %v9630
          %v9661 = vmul.f32 %v9624, %v9631
          %v9662 = vmul.f32 %v9625, %v9630
          %v9663 = vmul.f32 %v9626, %v9631
          %v9664 = vmul.f32 %v9627, %v9630
          %v9665 = vmul.f32 %v9628, %v9631
          %v9667 = vperm.slane %v9196, 0
          %v9668 = vperm.slane %v9196, 1
          %v9671 = vadd.f32 %v9634, %v9667
          %v9672 = vadd.f32 %v9635, %v9668
          %v9673 = vadd.f32 %v9636, %v9667
          %v9674 = vadd.f32 %v9637, %v9668
          %v9675 = vadd.f32 %v9638, %v9667
          %v9676 = vadd.f32 %v9639, %v9668
          %v9677 = vadd.f32 %v9640, %v9667
          %v9678 = vadd.f32 %v9641, %v9668
          %v9679 = vadd.f32 %v9642, %v9667
          %v9680 = vadd.f32 %v9643, %v9668
          %v9681 = vadd.f32 %v9644, %v9667
          %v9682 = vadd.f32 %v9645, %v9668
          %v9683 = vadd.f32 %v9646, %v9667
          %v9684 = vadd.f32 %v9647, %v9668
          %v9685 = vadd.f32 %v9648, %v9667
          %v9686 = vadd.f32 %v9649, %v9668
          %v9687 = vadd.f32 %v9650, %v9667
          %v9688 = vadd.f32 %v9651, %v9668
          %v9689 = vadd.f32 %v9652, %v9667
          %v9690 = vadd.f32 %v9653, %v9668
          %v9691 = vadd.f32 %v9654, %v9667
          %v9692 = vadd.f32 %v9655, %v9668
          %v9693 = vadd.f32 %v9656, %v9667
          %v9694 = vadd.f32 %v9657, %v9668
          %v9695 = vadd.f32 %v9658, %v9667
          %v9696 = vadd.f32 %v9659, %v9668
          %v9697 = vadd.f32 %v9660, %v9667
          %v9698 = vadd.f32 %v9661, %v9668
          %v9699 = vadd.f32 %v9662, %v9667
          %v9700 = vadd.f32 %v9663, %v9668
          %v9701 = vadd.f32 %v9664, %v9667
          %v9702 = vadd.f32 %v9665, %v9668
          %v9703 = vpack.c.bf16 %v9673, %v9671
          %v9704 = vpack.c.bf16 %v9674, %v9672
          %v9705 = vpack.c.bf16 %v9677, %v9675
          %v9706 = vpack.c.bf16 %v9678, %v9676
          %v9707 = vpack.c.bf16 %v9681, %v9679
          %v9708 = vpack.c.bf16 %v9682, %v9680
          %v9709 = vpack.c.bf16 %v9685, %v9683
          %v9710 = vpack.c.bf16 %v9686, %v9684
          %v9711 = vpack.c.bf16 %v9689, %v9687
          %v9712 = vpack.c.bf16 %v9690, %v9688
          %v9713 = vpack.c.bf16 %v9693, %v9691
          %v9714 = vpack.c.bf16 %v9694, %v9692
          %v9715 = vpack.c.bf16 %v9697, %v9695
          %v9716 = vpack.c.bf16 %v9698, %v9696
          %v9717 = vpack.c.bf16 %v9701, %v9699
          %v9718 = vpack.c.bf16 %v9702, %v9700
          %v9719 = vld [vmem:[%s14] sm:$0xf]
          %v9720 = vld [vmem:[%s12] sm:$0x1]
          %9721 = vmatpush.bf16.msra.mxu0 %v9717
          %9722 = vmatpush.bf16.msra.mxu0 %v9715
          %9723 = vmatpush.bf16.msra.mxu0 %v9713
          %9724 = vmatpush.bf16.msra.mxu0 %v9711
          %9725 = vmatpush.bf16.msra.mxu0 %v9709
          %9726 = vmatpush.bf16.msra.mxu0 %v9707
          %9727 = vmatpush.bf16.msra.mxu0 %v9705
          %9728 = vmatpush.bf16.msra.mxu0 %v9703
          %9729 = vmatmul.bf16.gmra.mxu0 %v9720
          %v9730 = vpop.f32.mrf.mxu0
          %v9731 = vadd.f32 0.0, %v9730
          %v9732 = vpop.f32.mrf.mxu0
          %9733 = vdwg.mxu0
          %9734 = vmatpush.bf16.msra.mxu0 %v9718
          %9735 = vmatpush.bf16.msra.mxu0 %v9716
          %9736 = vmatpush.bf16.msra.mxu0 %v9714
          %9737 = vmatpush.bf16.msra.mxu0 %v9712
          %9738 = vmatpush.bf16.msra.mxu0 %v9710
          %9739 = vmatpush.bf16.msra.mxu0 %v9708
          %9740 = vmatpush.bf16.msra.mxu0 %v9706
          %9741 = vmatpush.bf16.msra.mxu0 %v9704
          %9742 = vmatmul.bf16.gmra.mxu0 %v9720
          %v9743 = vpop.f32.mrf.mxu0
          %v9744 = vadd.f32 0.0, %v9743
          %v9745 = vpop.f32.mrf.mxu0
          %9746 = vdwg.mxu0
          %v9747 = vld [vmem:[%s13] sm:$0xff]
          %v9748 = vld [vmem:[%s13 + $0x8] sm:$0xff]
          %v9749 = vld [vmem:[%s13 + $0x10] sm:$0xff]
          %v9750 = vld [vmem:[%s13 + $0x18] sm:$0xff]
          %v9751 = vld [vmem:[%s13 + $0x20] sm:$0xff]
          %v9752 = vld [vmem:[%s13 + $0x28] sm:$0xff]
          %v9753 = vld [vmem:[%s13 + $0x30] sm:$0xff]
          %v9754 = vld [vmem:[%s13 + $0x38] sm:$0xff]
          %v9755 = vld [vmem:[%s13 + $0x40] sm:$0xff]
          %v9756 = vld [vmem:[%s13 + $0x48] sm:$0xff]
          %v9757 = vld [vmem:[%s13 + $0x50] sm:$0xff]
          %v9758 = vld [vmem:[%s13 + $0x58] sm:$0xff]
          %v9759 = vld [vmem:[%s13 + $0x60] sm:$0xff]
          %v9760 = vld [vmem:[%s13 + $0x68] sm:$0xff]
          %v9761 = vld [vmem:[%s13 + $0x70] sm:$0xff]
          %v9762 = vld [vmem:[%s13 + $0x78] sm:$0xff]
          %v9763 = vld [vmem:[%s13 + $0x80] sm:$0xff]
          %v9764 = vld [vmem:[%s13 + $0x88] sm:$0xff]
          %v9765 = vld [vmem:[%s13 + $0x90] sm:$0xff]
          %v9766 = vld [vmem:[%s13 + $0x98] sm:$0xff]
          %v9767 = vld [vmem:[%s13 + $0xa0] sm:$0xff]
          %v9768 = vld [vmem:[%s13 + $0xa8] sm:$0xff]
          %v9769 = vld [vmem:[%s13 + $0xb0] sm:$0xff]
          %v9770 = vld [vmem:[%s13 + $0xb8] sm:$0xff]
          %v9771 = vld [vmem:[%s13 + $0xc0] sm:$0xff]
          %v9772 = vld [vmem:[%s13 + $0xc8] sm:$0xff]
          %v9773 = vld [vmem:[%s13 + $0xd0] sm:$0xff]
          %v9774 = vld [vmem:[%s13 + $0xd8] sm:$0xff]
          %v9775 = vld [vmem:[%s13 + $0xe0] sm:$0xff]
          %v9776 = vld [vmem:[%s13 + $0xe8] sm:$0xff]
          %v9777 = vld [vmem:[%s13 + $0xf0] sm:$0xff]
          %v9778 = vld [vmem:[%s13 + $0xf8] sm:$0xff]
          %v9779 = vld [vmem:[%s13 + $0x100] sm:$0xff]
          %v9780 = vld [vmem:[%s13 + $0x108] sm:$0xff]
          %v9781 = vld [vmem:[%s13 + $0x110] sm:$0xff]
          %v9782 = vld [vmem:[%s13 + $0x118] sm:$0xff]
          %v9783 = vld [vmem:[%s13 + $0x120] sm:$0xff]
          %v9784 = vld [vmem:[%s13 + $0x128] sm:$0xff]
          %v9785 = vld [vmem:[%s13 + $0x130] sm:$0xff]
          %v9786 = vld [vmem:[%s13 + $0x138] sm:$0xff]
          %v9787 = vld [vmem:[%s13 + $0x140] sm:$0xff]
          %v9788 = vld [vmem:[%s13 + $0x148] sm:$0xff]
          %v9789 = vld [vmem:[%s13 + $0x150] sm:$0xff]
          %v9790 = vld [vmem:[%s13 + $0x158] sm:$0xff]
          %v9791 = vld [vmem:[%s13 + $0x160] sm:$0xff]
          %v9792 = vld [vmem:[%s13 + $0x168] sm:$0xff]
          %v9793 = vld [vmem:[%s13 + $0x170] sm:$0xff]
          %v9794 = vld [vmem:[%s13 + $0x178] sm:$0xff]
          %v9795 = vpack.c.bf16 %v9731, %v9731
          %v9796 = vpack.c.bf16 %v9744, %v9744
          %v9845 = vunpack.c.l.b16 %v9747
          %v9846 = vunpack.c.h.b16 %v9747
          %v9847 = vunpack.c.l.b16 %v9748
          %v9848 = vunpack.c.h.b16 %v9748
          %v9849 = vunpack.c.l.b16 %v9749
          %v9850 = vunpack.c.h.b16 %v9749
          %v9851 = vunpack.c.l.b16 %v9750
          %v9852 = vunpack.c.h.b16 %v9750
          %v9853 = vunpack.c.l.b16 %v9751
          %v9854 = vunpack.c.h.b16 %v9751
          %v9855 = vunpack.c.l.b16 %v9752
          %v9856 = vunpack.c.h.b16 %v9752
          %v9857 = vunpack.c.l.b16 %v9753
          %v9858 = vunpack.c.h.b16 %v9753
          %v9859 = vunpack.c.l.b16 %v9754
          %v9860 = vunpack.c.h.b16 %v9754
          %v9861 = vunpack.c.l.b16 %v9755
          %v9862 = vunpack.c.h.b16 %v9755
          %v9863 = vunpack.c.l.b16 %v9756
          %v9864 = vunpack.c.h.b16 %v9756
          %v9865 = vunpack.c.l.b16 %v9757
          %v9866 = vunpack.c.h.b16 %v9757
          %v9867 = vunpack.c.l.b16 %v9758
          %v9868 = vunpack.c.h.b16 %v9758
          %v9869 = vunpack.c.l.b16 %v9759
          %v9870 = vunpack.c.h.b16 %v9759
          %v9871 = vunpack.c.l.b16 %v9760
          %v9872 = vunpack.c.h.b16 %v9760
          %v9873 = vunpack.c.l.b16 %v9761
          %v9874 = vunpack.c.h.b16 %v9761
          %v9875 = vunpack.c.l.b16 %v9762
          %v9876 = vunpack.c.h.b16 %v9762
          %v9877 = vunpack.c.l.b16 %v9763
          %v9878 = vunpack.c.h.b16 %v9763
          %v9879 = vunpack.c.l.b16 %v9764
          %v9880 = vunpack.c.h.b16 %v9764
          %v9881 = vunpack.c.l.b16 %v9765
          %v9882 = vunpack.c.h.b16 %v9765
          %v9883 = vunpack.c.l.b16 %v9766
          %v9884 = vunpack.c.h.b16 %v9766
          %v9885 = vunpack.c.l.b16 %v9767
          %v9886 = vunpack.c.h.b16 %v9767
          %v9887 = vunpack.c.l.b16 %v9768
          %v9888 = vunpack.c.h.b16 %v9768
          %v9889 = vunpack.c.l.b16 %v9769
          %v9890 = vunpack.c.h.b16 %v9769
          %v9891 = vunpack.c.l.b16 %v9770
          %v9892 = vunpack.c.h.b16 %v9770
          %v9893 = vunpack.c.l.b16 %v9771
          %v9894 = vunpack.c.h.b16 %v9771
          %v9895 = vunpack.c.l.b16 %v9772
          %v9896 = vunpack.c.h.b16 %v9772
          %v9897 = vunpack.c.l.b16 %v9773
          %v9898 = vunpack.c.h.b16 %v9773
          %v9899 = vunpack.c.l.b16 %v9774
          %v9900 = vunpack.c.h.b16 %v9774
          %v9901 = vunpack.c.l.b16 %v9775
          %v9902 = vunpack.c.h.b16 %v9775
          %v9903 = vunpack.c.l.b16 %v9776
          %v9904 = vunpack.c.h.b16 %v9776
          %v9905 = vunpack.c.l.b16 %v9777
          %v9906 = vunpack.c.h.b16 %v9777
          %v9907 = vunpack.c.l.b16 %v9778
          %v9908 = vunpack.c.h.b16 %v9778
          %v9909 = vunpack.c.l.b16 %v9779
          %v9910 = vunpack.c.h.b16 %v9779
          %v9911 = vunpack.c.l.b16 %v9780
          %v9912 = vunpack.c.h.b16 %v9780
          %v9913 = vunpack.c.l.b16 %v9781
          %v9914 = vunpack.c.h.b16 %v9781
          %v9915 = vunpack.c.l.b16 %v9782
          %v9916 = vunpack.c.h.b16 %v9782
          %v9917 = vunpack.c.l.b16 %v9783
          %v9918 = vunpack.c.h.b16 %v9783
          %v9919 = vunpack.c.l.b16 %v9784
          %v9920 = vunpack.c.h.b16 %v9784
          %v9921 = vunpack.c.l.b16 %v9785
          %v9922 = vunpack.c.h.b16 %v9785
          %v9923 = vunpack.c.l.b16 %v9786
          %v9924 = vunpack.c.h.b16 %v9786
          %v9925 = vunpack.c.l.b16 %v9787
          %v9926 = vunpack.c.h.b16 %v9787
          %v9927 = vunpack.c.l.b16 %v9788
          %v9928 = vunpack.c.h.b16 %v9788
          %v9929 = vunpack.c.l.b16 %v9789
          %v9930 = vunpack.c.h.b16 %v9789
          %v9931 = vunpack.c.l.b16 %v9790
          %v9932 = vunpack.c.h.b16 %v9790
          %v9933 = vunpack.c.l.b16 %v9791
          %v9934 = vunpack.c.h.b16 %v9791
          %v9935 = vunpack.c.l.b16 %v9792
          %v9936 = vunpack.c.h.b16 %v9792
          %v9937 = vunpack.c.l.b16 %v9793
          %v9938 = vunpack.c.h.b16 %v9793
          %v9939 = vunpack.c.l.b16 %v9794
          %v9940 = vunpack.c.h.b16 %v9794
          %v9941 = vpack.c.b16 %v9849, %v9845
          %v9942 = vpack.c.b16 %v9850, %v9846
          %v9943 = vpack.c.b16 %v9851, %v9847
          %v9944 = vpack.c.b16 %v9852, %v9848
          %v9945 = vpack.c.b16 %v9857, %v9853
          %v9946 = vpack.c.b16 %v9858, %v9854
          %v9947 = vpack.c.b16 %v9859, %v9855
          %v9948 = vpack.c.b16 %v9860, %v9856
          %v9949 = vpack.c.b16 %v9865, %v9861
          %v9950 = vpack.c.b16 %v9866, %v9862
          %v9951 = vpack.c.b16 %v9867, %v9863
          %v9952 = vpack.c.b16 %v9868, %v9864
          %v9953 = vpack.c.b16 %v9873, %v9869
          %v9954 = vpack.c.b16 %v9874, %v9870
          %v9955 = vpack.c.b16 %v9875, %v9871
          %v9956 = vpack.c.b16 %v9876, %v9872
          %v9957 = vpack.c.b16 %v9881, %v9877
          %v9958 = vpack.c.b16 %v9882, %v9878
          %v9959 = vpack.c.b16 %v9883, %v9879
          %v9960 = vpack.c.b16 %v9884, %v9880
          %v9961 = vpack.c.b16 %v9889, %v9885
          %v9962 = vpack.c.b16 %v9890, %v9886
          %v9963 = vpack.c.b16 %v9891, %v9887
          %v9964 = vpack.c.b16 %v9892, %v9888
          %v9965 = vpack.c.b16 %v9897, %v9893
          %v9966 = vpack.c.b16 %v9898, %v9894
          %v9967 = vpack.c.b16 %v9899, %v9895
          %v9968 = vpack.c.b16 %v9900, %v9896
          %v9969 = vpack.c.b16 %v9905, %v9901
          %v9970 = vpack.c.b16 %v9906, %v9902
          %v9971 = vpack.c.b16 %v9907, %v9903
          %v9972 = vpack.c.b16 %v9908, %v9904
          %v9973 = vpack.c.b16 %v9913, %v9909
          %v9974 = vpack.c.b16 %v9914, %v9910
          %v9975 = vpack.c.b16 %v9915, %v9911
          %v9976 = vpack.c.b16 %v9916, %v9912
          %v9977 = vpack.c.b16 %v9921, %v9917
          %v9978 = vpack.c.b16 %v9922, %v9918
          %v9979 = vpack.c.b16 %v9923, %v9919
          %v9980 = vpack.c.b16 %v9924, %v9920
          %v9981 = vpack.c.b16 %v9929, %v9925
          %v9982 = vpack.c.b16 %v9930, %v9926
          %v9983 = vpack.c.b16 %v9931, %v9927
          %v9984 = vpack.c.b16 %v9932, %v9928
          %v9985 = vpack.c.b16 %v9937, %v9933
          %v9986 = vpack.c.b16 %v9938, %v9934
          %v9987 = vpack.c.b16 %v9939, %v9935
          %v9988 = vpack.c.b16 %v9940, %v9936
          %v10038 = vsel %vm1019, %v9796, 0
          %10040 = vmatpush.bf16.msra.mxu0 %v9969
          %10041 = vmatpush.bf16.msra.mxu0 %v9965
          %10042 = vmatpush.bf16.msra.mxu0 %v9961
          %10043 = vmatpush.bf16.msra.mxu0 %v9957
          %10044 = vmatpush.bf16.msra.mxu0 %v9953
          %10045 = vmatpush.bf16.msra.mxu0 %v9949
          %10046 = vmatpush.bf16.msra.mxu0 %v9945
          %10047 = vmatpush.bf16.msra.mxu0 %v9941
          %10048 = vmatmul.bf16.gmra.mxu0 %v9795
          %v10049 = vpop.f32.mrf.mxu0
          %v10050 = vadd.f32 0.0, %v10049
          %v10051 = vpop.f32.mrf.mxu0
          %10052 = vdwg.mxu0
          %10053 = vmatpush.bf16.msra.mxu0 0
          %10054 = vmatpush.bf16.msra.mxu0 0
          %10055 = vmatpush.bf16.msra.mxu0 0
          %10056 = vmatpush.bf16.msra.mxu0 0
          %10057 = vmatpush.bf16.msra.mxu0 %v9985
          %10058 = vmatpush.bf16.msra.mxu0 %v9981
          %10059 = vmatpush.bf16.msra.mxu0 %v9977
          %10060 = vmatpush.bf16.msra.mxu0 %v9973
          %10061 = vmatmul.bf16.gmra.mxu0 %v10038
          %v10062 = vpop.f32.mrf.mxu0
          %v10063 = vadd.f32 %v10050, %v10062
          %v10064 = vpop.f32.mrf.mxu0
          %10065 = vdwg.mxu0
          %10066 = vmatpush.bf16.msra.mxu0 %v9970
          %10067 = vmatpush.bf16.msra.mxu0 %v9966
          %10068 = vmatpush.bf16.msra.mxu0 %v9962
          %10069 = vmatpush.bf16.msra.mxu0 %v9958
          %10070 = vmatpush.bf16.msra.mxu0 %v9954
          %10071 = vmatpush.bf16.msra.mxu0 %v9950
          %10072 = vmatpush.bf16.msra.mxu0 %v9946
          %10073 = vmatpush.bf16.msra.mxu0 %v9942
          %10074 = vmatmul.bf16.gmra.mxu0 %v9795
          %v10075 = vpop.f32.mrf.mxu0
          %v10076 = vadd.f32 0.0, %v10075
          %v10077 = vpop.f32.mrf.mxu0
          %10078 = vdwg.mxu0
          %10079 = vmatpush.bf16.msra.mxu0 0
          %10080 = vmatpush.bf16.msra.mxu0 0
          %10081 = vmatpush.bf16.msra.mxu0 0
          %10082 = vmatpush.bf16.msra.mxu0 0
          %10083 = vmatpush.bf16.msra.mxu0 %v9986
          %10084 = vmatpush.bf16.msra.mxu0 %v9982
          %10085 = vmatpush.bf16.msra.mxu0 %v9978
          %10086 = vmatpush.bf16.msra.mxu0 %v9974
          %10087 = vmatmul.bf16.gmra.mxu0 %v10038
          %v10088 = vpop.f32.mrf.mxu0
          %v10089 = vadd.f32 %v10076, %v10088
          %v10090 = vpop.f32.mrf.mxu0
          %10091 = vdwg.mxu0
          %10092 = vmatpush.bf16.msra.mxu0 %v9971
          %10093 = vmatpush.bf16.msra.mxu0 %v9967
          %10094 = vmatpush.bf16.msra.mxu0 %v9963
          %10095 = vmatpush.bf16.msra.mxu0 %v9959
          %10096 = vmatpush.bf16.msra.mxu0 %v9955
          %10097 = vmatpush.bf16.msra.mxu0 %v9951
          %10098 = vmatpush.bf16.msra.mxu0 %v9947
          %10099 = vmatpush.bf16.msra.mxu0 %v9943
          %10100 = vmatmul.bf16.gmra.mxu0 %v9795
          %v10101 = vpop.f32.mrf.mxu0
          %v10102 = vadd.f32 0.0, %v10101
          %v10103 = vpop.f32.mrf.mxu0
          %10104 = vdwg.mxu0
          %10105 = vmatpush.bf16.msra.mxu0 0
          %10106 = vmatpush.bf16.msra.mxu0 0
          %10107 = vmatpush.bf16.msra.mxu0 0
          %10108 = vmatpush.bf16.msra.mxu0 0
          %10109 = vmatpush.bf16.msra.mxu0 %v9987
          %10110 = vmatpush.bf16.msra.mxu0 %v9983
          %10111 = vmatpush.bf16.msra.mxu0 %v9979
          %10112 = vmatpush.bf16.msra.mxu0 %v9975
          %10113 = vmatmul.bf16.gmra.mxu0 %v10038
          %v10114 = vpop.f32.mrf.mxu0
          %v10115 = vadd.f32 %v10102, %v10114
          %v10116 = vpop.f32.mrf.mxu0
          %10117 = vdwg.mxu0
          %10118 = vmatpush.bf16.msra.mxu0 %v9972
          %10119 = vmatpush.bf16.msra.mxu0 %v9968
          %10120 = vmatpush.bf16.msra.mxu0 %v9964
          %10121 = vmatpush.bf16.msra.mxu0 %v9960
          %10122 = vmatpush.bf16.msra.mxu0 %v9956
          %10123 = vmatpush.bf16.msra.mxu0 %v9952
          %10124 = vmatpush.bf16.msra.mxu0 %v9948
          %10125 = vmatpush.bf16.msra.mxu0 %v9944
          %10126 = vmatmul.bf16.gmra.mxu0 %v9795
          %v10127 = vpop.f32.mrf.mxu0
          %v10128 = vadd.f32 0.0, %v10127
          %v10129 = vpop.f32.mrf.mxu0
          %10130 = vdwg.mxu0
          %10131 = vmatpush.bf16.msra.mxu0 0
          %10132 = vmatpush.bf16.msra.mxu0 0
          %10133 = vmatpush.bf16.msra.mxu0 0
          %10134 = vmatpush.bf16.msra.mxu0 0
          %10135 = vmatpush.bf16.msra.mxu0 %v9988
          %10136 = vmatpush.bf16.msra.mxu0 %v9984
          %10137 = vmatpush.bf16.msra.mxu0 %v9980
          %10138 = vmatpush.bf16.msra.mxu0 %v9976
          %10139 = vmatmul.bf16.gmra.mxu0 %v10038
          %v10140 = vpop.f32.mrf.mxu0
          %v10141 = vadd.f32 %v10128, %v10140
          %v10142 = vpop.f32.mrf.mxu0
          %10143 = vdwg.mxu0
          %v10145 = vperm.slane %v9719, 0
          %v10146 = vperm.slane %v9719, 1
          %v10147 = vperm.slane %v9719, 2
          %v10148 = vperm.slane %v9719, 3
          %v10153 = vadd.f32 %v10145, %v10063
          %v10154 = vadd.f32 %v10146, %v10089
          %v10155 = vadd.f32 %v10147, %v10115
          %v10156 = vadd.f32 %v10148, %v10141
          %s10157 = scalar_lea.vmem %s12, 1
          %v10158 = vld [vmem:[%s10157] sm:$0x1]
          %10159 = vmatpush.bf16.msra.mxu0 %v9717
          %10160 = vmatpush.bf16.msra.mxu0 %v9715
          %10161 = vmatpush.bf16.msra.mxu0 %v9713
          %10162 = vmatpush.bf16.msra.mxu0 %v9711
          %10163 = vmatpush.bf16.msra.mxu0 %v9709
          %10164 = vmatpush.bf16.msra.mxu0 %v9707
          %10165 = vmatpush.bf16.msra.mxu0 %v9705
          %10166 = vmatpush.bf16.msra.mxu0 %v9703
          %10167 = vmatmul.bf16.gmra.mxu0 %v10158
          %v10168 = vpop.f32.mrf.mxu0
          %v10169 = vadd.f32 0.0, %v10168
          %v10170 = vpop.f32.mrf.mxu0
          %10171 = vdwg.mxu0
          %10172 = vmatpush.bf16.msra.mxu0 %v9718
          %10173 = vmatpush.bf16.msra.mxu0 %v9716
          %10174 = vmatpush.bf16.msra.mxu0 %v9714
          %10175 = vmatpush.bf16.msra.mxu0 %v9712
          %10176 = vmatpush.bf16.msra.mxu0 %v9710
          %10177 = vmatpush.bf16.msra.mxu0 %v9708
          %10178 = vmatpush.bf16.msra.mxu0 %v9706
          %10179 = vmatpush.bf16.msra.mxu0 %v9704
          %10180 = vmatmul.bf16.gmra.mxu0 %v10158
          %v10181 = vpop.f32.mrf.mxu0
          %v10182 = vadd.f32 0.0, %v10181
          %v10183 = vpop.f32.mrf.mxu0
          %10184 = vdwg.mxu0
          %s10185 = scalar_lea.vmem %s13, 384
          %v10186 = vld [vmem:[%s10185] sm:$0xff]
          %v10187 = vld [vmem:[%s10185 + $0x8] sm:$0xff]
          %v10188 = vld [vmem:[%s10185 + $0x10] sm:$0xff]
          %v10189 = vld [vmem:[%s10185 + $0x18] sm:$0xff]
          %v10190 = vld [vmem:[%s10185 + $0x20] sm:$0xff]
          %v10191 = vld [vmem:[%s10185 + $0x28] sm:$0xff]
          %v10192 = vld [vmem:[%s10185 + $0x30] sm:$0xff]
          %v10193 = vld [vmem:[%s10185 + $0x38] sm:$0xff]
          %v10194 = vld [vmem:[%s10185 + $0x40] sm:$0xff]
          %v10195 = vld [vmem:[%s10185 + $0x48] sm:$0xff]
          %v10196 = vld [vmem:[%s10185 + $0x50] sm:$0xff]
          %v10197 = vld [vmem:[%s10185 + $0x58] sm:$0xff]
          %v10198 = vld [vmem:[%s10185 + $0x60] sm:$0xff]
          %v10199 = vld [vmem:[%s10185 + $0x68] sm:$0xff]
          %v10200 = vld [vmem:[%s10185 + $0x70] sm:$0xff]
          %v10201 = vld [vmem:[%s10185 + $0x78] sm:$0xff]
          %v10202 = vld [vmem:[%s10185 + $0x80] sm:$0xff]
          %v10203 = vld [vmem:[%s10185 + $0x88] sm:$0xff]
          %v10204 = vld [vmem:[%s10185 + $0x90] sm:$0xff]
          %v10205 = vld [vmem:[%s10185 + $0x98] sm:$0xff]
          %v10206 = vld [vmem:[%s10185 + $0xa0] sm:$0xff]
          %v10207 = vld [vmem:[%s10185 + $0xa8] sm:$0xff]
          %v10208 = vld [vmem:[%s10185 + $0xb0] sm:$0xff]
          %v10209 = vld [vmem:[%s10185 + $0xb8] sm:$0xff]
          %v10210 = vld [vmem:[%s10185 + $0xc0] sm:$0xff]
          %v10211 = vld [vmem:[%s10185 + $0xc8] sm:$0xff]
          %v10212 = vld [vmem:[%s10185 + $0xd0] sm:$0xff]
          %v10213 = vld [vmem:[%s10185 + $0xd8] sm:$0xff]
          %v10214 = vld [vmem:[%s10185 + $0xe0] sm:$0xff]
          %v10215 = vld [vmem:[%s10185 + $0xe8] sm:$0xff]
          %v10216 = vld [vmem:[%s10185 + $0xf0] sm:$0xff]
          %v10217 = vld [vmem:[%s10185 + $0xf8] sm:$0xff]
          %v10218 = vld [vmem:[%s10185 + $0x100] sm:$0xff]
          %v10219 = vld [vmem:[%s10185 + $0x108] sm:$0xff]
          %v10220 = vld [vmem:[%s10185 + $0x110] sm:$0xff]
          %v10221 = vld [vmem:[%s10185 + $0x118] sm:$0xff]
          %v10222 = vld [vmem:[%s10185 + $0x120] sm:$0xff]
          %v10223 = vld [vmem:[%s10185 + $0x128] sm:$0xff]
          %v10224 = vld [vmem:[%s10185 + $0x130] sm:$0xff]
          %v10225 = vld [vmem:[%s10185 + $0x138] sm:$0xff]
          %v10226 = vld [vmem:[%s10185 + $0x140] sm:$0xff]
          %v10227 = vld [vmem:[%s10185 + $0x148] sm:$0xff]
          %v10228 = vld [vmem:[%s10185 + $0x150] sm:$0xff]
          %v10229 = vld [vmem:[%s10185 + $0x158] sm:$0xff]
          %v10230 = vld [vmem:[%s10185 + $0x160] sm:$0xff]
          %v10231 = vld [vmem:[%s10185 + $0x168] sm:$0xff]
          %v10232 = vld [vmem:[%s10185 + $0x170] sm:$0xff]
          %v10233 = vld [vmem:[%s10185 + $0x178] sm:$0xff]
          %v10234 = vpack.c.bf16 %v10169, %v10169
          %v10235 = vpack.c.bf16 %v10182, %v10182
          %v10284 = vunpack.c.l.b16 %v10186
          %v10285 = vunpack.c.h.b16 %v10186
          %v10286 = vunpack.c.l.b16 %v10187
          %v10287 = vunpack.c.h.b16 %v10187
          %v10288 = vunpack.c.l.b16 %v10188
          %v10289 = vunpack.c.h.b16 %v10188
          %v10290 = vunpack.c.l.b16 %v10189
          %v10291 = vunpack.c.h.b16 %v10189
          %v10292 = vunpack.c.l.b16 %v10190
          %v10293 = vunpack.c.h.b16 %v10190
          %v10294 = vunpack.c.l.b16 %v10191
          %v10295 = vunpack.c.h.b16 %v10191
          %v10296 = vunpack.c.l.b16 %v10192
          %v10297 = vunpack.c.h.b16 %v10192
          %v10298 = vunpack.c.l.b16 %v10193
          %v10299 = vunpack.c.h.b16 %v10193
          %v10300 = vunpack.c.l.b16 %v10194
          %v10301 = vunpack.c.h.b16 %v10194
          %v10302 = vunpack.c.l.b16 %v10195
          %v10303 = vunpack.c.h.b16 %v10195
          %v10304 = vunpack.c.l.b16 %v10196
          %v10305 = vunpack.c.h.b16 %v10196
          %v10306 = vunpack.c.l.b16 %v10197
          %v10307 = vunpack.c.h.b16 %v10197
          %v10308 = vunpack.c.l.b16 %v10198
          %v10309 = vunpack.c.h.b16 %v10198
          %v10310 = vunpack.c.l.b16 %v10199
          %v10311 = vunpack.c.h.b16 %v10199
          %v10312 = vunpack.c.l.b16 %v10200
          %v10313 = vunpack.c.h.b16 %v10200
          %v10314 = vunpack.c.l.b16 %v10201
          %v10315 = vunpack.c.h.b16 %v10201
          %v10316 = vunpack.c.l.b16 %v10202
          %v10317 = vunpack.c.h.b16 %v10202
          %v10318 = vunpack.c.l.b16 %v10203
          %v10319 = vunpack.c.h.b16 %v10203
          %v10320 = vunpack.c.l.b16 %v10204
          %v10321 = vunpack.c.h.b16 %v10204
          %v10322 = vunpack.c.l.b16 %v10205
          %v10323 = vunpack.c.h.b16 %v10205
          %v10324 = vunpack.c.l.b16 %v10206
          %v10325 = vunpack.c.h.b16 %v10206
          %v10326 = vunpack.c.l.b16 %v10207
          %v10327 = vunpack.c.h.b16 %v10207
          %v10328 = vunpack.c.l.b16 %v10208
          %v10329 = vunpack.c.h.b16 %v10208
          %v10330 = vunpack.c.l.b16 %v10209
          %v10331 = vunpack.c.h.b16 %v10209
          %v10332 = vunpack.c.l.b16 %v10210
          %v10333 = vunpack.c.h.b16 %v10210
          %v10334 = vunpack.c.l.b16 %v10211
          %v10335 = vunpack.c.h.b16 %v10211
          %v10336 = vunpack.c.l.b16 %v10212
          %v10337 = vunpack.c.h.b16 %v10212
          %v10338 = vunpack.c.l.b16 %v10213
          %v10339 = vunpack.c.h.b16 %v10213
          %v10340 = vunpack.c.l.b16 %v10214
          %v10341 = vunpack.c.h.b16 %v10214
          %v10342 = vunpack.c.l.b16 %v10215
          %v10343 = vunpack.c.h.b16 %v10215
          %v10344 = vunpack.c.l.b16 %v10216
          %v10345 = vunpack.c.h.b16 %v10216
          %v10346 = vunpack.c.l.b16 %v10217
          %v10347 = vunpack.c.h.b16 %v10217
          %v10348 = vunpack.c.l.b16 %v10218
          %v10349 = vunpack.c.h.b16 %v10218
          %v10350 = vunpack.c.l.b16 %v10219
          %v10351 = vunpack.c.h.b16 %v10219
          %v10352 = vunpack.c.l.b16 %v10220
          %v10353 = vunpack.c.h.b16 %v10220
          %v10354 = vunpack.c.l.b16 %v10221
          %v10355 = vunpack.c.h.b16 %v10221
          %v10356 = vunpack.c.l.b16 %v10222
          %v10357 = vunpack.c.h.b16 %v10222
          %v10358 = vunpack.c.l.b16 %v10223
          %v10359 = vunpack.c.h.b16 %v10223
          %v10360 = vunpack.c.l.b16 %v10224
          %v10361 = vunpack.c.h.b16 %v10224
          %v10362 = vunpack.c.l.b16 %v10225
          %v10363 = vunpack.c.h.b16 %v10225
          %v10364 = vunpack.c.l.b16 %v10226
          %v10365 = vunpack.c.h.b16 %v10226
          %v10366 = vunpack.c.l.b16 %v10227
          %v10367 = vunpack.c.h.b16 %v10227
          %v10368 = vunpack.c.l.b16 %v10228
          %v10369 = vunpack.c.h.b16 %v10228
          %v10370 = vunpack.c.l.b16 %v10229
          %v10371 = vunpack.c.h.b16 %v10229
          %v10372 = vunpack.c.l.b16 %v10230
          %v10373 = vunpack.c.h.b16 %v10230
          %v10374 = vunpack.c.l.b16 %v10231
          %v10375 = vunpack.c.h.b16 %v10231
          %v10376 = vunpack.c.l.b16 %v10232
          %v10377 = vunpack.c.h.b16 %v10232
          %v10378 = vunpack.c.l.b16 %v10233
          %v10379 = vunpack.c.h.b16 %v10233
          %v10380 = vpack.c.b16 %v10288, %v10284
          %v10381 = vpack.c.b16 %v10289, %v10285
          %v10382 = vpack.c.b16 %v10290, %v10286
          %v10383 = vpack.c.b16 %v10291, %v10287
          %v10384 = vpack.c.b16 %v10296, %v10292
          %v10385 = vpack.c.b16 %v10297, %v10293
          %v10386 = vpack.c.b16 %v10298, %v10294
          %v10387 = vpack.c.b16 %v10299, %v10295
          %v10388 = vpack.c.b16 %v10304, %v10300
          %v10389 = vpack.c.b16 %v10305, %v10301
          %v10390 = vpack.c.b16 %v10306, %v10302
          %v10391 = vpack.c.b16 %v10307, %v10303
          %v10392 = vpack.c.b16 %v10312, %v10308
          %v10393 = vpack.c.b16 %v10313, %v10309
          %v10394 = vpack.c.b16 %v10314, %v10310
          %v10395 = vpack.c.b16 %v10315, %v10311
          %v10396 = vpack.c.b16 %v10320, %v10316
          %v10397 = vpack.c.b16 %v10321, %v10317
          %v10398 = vpack.c.b16 %v10322, %v10318
          %v10399 = vpack.c.b16 %v10323, %v10319
          %v10400 = vpack.c.b16 %v10328, %v10324
          %v10401 = vpack.c.b16 %v10329, %v10325
          %v10402 = vpack.c.b16 %v10330, %v10326
          %v10403 = vpack.c.b16 %v10331, %v10327
          %v10404 = vpack.c.b16 %v10336, %v10332
          %v10405 = vpack.c.b16 %v10337, %v10333
          %v10406 = vpack.c.b16 %v10338, %v10334
          %v10407 = vpack.c.b16 %v10339, %v10335
          %v10408 = vpack.c.b16 %v10344, %v10340
          %v10409 = vpack.c.b16 %v10345, %v10341
          %v10410 = vpack.c.b16 %v10346, %v10342
          %v10411 = vpack.c.b16 %v10347, %v10343
          %v10412 = vpack.c.b16 %v10352, %v10348
          %v10413 = vpack.c.b16 %v10353, %v10349
          %v10414 = vpack.c.b16 %v10354, %v10350
          %v10415 = vpack.c.b16 %v10355, %v10351
          %v10416 = vpack.c.b16 %v10360, %v10356
          %v10417 = vpack.c.b16 %v10361, %v10357
          %v10418 = vpack.c.b16 %v10362, %v10358
          %v10419 = vpack.c.b16 %v10363, %v10359
          %v10420 = vpack.c.b16 %v10368, %v10364
          %v10421 = vpack.c.b16 %v10369, %v10365
          %v10422 = vpack.c.b16 %v10370, %v10366
          %v10423 = vpack.c.b16 %v10371, %v10367
          %v10424 = vpack.c.b16 %v10376, %v10372
          %v10425 = vpack.c.b16 %v10377, %v10373
          %v10426 = vpack.c.b16 %v10378, %v10374
          %v10427 = vpack.c.b16 %v10379, %v10375
          %v10477 = vsel %vm1019, %v10235, 0
          %10479 = vmatpush.bf16.msra.mxu0 %v10408
          %10480 = vmatpush.bf16.msra.mxu0 %v10404
          %10481 = vmatpush.bf16.msra.mxu0 %v10400
          %10482 = vmatpush.bf16.msra.mxu0 %v10396
          %10483 = vmatpush.bf16.msra.mxu0 %v10392
          %10484 = vmatpush.bf16.msra.mxu0 %v10388
          %10485 = vmatpush.bf16.msra.mxu0 %v10384
          %10486 = vmatpush.bf16.msra.mxu0 %v10380
          %10487 = vmatmul.bf16.gmra.mxu0 %v10234
          %v10488 = vpop.f32.mrf.mxu0
          %v10489 = vadd.f32 0.0, %v10488
          %v10490 = vpop.f32.mrf.mxu0
          %10491 = vdwg.mxu0
          %10492 = vmatpush.bf16.msra.mxu0 0
          %10493 = vmatpush.bf16.msra.mxu0 0
          %10494 = vmatpush.bf16.msra.mxu0 0
          %10495 = vmatpush.bf16.msra.mxu0 0
          %10496 = vmatpush.bf16.msra.mxu0 %v10424
          %10497 = vmatpush.bf16.msra.mxu0 %v10420
          %10498 = vmatpush.bf16.msra.mxu0 %v10416
          %10499 = vmatpush.bf16.msra.mxu0 %v10412
          %10500 = vmatmul.bf16.gmra.mxu0 %v10477
          %v10501 = vpop.f32.mrf.mxu0
          %v10502 = vadd.f32 %v10489, %v10501
          %v10503 = vpop.f32.mrf.mxu0
          %10504 = vdwg.mxu0
          %10505 = vmatpush.bf16.msra.mxu0 %v10409
          %10506 = vmatpush.bf16.msra.mxu0 %v10405
          %10507 = vmatpush.bf16.msra.mxu0 %v10401
          %10508 = vmatpush.bf16.msra.mxu0 %v10397
          %10509 = vmatpush.bf16.msra.mxu0 %v10393
          %10510 = vmatpush.bf16.msra.mxu0 %v10389
          %10511 = vmatpush.bf16.msra.mxu0 %v10385
          %10512 = vmatpush.bf16.msra.mxu0 %v10381
          %10513 = vmatmul.bf16.gmra.mxu0 %v10234
          %v10514 = vpop.f32.mrf.mxu0
          %v10515 = vadd.f32 0.0, %v10514
          %v10516 = vpop.f32.mrf.mxu0
          %10517 = vdwg.mxu0
          %10518 = vmatpush.bf16.msra.mxu0 0
          %10519 = vmatpush.bf16.msra.mxu0 0
          %10520 = vmatpush.bf16.msra.mxu0 0
          %10521 = vmatpush.bf16.msra.mxu0 0
          %10522 = vmatpush.bf16.msra.mxu0 %v10425
          %10523 = vmatpush.bf16.msra.mxu0 %v10421
          %10524 = vmatpush.bf16.msra.mxu0 %v10417
          %10525 = vmatpush.bf16.msra.mxu0 %v10413
          %10526 = vmatmul.bf16.gmra.mxu0 %v10477
          %v10527 = vpop.f32.mrf.mxu0
          %v10528 = vadd.f32 %v10515, %v10527
          %v10529 = vpop.f32.mrf.mxu0
          %10530 = vdwg.mxu0
          %10531 = vmatpush.bf16.msra.mxu0 %v10410
          %10532 = vmatpush.bf16.msra.mxu0 %v10406
          %10533 = vmatpush.bf16.msra.mxu0 %v10402
          %10534 = vmatpush.bf16.msra.mxu0 %v10398
          %10535 = vmatpush.bf16.msra.mxu0 %v10394
          %10536 = vmatpush.bf16.msra.mxu0 %v10390
          %10537 = vmatpush.bf16.msra.mxu0 %v10386
          %10538 = vmatpush.bf16.msra.mxu0 %v10382
          %10539 = vmatmul.bf16.gmra.mxu0 %v10234
          %v10540 = vpop.f32.mrf.mxu0
          %v10541 = vadd.f32 0.0, %v10540
          %v10542 = vpop.f32.mrf.mxu0
          %10543 = vdwg.mxu0
          %10544 = vmatpush.bf16.msra.mxu0 0
          %10545 = vmatpush.bf16.msra.mxu0 0
          %10546 = vmatpush.bf16.msra.mxu0 0
          %10547 = vmatpush.bf16.msra.mxu0 0
          %10548 = vmatpush.bf16.msra.mxu0 %v10426
          %10549 = vmatpush.bf16.msra.mxu0 %v10422
          %10550 = vmatpush.bf16.msra.mxu0 %v10418
          %10551 = vmatpush.bf16.msra.mxu0 %v10414
          %10552 = vmatmul.bf16.gmra.mxu0 %v10477
          %v10553 = vpop.f32.mrf.mxu0
          %v10554 = vadd.f32 %v10541, %v10553
          %v10555 = vpop.f32.mrf.mxu0
          %10556 = vdwg.mxu0
          %10557 = vmatpush.bf16.msra.mxu0 %v10411
          %10558 = vmatpush.bf16.msra.mxu0 %v10407
          %10559 = vmatpush.bf16.msra.mxu0 %v10403
          %10560 = vmatpush.bf16.msra.mxu0 %v10399
          %10561 = vmatpush.bf16.msra.mxu0 %v10395
          %10562 = vmatpush.bf16.msra.mxu0 %v10391
          %10563 = vmatpush.bf16.msra.mxu0 %v10387
          %10564 = vmatpush.bf16.msra.mxu0 %v10383
          %10565 = vmatmul.bf16.gmra.mxu0 %v10234
          %v10566 = vpop.f32.mrf.mxu0
          %v10567 = vadd.f32 0.0, %v10566
          %v10568 = vpop.f32.mrf.mxu0
          %10569 = vdwg.mxu0
          %10570 = vmatpush.bf16.msra.mxu0 0
          %10571 = vmatpush.bf16.msra.mxu0 0
          %10572 = vmatpush.bf16.msra.mxu0 0
          %10573 = vmatpush.bf16.msra.mxu0 0
          %10574 = vmatpush.bf16.msra.mxu0 %v10427
          %10575 = vmatpush.bf16.msra.mxu0 %v10423
          %10576 = vmatpush.bf16.msra.mxu0 %v10419
          %10577 = vmatpush.bf16.msra.mxu0 %v10415
          %10578 = vmatmul.bf16.gmra.mxu0 %v10477
          %v10579 = vpop.f32.mrf.mxu0
          %v10580 = vadd.f32 %v10567, %v10579
          %v10581 = vpop.f32.mrf.mxu0
          %10582 = vdwg.mxu0
          %v10583 = vadd.f32 %v10153, %v10502
          %v10584 = vadd.f32 %v10154, %v10528
          %v10585 = vadd.f32 %v10155, %v10554
          %v10586 = vadd.f32 %v10156, %v10580
          %s10587 = scalar_lea.vmem %s12, 2
          %v10588 = vld [vmem:[%s10587] sm:$0x1]
          %10589 = vmatpush.bf16.msra.mxu0 %v9717
          %10590 = vmatpush.bf16.msra.mxu0 %v9715
          %10591 = vmatpush.bf16.msra.mxu0 %v9713
          %10592 = vmatpush.bf16.msra.mxu0 %v9711
          %10593 = vmatpush.bf16.msra.mxu0 %v9709
          %10594 = vmatpush.bf16.msra.mxu0 %v9707
          %10595 = vmatpush.bf16.msra.mxu0 %v9705
          %10596 = vmatpush.bf16.msra.mxu0 %v9703
          %10597 = vmatmul.bf16.gmra.mxu0 %v10588
          %v10598 = vpop.f32.mrf.mxu0
          %v10599 = vadd.f32 0.0, %v10598
          %v10600 = vpop.f32.mrf.mxu0
          %10601 = vdwg.mxu0
          %10602 = vmatpush.bf16.msra.mxu0 %v9718
          %10603 = vmatpush.bf16.msra.mxu0 %v9716
          %10604 = vmatpush.bf16.msra.mxu0 %v9714
          %10605 = vmatpush.bf16.msra.mxu0 %v9712
          %10606 = vmatpush.bf16.msra.mxu0 %v9710
          %10607 = vmatpush.bf16.msra.mxu0 %v9708
          %10608 = vmatpush.bf16.msra.mxu0 %v9706
          %10609 = vmatpush.bf16.msra.mxu0 %v9704
          %10610 = vmatmul.bf16.gmra.mxu0 %v10588
          %v10611 = vpop.f32.mrf.mxu0
          %v10612 = vadd.f32 0.0, %v10611
          %v10613 = vpop.f32.mrf.mxu0
          %10614 = vdwg.mxu0
          %s10615 = scalar_lea.vmem %s13, 768
          %v10616 = vld [vmem:[%s10615] sm:$0xff]
          %v10617 = vld [vmem:[%s10615 + $0x8] sm:$0xff]
          %v10618 = vld [vmem:[%s10615 + $0x10] sm:$0xff]
          %v10619 = vld [vmem:[%s10615 + $0x18] sm:$0xff]
          %v10620 = vld [vmem:[%s10615 + $0x20] sm:$0xff]
          %v10621 = vld [vmem:[%s10615 + $0x28] sm:$0xff]
          %v10622 = vld [vmem:[%s10615 + $0x30] sm:$0xff]
          %v10623 = vld [vmem:[%s10615 + $0x38] sm:$0xff]
          %v10624 = vld [vmem:[%s10615 + $0x40] sm:$0xff]
          %v10625 = vld [vmem:[%s10615 + $0x48] sm:$0xff]
          %v10626 = vld [vmem:[%s10615 + $0x50] sm:$0xff]
          %v10627 = vld [vmem:[%s10615 + $0x58] sm:$0xff]
          %v10628 = vld [vmem:[%s10615 + $0x60] sm:$0xff]
          %v10629 = vld [vmem:[%s10615 + $0x68] sm:$0xff]
          %v10630 = vld [vmem:[%s10615 + $0x70] sm:$0xff]
          %v10631 = vld [vmem:[%s10615 + $0x78] sm:$0xff]
          %v10632 = vld [vmem:[%s10615 + $0x80] sm:$0xff]
          %v10633 = vld [vmem:[%s10615 + $0x88] sm:$0xff]
          %v10634 = vld [vmem:[%s10615 + $0x90] sm:$0xff]
          %v10635 = vld [vmem:[%s10615 + $0x98] sm:$0xff]
          %v10636 = vld [vmem:[%s10615 + $0xa0] sm:$0xff]
          %v10637 = vld [vmem:[%s10615 + $0xa8] sm:$0xff]
          %v10638 = vld [vmem:[%s10615 + $0xb0] sm:$0xff]
          %v10639 = vld [vmem:[%s10615 + $0xb8] sm:$0xff]
          %v10640 = vld [vmem:[%s10615 + $0xc0] sm:$0xff]
          %v10641 = vld [vmem:[%s10615 + $0xc8] sm:$0xff]
          %v10642 = vld [vmem:[%s10615 + $0xd0] sm:$0xff]
          %v10643 = vld [vmem:[%s10615 + $0xd8] sm:$0xff]
          %v10644 = vld [vmem:[%s10615 + $0xe0] sm:$0xff]
          %v10645 = vld [vmem:[%s10615 + $0xe8] sm:$0xff]
          %v10646 = vld [vmem:[%s10615 + $0xf0] sm:$0xff]
          %v10647 = vld [vmem:[%s10615 + $0xf8] sm:$0xff]
          %v10648 = vld [vmem:[%s10615 + $0x100] sm:$0xff]
          %v10649 = vld [vmem:[%s10615 + $0x108] sm:$0xff]
          %v10650 = vld [vmem:[%s10615 + $0x110] sm:$0xff]
          %v10651 = vld [vmem:[%s10615 + $0x118] sm:$0xff]
          %v10652 = vld [vmem:[%s10615 + $0x120] sm:$0xff]
          %v10653 = vld [vmem:[%s10615 + $0x128] sm:$0xff]
          %v10654 = vld [vmem:[%s10615 + $0x130] sm:$0xff]
          %v10655 = vld [vmem:[%s10615 + $0x138] sm:$0xff]
          %v10656 = vld [vmem:[%s10615 + $0x140] sm:$0xff]
          %v10657 = vld [vmem:[%s10615 + $0x148] sm:$0xff]
          %v10658 = vld [vmem:[%s10615 + $0x150] sm:$0xff]
          %v10659 = vld [vmem:[%s10615 + $0x158] sm:$0xff]
          %v10660 = vld [vmem:[%s10615 + $0x160] sm:$0xff]
          %v10661 = vld [vmem:[%s10615 + $0x168] sm:$0xff]
          %v10662 = vld [vmem:[%s10615 + $0x170] sm:$0xff]
          %v10663 = vld [vmem:[%s10615 + $0x178] sm:$0xff]
          %v10664 = vpack.c.bf16 %v10599, %v10599
          %v10665 = vpack.c.bf16 %v10612, %v10612
          %v10714 = vunpack.c.l.b16 %v10616
          %v10715 = vunpack.c.h.b16 %v10616
          %v10716 = vunpack.c.l.b16 %v10617
          %v10717 = vunpack.c.h.b16 %v10617
          %v10718 = vunpack.c.l.b16 %v10618
          %v10719 = vunpack.c.h.b16 %v10618
          %v10720 = vunpack.c.l.b16 %v10619
          %v10721 = vunpack.c.h.b16 %v10619
          %v10722 = vunpack.c.l.b16 %v10620
          %v10723 = vunpack.c.h.b16 %v10620
          %v10724 = vunpack.c.l.b16 %v10621
          %v10725 = vunpack.c.h.b16 %v10621
          %v10726 = vunpack.c.l.b16 %v10622
          %v10727 = vunpack.c.h.b16 %v10622
          %v10728 = vunpack.c.l.b16 %v10623
          %v10729 = vunpack.c.h.b16 %v10623
          %v10730 = vunpack.c.l.b16 %v10624
          %v10731 = vunpack.c.h.b16 %v10624
          %v10732 = vunpack.c.l.b16 %v10625
          %v10733 = vunpack.c.h.b16 %v10625
          %v10734 = vunpack.c.l.b16 %v10626
          %v10735 = vunpack.c.h.b16 %v10626
          %v10736 = vunpack.c.l.b16 %v10627
          %v10737 = vunpack.c.h.b16 %v10627
          %v10738 = vunpack.c.l.b16 %v10628
          %v10739 = vunpack.c.h.b16 %v10628
          %v10740 = vunpack.c.l.b16 %v10629
          %v10741 = vunpack.c.h.b16 %v10629
          %v10742 = vunpack.c.l.b16 %v10630
          %v10743 = vunpack.c.h.b16 %v10630
          %v10744 = vunpack.c.l.b16 %v10631
          %v10745 = vunpack.c.h.b16 %v10631
          %v10746 = vunpack.c.l.b16 %v10632
          %v10747 = vunpack.c.h.b16 %v10632
          %v10748 = vunpack.c.l.b16 %v10633
          %v10749 = vunpack.c.h.b16 %v10633
          %v10750 = vunpack.c.l.b16 %v10634
          %v10751 = vunpack.c.h.b16 %v10634
          %v10752 = vunpack.c.l.b16 %v10635
          %v10753 = vunpack.c.h.b16 %v10635
          %v10754 = vunpack.c.l.b16 %v10636
          %v10755 = vunpack.c.h.b16 %v10636
          %v10756 = vunpack.c.l.b16 %v10637
          %v10757 = vunpack.c.h.b16 %v10637
          %v10758 = vunpack.c.l.b16 %v10638
          %v10759 = vunpack.c.h.b16 %v10638
          %v10760 = vunpack.c.l.b16 %v10639
          %v10761 = vunpack.c.h.b16 %v10639
          %v10762 = vunpack.c.l.b16 %v10640
          %v10763 = vunpack.c.h.b16 %v10640
          %v10764 = vunpack.c.l.b16 %v10641
          %v10765 = vunpack.c.h.b16 %v10641
          %v10766 = vunpack.c.l.b16 %v10642
          %v10767 = vunpack.c.h.b16 %v10642
          %v10768 = vunpack.c.l.b16 %v10643
          %v10769 = vunpack.c.h.b16 %v10643
          %v10770 = vunpack.c.l.b16 %v10644
          %v10771 = vunpack.c.h.b16 %v10644
          %v10772 = vunpack.c.l.b16 %v10645
          %v10773 = vunpack.c.h.b16 %v10645
          %v10774 = vunpack.c.l.b16 %v10646
          %v10775 = vunpack.c.h.b16 %v10646
          %v10776 = vunpack.c.l.b16 %v10647
          %v10777 = vunpack.c.h.b16 %v10647
          %v10778 = vunpack.c.l.b16 %v10648
          %v10779 = vunpack.c.h.b16 %v10648
          %v10780 = vunpack.c.l.b16 %v10649
          %v10781 = vunpack.c.h.b16 %v10649
          %v10782 = vunpack.c.l.b16 %v10650
          %v10783 = vunpack.c.h.b16 %v10650
          %v10784 = vunpack.c.l.b16 %v10651
          %v10785 = vunpack.c.h.b16 %v10651
          %v10786 = vunpack.c.l.b16 %v10652
          %v10787 = vunpack.c.h.b16 %v10652
          %v10788 = vunpack.c.l.b16 %v10653
          %v10789 = vunpack.c.h.b16 %v10653
          %v10790 = vunpack.c.l.b16 %v10654
          %v10791 = vunpack.c.h.b16 %v10654
          %v10792 = vunpack.c.l.b16 %v10655
          %v10793 = vunpack.c.h.b16 %v10655
          %v10794 = vunpack.c.l.b16 %v10656
          %v10795 = vunpack.c.h.b16 %v10656
          %v10796 = vunpack.c.l.b16 %v10657
          %v10797 = vunpack.c.h.b16 %v10657
          %v10798 = vunpack.c.l.b16 %v10658
          %v10799 = vunpack.c.h.b16 %v10658
          %v10800 = vunpack.c.l.b16 %v10659
          %v10801 = vunpack.c.h.b16 %v10659
          %v10802 = vunpack.c.l.b16 %v10660
          %v10803 = vunpack.c.h.b16 %v10660
          %v10804 = vunpack.c.l.b16 %v10661
          %v10805 = vunpack.c.h.b16 %v10661
          %v10806 = vunpack.c.l.b16 %v10662
          %v10807 = vunpack.c.h.b16 %v10662
          %v10808 = vunpack.c.l.b16 %v10663
          %v10809 = vunpack.c.h.b16 %v10663
          %v10810 = vpack.c.b16 %v10718, %v10714
          %v10811 = vpack.c.b16 %v10719, %v10715
          %v10812 = vpack.c.b16 %v10720, %v10716
          %v10813 = vpack.c.b16 %v10721, %v10717
          %v10814 = vpack.c.b16 %v10726, %v10722
          %v10815 = vpack.c.b16 %v10727, %v10723
          %v10816 = vpack.c.b16 %v10728, %v10724
          %v10817 = vpack.c.b16 %v10729, %v10725
          %v10818 = vpack.c.b16 %v10734, %v10730
          %v10819 = vpack.c.b16 %v10735, %v10731
          %v10820 = vpack.c.b16 %v10736, %v10732
          %v10821 = vpack.c.b16 %v10737, %v10733
          %v10822 = vpack.c.b16 %v10742, %v10738
          %v10823 = vpack.c.b16 %v10743, %v10739
          %v10824 = vpack.c.b16 %v10744, %v10740
          %v10825 = vpack.c.b16 %v10745, %v10741
          %v10826 = vpack.c.b16 %v10750, %v10746
          %v10827 = vpack.c.b16 %v10751, %v10747
          %v10828 = vpack.c.b16 %v10752, %v10748
          %v10829 = vpack.c.b16 %v10753, %v10749
          %v10830 = vpack.c.b16 %v10758, %v10754
          %v10831 = vpack.c.b16 %v10759, %v10755
          %v10832 = vpack.c.b16 %v10760, %v10756
          %v10833 = vpack.c.b16 %v10761, %v10757
          %v10834 = vpack.c.b16 %v10766, %v10762
          %v10835 = vpack.c.b16 %v10767, %v10763
          %v10836 = vpack.c.b16 %v10768, %v10764
          %v10837 = vpack.c.b16 %v10769, %v10765
          %v10838 = vpack.c.b16 %v10774, %v10770
          %v10839 = vpack.c.b16 %v10775, %v10771
          %v10840 = vpack.c.b16 %v10776, %v10772
          %v10841 = vpack.c.b16 %v10777, %v10773
          %v10842 = vpack.c.b16 %v10782, %v10778
          %v10843 = vpack.c.b16 %v10783, %v10779
          %v10844 = vpack.c.b16 %v10784, %v10780
          %v10845 = vpack.c.b16 %v10785, %v10781
          %v10846 = vpack.c.b16 %v10790, %v10786
          %v10847 = vpack.c.b16 %v10791, %v10787
          %v10848 = vpack.c.b16 %v10792, %v10788
          %v10849 = vpack.c.b16 %v10793, %v10789
          %v10850 = vpack.c.b16 %v10798, %v10794
          %v10851 = vpack.c.b16 %v10799, %v10795
          %v10852 = vpack.c.b16 %v10800, %v10796
          %v10853 = vpack.c.b16 %v10801, %v10797
          %v10854 = vpack.c.b16 %v10806, %v10802
          %v10855 = vpack.c.b16 %v10807, %v10803
          %v10856 = vpack.c.b16 %v10808, %v10804
          %v10857 = vpack.c.b16 %v10809, %v10805
          %v10907 = vsel %vm1019, %v10665, 0
          %10909 = vmatpush.bf16.msra.mxu0 %v10838
          %10910 = vmatpush.bf16.msra.mxu0 %v10834
          %10911 = vmatpush.bf16.msra.mxu0 %v10830
          %10912 = vmatpush.bf16.msra.mxu0 %v10826
          %10913 = vmatpush.bf16.msra.mxu0 %v10822
          %10914 = vmatpush.bf16.msra.mxu0 %v10818
          %10915 = vmatpush.bf16.msra.mxu0 %v10814
          %10916 = vmatpush.bf16.msra.mxu0 %v10810
          %10917 = vmatmul.bf16.gmra.mxu0 %v10664
          %v10918 = vpop.f32.mrf.mxu0
          %v10919 = vadd.f32 0.0, %v10918
          %v10920 = vpop.f32.mrf.mxu0
          %10921 = vdwg.mxu0
          %10922 = vmatpush.bf16.msra.mxu0 0
          %10923 = vmatpush.bf16.msra.mxu0 0
          %10924 = vmatpush.bf16.msra.mxu0 0
          %10925 = vmatpush.bf16.msra.mxu0 0
          %10926 = vmatpush.bf16.msra.mxu0 %v10854
          %10927 = vmatpush.bf16.msra.mxu0 %v10850
          %10928 = vmatpush.bf16.msra.mxu0 %v10846
          %10929 = vmatpush.bf16.msra.mxu0 %v10842
          %10930 = vmatmul.bf16.gmra.mxu0 %v10907
          %v10931 = vpop.f32.mrf.mxu0
          %v10932 = vadd.f32 %v10919, %v10931
          %v10933 = vpop.f32.mrf.mxu0
          %10934 = vdwg.mxu0
          %10935 = vmatpush.bf16.msra.mxu0 %v10839
          %10936 = vmatpush.bf16.msra.mxu0 %v10835
          %10937 = vmatpush.bf16.msra.mxu0 %v10831
          %10938 = vmatpush.bf16.msra.mxu0 %v10827
          %10939 = vmatpush.bf16.msra.mxu0 %v10823
          %10940 = vmatpush.bf16.msra.mxu0 %v10819
          %10941 = vmatpush.bf16.msra.mxu0 %v10815
          %10942 = vmatpush.bf16.msra.mxu0 %v10811
          %10943 = vmatmul.bf16.gmra.mxu0 %v10664
          %v10944 = vpop.f32.mrf.mxu0
          %v10945 = vadd.f32 0.0, %v10944
          %v10946 = vpop.f32.mrf.mxu0
          %10947 = vdwg.mxu0
          %10948 = vmatpush.bf16.msra.mxu0 0
          %10949 = vmatpush.bf16.msra.mxu0 0
          %10950 = vmatpush.bf16.msra.mxu0 0
          %10951 = vmatpush.bf16.msra.mxu0 0
          %10952 = vmatpush.bf16.msra.mxu0 %v10855
          %10953 = vmatpush.bf16.msra.mxu0 %v10851
          %10954 = vmatpush.bf16.msra.mxu0 %v10847
          %10955 = vmatpush.bf16.msra.mxu0 %v10843
          %10956 = vmatmul.bf16.gmra.mxu0 %v10907
          %v10957 = vpop.f32.mrf.mxu0
          %v10958 = vadd.f32 %v10945, %v10957
          %v10959 = vpop.f32.mrf.mxu0
          %10960 = vdwg.mxu0
          %10961 = vmatpush.bf16.msra.mxu0 %v10840
          %10962 = vmatpush.bf16.msra.mxu0 %v10836
          %10963 = vmatpush.bf16.msra.mxu0 %v10832
          %10964 = vmatpush.bf16.msra.mxu0 %v10828
          %10965 = vmatpush.bf16.msra.mxu0 %v10824
          %10966 = vmatpush.bf16.msra.mxu0 %v10820
          %10967 = vmatpush.bf16.msra.mxu0 %v10816
          %10968 = vmatpush.bf16.msra.mxu0 %v10812
          %10969 = vmatmul.bf16.gmra.mxu0 %v10664
          %v10970 = vpop.f32.mrf.mxu0
          %v10971 = vadd.f32 0.0, %v10970
          %v10972 = vpop.f32.mrf.mxu0
          %10973 = vdwg.mxu0
          %10974 = vmatpush.bf16.msra.mxu0 0
          %10975 = vmatpush.bf16.msra.mxu0 0
          %10976 = vmatpush.bf16.msra.mxu0 0
          %10977 = vmatpush.bf16.msra.mxu0 0
          %10978 = vmatpush.bf16.msra.mxu0 %v10856
          %10979 = vmatpush.bf16.msra.mxu0 %v10852
          %10980 = vmatpush.bf16.msra.mxu0 %v10848
          %10981 = vmatpush.bf16.msra.mxu0 %v10844
          %10982 = vmatmul.bf16.gmra.mxu0 %v10907
          %v10983 = vpop.f32.mrf.mxu0
          %v10984 = vadd.f32 %v10971, %v10983
          %v10985 = vpop.f32.mrf.mxu0
          %10986 = vdwg.mxu0
          %10987 = vmatpush.bf16.msra.mxu0 %v10841
          %10988 = vmatpush.bf16.msra.mxu0 %v10837
          %10989 = vmatpush.bf16.msra.mxu0 %v10833
          %10990 = vmatpush.bf16.msra.mxu0 %v10829
          %10991 = vmatpush.bf16.msra.mxu0 %v10825
          %10992 = vmatpush.bf16.msra.mxu0 %v10821
          %10993 = vmatpush.bf16.msra.mxu0 %v10817
          %10994 = vmatpush.bf16.msra.mxu0 %v10813
          %10995 = vmatmul.bf16.gmra.mxu0 %v10664
          %v10996 = vpop.f32.mrf.mxu0
          %v10997 = vadd.f32 0.0, %v10996
          %v10998 = vpop.f32.mrf.mxu0
          %10999 = vdwg.mxu0
          %11000 = vmatpush.bf16.msra.mxu0 0
          %11001 = vmatpush.bf16.msra.mxu0 0
          %11002 = vmatpush.bf16.msra.mxu0 0
          %11003 = vmatpush.bf16.msra.mxu0 0
          %11004 = vmatpush.bf16.msra.mxu0 %v10857
          %11005 = vmatpush.bf16.msra.mxu0 %v10853
          %11006 = vmatpush.bf16.msra.mxu0 %v10849
          %11007 = vmatpush.bf16.msra.mxu0 %v10845
          %11008 = vmatmul.bf16.gmra.mxu0 %v10907
          %v11009 = vpop.f32.mrf.mxu0
          %v11010 = vadd.f32 %v10997, %v11009
          %v11011 = vpop.f32.mrf.mxu0
          %11012 = vdwg.mxu0
          %v11013 = vadd.f32 %v10583, %v10932
          %v11014 = vadd.f32 %v10584, %v10958
          %v11015 = vadd.f32 %v10585, %v10984
          %v11016 = vadd.f32 %v10586, %v11010
          %v11021 = vrot.slane %v11014, 6
          %v11022 = vrot.slane %v11015, 4
          %v11023 = vrot.slane %v11016, 2
          %vm11024 = vcmask 1041408
          %v11025 = vsel %vm11024, %v11013, %v11021
          %vm11026 = vcmask 1045508
          %v11027 = vsel %vm11026, %v11022, %v11023
          %v11028 = vsel %vm3475, %v11025, %v11027
          %vm11030 = vcmask 1043458
          %vm11031 = vmor %vm11030, %vm11024
          %vm11032 = vmor %vm11026, %vm11031
          %vm11033 = vcmask 130054
          %vm11034 = vmor %vm11033, %vm11032
          %11035 = vst.msk [vmem:[#allocation3] sm:$0xff] %vm11034, %v11028
        $region88: #{forward.1} parent=79 // pred_fallthru
          _
        // Predicated region
        $region89: #{forward.1} parent=79 // pred_check
          %p11036 = pneg %p380
        $region90: #{forward.1} parent=79 // pred_check_branch
          %11038 = sbr.rel (%p11036) target = $region92
        $region91: #{forward.1} parent=79 // pred_region
          %11040 = vsyncadd [#allocation4], 0
          %s11042 = sshll.u32 [#allocation3], 4
          %s11043 = int_to_ptr.vmem [resolvable:$true] %s11042
          %s11044 = sshll.u32 %s15, 4
          %s11045 = int_to_ptr.hbm [resolvable:$true] %s11044
          %11047 = dma.vmem_to_hbm [thread:$0]  %s11043, 128, %s11045, [#allocation4]
        $region92: #{forward.1} parent=79 // pred_fallthru
          _
        // Predicated region
        $region93: #{forward.1} parent=79 // pred_check
          %p11048 = pneg %p380
        $region94: #{forward.1} parent=79 // pred_check_branch
          %11050 = sbr.rel (%p11048) target = $region96
        $region95: #{forward.1} parent=79 // pred_region
          %11052 = dma.done [#allocation4], 128
        $region96: #{forward.1} parent=79 // pred_fallthru
          _
      $region80: #{forward.1} parent=5 // pred_fallthru
        _
      %p11053 = scmp.le.s32.totalorder 2, %s22
      // Predicated region
      $region97: #{forward.1} parent=5 // pred_check
        %p11054 = pneg %p11053
      $region98: #{forward.1} parent=5 // pred_check_branch
        %11056 = sbr.rel (%p11054) target = $region100
      $region99: #{forward.1} parent=5 // pred_region
        %s11057 = ssub.s32 %s22, 2
      $region100: #{forward.1} parent=5 // pred_fallthru
        _
    $region6: #{forward.1} parent=1 // loop_footer
      %s26 = sadd.s32 1, %s22
    $region7: #{forward.1} parent=1 // loop_footer_branch
      %21 = sbr.rel target = $region3
    $region8: #{forward.1} parent=1 // loop_exit
      _
    %11058 = vsyncpa [#allocation4], 1
    %s11059 = scalar_lea.sflag [#allocation4], 1
    %11060 = vsyncpa %s11059, 1

</llo_original>
